<compile_context>
chip_gen: v7x
topology: tpu7x:2x2x1
jax: 0.10.0
libtpu: 0.0.40
codegen_flags: <defaults>
</compile_context>

<pallas_src>
import functools

import jax
import jax.numpy as jnp
from jax import lax
from jax.experimental import pallas as pl
from jax.experimental.pallas import tpu as pltpu


def _round_up(a, m):
    return ((a + m - 1) // m) * m


# --------------------------------------------------------------------------
# Kernel
# --------------------------------------------------------------------------
def _lstm_forecaster_kernel(cfg, *refs):
    (num_layers, Hp, seq_len, t_chunk, has_rest, dot_dtype) = cfg

    if has_rest:
        (x_ref,        # (seq, B, input_size)   time-major, batch-padded block
         w_ih0_ref,    # (input_size, 4Hp)      layer-0 input weights [i|f|o|g]
         b_ref,        # (L, 1, 4Hp)            b_ih + b_hh           [i|f|o|g]
         w_fc_ref,     # (1, Hp)
         b_fc_ref,     # (1, 1)
         w_hh_hbm,     # (L, Hp, 4Hp)   in HBM  recurrent weights     [i|f|o|g]
         w_ih_hbm,     # (L-1, Hp, 4Hp) in HBM  input weights, layers >= 1
         pred_ref,     # (B, 1)
         hN_ref,       # (L, B, Hp)
         cN_ref,       # (L, B, Hp)
         gates_buf,    # VMEM (t_chunk, B, 4Hp)  per-chunk hoisted projection
         w_hh_buf,     # VMEM (2, Hp, 4Hp)       double-buffered layer weights
         w_ih_buf,     # VMEM (2, Hp, 4Hp)
         act_buf,      # VMEM (seq, B, Hp)       inter-layer activations
         dma_sem,      # DMA sems (2, 2)         [kind, slot]
         ) = refs
    else:
        (x_ref, w_ih0_ref, b_ref, w_fc_ref, b_fc_ref, w_hh_hbm,
         pred_ref, hN_ref, cN_ref,
         gates_buf, w_hh_buf, dma_sem) = refs
        w_ih_hbm = w_ih_buf = act_buf = None

    B = x_ref.shape[1]
    H4 = 4 * Hp
    n_chunks = (seq_len + t_chunk - 1) // t_chunk

    def whh_slot(l):
        return l % 2

    def wih_slot(l):
        return (l - 1) % 2

    # ---- layer-weight streaming: HBM -> double-buffered VMEM scratch -------
    def start_whh(l):
        pltpu.make_async_copy(w_hh_hbm.at[l], w_hh_buf.at[whh_slot(l)],
                              dma_sem.at[0, whh_slot(l)]).start()

    def wait_whh(l):
        pltpu.make_async_copy(w_hh_hbm.at[l], w_hh_buf.at[whh_slot(l)],
                              dma_sem.at[0, whh_slot(l)]).wait()

    def start_wih(l):
        pltpu.make_async_copy(w_ih_hbm.at[l - 1], w_ih_buf.at[wih_slot(l)],
                              dma_sem.at[1, wih_slot(l)]).start()

    def wait_wih(l):
        pltpu.make_async_copy(w_ih_hbm.at[l - 1], w_ih_buf.at[wih_slot(l)],
                              dma_sem.at[1, wih_slot(l)]).wait()

    def run_layer(layer_idx, xin_ref, w_ih_view, w_hh_view, is_top):
        k_in = xin_ref.shape[-1]
        bias = b_ref[layer_idx]                       # (1, 4Hp), f32

        h = jnp.zeros((B, Hp), jnp.float32)
        c = jnp.zeros((B, Hp), jnp.float32)

        for ci in range(n_chunks):
            t0 = ci * t_chunk
            tc = min(t_chunk, seq_len - t0)

            # -- hoisted input projection for this chunk: one MXU pass -------
            xin = (xin_ref[pl.ds(t0, tc)]
                   .reshape(tc * B, k_in)
                   .astype(dot_dtype))
            proj = jnp.dot(xin, w_ih_view[...],
                           preferred_element_type=jnp.float32) + bias
            gates_buf[pl.ds(0, tc)] = proj.reshape(tc, B, H4)

            # -- recurrence: only h @ W_hh remains on the critical path ------
            def step(t, carry):
                h_t, c_t = carry
                gates = gates_buf[t] + jnp.dot(
                    h_t.astype(dot_dtype), w_hh_view[...],
                    preferred_element_type=jnp.float32)
                # gate order [i, f, o, g]: one sigmoid over contiguous 3Hp
                sig = jax.nn.sigmoid(gates[:, :3 * Hp])
                i_g = sig[:, 0 * Hp:1 * Hp]
                f_g = sig[:, 1 * Hp:2 * Hp]
                o_g = sig[:, 2 * Hp:3 * Hp]
                g_g = jnp.tanh(gates[:, 3 * Hp:])
                c_new = f_g * c_t + i_g * g_g
                h_new = o_g * jnp.tanh(c_new)
                if not is_top:
                    act_buf[t0 + t] = h_new           # next layer's input
                return (h_new, c_new)

            h, c = lax.fori_loop(0, tc, step, (h, c), unroll=min(tc, 8))

        hN_ref[layer_idx] = h
        cN_ref[layer_idx] = c
        return h

    # ---- layer schedule: prefetch layer l+1's weights during layer l -------
    start_whh(0)
    if num_layers > 1:
        start_wih(1)
        start_whh(1)
    wait_whh(0)
    h_top = run_layer(0, x_ref, w_ih0_ref, w_hh_buf.at[whh_slot(0)],
                      is_top=(num_layers == 1))
    for l in range(1, num_layers):
        if l + 1 < num_layers:
            start_wih(l + 1)
            start_whh(l + 1)
        wait_wih(l)
        wait_whh(l)
        h_top = run_layer(l, act_buf, w_ih_buf.at[wih_slot(l)],
                          w_hh_buf.at[whh_slot(l)],
                          is_top=(l == num_layers - 1))

    # fc head: pred = h_top @ w_fc.T + b_fc  (VPU multiply + lane reduce)
    pred_ref[...] = (jnp.sum(h_top * w_fc_ref[...], axis=-1, keepdims=True)
                     + b_fc_ref[...])


# --------------------------------------------------------------------------
# Parameter packing (PyTorch layout -> lane-aligned, gate-reordered layout)
# --------------------------------------------------------------------------
def _pack_gate_weight(w, H, Hp, Kp, dtype):
    """w: (..., 4H, K) PyTorch [i|f|g|o] -> (..., Kp, 4Hp) kernel [i|f|o|g]."""
    i, f, g, o = jnp.split(w, 4, axis=-2)
    blocks = []
    for blk in (i, f, o, g):
        pad = [(0, 0)] * blk.ndim
        pad[-2] = (0, Hp - H)
        pad[-1] = (0, Kp - blk.shape[-1])
        blocks.append(jnp.pad(blk, pad))
    w4 = jnp.concatenate(blocks, axis=-2)             # (..., 4Hp, Kp)
    return jnp.swapaxes(w4, -1, -2).astype(dtype)     # (..., Kp, 4Hp)


def _pack_gate_bias(b, H, Hp):
    """b: (L, 4H) [i|f|g|o] -> (L, 4Hp) [i|f|o|g], zero padded."""
    i, f, g, o = jnp.split(b, 4, axis=-1)
    blocks = [jnp.pad(x, [(0, 0)] * (x.ndim - 1) + [(0, Hp - H)])
              for x in (i, f, o, g)]
    return jnp.concatenate(blocks, axis=-1)


# --------------------------------------------------------------------------
# Wrapper
# --------------------------------------------------------------------------
def lstm_forecaster_forward(x_bsi, pt_params, *, use_bf16_dots=False,
                            time_chunk=64):
    """x_bsi: (batch, seq, input_size) f32. Returns (pred, (h_n, c_n))."""
    x_bsi = jnp.asarray(x_bsi, jnp.float32)
    batch, seq, input_size = x_bsi.shape

    w_ih0, w_ih_rest, w_hh, b_ih, b_hh, w_fc, b_fc = pt_params
    num_layers = int(w_hh.shape[0])
    H = int(w_hh.shape[-1])
    Hp = _round_up(H, 128)                   # lane-aligned gate slices
    has_rest = num_layers > 1
    dot_dtype = jnp.bfloat16 if use_bf16_dots else jnp.float32

    # ---- pack params (padded channels are zero => provably inert) ----------
    w_ih0_k = _pack_gate_weight(jnp.asarray(w_ih0, jnp.float32),
                                H, Hp, input_size, dot_dtype)
    w_hh_k = _pack_gate_weight(jnp.asarray(w_hh, jnp.float32),
                               H, Hp, Hp, dot_dtype)
    b_k = _pack_gate_bias(jnp.asarray(b_ih + b_hh, jnp.float32),
                          H, Hp)[:, None, :]
    w_fc_k = jnp.pad(jnp.asarray(w_fc, jnp.float32).reshape(1, H),
                     ((0, 0), (0, Hp - H)))
    b_fc_k = jnp.asarray(b_fc, jnp.float32).reshape(1, 1)
    if has_rest:
        w_ih_rest_k = _pack_gate_weight(jnp.asarray(w_ih_rest, jnp.float32),
                                        H, Hp, Hp, dot_dtype)

    # ---- batch padding + batch-parallel grid (engages v7x's 2nd TC) --------
    if batch >= 32:
        nb = 2
        Bp = _round_up(batch, 32)
    else:
        nb = 1
        Bp = _round_up(batch, 16)            # 16 = bf16 sublane tile
    B_blk = Bp // nb

    x_tbi = jnp.transpose(x_bsi, (1, 0, 2))  # time-major
    if Bp != batch:
        x_tbi = jnp.pad(x_tbi, ((0, 0), (0, Bp - batch), (0, 0)))

    # keep T_c*B reasonably large for MXU efficiency (>= 512 rows on v5e)
    t_chunk = seq if seq <= time_chunk else time_chunk

    # ---- specs --------------------------------------------------------------
    in_specs = [
        pl.BlockSpec((seq, B_blk, input_size), lambda i: (0, i, 0)),   # x
        pl.BlockSpec((input_size, 4 * Hp), lambda i: (0, 0)),          # w_ih0
        pl.BlockSpec((num_layers, 1, 4 * Hp), lambda i: (0, 0, 0)),    # bias
        pl.BlockSpec((1, Hp), lambda i: (0, 0)),                       # w_fc
        pl.BlockSpec((1, 1), lambda i: (0, 0)),                        # b_fc
        pl.BlockSpec(memory_space=pl.ANY),                             # w_hh HBM
    ]
    inputs = [x_tbi, w_ih0_k, b_k, w_fc_k, b_fc_k, w_hh_k]
    if has_rest:
        in_specs.append(pl.BlockSpec(memory_space=pl.ANY))             # w_ih HBM
        inputs.append(w_ih_rest_k)

    out_specs = (
        pl.BlockSpec((B_blk, 1), lambda i: (i, 0)),
        pl.BlockSpec((num_layers, B_blk, Hp), lambda i: (0, i, 0)),
        pl.BlockSpec((num_layers, B_blk, Hp), lambda i: (0, i, 0)),
    )
    out_shapes = (
        jax.ShapeDtypeStruct((Bp, 1), jnp.float32),                    # pred
        jax.ShapeDtypeStruct((num_layers, Bp, Hp), jnp.float32),       # h_n
        jax.ShapeDtypeStruct((num_layers, Bp, Hp), jnp.float32),       # c_n
    )

    scratch = [
        pltpu.VMEM((t_chunk, B_blk, 4 * Hp), jnp.float32),   # gates chunk
        pltpu.VMEM((2, Hp, 4 * Hp), dot_dtype),              # w_hh double buf
    ]
    if has_rest:
        scratch += [
            pltpu.VMEM((2, Hp, 4 * Hp), dot_dtype),          # w_ih double buf
            pltpu.VMEM((seq, B_blk, Hp), jnp.float32),       # inter-layer acts
        ]
    scratch.append(pltpu.SemaphoreType.DMA((2, 2)))

    # ---- VMEM budget for the chunked working set ----------------------------
    wb = 2 if use_bf16_dots else 4
    est = (2 * seq * B_blk * input_size * 4                  # x block (dbuf)
           + input_size * 4 * Hp * wb                        # w_ih0
           + num_layers * 4 * Hp * 4                         # bias
           + Hp * 4 + 4                                      # fc
           + t_chunk * B_blk * 4 * Hp * 4                    # gates chunk
           + 2 * Hp * 4 * Hp * wb                            # w_hh bufs
           + 2 * (B_blk + 2 * num_layers * B_blk * Hp) * 4)  # outputs (dbuf)
    if has_rest:
        est += 2 * Hp * 4 * Hp * wb + seq * B_blk * Hp * 4
    vmem_limit = int(min(max(2 * est + (8 << 20), 32 << 20), 64 << 20))

    kernel = functools.partial(
        _lstm_forecaster_kernel,
        (num_layers, Hp, seq, t_chunk, has_rest, dot_dtype))

    pred, h_n, c_n = pl.pallas_call(
        kernel,
        grid=(nb,),
        out_shape=out_shapes,
        in_specs=in_specs,
        out_specs=out_specs,
        scratch_shapes=scratch,
        compiler_params=pltpu.CompilerParams(
            dimension_semantics=("parallel",),
            vmem_limit_bytes=vmem_limit),
    )(*inputs)

    return pred[:batch], (h_n[:, :batch, :H], c_n[:, :batch, :H])


# --------------------------------------------------------------------------
# PyTorch-faithful init + pure-JAX reference (for validation)
# --------------------------------------------------------------------------
def init_params(key, input_size, hidden_size, num_layers):
    """PyTorch nn.LSTM / nn.Linear shaped params, U(-1/sqrt(H), 1/sqrt(H))."""
    k = 1.0 / jnp.sqrt(hidden_size)
    keys = jax.random.split(key, 7)
    H4 = 4 * hidden_size
    n_rest = max(num_layers - 1, 0)
    w_ih0 = jax.random.uniform(keys[0], (H4, input_size), minval=-k, maxval=k)
    w_ih_rest = jax.random.uniform(keys[1], (n_rest, H4, hidden_size),
                                   minval=-k, maxval=k)
    w_hh = jax.random.uniform(keys[2], (num_layers, H4, hidden_size),
                              minval=-k, maxval=k)
    b_ih = jax.random.uniform(keys[3], (num_layers, H4), minval=-k, maxval=k)
    b_hh = jax.random.uniform(keys[4], (num_layers, H4), minval=-k, maxval=k)
    w_fc = jax.random.uniform(keys[5], (1, hidden_size), minval=-k, maxval=k)
    b_fc = jax.random.uniform(keys[6], (1,), minval=-k, maxval=k)
    return (w_ih0, w_ih_rest, w_hh, b_ih, b_hh, w_fc, b_fc)


def lstm_forecaster_ref(x_bsi, pt_params):
    """Pure-JAX reference matching PyTorch LSTM semantics (gate order i,f,g,o)."""
    w_ih0, w_ih_rest, w_hh, b_ih, b_hh, w_fc, b_fc = pt_params
    num_layers, _, H = w_hh.shape
    batch, seq, _ = x_bsi.shape
    layer_in = x_bsi
    h_list, c_list = [], []
    for l in range(num_layers):
        w_ih = w_ih0 if l == 0 else w_ih_rest[l - 1]
        h = jnp.zeros((batch, H), jnp.float32)
        c = jnp.zeros((batch, H), jnp.float32)
        outs = []
        for t in range(seq):
            g = layer_in[:, t, :] @ w_ih.T + h @ w_hh[l].T + b_ih[l] + b_hh[l]
            i_g = jax.nn.sigmoid(g[:, :H])
            f_g = jax.nn.sigmoid(g[:, H:2 * H])
            g_g = jnp.tanh(g[:, 2 * H:3 * H])
            o_g = jax.nn.sigmoid(g[:, 3 * H:])
            c = f_g * c + i_g * g_g
            h = o_g * jnp.tanh(c)
            outs.append(h)
        layer_in = jnp.stack(outs, axis=1)
        h_list.append(h)
        c_list.append(c)
    pred = layer_in[:, -1, :] @ w_fc.T + b_fc
    return pred, (jnp.stack(h_list), jnp.stack(c_list))


# --------------------------------------------------------------------------
if __name__ == "__main__":
    batch, seq, input_size, hidden_size, num_layers = 2, 8, 4, 32, 2

    key = jax.random.PRNGKey(0)
    kx, kp = jax.random.split(key)
    x = jax.random.normal(kx, (batch, seq, input_size), dtype=jnp.float32)
    params = init_params(kp, input_size, hidden_size, num_layers)
    # note: nn.LSTM inter-layer dropout (train-mode only, default 0.0) is not applied.

    pred_ref, (h_ref, c_ref) = lstm_forecaster_ref(x, params)

    # exact f32 path
    pred, (h_n, c_n) = lstm_forecaster_forward(x, params)
    jax.block_until_ready((pred, h_n, c_n))
    assert pred.shape == (batch, 1)
    assert h_n.shape == (num_layers, batch, hidden_size)
    assert c_n.shape == (num_layers, batch, hidden_size)
    assert jnp.allclose(pred, pred_ref, atol=1e-3, rtol=1e-3)
    assert jnp.allclose(h_n, h_ref, atol=1e-3, rtol=1e-3)
    assert jnp.allclose(c_n, c_ref, atol=1e-3, rtol=1e-3)

    # bf16-at-the-dot fast path (f32 accumulation), looser tolerance
    pred_b, (h_b, c_b) = lstm_forecaster_forward(x, params, use_bf16_dots=True)
    jax.block_until_ready((pred_b, h_b, c_b))
    assert jnp.allclose(pred_b, pred_ref, atol=5e-2, rtol=5e-2)
    assert jnp.allclose(h_b, h_ref, atol=5e-2, rtol=5e-2)

    print("KERNEL_OK")
</pallas_src>

<mosaic_0001>
module attributes {stable_mosaic.version = 11 : i64} {
  func.func @_lstm_forecaster_kernel(%arg0: i32, %arg1: memref<8x16x4xf32, #tpu.memory_space<vmem>>, %arg2: memref<4x512xf32, #tpu.memory_space<vmem>>, %arg3: memref<2x1x512xf32, #tpu.memory_space<vmem>>, %arg4: memref<1x128xf32, #tpu.memory_space<vmem>>, %arg5: memref<1x1xf32, #tpu.memory_space<vmem>>, %arg6: memref<2x128x512xf32, #tpu.memory_space<any>>, %arg7: memref<1x128x512xf32, #tpu.memory_space<any>>, %arg8: memref<16x1xf32, #tpu.memory_space<vmem>>, %arg9: memref<2x16x128xf32, #tpu.memory_space<vmem>>, %arg10: memref<2x16x128xf32, #tpu.memory_space<vmem>>, %arg11: memref<8x16x512xf32, #tpu.memory_space<vmem>>, %arg12: memref<2x128x512xf32, #tpu.memory_space<vmem>>, %arg13: memref<2x128x512xf32, #tpu.memory_space<vmem>>, %arg14: memref<8x16x128xf32, #tpu.memory_space<vmem>>, %arg15: memref<2x2x!tpu.dma_semaphore, #tpu.memory_space<semaphore_mem>>) attributes {dimension_semantics = [#tpu.dimension_semantics<parallel>], iteration_bounds = array<i64: 1>, scalar_prefetch = 0 : i64, scratch_operands = 5 : i64, tpu.core_type = #tpu.core_type<tc>, window_params = [{transform_indices = @transform_0, window_bounds = array<i64: 8, 16, 4>}, {pipeline_mode = #tpu.pipeline_mode<synchronous>, transform_indices = @transform_1, window_bounds = array<i64: 4, 512>}, {pipeline_mode = #tpu.pipeline_mode<synchronous>, transform_indices = @transform_2, window_bounds = array<i64: 2, 1, 512>}, {pipeline_mode = #tpu.pipeline_mode<synchronous>, transform_indices = @transform_3, window_bounds = array<i64: 1, 128>}, {pipeline_mode = #tpu.pipeline_mode<synchronous>, transform_indices = @transform_4, window_bounds = array<i64: 1, 1>}, {}, {}, {transform_indices = @transform_7, window_bounds = array<i64: 16, 1>}, {transform_indices = @transform_8, window_bounds = array<i64: 2, 16, 128>}, {transform_indices = @transform_9, window_bounds = array<i64: 2, 16, 128>}]} {
    %c0_i32 = arith.constant 0 : i32
    %c0_i32_0 = arith.constant 0 : i32
    %c0_i32_1 = arith.constant 0 : i32
    %c0_i32_2 = arith.constant 0 : i32
    %c0_i32_3 = arith.constant 0 : i32
    %c0_i32_4 = arith.constant 0 : i32
    %0 = tpu.memref_slice %arg6[%c0_i32, %c0_i32_3, %c0_i32_4] : memref<2x128x512xf32, #tpu.memory_space<any>> -> memref<1x128x512xf32, #tpu.memory_space<any>>
    %1 = tpu.memref_squeeze %0 : memref<1x128x512xf32, #tpu.memory_space<any>> -> memref<128x512xf32, #tpu.memory_space<any>>
    %c0_i32_5 = arith.constant 0 : i32
    %c0_i32_6 = arith.constant 0 : i32
    %2 = tpu.memref_slice %arg12[%c0_i32_0, %c0_i32_5, %c0_i32_6] : memref<2x128x512xf32, #tpu.memory_space<vmem>> -> memref<1x128x512xf32, #tpu.memory_space<vmem>>
    %3 = tpu.memref_squeeze %2 : memref<1x128x512xf32, #tpu.memory_space<vmem>> -> memref<128x512xf32, #tpu.memory_space<vmem>>
    %4 = tpu.memref_slice %arg15[%c0_i32_1, %c0_i32_2] : memref<2x2x!tpu.dma_semaphore, #tpu.memory_space<semaphore_mem>> -> memref<1x1x!tpu.dma_semaphore, #tpu.memory_space<semaphore_mem>>
    %5 = tpu.memref_squeeze %4 : memref<1x1x!tpu.dma_semaphore, #tpu.memory_space<semaphore_mem>> -> memref<!tpu.dma_semaphore, #tpu.memory_space<semaphore_mem>>
    tpu.enqueue_dma source(%1 : memref<128x512xf32, #tpu.memory_space<any>>) target(%3 : memref<128x512xf32, #tpu.memory_space<vmem>>) target_semaphore(%5 : memref<!tpu.dma_semaphore, #tpu.memory_space<semaphore_mem>>)
    %c0_i32_7 = arith.constant 0 : i32
    %c0_i32_8 = arith.constant 0 : i32
    %c1_i32 = arith.constant 1 : i32
    %c0_i32_9 = arith.constant 0 : i32
    %c0_i32_10 = arith.constant 0 : i32
    %c0_i32_11 = arith.constant 0 : i32
    %6 = tpu.memref_slice %arg7[%c0_i32_7, %c0_i32_10, %c0_i32_11] : memref<1x128x512xf32, #tpu.memory_space<any>> -> memref<1x128x512xf32, #tpu.memory_space<any>>
    %7 = tpu.memref_squeeze %6 : memref<1x128x512xf32, #tpu.memory_space<any>> -> memref<128x512xf32, #tpu.memory_space<any>>
    %c0_i32_12 = arith.constant 0 : i32
    %c0_i32_13 = arith.constant 0 : i32
    %8 = tpu.memref_slice %arg13[%c0_i32_8, %c0_i32_12, %c0_i32_13] : memref<2x128x512xf32, #tpu.memory_space<vmem>> -> memref<1x128x512xf32, #tpu.memory_space<vmem>>
    %9 = tpu.memref_squeeze %8 : memref<1x128x512xf32, #tpu.memory_space<vmem>> -> memref<128x512xf32, #tpu.memory_space<vmem>>
    %10 = tpu.memref_slice %arg15[%c1_i32, %c0_i32_9] : memref<2x2x!tpu.dma_semaphore, #tpu.memory_space<semaphore_mem>> -> memref<1x1x!tpu.dma_semaphore, #tpu.memory_space<semaphore_mem>>
    %11 = tpu.memref_squeeze %10 : memref<1x1x!tpu.dma_semaphore, #tpu.memory_space<semaphore_mem>> -> memref<!tpu.dma_semaphore, #tpu.memory_space<semaphore_mem>>
    tpu.enqueue_dma source(%7 : memref<128x512xf32, #tpu.memory_space<any>>) target(%9 : memref<128x512xf32, #tpu.memory_space<vmem>>) target_semaphore(%11 : memref<!tpu.dma_semaphore, #tpu.memory_space<semaphore_mem>>)
    %c1_i32_14 = arith.constant 1 : i32
    %c1_i32_15 = arith.constant 1 : i32
    %c0_i32_16 = arith.constant 0 : i32
    %c1_i32_17 = arith.constant 1 : i32
    %c0_i32_18 = arith.constant 0 : i32
    %c0_i32_19 = arith.constant 0 : i32
    %12 = tpu.memref_slice %arg6[%c1_i32_14, %c0_i32_18, %c0_i32_19] : memref<2x128x512xf32, #tpu.memory_space<any>> -> memref<1x128x512xf32, #tpu.memory_space<any>>
    %13 = tpu.memref_squeeze %12 : memref<1x128x512xf32, #tpu.memory_space<any>> -> memref<128x512xf32, #tpu.memory_space<any>>
    %c0_i32_20 = arith.constant 0 : i32
    %c0_i32_21 = arith.constant 0 : i32
    %14 = tpu.memref_slice %arg12[%c1_i32_15, %c0_i32_20, %c0_i32_21] : memref<2x128x512xf32, #tpu.memory_space<vmem>> -> memref<1x128x512xf32, #tpu.memory_space<vmem>>
    %15 = tpu.memref_squeeze %14 : memref<1x128x512xf32, #tpu.memory_space<vmem>> -> memref<128x512xf32, #tpu.memory_space<vmem>>
    %16 = tpu.memref_slice %arg15[%c0_i32_16, %c1_i32_17] : memref<2x2x!tpu.dma_semaphore, #tpu.memory_space<semaphore_mem>> -> memref<1x1x!tpu.dma_semaphore, #tpu.memory_space<semaphore_mem>>
    %17 = tpu.memref_squeeze %16 : memref<1x1x!tpu.dma_semaphore, #tpu.memory_space<semaphore_mem>> -> memref<!tpu.dma_semaphore, #tpu.memory_space<semaphore_mem>>
    tpu.enqueue_dma source(%13 : memref<128x512xf32, #tpu.memory_space<any>>) target(%15 : memref<128x512xf32, #tpu.memory_space<vmem>>) target_semaphore(%17 : memref<!tpu.dma_semaphore, #tpu.memory_space<semaphore_mem>>)
    %c0_i32_22 = arith.constant 0 : i32
    %c0_i32_23 = arith.constant 0 : i32
    %c0_i32_24 = arith.constant 0 : i32
    %c0_i32_25 = arith.constant 0 : i32
    %c0_i32_26 = arith.constant 0 : i32
    %c0_i32_27 = arith.constant 0 : i32
    %18 = tpu.memref_slice %arg6[%c0_i32_22, %c0_i32_26, %c0_i32_27] : memref<2x128x512xf32, #tpu.memory_space<any>> -> memref<1x128x512xf32, #tpu.memory_space<any>>
    %19 = tpu.memref_squeeze %18 : memref<1x128x512xf32, #tpu.memory_space<any>> -> memref<128x512xf32, #tpu.memory_space<any>>
    %c0_i32_28 = arith.constant 0 : i32
    %c0_i32_29 = arith.constant 0 : i32
    %20 = tpu.memref_slice %arg12[%c0_i32_23, %c0_i32_28, %c0_i32_29] : memref<2x128x512xf32, #tpu.memory_space<vmem>> -> memref<1x128x512xf32, #tpu.memory_space<vmem>>
    %21 = tpu.memref_squeeze %20 : memref<1x128x512xf32, #tpu.memory_space<vmem>> -> memref<128x512xf32, #tpu.memory_space<vmem>>
    %22 = tpu.memref_slice %arg15[%c0_i32_24, %c0_i32_25] : memref<2x2x!tpu.dma_semaphore, #tpu.memory_space<semaphore_mem>> -> memref<1x1x!tpu.dma_semaphore, #tpu.memory_space<semaphore_mem>>
    %23 = tpu.memref_squeeze %22 : memref<1x1x!tpu.dma_semaphore, #tpu.memory_space<semaphore_mem>> -> memref<!tpu.dma_semaphore, #tpu.memory_space<semaphore_mem>>
    tpu.wait_dma2 semaphore(%23 : memref<!tpu.dma_semaphore, #tpu.memory_space<semaphore_mem>>) src(%19 : memref<128x512xf32, #tpu.memory_space<any>>) dst(%21 : memref<128x512xf32, #tpu.memory_space<vmem>>)
    %c0 = arith.constant 0 : index
    %c0_30 = arith.constant 0 : index
    %c0_31 = arith.constant 0 : index
    %24 = vector.load %arg3[%c0, %c0_30, %c0_31] : memref<2x1x512xf32, #tpu.memory_space<vmem>>, vector<1x1x512xf32>
    %25 = vector.shape_cast %24 : vector<1x1x512xf32> to vector<1x512xf32>
    %cst = arith.constant 0.000000e+00 : f32
    %26 = vector.broadcast %cst : f32 to vector<16x128xf32>
    %cst_32 = arith.constant 0.000000e+00 : f32
    %27 = vector.broadcast %cst_32 : f32 to vector<16x128xf32>
    %c0_33 = arith.constant 0 : index
    %c0_34 = arith.constant 0 : index
    %c0_35 = arith.constant 0 : index
    %28 = vector.load %arg1[%c0_33, %c0_34, %c0_35] : memref<8x16x4xf32, #tpu.memory_space<vmem>>, vector<8x16x4xf32>
    %29 = vector.shape_cast %28 : vector<8x16x4xf32> to vector<128x4xf32>
    %c0_36 = arith.constant 0 : index
    %c0_37 = arith.constant 0 : index
    %30 = vector.load %arg2[%c0_36, %c0_37] : memref<4x512xf32, #tpu.memory_space<vmem>>, vector<4x512xf32>
    %cst_38 = arith.constant dense<0.000000e+00> : vector<128x512xf32>
    %31 = tpu.matmul %29, %30, %cst_38 {dimension_numbers = #tpu.dot_dimension_numbers<[1], [0], [0], [1], [0, 0, 1, 1], [], []>} : vector<128x4xf32>, vector<4x512xf32>, vector<128x512xf32> -> vector<128x512xf32>
    %32 = vector.broadcast %25 : vector<1x512xf32> to vector<128x512xf32>
    %33 = arith.addf %31, %32 : vector<128x512xf32>
    %34 = vector.shape_cast %33 : vector<128x512xf32> to vector<8x16x512xf32>
    %c0_39 = arith.constant 0 : index
    %c0_40 = arith.constant 0 : index
    %c0_41 = arith.constant 0 : index
    %35 = vector.load %arg11[%c0_39, %c0_40, %c0_41] : memref<8x16x512xf32, #tpu.memory_space<vmem>>, vector<8x16x512xf32>
    tpu.vector_store %arg11[%c0_39, %c0_40, %c0_41], %34 {strides = array<i32>} : memref<8x16x512xf32, #tpu.memory_space<vmem>>, vector<8x16x512xf32>,
    %c0_i32_42 = arith.constant 0 : i32
    %c0_i32_43 = arith.constant 0 : i32
    %36 = arith.index_cast %c0_i32_43 : i32 to index
    %c0_44 = arith.constant 0 : index
    %c0_45 = arith.constant 0 : index
    %37 = vector.load %arg11[%36, %c0_44, %c0_45] : memref<8x16x512xf32, #tpu.memory_space<vmem>>, vector<1x16x512xf32>
    %38 = vector.shape_cast %37 : vector<1x16x512xf32> to vector<16x512xf32>
    %39 = arith.index_cast %c0_i32_42 : i32 to index
    %c0_46 = arith.constant 0 : index
    %c0_47 = arith.constant 0 : index
    %40 = vector.load %arg12[%39, %c0_46, %c0_47] : memref<2x128x512xf32, #tpu.memory_space<vmem>>, vector<1x128x512xf32>
    %41 = vector.shape_cast %40 : vector<1x128x512xf32> to vector<128x512xf32>
    %cst_48 = arith.constant dense<0.000000e+00> : vector<16x512xf32>
    %42 = tpu.matmul %26, %41, %cst_48 {dimension_numbers = #tpu.dot_dimension_numbers<[1], [0], [0], [1], [0, 0, 1, 1], [], []>} : vector<16x128xf32>, vector<128x512xf32>, vector<16x512xf32> -> vector<16x512xf32>
    %43 = arith.addf %38, %42 : vector<16x512xf32>
    %44 = vector.extract_strided_slice %43 {offsets = [0, 0], sizes = [16, 384], strides = [1, 1]} : vector<16x512xf32> to vector<16x384xf32>
    %45 = arith.negf %44 : vector<16x384xf32>
    %46 = math.exp %45 : vector<16x384xf32>
    %cst_49 = arith.constant 1.000000e+00 : f32
    %47 = vector.broadcast %cst_49 : f32 to vector<16x384xf32>
    %48 = arith.addf %47, %46 : vector<16x384xf32>
    %49 = arith.divf %47, %48 : vector<16x384xf32>
    %50 = vector.extract_strided_slice %49 {offsets = [0, 0], sizes = [16, 128], strides = [1, 1]} : vector<16x384xf32> to vector<16x128xf32>
    %51 = vector.extract_strided_slice %49 {offsets = [0, 128], sizes = [16, 128], strides = [1, 1]} : vector<16x384xf32> to vector<16x128xf32>
    %52 = vector.extract_strided_slice %49 {offsets = [0, 256], sizes = [16, 128], strides = [1, 1]} : vector<16x384xf32> to vector<16x128xf32>
    %53 = vector.extract_strided_slice %43 {offsets = [0, 384], sizes = [16, 128], strides = [1, 1]} : vector<16x512xf32> to vector<16x128xf32>
    %54 = math.tanh %53 : vector<16x128xf32>
    %55 = arith.mulf %51, %27 : vector<16x128xf32>
    %56 = arith.mulf %50, %54 : vector<16x128xf32>
    %57 = arith.addf %55, %56 : vector<16x128xf32>
    %58 = math.tanh %57 : vector<16x128xf32>
    %59 = arith.mulf %52, %58 : vector<16x128xf32>
    %c0_i32_50 = arith.constant 0 : i32
    %60 = arith.addi %c0_i32_50, %c0_i32_43 : i32
    %61 = arith.index_cast %60 : i32 to index
    %c0_51 = arith.constant 0 : index
    %c0_52 = arith.constant 0 : index
    %62 = vector.load %arg14[%61, %c0_51, %c0_52] : memref<8x16x128xf32, #tpu.memory_space<vmem>>, vector<1x16x128xf32>
    %63 = vector.shape_cast %62 : vector<1x16x128xf32> to vector<16x128xf32>
    %64 = vector.shape_cast %59 : vector<16x128xf32> to vector<1x16x128xf32>
    tpu.vector_store %arg14[%61, %c0_51, %c0_52], %64 {strides = array<i32>} : memref<8x16x128xf32, #tpu.memory_space<vmem>>, vector<1x16x128xf32>,
    %c1_i32_53 = arith.constant 1 : i32
    %65 = arith.index_cast %c1_i32_53 : i32 to index
    %c0_54 = arith.constant 0 : index
    %c0_55 = arith.constant 0 : index
    %66 = vector.load %arg11[%65, %c0_54, %c0_55] : memref<8x16x512xf32, #tpu.memory_space<vmem>>, vector<1x16x512xf32>
    %67 = vector.shape_cast %66 : vector<1x16x512xf32> to vector<16x512xf32>
    %68 = arith.index_cast %c0_i32_42 : i32 to index
    %c0_56 = arith.constant 0 : index
    %c0_57 = arith.constant 0 : index
    %69 = vector.load %arg12[%68, %c0_56, %c0_57] : memref<2x128x512xf32, #tpu.memory_space<vmem>>, vector<1x128x512xf32>
    %70 = vector.shape_cast %69 : vector<1x128x512xf32> to vector<128x512xf32>
    %cst_58 = arith.constant dense<0.000000e+00> : vector<16x512xf32>
    %71 = tpu.matmul %59, %70, %cst_58 {dimension_numbers = #tpu.dot_dimension_numbers<[1], [0], [0], [1], [0, 0, 1, 1], [], []>} : vector<16x128xf32>, vector<128x512xf32>, vector<16x512xf32> -> vector<16x512xf32>
    %72 = arith.addf %67, %71 : vector<16x512xf32>
    %73 = vector.extract_strided_slice %72 {offsets = [0, 0], sizes = [16, 384], strides = [1, 1]} : vector<16x512xf32> to vector<16x384xf32>
    %74 = arith.negf %73 : vector<16x384xf32>
    %75 = math.exp %74 : vector<16x384xf32>
    %cst_59 = arith.constant 1.000000e+00 : f32
    %76 = vector.broadcast %cst_59 : f32 to vector<16x384xf32>
    %77 = arith.addf %76, %75 : vector<16x384xf32>
    %78 = arith.divf %76, %77 : vector<16x384xf32>
    %79 = vector.extract_strided_slice %78 {offsets = [0, 0], sizes = [16, 128], strides = [1, 1]} : vector<16x384xf32> to vector<16x128xf32>
    %80 = vector.extract_strided_slice %78 {offsets = [0, 128], sizes = [16, 128], strides = [1, 1]} : vector<16x384xf32> to vector<16x128xf32>
    %81 = vector.extract_strided_slice %78 {offsets = [0, 256], sizes = [16, 128], strides = [1, 1]} : vector<16x384xf32> to vector<16x128xf32>
    %82 = vector.extract_strided_slice %72 {offsets = [0, 384], sizes = [16, 128], strides = [1, 1]} : vector<16x512xf32> to vector<16x128xf32>
    %83 = math.tanh %82 : vector<16x128xf32>
    %84 = arith.mulf %80, %57 : vector<16x128xf32>
    %85 = arith.mulf %79, %83 : vector<16x128xf32>
    %86 = arith.addf %84, %85 : vector<16x128xf32>
    %87 = math.tanh %86 : vector<16x128xf32>
    %88 = arith.mulf %81, %87 : vector<16x128xf32>
    %c0_i32_60 = arith.constant 0 : i32
    %89 = arith.addi %c0_i32_60, %c1_i32_53 : i32
    %90 = arith.index_cast %89 : i32 to index
    %c0_61 = arith.constant 0 : index
    %c0_62 = arith.constant 0 : index
    %91 = vector.load %arg14[%90, %c0_61, %c0_62] : memref<8x16x128xf32, #tpu.memory_space<vmem>>, vector<1x16x128xf32>
    %92 = vector.shape_cast %91 : vector<1x16x128xf32> to vector<16x128xf32>
    %93 = vector.shape_cast %88 : vector<16x128xf32> to vector<1x16x128xf32>
    tpu.vector_store %arg14[%90, %c0_61, %c0_62], %93 {strides = array<i32>} : memref<8x16x128xf32, #tpu.memory_space<vmem>>, vector<1x16x128xf32>,
    %c2_i32 = arith.constant 2 : i32
    %94 = arith.index_cast %c2_i32 : i32 to index
    %c0_63 = arith.constant 0 : index
    %c0_64 = arith.constant 0 : index
    %95 = vector.load %arg11[%94, %c0_63, %c0_64] : memref<8x16x512xf32, #tpu.memory_space<vmem>>, vector<1x16x512xf32>
    %96 = vector.shape_cast %95 : vector<1x16x512xf32> to vector<16x512xf32>
    %97 = arith.index_cast %c0_i32_42 : i32 to index
    %c0_65 = arith.constant 0 : index
    %c0_66 = arith.constant 0 : index
    %98 = vector.load %arg12[%97, %c0_65, %c0_66] : memref<2x128x512xf32, #tpu.memory_space<vmem>>, vector<1x128x512xf32>
    %99 = vector.shape_cast %98 : vector<1x128x512xf32> to vector<128x512xf32>
    %cst_67 = arith.constant dense<0.000000e+00> : vector<16x512xf32>
    %100 = tpu.matmul %88, %99, %cst_67 {dimension_numbers = #tpu.dot_dimension_numbers<[1], [0], [0], [1], [0, 0, 1, 1], [], []>} : vector<16x128xf32>, vector<128x512xf32>, vector<16x512xf32> -> vector<16x512xf32>
    %101 = arith.addf %96, %100 : vector<16x512xf32>
    %102 = vector.extract_strided_slice %101 {offsets = [0, 0], sizes = [16, 384], strides = [1, 1]} : vector<16x512xf32> to vector<16x384xf32>
    %103 = arith.negf %102 : vector<16x384xf32>
    %104 = math.exp %103 : vector<16x384xf32>
    %cst_68 = arith.constant 1.000000e+00 : f32
    %105 = vector.broadcast %cst_68 : f32 to vector<16x384xf32>
    %106 = arith.addf %105, %104 : vector<16x384xf32>
    %107 = arith.divf %105, %106 : vector<16x384xf32>
    %108 = vector.extract_strided_slice %107 {offsets = [0, 0], sizes = [16, 128], strides = [1, 1]} : vector<16x384xf32> to vector<16x128xf32>
    %109 = vector.extract_strided_slice %107 {offsets = [0, 128], sizes = [16, 128], strides = [1, 1]} : vector<16x384xf32> to vector<16x128xf32>
    %110 = vector.extract_strided_slice %107 {offsets = [0, 256], sizes = [16, 128], strides = [1, 1]} : vector<16x384xf32> to vector<16x128xf32>
    %111 = vector.extract_strided_slice %101 {offsets = [0, 384], sizes = [16, 128], strides = [1, 1]} : vector<16x512xf32> to vector<16x128xf32>
    %112 = math.tanh %111 : vector<16x128xf32>
    %113 = arith.mulf %109, %86 : vector<16x128xf32>
    %114 = arith.mulf %108, %112 : vector<16x128xf32>
    %115 = arith.addf %113, %114 : vector<16x128xf32>
    %116 = math.tanh %115 : vector<16x128xf32>
    %117 = arith.mulf %110, %116 : vector<16x128xf32>
    %c0_i32_69 = arith.constant 0 : i32
    %118 = arith.addi %c0_i32_69, %c2_i32 : i32
    %119 = arith.index_cast %118 : i32 to index
    %c0_70 = arith.constant 0 : index
    %c0_71 = arith.constant 0 : index
    %120 = vector.load %arg14[%119, %c0_70, %c0_71] : memref<8x16x128xf32, #tpu.memory_space<vmem>>, vector<1x16x128xf32>
    %121 = vector.shape_cast %120 : vector<1x16x128xf32> to vector<16x128xf32>
    %122 = vector.shape_cast %117 : vector<16x128xf32> to vector<1x16x128xf32>
    tpu.vector_store %arg14[%119, %c0_70, %c0_71], %122 {strides = array<i32>} : memref<8x16x128xf32, #tpu.memory_space<vmem>>, vector<1x16x128xf32>,
    %c3_i32 = arith.constant 3 : i32
    %123 = arith.index_cast %c3_i32 : i32 to index
    %c0_72 = arith.constant 0 : index
    %c0_73 = arith.constant 0 : index
    %124 = vector.load %arg11[%123, %c0_72, %c0_73] : memref<8x16x512xf32, #tpu.memory_space<vmem>>, vector<1x16x512xf32>
    %125 = vector.shape_cast %124 : vector<1x16x512xf32> to vector<16x512xf32>
    %126 = arith.index_cast %c0_i32_42 : i32 to index
    %c0_74 = arith.constant 0 : index
    %c0_75 = arith.constant 0 : index
    %127 = vector.load %arg12[%126, %c0_74, %c0_75] : memref<2x128x512xf32, #tpu.memory_space<vmem>>, vector<1x128x512xf32>
    %128 = vector.shape_cast %127 : vector<1x128x512xf32> to vector<128x512xf32>
    %cst_76 = arith.constant dense<0.000000e+00> : vector<16x512xf32>
    %129 = tpu.matmul %117, %128, %cst_76 {dimension_numbers = #tpu.dot_dimension_numbers<[1], [0], [0], [1], [0, 0, 1, 1], [], []>} : vector<16x128xf32>, vector<128x512xf32>, vector<16x512xf32> -> vector<16x512xf32>
    %130 = arith.addf %125, %129 : vector<16x512xf32>
    %131 = vector.extract_strided_slice %130 {offsets = [0, 0], sizes = [16, 384], strides = [1, 1]} : vector<16x512xf32> to vector<16x384xf32>
    %132 = arith.negf %131 : vector<16x384xf32>
    %133 = math.exp %132 : vector<16x384xf32>
    %cst_77 = arith.constant 1.000000e+00 : f32
    %134 = vector.broadcast %cst_77 : f32 to vector<16x384xf32>
    %135 = arith.addf %134, %133 : vector<16x384xf32>
    %136 = arith.divf %134, %135 : vector<16x384xf32>
    %137 = vector.extract_strided_slice %136 {offsets = [0, 0], sizes = [16, 128], strides = [1, 1]} : vector<16x384xf32> to vector<16x128xf32>
    %138 = vector.extract_strided_slice %136 {offsets = [0, 128], sizes = [16, 128], strides = [1, 1]} : vector<16x384xf32> to vector<16x128xf32>
    %139 = vector.extract_strided_slice %136 {offsets = [0, 256], sizes = [16, 128], strides = [1, 1]} : vector<16x384xf32> to vector<16x128xf32>
    %140 = vector.extract_strided_slice %130 {offsets = [0, 384], sizes = [16, 128], strides = [1, 1]} : vector<16x512xf32> to vector<16x128xf32>
    %141 = math.tanh %140 : vector<16x128xf32>
    %142 = arith.mulf %138, %115 : vector<16x128xf32>
    %143 = arith.mulf %137, %141 : vector<16x128xf32>
    %144 = arith.addf %142, %143 : vector<16x128xf32>
    %145 = math.tanh %144 : vector<16x128xf32>
    %146 = arith.mulf %139, %145 : vector<16x128xf32>
    %c0_i32_78 = arith.constant 0 : i32
    %147 = arith.addi %c0_i32_78, %c3_i32 : i32
    %148 = arith.index_cast %147 : i32 to index
    %c0_79 = arith.constant 0 : index
    %c0_80 = arith.constant 0 : index
    %149 = vector.load %arg14[%148, %c0_79, %c0_80] : memref<8x16x128xf32, #tpu.memory_space<vmem>>, vector<1x16x128xf32>
    %150 = vector.shape_cast %149 : vector<1x16x128xf32> to vector<16x128xf32>
    %151 = vector.shape_cast %146 : vector<16x128xf32> to vector<1x16x128xf32>
    tpu.vector_store %arg14[%148, %c0_79, %c0_80], %151 {strides = array<i32>} : memref<8x16x128xf32, #tpu.memory_space<vmem>>, vector<1x16x128xf32>,
    %c4_i32 = arith.constant 4 : i32
    %152 = arith.index_cast %c4_i32 : i32 to index
    %c0_81 = arith.constant 0 : index
    %c0_82 = arith.constant 0 : index
    %153 = vector.load %arg11[%152, %c0_81, %c0_82] : memref<8x16x512xf32, #tpu.memory_space<vmem>>, vector<1x16x512xf32>
    %154 = vector.shape_cast %153 : vector<1x16x512xf32> to vector<16x512xf32>
    %155 = arith.index_cast %c0_i32_42 : i32 to index
    %c0_83 = arith.constant 0 : index
    %c0_84 = arith.constant 0 : index
    %156 = vector.load %arg12[%155, %c0_83, %c0_84] : memref<2x128x512xf32, #tpu.memory_space<vmem>>, vector<1x128x512xf32>
    %157 = vector.shape_cast %156 : vector<1x128x512xf32> to vector<128x512xf32>
    %cst_85 = arith.constant dense<0.000000e+00> : vector<16x512xf32>
    %158 = tpu.matmul %146, %157, %cst_85 {dimension_numbers = #tpu.dot_dimension_numbers<[1], [0], [0], [1], [0, 0, 1, 1], [], []>} : vector<16x128xf32>, vector<128x512xf32>, vector<16x512xf32> -> vector<16x512xf32>
    %159 = arith.addf %154, %158 : vector<16x512xf32>
    %160 = vector.extract_strided_slice %159 {offsets = [0, 0], sizes = [16, 384], strides = [1, 1]} : vector<16x512xf32> to vector<16x384xf32>
    %161 = arith.negf %160 : vector<16x384xf32>
    %162 = math.exp %161 : vector<16x384xf32>
    %cst_86 = arith.constant 1.000000e+00 : f32
    %163 = vector.broadcast %cst_86 : f32 to vector<16x384xf32>
    %164 = arith.addf %163, %162 : vector<16x384xf32>
    %165 = arith.divf %163, %164 : vector<16x384xf32>
    %166 = vector.extract_strided_slice %165 {offsets = [0, 0], sizes = [16, 128], strides = [1, 1]} : vector<16x384xf32> to vector<16x128xf32>
    %167 = vector.extract_strided_slice %165 {offsets = [0, 128], sizes = [16, 128], strides = [1, 1]} : vector<16x384xf32> to vector<16x128xf32>
    %168 = vector.extract_strided_slice %165 {offsets = [0, 256], sizes = [16, 128], strides = [1, 1]} : vector<16x384xf32> to vector<16x128xf32>
    %169 = vector.extract_strided_slice %159 {offsets = [0, 384], sizes = [16, 128], strides = [1, 1]} : vector<16x512xf32> to vector<16x128xf32>
    %170 = math.tanh %169 : vector<16x128xf32>
    %171 = arith.mulf %167, %144 : vector<16x128xf32>
    %172 = arith.mulf %166, %170 : vector<16x128xf32>
    %173 = arith.addf %171, %172 : vector<16x128xf32>
    %174 = math.tanh %173 : vector<16x128xf32>
    %175 = arith.mulf %168, %174 : vector<16x128xf32>
    %c0_i32_87 = arith.constant 0 : i32
    %176 = arith.addi %c0_i32_87, %c4_i32 : i32
    %177 = arith.index_cast %176 : i32 to index
    %c0_88 = arith.constant 0 : index
    %c0_89 = arith.constant 0 : index
    %178 = vector.load %arg14[%177, %c0_88, %c0_89] : memref<8x16x128xf32, #tpu.memory_space<vmem>>, vector<1x16x128xf32>
    %179 = vector.shape_cast %178 : vector<1x16x128xf32> to vector<16x128xf32>
    %180 = vector.shape_cast %175 : vector<16x128xf32> to vector<1x16x128xf32>
    tpu.vector_store %arg14[%177, %c0_88, %c0_89], %180 {strides = array<i32>} : memref<8x16x128xf32, #tpu.memory_space<vmem>>, vector<1x16x128xf32>,
    %c5_i32 = arith.constant 5 : i32
    %181 = arith.index_cast %c5_i32 : i32 to index
    %c0_90 = arith.constant 0 : index
    %c0_91 = arith.constant 0 : index
    %182 = vector.load %arg11[%181, %c0_90, %c0_91] : memref<8x16x512xf32, #tpu.memory_space<vmem>>, vector<1x16x512xf32>
    %183 = vector.shape_cast %182 : vector<1x16x512xf32> to vector<16x512xf32>
    %184 = arith.index_cast %c0_i32_42 : i32 to index
    %c0_92 = arith.constant 0 : index
    %c0_93 = arith.constant 0 : index
    %185 = vector.load %arg12[%184, %c0_92, %c0_93] : memref<2x128x512xf32, #tpu.memory_space<vmem>>, vector<1x128x512xf32>
    %186 = vector.shape_cast %185 : vector<1x128x512xf32> to vector<128x512xf32>
    %cst_94 = arith.constant dense<0.000000e+00> : vector<16x512xf32>
    %187 = tpu.matmul %175, %186, %cst_94 {dimension_numbers = #tpu.dot_dimension_numbers<[1], [0], [0], [1], [0, 0, 1, 1], [], []>} : vector<16x128xf32>, vector<128x512xf32>, vector<16x512xf32> -> vector<16x512xf32>
    %188 = arith.addf %183, %187 : vector<16x512xf32>
    %189 = vector.extract_strided_slice %188 {offsets = [0, 0], sizes = [16, 384], strides = [1, 1]} : vector<16x512xf32> to vector<16x384xf32>
    %190 = arith.negf %189 : vector<16x384xf32>
    %191 = math.exp %190 : vector<16x384xf32>
    %cst_95 = arith.constant 1.000000e+00 : f32
    %192 = vector.broadcast %cst_95 : f32 to vector<16x384xf32>
    %193 = arith.addf %192, %191 : vector<16x384xf32>
    %194 = arith.divf %192, %193 : vector<16x384xf32>
    %195 = vector.extract_strided_slice %194 {offsets = [0, 0], sizes = [16, 128], strides = [1, 1]} : vector<16x384xf32> to vector<16x128xf32>
    %196 = vector.extract_strided_slice %194 {offsets = [0, 128], sizes = [16, 128], strides = [1, 1]} : vector<16x384xf32> to vector<16x128xf32>
    %197 = vector.extract_strided_slice %194 {offsets = [0, 256], sizes = [16, 128], strides = [1, 1]} : vector<16x384xf32> to vector<16x128xf32>
    %198 = vector.extract_strided_slice %188 {offsets = [0, 384], sizes = [16, 128], strides = [1, 1]} : vector<16x512xf32> to vector<16x128xf32>
    %199 = math.tanh %198 : vector<16x128xf32>
    %200 = arith.mulf %196, %173 : vector<16x128xf32>
    %201 = arith.mulf %195, %199 : vector<16x128xf32>
    %202 = arith.addf %200, %201 : vector<16x128xf32>
    %203 = math.tanh %202 : vector<16x128xf32>
    %204 = arith.mulf %197, %203 : vector<16x128xf32>
    %c0_i32_96 = arith.constant 0 : i32
    %205 = arith.addi %c0_i32_96, %c5_i32 : i32
    %206 = arith.index_cast %205 : i32 to index
    %c0_97 = arith.constant 0 : index
    %c0_98 = arith.constant 0 : index
    %207 = vector.load %arg14[%206, %c0_97, %c0_98] : memref<8x16x128xf32, #tpu.memory_space<vmem>>, vector<1x16x128xf32>
    %208 = vector.shape_cast %207 : vector<1x16x128xf32> to vector<16x128xf32>
    %209 = vector.shape_cast %204 : vector<16x128xf32> to vector<1x16x128xf32>
    tpu.vector_store %arg14[%206, %c0_97, %c0_98], %209 {strides = array<i32>} : memref<8x16x128xf32, #tpu.memory_space<vmem>>, vector<1x16x128xf32>,
    %c6_i32 = arith.constant 6 : i32
    %210 = arith.index_cast %c6_i32 : i32 to index
    %c0_99 = arith.constant 0 : index
    %c0_100 = arith.constant 0 : index
    %211 = vector.load %arg11[%210, %c0_99, %c0_100] : memref<8x16x512xf32, #tpu.memory_space<vmem>>, vector<1x16x512xf32>
    %212 = vector.shape_cast %211 : vector<1x16x512xf32> to vector<16x512xf32>
    %213 = arith.index_cast %c0_i32_42 : i32 to index
    %c0_101 = arith.constant 0 : index
    %c0_102 = arith.constant 0 : index
    %214 = vector.load %arg12[%213, %c0_101, %c0_102] : memref<2x128x512xf32, #tpu.memory_space<vmem>>, vector<1x128x512xf32>
    %215 = vector.shape_cast %214 : vector<1x128x512xf32> to vector<128x512xf32>
    %cst_103 = arith.constant dense<0.000000e+00> : vector<16x512xf32>
    %216 = tpu.matmul %204, %215, %cst_103 {dimension_numbers = #tpu.dot_dimension_numbers<[1], [0], [0], [1], [0, 0, 1, 1], [], []>} : vector<16x128xf32>, vector<128x512xf32>, vector<16x512xf32> -> vector<16x512xf32>
    %217 = arith.addf %212, %216 : vector<16x512xf32>
    %218 = vector.extract_strided_slice %217 {offsets = [0, 0], sizes = [16, 384], strides = [1, 1]} : vector<16x512xf32> to vector<16x384xf32>
    %219 = arith.negf %218 : vector<16x384xf32>
    %220 = math.exp %219 : vector<16x384xf32>
    %cst_104 = arith.constant 1.000000e+00 : f32
    %221 = vector.broadcast %cst_104 : f32 to vector<16x384xf32>
    %222 = arith.addf %221, %220 : vector<16x384xf32>
    %223 = arith.divf %221, %222 : vector<16x384xf32>
    %224 = vector.extract_strided_slice %223 {offsets = [0, 0], sizes = [16, 128], strides = [1, 1]} : vector<16x384xf32> to vector<16x128xf32>
    %225 = vector.extract_strided_slice %223 {offsets = [0, 128], sizes = [16, 128], strides = [1, 1]} : vector<16x384xf32> to vector<16x128xf32>
    %226 = vector.extract_strided_slice %223 {offsets = [0, 256], sizes = [16, 128], strides = [1, 1]} : vector<16x384xf32> to vector<16x128xf32>
    %227 = vector.extract_strided_slice %217 {offsets = [0, 384], sizes = [16, 128], strides = [1, 1]} : vector<16x512xf32> to vector<16x128xf32>
    %228 = math.tanh %227 : vector<16x128xf32>
    %229 = arith.mulf %225, %202 : vector<16x128xf32>
    %230 = arith.mulf %224, %228 : vector<16x128xf32>
    %231 = arith.addf %229, %230 : vector<16x128xf32>
    %232 = math.tanh %231 : vector<16x128xf32>
    %233 = arith.mulf %226, %232 : vector<16x128xf32>
    %c0_i32_105 = arith.constant 0 : i32
    %234 = arith.addi %c0_i32_105, %c6_i32 : i32
    %235 = arith.index_cast %234 : i32 to index
    %c0_106 = arith.constant 0 : index
    %c0_107 = arith.constant 0 : index
    %236 = vector.load %arg14[%235, %c0_106, %c0_107] : memref<8x16x128xf32, #tpu.memory_space<vmem>>, vector<1x16x128xf32>
    %237 = vector.shape_cast %236 : vector<1x16x128xf32> to vector<16x128xf32>
    %238 = vector.shape_cast %233 : vector<16x128xf32> to vector<1x16x128xf32>
    tpu.vector_store %arg14[%235, %c0_106, %c0_107], %238 {strides = array<i32>} : memref<8x16x128xf32, #tpu.memory_space<vmem>>, vector<1x16x128xf32>,
    %c7_i32 = arith.constant 7 : i32
    %239 = arith.index_cast %c7_i32 : i32 to index
    %c0_108 = arith.constant 0 : index
    %c0_109 = arith.constant 0 : index
    %240 = vector.load %arg11[%239, %c0_108, %c0_109] : memref<8x16x512xf32, #tpu.memory_space<vmem>>, vector<1x16x512xf32>
    %241 = vector.shape_cast %240 : vector<1x16x512xf32> to vector<16x512xf32>
    %242 = arith.index_cast %c0_i32_42 : i32 to index
    %c0_110 = arith.constant 0 : index
    %c0_111 = arith.constant 0 : index
    %243 = vector.load %arg12[%242, %c0_110, %c0_111] : memref<2x128x512xf32, #tpu.memory_space<vmem>>, vector<1x128x512xf32>
    %244 = vector.shape_cast %243 : vector<1x128x512xf32> to vector<128x512xf32>
    %cst_112 = arith.constant dense<0.000000e+00> : vector<16x512xf32>
    %245 = tpu.matmul %233, %244, %cst_112 {dimension_numbers = #tpu.dot_dimension_numbers<[1], [0], [0], [1], [0, 0, 1, 1], [], []>} : vector<16x128xf32>, vector<128x512xf32>, vector<16x512xf32> -> vector<16x512xf32>
    %246 = arith.addf %241, %245 : vector<16x512xf32>
    %247 = vector.extract_strided_slice %246 {offsets = [0, 0], sizes = [16, 384], strides = [1, 1]} : vector<16x512xf32> to vector<16x384xf32>
    %248 = arith.negf %247 : vector<16x384xf32>
    %249 = math.exp %248 : vector<16x384xf32>
    %cst_113 = arith.constant 1.000000e+00 : f32
    %250 = vector.broadcast %cst_113 : f32 to vector<16x384xf32>
    %251 = arith.addf %250, %249 : vector<16x384xf32>
    %252 = arith.divf %250, %251 : vector<16x384xf32>
    %253 = vector.extract_strided_slice %252 {offsets = [0, 0], sizes = [16, 128], strides = [1, 1]} : vector<16x384xf32> to vector<16x128xf32>
    %254 = vector.extract_strided_slice %252 {offsets = [0, 128], sizes = [16, 128], strides = [1, 1]} : vector<16x384xf32> to vector<16x128xf32>
    %255 = vector.extract_strided_slice %252 {offsets = [0, 256], sizes = [16, 128], strides = [1, 1]} : vector<16x384xf32> to vector<16x128xf32>
    %256 = vector.extract_strided_slice %246 {offsets = [0, 384], sizes = [16, 128], strides = [1, 1]} : vector<16x512xf32> to vector<16x128xf32>
    %257 = math.tanh %256 : vector<16x128xf32>
    %258 = arith.mulf %254, %231 : vector<16x128xf32>
    %259 = arith.mulf %253, %257 : vector<16x128xf32>
    %260 = arith.addf %258, %259 : vector<16x128xf32>
    %261 = math.tanh %260 : vector<16x128xf32>
    %262 = arith.mulf %255, %261 : vector<16x128xf32>
    %c0_i32_114 = arith.constant 0 : i32
    %263 = arith.addi %c0_i32_114, %c7_i32 : i32
    %264 = arith.index_cast %263 : i32 to index
    %c0_115 = arith.constant 0 : index
    %c0_116 = arith.constant 0 : index
    %265 = vector.load %arg14[%264, %c0_115, %c0_116] : memref<8x16x128xf32, #tpu.memory_space<vmem>>, vector<1x16x128xf32>
    %266 = vector.shape_cast %265 : vector<1x16x128xf32> to vector<16x128xf32>
    %267 = vector.shape_cast %262 : vector<16x128xf32> to vector<1x16x128xf32>
    tpu.vector_store %arg14[%264, %c0_115, %c0_116], %267 {strides = array<i32>} : memref<8x16x128xf32, #tpu.memory_space<vmem>>, vector<1x16x128xf32>,
    %c8_i32 = arith.constant 8 : i32
    %c0_117 = arith.constant 0 : index
    %c0_118 = arith.constant 0 : index
    %c0_119 = arith.constant 0 : index
    %268 = vector.load %arg9[%c0_117, %c0_118, %c0_119] : memref<2x16x128xf32, #tpu.memory_space<vmem>>, vector<1x16x128xf32>
    %269 = vector.shape_cast %268 : vector<1x16x128xf32> to vector<16x128xf32>
    %270 = vector.shape_cast %262 : vector<16x128xf32> to vector<1x16x128xf32>
    tpu.vector_store %arg9[%c0_117, %c0_118, %c0_119], %270 {strides = array<i32>} : memref<2x16x128xf32, #tpu.memory_space<vmem>>, vector<1x16x128xf32>,
    %c0_120 = arith.constant 0 : index
    %c0_121 = arith.constant 0 : index
    %c0_122 = arith.constant 0 : index
    %271 = vector.load %arg10[%c0_120, %c0_121, %c0_122] : memref<2x16x128xf32, #tpu.memory_space<vmem>>, vector<1x16x128xf32>
    %272 = vector.shape_cast %271 : vector<1x16x128xf32> to vector<16x128xf32>
    %273 = vector.shape_cast %260 : vector<16x128xf32> to vector<1x16x128xf32>
    tpu.vector_store %arg10[%c0_120, %c0_121, %c0_122], %273 {strides = array<i32>} : memref<2x16x128xf32, #tpu.memory_space<vmem>>, vector<1x16x128xf32>,
    %c0_i32_123 = arith.constant 0 : i32
    %c0_i32_124 = arith.constant 0 : i32
    %c1_i32_125 = arith.constant 1 : i32
    %c0_i32_126 = arith.constant 0 : i32
    %c0_i32_127 = arith.constant 0 : i32
    %c0_i32_128 = arith.constant 0 : i32
    %274 = tpu.memref_slice %arg7[%c0_i32_123, %c0_i32_127, %c0_i32_128] : memref<1x128x512xf32, #tpu.memory_space<any>> -> memref<1x128x512xf32, #tpu.memory_space<any>>
    %275 = tpu.memref_squeeze %274 : memref<1x128x512xf32, #tpu.memory_space<any>> -> memref<128x512xf32, #tpu.memory_space<any>>
    %c0_i32_129 = arith.constant 0 : i32
    %c0_i32_130 = arith.constant 0 : i32
    %276 = tpu.memref_slice %arg13[%c0_i32_124, %c0_i32_129, %c0_i32_130] : memref<2x128x512xf32, #tpu.memory_space<vmem>> -> memref<1x128x512xf32, #tpu.memory_space<vmem>>
    %277 = tpu.memref_squeeze %276 : memref<1x128x512xf32, #tpu.memory_space<vmem>> -> memref<128x512xf32, #tpu.memory_space<vmem>>
    %278 = tpu.memref_slice %arg15[%c1_i32_125, %c0_i32_126] : memref<2x2x!tpu.dma_semaphore, #tpu.memory_space<semaphore_mem>> -> memref<1x1x!tpu.dma_semaphore, #tpu.memory_space<semaphore_mem>>
    %279 = tpu.memref_squeeze %278 : memref<1x1x!tpu.dma_semaphore, #tpu.memory_space<semaphore_mem>> -> memref<!tpu.dma_semaphore, #tpu.memory_space<semaphore_mem>>
    tpu.wait_dma2 semaphore(%279 : memref<!tpu.dma_semaphore, #tpu.memory_space<semaphore_mem>>) src(%275 : memref<128x512xf32, #tpu.memory_space<any>>) dst(%277 : memref<128x512xf32, #tpu.memory_space<vmem>>)
    %c1_i32_131 = arith.constant 1 : i32
    %c1_i32_132 = arith.constant 1 : i32
    %c0_i32_133 = arith.constant 0 : i32
    %c1_i32_134 = arith.constant 1 : i32
    %c0_i32_135 = arith.constant 0 : i32
    %c0_i32_136 = arith.constant 0 : i32
    %280 = tpu.memref_slice %arg6[%c1_i32_131, %c0_i32_135, %c0_i32_136] : memref<2x128x512xf32, #tpu.memory_space<any>> -> memref<1x128x512xf32, #tpu.memory_space<any>>
    %281 = tpu.memref_squeeze %280 : memref<1x128x512xf32, #tpu.memory_space<any>> -> memref<128x512xf32, #tpu.memory_space<any>>
    %c0_i32_137 = arith.constant 0 : i32
    %c0_i32_138 = arith.constant 0 : i32
    %282 = tpu.memref_slice %arg12[%c1_i32_132, %c0_i32_137, %c0_i32_138] : memref<2x128x512xf32, #tpu.memory_space<vmem>> -> memref<1x128x512xf32, #tpu.memory_space<vmem>>
    %283 = tpu.memref_squeeze %282 : memref<1x128x512xf32, #tpu.memory_space<vmem>> -> memref<128x512xf32, #tpu.memory_space<vmem>>
    %284 = tpu.memref_slice %arg15[%c0_i32_133, %c1_i32_134] : memref<2x2x!tpu.dma_semaphore, #tpu.memory_space<semaphore_mem>> -> memref<1x1x!tpu.dma_semaphore, #tpu.memory_space<semaphore_mem>>
    %285 = tpu.memref_squeeze %284 : memref<1x1x!tpu.dma_semaphore, #tpu.memory_space<semaphore_mem>> -> memref<!tpu.dma_semaphore, #tpu.memory_space<semaphore_mem>>
    tpu.wait_dma2 semaphore(%285 : memref<!tpu.dma_semaphore, #tpu.memory_space<semaphore_mem>>) src(%281 : memref<128x512xf32, #tpu.memory_space<any>>) dst(%283 : memref<128x512xf32, #tpu.memory_space<vmem>>)
    %c1 = arith.constant 1 : index
    %c0_139 = arith.constant 0 : index
    %c0_140 = arith.constant 0 : index
    %286 = vector.load %arg3[%c1, %c0_139, %c0_140] : memref<2x1x512xf32, #tpu.memory_space<vmem>>, vector<1x1x512xf32>
    %287 = vector.shape_cast %286 : vector<1x1x512xf32> to vector<1x512xf32>
    %cst_141 = arith.constant 0.000000e+00 : f32
    %288 = vector.broadcast %cst_141 : f32 to vector<16x128xf32>
    %cst_142 = arith.constant 0.000000e+00 : f32
    %289 = vector.broadcast %cst_142 : f32 to vector<16x128xf32>
    %c0_143 = arith.constant 0 : index
    %c0_144 = arith.constant 0 : index
    %c0_145 = arith.constant 0 : index
    %290 = vector.load %arg14[%c0_143, %c0_144, %c0_145] : memref<8x16x128xf32, #tpu.memory_space<vmem>>, vector<8x16x128xf32>
    %291 = vector.shape_cast %290 : vector<8x16x128xf32> to vector<128x128xf32>
    %c0_146 = arith.constant 0 : index
    %c0_147 = arith.constant 0 : index
    %c0_148 = arith.constant 0 : index
    %292 = vector.load %arg13[%c0_146, %c0_147, %c0_148] : memref<2x128x512xf32, #tpu.memory_space<vmem>>, vector<1x128x512xf32>
    %293 = vector.shape_cast %292 : vector<1x128x512xf32> to vector<128x512xf32>
    %cst_149 = arith.constant dense<0.000000e+00> : vector<128x512xf32>
    %294 = tpu.matmul %291, %293, %cst_149 {dimension_numbers = #tpu.dot_dimension_numbers<[1], [0], [0], [1], [0, 0, 1, 1], [], []>} : vector<128x128xf32>, vector<128x512xf32>, vector<128x512xf32> -> vector<128x512xf32>
    %295 = vector.broadcast %287 : vector<1x512xf32> to vector<128x512xf32>
    %296 = arith.addf %294, %295 : vector<128x512xf32>
    %297 = vector.shape_cast %296 : vector<128x512xf32> to vector<8x16x512xf32>
    %c0_150 = arith.constant 0 : index
    %c0_151 = arith.constant 0 : index
    %c0_152 = arith.constant 0 : index
    %298 = vector.load %arg11[%c0_150, %c0_151, %c0_152] : memref<8x16x512xf32, #tpu.memory_space<vmem>>, vector<8x16x512xf32>
    tpu.vector_store %arg11[%c0_150, %c0_151, %c0_152], %297 {strides = array<i32>} : memref<8x16x512xf32, #tpu.memory_space<vmem>>, vector<8x16x512xf32>,
    %c1_i32_153 = arith.constant 1 : i32
    %c0_i32_154 = arith.constant 0 : i32
    %299 = arith.index_cast %c0_i32_154 : i32 to index
    %c0_155 = arith.constant 0 : index
    %c0_156 = arith.constant 0 : index
    %300 = vector.load %arg11[%299, %c0_155, %c0_156] : memref<8x16x512xf32, #tpu.memory_space<vmem>>, vector<1x16x512xf32>
    %301 = vector.shape_cast %300 : vector<1x16x512xf32> to vector<16x512xf32>
    %302 = arith.index_cast %c1_i32_153 : i32 to index
    %c0_157 = arith.constant 0 : index
    %c0_158 = arith.constant 0 : index
    %303 = vector.load %arg12[%302, %c0_157, %c0_158] : memref<2x128x512xf32, #tpu.memory_space<vmem>>, vector<1x128x512xf32>
    %304 = vector.shape_cast %303 : vector<1x128x512xf32> to vector<128x512xf32>
    %cst_159 = arith.constant dense<0.000000e+00> : vector<16x512xf32>
    %305 = tpu.matmul %288, %304, %cst_159 {dimension_numbers = #tpu.dot_dimension_numbers<[1], [0], [0], [1], [0, 0, 1, 1], [], []>} : vector<16x128xf32>, vector<128x512xf32>, vector<16x512xf32> -> vector<16x512xf32>
    %306 = arith.addf %301, %305 : vector<16x512xf32>
    %307 = vector.extract_strided_slice %306 {offsets = [0, 0], sizes = [16, 384], strides = [1, 1]} : vector<16x512xf32> to vector<16x384xf32>
    %308 = arith.negf %307 : vector<16x384xf32>
    %309 = math.exp %308 : vector<16x384xf32>
    %cst_160 = arith.constant 1.000000e+00 : f32
    %310 = vector.broadcast %cst_160 : f32 to vector<16x384xf32>
    %311 = arith.addf %310, %309 : vector<16x384xf32>
    %312 = arith.divf %310, %311 : vector<16x384xf32>
    %313 = vector.extract_strided_slice %312 {offsets = [0, 0], sizes = [16, 128], strides = [1, 1]} : vector<16x384xf32> to vector<16x128xf32>
    %314 = vector.extract_strided_slice %312 {offsets = [0, 128], sizes = [16, 128], strides = [1, 1]} : vector<16x384xf32> to vector<16x128xf32>
    %315 = vector.extract_strided_slice %312 {offsets = [0, 256], sizes = [16, 128], strides = [1, 1]} : vector<16x384xf32> to vector<16x128xf32>
    %316 = vector.extract_strided_slice %306 {offsets = [0, 384], sizes = [16, 128], strides = [1, 1]} : vector<16x512xf32> to vector<16x128xf32>
    %317 = math.tanh %316 : vector<16x128xf32>
    %318 = arith.mulf %314, %289 : vector<16x128xf32>
    %319 = arith.mulf %313, %317 : vector<16x128xf32>
    %320 = arith.addf %318, %319 : vector<16x128xf32>
    %321 = math.tanh %320 : vector<16x128xf32>
    %322 = arith.mulf %315, %321 : vector<16x128xf32>
    %c1_i32_161 = arith.constant 1 : i32
    %323 = arith.index_cast %c1_i32_161 : i32 to index
    %c0_162 = arith.constant 0 : index
    %c0_163 = arith.constant 0 : index
    %324 = vector.load %arg11[%323, %c0_162, %c0_163] : memref<8x16x512xf32, #tpu.memory_space<vmem>>, vector<1x16x512xf32>
    %325 = vector.shape_cast %324 : vector<1x16x512xf32> to vector<16x512xf32>
    %326 = arith.index_cast %c1_i32_153 : i32 to index
    %c0_164 = arith.constant 0 : index
    %c0_165 = arith.constant 0 : index
    %327 = vector.load %arg12[%326, %c0_164, %c0_165] : memref<2x128x512xf32, #tpu.memory_space<vmem>>, vector<1x128x512xf32>
    %328 = vector.shape_cast %327 : vector<1x128x512xf32> to vector<128x512xf32>
    %cst_166 = arith.constant dense<0.000000e+00> : vector<16x512xf32>
    %329 = tpu.matmul %322, %328, %cst_166 {dimension_numbers = #tpu.dot_dimension_numbers<[1], [0], [0], [1], [0, 0, 1, 1], [], []>} : vector<16x128xf32>, vector<128x512xf32>, vector<16x512xf32> -> vector<16x512xf32>
    %330 = arith.addf %325, %329 : vector<16x512xf32>
    %331 = vector.extract_strided_slice %330 {offsets = [0, 0], sizes = [16, 384], strides = [1, 1]} : vector<16x512xf32> to vector<16x384xf32>
    %332 = arith.negf %331 : vector<16x384xf32>
    %333 = math.exp %332 : vector<16x384xf32>
    %cst_167 = arith.constant 1.000000e+00 : f32
    %334 = vector.broadcast %cst_167 : f32 to vector<16x384xf32>
    %335 = arith.addf %334, %333 : vector<16x384xf32>
    %336 = arith.divf %334, %335 : vector<16x384xf32>
    %337 = vector.extract_strided_slice %336 {offsets = [0, 0], sizes = [16, 128], strides = [1, 1]} : vector<16x384xf32> to vector<16x128xf32>
    %338 = vector.extract_strided_slice %336 {offsets = [0, 128], sizes = [16, 128], strides = [1, 1]} : vector<16x384xf32> to vector<16x128xf32>
    %339 = vector.extract_strided_slice %336 {offsets = [0, 256], sizes = [16, 128], strides = [1, 1]} : vector<16x384xf32> to vector<16x128xf32>
    %340 = vector.extract_strided_slice %330 {offsets = [0, 384], sizes = [16, 128], strides = [1, 1]} : vector<16x512xf32> to vector<16x128xf32>
    %341 = math.tanh %340 : vector<16x128xf32>
    %342 = arith.mulf %338, %320 : vector<16x128xf32>
    %343 = arith.mulf %337, %341 : vector<16x128xf32>
    %344 = arith.addf %342, %343 : vector<16x128xf32>
    %345 = math.tanh %344 : vector<16x128xf32>
    %346 = arith.mulf %339, %345 : vector<16x128xf32>
    %c2_i32_168 = arith.constant 2 : i32
    %347 = arith.index_cast %c2_i32_168 : i32 to index
    %c0_169 = arith.constant 0 : index
    %c0_170 = arith.constant 0 : index
    %348 = vector.load %arg11[%347, %c0_169, %c0_170] : memref<8x16x512xf32, #tpu.memory_space<vmem>>, vector<1x16x512xf32>
    %349 = vector.shape_cast %348 : vector<1x16x512xf32> to vector<16x512xf32>
    %350 = arith.index_cast %c1_i32_153 : i32 to index
    %c0_171 = arith.constant 0 : index
    %c0_172 = arith.constant 0 : index
    %351 = vector.load %arg12[%350, %c0_171, %c0_172] : memref<2x128x512xf32, #tpu.memory_space<vmem>>, vector<1x128x512xf32>
    %352 = vector.shape_cast %351 : vector<1x128x512xf32> to vector<128x512xf32>
    %cst_173 = arith.constant dense<0.000000e+00> : vector<16x512xf32>
    %353 = tpu.matmul %346, %352, %cst_173 {dimension_numbers = #tpu.dot_dimension_numbers<[1], [0], [0], [1], [0, 0, 1, 1], [], []>} : vector<16x128xf32>, vector<128x512xf32>, vector<16x512xf32> -> vector<16x512xf32>
    %354 = arith.addf %349, %353 : vector<16x512xf32>
    %355 = vector.extract_strided_slice %354 {offsets = [0, 0], sizes = [16, 384], strides = [1, 1]} : vector<16x512xf32> to vector<16x384xf32>
    %356 = arith.negf %355 : vector<16x384xf32>
    %357 = math.exp %356 : vector<16x384xf32>
    %cst_174 = arith.constant 1.000000e+00 : f32
    %358 = vector.broadcast %cst_174 : f32 to vector<16x384xf32>
    %359 = arith.addf %358, %357 : vector<16x384xf32>
    %360 = arith.divf %358, %359 : vector<16x384xf32>
    %361 = vector.extract_strided_slice %360 {offsets = [0, 0], sizes = [16, 128], strides = [1, 1]} : vector<16x384xf32> to vector<16x128xf32>
    %362 = vector.extract_strided_slice %360 {offsets = [0, 128], sizes = [16, 128], strides = [1, 1]} : vector<16x384xf32> to vector<16x128xf32>
    %363 = vector.extract_strided_slice %360 {offsets = [0, 256], sizes = [16, 128], strides = [1, 1]} : vector<16x384xf32> to vector<16x128xf32>
    %364 = vector.extract_strided_slice %354 {offsets = [0, 384], sizes = [16, 128], strides = [1, 1]} : vector<16x512xf32> to vector<16x128xf32>
    %365 = math.tanh %364 : vector<16x128xf32>
    %366 = arith.mulf %362, %344 : vector<16x128xf32>
    %367 = arith.mulf %361, %365 : vector<16x128xf32>
    %368 = arith.addf %366, %367 : vector<16x128xf32>
    %369 = math.tanh %368 : vector<16x128xf32>
    %370 = arith.mulf %363, %369 : vector<16x128xf32>
    %c3_i32_175 = arith.constant 3 : i32
    %371 = arith.index_cast %c3_i32_175 : i32 to index
    %c0_176 = arith.constant 0 : index
    %c0_177 = arith.constant 0 : index
    %372 = vector.load %arg11[%371, %c0_176, %c0_177] : memref<8x16x512xf32, #tpu.memory_space<vmem>>, vector<1x16x512xf32>
    %373 = vector.shape_cast %372 : vector<1x16x512xf32> to vector<16x512xf32>
    %374 = arith.index_cast %c1_i32_153 : i32 to index
    %c0_178 = arith.constant 0 : index
    %c0_179 = arith.constant 0 : index
    %375 = vector.load %arg12[%374, %c0_178, %c0_179] : memref<2x128x512xf32, #tpu.memory_space<vmem>>, vector<1x128x512xf32>
    %376 = vector.shape_cast %375 : vector<1x128x512xf32> to vector<128x512xf32>
    %cst_180 = arith.constant dense<0.000000e+00> : vector<16x512xf32>
    %377 = tpu.matmul %370, %376, %cst_180 {dimension_numbers = #tpu.dot_dimension_numbers<[1], [0], [0], [1], [0, 0, 1, 1], [], []>} : vector<16x128xf32>, vector<128x512xf32>, vector<16x512xf32> -> vector<16x512xf32>
    %378 = arith.addf %373, %377 : vector<16x512xf32>
    %379 = vector.extract_strided_slice %378 {offsets = [0, 0], sizes = [16, 384], strides = [1, 1]} : vector<16x512xf32> to vector<16x384xf32>
    %380 = arith.negf %379 : vector<16x384xf32>
    %381 = math.exp %380 : vector<16x384xf32>
    %cst_181 = arith.constant 1.000000e+00 : f32
    %382 = vector.broadcast %cst_181 : f32 to vector<16x384xf32>
    %383 = arith.addf %382, %381 : vector<16x384xf32>
    %384 = arith.divf %382, %383 : vector<16x384xf32>
    %385 = vector.extract_strided_slice %384 {offsets = [0, 0], sizes = [16, 128], strides = [1, 1]} : vector<16x384xf32> to vector<16x128xf32>
    %386 = vector.extract_strided_slice %384 {offsets = [0, 128], sizes = [16, 128], strides = [1, 1]} : vector<16x384xf32> to vector<16x128xf32>
    %387 = vector.extract_strided_slice %384 {offsets = [0, 256], sizes = [16, 128], strides = [1, 1]} : vector<16x384xf32> to vector<16x128xf32>
    %388 = vector.extract_strided_slice %378 {offsets = [0, 384], sizes = [16, 128], strides = [1, 1]} : vector<16x512xf32> to vector<16x128xf32>
    %389 = math.tanh %388 : vector<16x128xf32>
    %390 = arith.mulf %386, %368 : vector<16x128xf32>
    %391 = arith.mulf %385, %389 : vector<16x128xf32>
    %392 = arith.addf %390, %391 : vector<16x128xf32>
    %393 = math.tanh %392 : vector<16x128xf32>
    %394 = arith.mulf %387, %393 : vector<16x128xf32>
    %c4_i32_182 = arith.constant 4 : i32
    %395 = arith.index_cast %c4_i32_182 : i32 to index
    %c0_183 = arith.constant 0 : index
    %c0_184 = arith.constant 0 : index
    %396 = vector.load %arg11[%395, %c0_183, %c0_184] : memref<8x16x512xf32, #tpu.memory_space<vmem>>, vector<1x16x512xf32>
    %397 = vector.shape_cast %396 : vector<1x16x512xf32> to vector<16x512xf32>
    %398 = arith.index_cast %c1_i32_153 : i32 to index
    %c0_185 = arith.constant 0 : index
    %c0_186 = arith.constant 0 : index
    %399 = vector.load %arg12[%398, %c0_185, %c0_186] : memref<2x128x512xf32, #tpu.memory_space<vmem>>, vector<1x128x512xf32>
    %400 = vector.shape_cast %399 : vector<1x128x512xf32> to vector<128x512xf32>
    %cst_187 = arith.constant dense<0.000000e+00> : vector<16x512xf32>
    %401 = tpu.matmul %394, %400, %cst_187 {dimension_numbers = #tpu.dot_dimension_numbers<[1], [0], [0], [1], [0, 0, 1, 1], [], []>} : vector<16x128xf32>, vector<128x512xf32>, vector<16x512xf32> -> vector<16x512xf32>
    %402 = arith.addf %397, %401 : vector<16x512xf32>
    %403 = vector.extract_strided_slice %402 {offsets = [0, 0], sizes = [16, 384], strides = [1, 1]} : vector<16x512xf32> to vector<16x384xf32>
    %404 = arith.negf %403 : vector<16x384xf32>
    %405 = math.exp %404 : vector<16x384xf32>
    %cst_188 = arith.constant 1.000000e+00 : f32
    %406 = vector.broadcast %cst_188 : f32 to vector<16x384xf32>
    %407 = arith.addf %406, %405 : vector<16x384xf32>
    %408 = arith.divf %406, %407 : vector<16x384xf32>
    %409 = vector.extract_strided_slice %408 {offsets = [0, 0], sizes = [16, 128], strides = [1, 1]} : vector<16x384xf32> to vector<16x128xf32>
    %410 = vector.extract_strided_slice %408 {offsets = [0, 128], sizes = [16, 128], strides = [1, 1]} : vector<16x384xf32> to vector<16x128xf32>
    %411 = vector.extract_strided_slice %408 {offsets = [0, 256], sizes = [16, 128], strides = [1, 1]} : vector<16x384xf32> to vector<16x128xf32>
    %412 = vector.extract_strided_slice %402 {offsets = [0, 384], sizes = [16, 128], strides = [1, 1]} : vector<16x512xf32> to vector<16x128xf32>
    %413 = math.tanh %412 : vector<16x128xf32>
    %414 = arith.mulf %410, %392 : vector<16x128xf32>
    %415 = arith.mulf %409, %413 : vector<16x128xf32>
    %416 = arith.addf %414, %415 : vector<16x128xf32>
    %417 = math.tanh %416 : vector<16x128xf32>
    %418 = arith.mulf %411, %417 : vector<16x128xf32>
    %c5_i32_189 = arith.constant 5 : i32
    %419 = arith.index_cast %c5_i32_189 : i32 to index
    %c0_190 = arith.constant 0 : index
    %c0_191 = arith.constant 0 : index
    %420 = vector.load %arg11[%419, %c0_190, %c0_191] : memref<8x16x512xf32, #tpu.memory_space<vmem>>, vector<1x16x512xf32>
    %421 = vector.shape_cast %420 : vector<1x16x512xf32> to vector<16x512xf32>
    %422 = arith.index_cast %c1_i32_153 : i32 to index
    %c0_192 = arith.constant 0 : index
    %c0_193 = arith.constant 0 : index
    %423 = vector.load %arg12[%422, %c0_192, %c0_193] : memref<2x128x512xf32, #tpu.memory_space<vmem>>, vector<1x128x512xf32>
    %424 = vector.shape_cast %423 : vector<1x128x512xf32> to vector<128x512xf32>
    %cst_194 = arith.constant dense<0.000000e+00> : vector<16x512xf32>
    %425 = tpu.matmul %418, %424, %cst_194 {dimension_numbers = #tpu.dot_dimension_numbers<[1], [0], [0], [1], [0, 0, 1, 1], [], []>} : vector<16x128xf32>, vector<128x512xf32>, vector<16x512xf32> -> vector<16x512xf32>
    %426 = arith.addf %421, %425 : vector<16x512xf32>
    %427 = vector.extract_strided_slice %426 {offsets = [0, 0], sizes = [16, 384], strides = [1, 1]} : vector<16x512xf32> to vector<16x384xf32>
    %428 = arith.negf %427 : vector<16x384xf32>
    %429 = math.exp %428 : vector<16x384xf32>
    %cst_195 = arith.constant 1.000000e+00 : f32
    %430 = vector.broadcast %cst_195 : f32 to vector<16x384xf32>
    %431 = arith.addf %430, %429 : vector<16x384xf32>
    %432 = arith.divf %430, %431 : vector<16x384xf32>
    %433 = vector.extract_strided_slice %432 {offsets = [0, 0], sizes = [16, 128], strides = [1, 1]} : vector<16x384xf32> to vector<16x128xf32>
    %434 = vector.extract_strided_slice %432 {offsets = [0, 128], sizes = [16, 128], strides = [1, 1]} : vector<16x384xf32> to vector<16x128xf32>
    %435 = vector.extract_strided_slice %432 {offsets = [0, 256], sizes = [16, 128], strides = [1, 1]} : vector<16x384xf32> to vector<16x128xf32>
    %436 = vector.extract_strided_slice %426 {offsets = [0, 384], sizes = [16, 128], strides = [1, 1]} : vector<16x512xf32> to vector<16x128xf32>
    %437 = math.tanh %436 : vector<16x128xf32>
    %438 = arith.mulf %434, %416 : vector<16x128xf32>
    %439 = arith.mulf %433, %437 : vector<16x128xf32>
    %440 = arith.addf %438, %439 : vector<16x128xf32>
    %441 = math.tanh %440 : vector<16x128xf32>
    %442 = arith.mulf %435, %441 : vector<16x128xf32>
    %c6_i32_196 = arith.constant 6 : i32
    %443 = arith.index_cast %c6_i32_196 : i32 to index
    %c0_197 = arith.constant 0 : index
    %c0_198 = arith.constant 0 : index
    %444 = vector.load %arg11[%443, %c0_197, %c0_198] : memref<8x16x512xf32, #tpu.memory_space<vmem>>, vector<1x16x512xf32>
    %445 = vector.shape_cast %444 : vector<1x16x512xf32> to vector<16x512xf32>
    %446 = arith.index_cast %c1_i32_153 : i32 to index
    %c0_199 = arith.constant 0 : index
    %c0_200 = arith.constant 0 : index
    %447 = vector.load %arg12[%446, %c0_199, %c0_200] : memref<2x128x512xf32, #tpu.memory_space<vmem>>, vector<1x128x512xf32>
    %448 = vector.shape_cast %447 : vector<1x128x512xf32> to vector<128x512xf32>
    %cst_201 = arith.constant dense<0.000000e+00> : vector<16x512xf32>
    %449 = tpu.matmul %442, %448, %cst_201 {dimension_numbers = #tpu.dot_dimension_numbers<[1], [0], [0], [1], [0, 0, 1, 1], [], []>} : vector<16x128xf32>, vector<128x512xf32>, vector<16x512xf32> -> vector<16x512xf32>
    %450 = arith.addf %445, %449 : vector<16x512xf32>
    %451 = vector.extract_strided_slice %450 {offsets = [0, 0], sizes = [16, 384], strides = [1, 1]} : vector<16x512xf32> to vector<16x384xf32>
    %452 = arith.negf %451 : vector<16x384xf32>
    %453 = math.exp %452 : vector<16x384xf32>
    %cst_202 = arith.constant 1.000000e+00 : f32
    %454 = vector.broadcast %cst_202 : f32 to vector<16x384xf32>
    %455 = arith.addf %454, %453 : vector<16x384xf32>
    %456 = arith.divf %454, %455 : vector<16x384xf32>
    %457 = vector.extract_strided_slice %456 {offsets = [0, 0], sizes = [16, 128], strides = [1, 1]} : vector<16x384xf32> to vector<16x128xf32>
    %458 = vector.extract_strided_slice %456 {offsets = [0, 128], sizes = [16, 128], strides = [1, 1]} : vector<16x384xf32> to vector<16x128xf32>
    %459 = vector.extract_strided_slice %456 {offsets = [0, 256], sizes = [16, 128], strides = [1, 1]} : vector<16x384xf32> to vector<16x128xf32>
    %460 = vector.extract_strided_slice %450 {offsets = [0, 384], sizes = [16, 128], strides = [1, 1]} : vector<16x512xf32> to vector<16x128xf32>
    %461 = math.tanh %460 : vector<16x128xf32>
    %462 = arith.mulf %458, %440 : vector<16x128xf32>
    %463 = arith.mulf %457, %461 : vector<16x128xf32>
    %464 = arith.addf %462, %463 : vector<16x128xf32>
    %465 = math.tanh %464 : vector<16x128xf32>
    %466 = arith.mulf %459, %465 : vector<16x128xf32>
    %c7_i32_203 = arith.constant 7 : i32
    %467 = arith.index_cast %c7_i32_203 : i32 to index
    %c0_204 = arith.constant 0 : index
    %c0_205 = arith.constant 0 : index
    %468 = vector.load %arg11[%467, %c0_204, %c0_205] : memref<8x16x512xf32, #tpu.memory_space<vmem>>, vector<1x16x512xf32>
    %469 = vector.shape_cast %468 : vector<1x16x512xf32> to vector<16x512xf32>
    %470 = arith.index_cast %c1_i32_153 : i32 to index
    %c0_206 = arith.constant 0 : index
    %c0_207 = arith.constant 0 : index
    %471 = vector.load %arg12[%470, %c0_206, %c0_207] : memref<2x128x512xf32, #tpu.memory_space<vmem>>, vector<1x128x512xf32>
    %472 = vector.shape_cast %471 : vector<1x128x512xf32> to vector<128x512xf32>
    %cst_208 = arith.constant dense<0.000000e+00> : vector<16x512xf32>
    %473 = tpu.matmul %466, %472, %cst_208 {dimension_numbers = #tpu.dot_dimension_numbers<[1], [0], [0], [1], [0, 0, 1, 1], [], []>} : vector<16x128xf32>, vector<128x512xf32>, vector<16x512xf32> -> vector<16x512xf32>
    %474 = arith.addf %469, %473 : vector<16x512xf32>
    %475 = vector.extract_strided_slice %474 {offsets = [0, 0], sizes = [16, 384], strides = [1, 1]} : vector<16x512xf32> to vector<16x384xf32>
    %476 = arith.negf %475 : vector<16x384xf32>
    %477 = math.exp %476 : vector<16x384xf32>
    %cst_209 = arith.constant 1.000000e+00 : f32
    %478 = vector.broadcast %cst_209 : f32 to vector<16x384xf32>
    %479 = arith.addf %478, %477 : vector<16x384xf32>
    %480 = arith.divf %478, %479 : vector<16x384xf32>
    %481 = vector.extract_strided_slice %480 {offsets = [0, 0], sizes = [16, 128], strides = [1, 1]} : vector<16x384xf32> to vector<16x128xf32>
    %482 = vector.extract_strided_slice %480 {offsets = [0, 128], sizes = [16, 128], strides = [1, 1]} : vector<16x384xf32> to vector<16x128xf32>
    %483 = vector.extract_strided_slice %480 {offsets = [0, 256], sizes = [16, 128], strides = [1, 1]} : vector<16x384xf32> to vector<16x128xf32>
    %484 = vector.extract_strided_slice %474 {offsets = [0, 384], sizes = [16, 128], strides = [1, 1]} : vector<16x512xf32> to vector<16x128xf32>
    %485 = math.tanh %484 : vector<16x128xf32>
    %486 = arith.mulf %482, %464 : vector<16x128xf32>
    %487 = arith.mulf %481, %485 : vector<16x128xf32>
    %488 = arith.addf %486, %487 : vector<16x128xf32>
    %489 = math.tanh %488 : vector<16x128xf32>
    %490 = arith.mulf %483, %489 : vector<16x128xf32>
    %c8_i32_210 = arith.constant 8 : i32
    %c1_211 = arith.constant 1 : index
    %c0_212 = arith.constant 0 : index
    %c0_213 = arith.constant 0 : index
    %491 = vector.load %arg9[%c1_211, %c0_212, %c0_213] : memref<2x16x128xf32, #tpu.memory_space<vmem>>, vector<1x16x128xf32>
    %492 = vector.shape_cast %491 : vector<1x16x128xf32> to vector<16x128xf32>
    %493 = vector.shape_cast %490 : vector<16x128xf32> to vector<1x16x128xf32>
    tpu.vector_store %arg9[%c1_211, %c0_212, %c0_213], %493 {strides = array<i32>} : memref<2x16x128xf32, #tpu.memory_space<vmem>>, vector<1x16x128xf32>,
    %c1_214 = arith.constant 1 : index
    %c0_215 = arith.constant 0 : index
    %c0_216 = arith.constant 0 : index
    %494 = vector.load %arg10[%c1_214, %c0_215, %c0_216] : memref<2x16x128xf32, #tpu.memory_space<vmem>>, vector<1x16x128xf32>
    %495 = vector.shape_cast %494 : vector<1x16x128xf32> to vector<16x128xf32>
    %496 = vector.shape_cast %488 : vector<16x128xf32> to vector<1x16x128xf32>
    tpu.vector_store %arg10[%c1_214, %c0_215, %c0_216], %496 {strides = array<i32>} : memref<2x16x128xf32, #tpu.memory_space<vmem>>, vector<1x16x128xf32>,
    %c0_217 = arith.constant 0 : index
    %c0_218 = arith.constant 0 : index
    %497 = vector.load %arg4[%c0_217, %c0_218] : memref<1x128xf32, #tpu.memory_space<vmem>>, vector<1x128xf32>
    %498 = vector.broadcast %497 : vector<1x128xf32> to vector<16x128xf32>
    %499 = arith.mulf %490, %498 : vector<16x128xf32>
    %cst_219 = arith.constant dense<0.000000e+00> : vector<16xf32>
    %500 = vector.multi_reduction <add>, %499, %cst_219 [1] : vector<16x128xf32> to vector<16xf32>
    %501 = vector.shape_cast %500 : vector<16xf32> to vector<16x1xf32>
    %c0_220 = arith.constant 0 : index
    %c0_221 = arith.constant 0 : index
    %502 = vector.load %arg5[%c0_220, %c0_221] : memref<1x1xf32, #tpu.memory_space<vmem>>, vector<1x1xf32>
    %503 = vector.broadcast %502 : vector<1x1xf32> to vector<16x1xf32>
    %504 = arith.addf %501, %503 : vector<16x1xf32>
    %c0_222 = arith.constant 0 : index
    %c0_223 = arith.constant 0 : index
    %505 = vector.load %arg8[%c0_222, %c0_223] : memref<16x1xf32, #tpu.memory_space<vmem>>, vector<16x1xf32>
    tpu.vector_store %arg8[%c0_222, %c0_223], %504 {strides = array<i32>} : memref<16x1xf32, #tpu.memory_space<vmem>>, vector<16x1xf32>,
    return
  }
  func.func @transform_0(%arg0: i32) -> (i32, i32, i32) {
    %c0_i32 = arith.constant 0 : i32
    %c0_i32_0 = arith.constant 0 : i32
    %c0_i32_1 = arith.constant 0 : i32
    return %c0_i32, %arg0, %c0_i32_0 : i32, i32, i32
  }
  func.func @transform_1(%arg0: i32) -> (i32, i32) {
    %c0_i32 = arith.constant 0 : i32
    %c0_i32_0 = arith.constant 0 : i32
    %c0_i32_1 = arith.constant 0 : i32
    return %c0_i32, %c0_i32_0 : i32, i32
  }
  func.func @transform_2(%arg0: i32) -> (i32, i32, i32) {
    %c0_i32 = arith.constant 0 : i32
    %c0_i32_0 = arith.constant 0 : i32
    %c0_i32_1 = arith.constant 0 : i32
    %c0_i32_2 = arith.constant 0 : i32
    return %c0_i32, %c0_i32_0, %c0_i32_1 : i32, i32, i32
  }
  func.func @transform_3(%arg0: i32) -> (i32, i32) {
    %c0_i32 = arith.constant 0 : i32
    %c0_i32_0 = arith.constant 0 : i32
    %c0_i32_1 = arith.constant 0 : i32
    return %c0_i32, %c0_i32_0 : i32, i32
  }
  func.func @transform_4(%arg0: i32) -> (i32, i32) {
    %c0_i32 = arith.constant 0 : i32
    %c0_i32_0 = arith.constant 0 : i32
    %c0_i32_1 = arith.constant 0 : i32
    return %c0_i32, %c0_i32_0 : i32, i32
  }
  func.func @transform_7(%arg0: i32) -> (i32, i32) {
    %c0_i32 = arith.constant 0 : i32
    %c0_i32_0 = arith.constant 0 : i32
    return %arg0, %c0_i32 : i32, i32
  }
  func.func @transform_8(%arg0: i32) -> (i32, i32, i32) {
    %c0_i32 = arith.constant 0 : i32
    %c0_i32_0 = arith.constant 0 : i32
    %c0_i32_1 = arith.constant 0 : i32
    return %c0_i32, %arg0, %c0_i32_0 : i32, i32, i32
  }
  func.func @transform_9(%arg0: i32) -> (i32, i32, i32) {
    %c0_i32 = arith.constant 0 : i32
    %c0_i32_0 = arith.constant 0 : i32
    %c0_i32_1 = arith.constant 0 : i32
    return %c0_i32, %arg0, %c0_i32_0 : i32, i32, i32
  }
}

</mosaic_0001>

<llo_original>
// kernel: tpu_custom_call.1
$region0: #{tpu_custom_call.1}
  #allocation0 [shape = 'u32[]', space=smem, size = 0x4, offset = 0x4, fixed_abs, tag = 'smem constant byte address 0x4 - core index']
  #allocation1 [shape = 'u32[144,128]{1,0:T(1,128)}', space=vmem, size = 0x12000, scoped, tag = 'internal scratch']
  #allocation2 [shape = 'f32[8,16,512]{2,1,0:T(8,128)}', space=vmem, size = 0x40000, scoped, tag = 'scratch operand']
  #allocation3 [shape = 'f32[2,128,512]{2,1,0:T(8,128)}', space=vmem, size = 0x80000, scoped, tag = 'scratch operand']
  #allocation4 [shape = 'f32[2,128,512]{2,1,0:T(8,128)}', space=vmem, size = 0x80000, scoped, tag = 'scratch operand']
  #allocation5 [shape = 'f32[8,16,128]{2,1,0:T(8,128)}', space=vmem, size = 0x10000, scoped, tag = 'scratch operand']
  #allocation6 [shape = 's32[4]{0}', space=sflag, size = 0x10, scoped, tag = 'scratch operand']
  #allocation7 [shape = 'f32[1,1]{1,0:T(1,128)S(1)}', space=vmem, size = 0x200, scoped, tag = 'scoped memory for tpu_custom_call.1']
  #allocation12 [shape = 's32[]', space=sflag, size = 0x4, offset = 0, fixed_abs, tag = 'sflag constant byte address 0x0 - dummy sync flag']
  #allocation13 [shape = 's32[]', space=sflag, size = 0x4, offset = 0, fixed_abs, tag = 'sflag constant byte address 0x0 - dummy sync flag']
  #allocation14 [shape = 'u32[]', space=smem, size = 0x4, offset = 0x44, fixed_abs, tag = 'smem constant byte address 0x44 - assertion arg 0']
  #allocation15 [shape = 'u32[]', space=smem, size = 0x4, offset = 0x48, fixed_abs, tag = 'smem constant byte address 0x48 - assertion arg 1']
  #allocation16 [shape = 's32[]', space=sflag, size = 0x4, offset = 0, fixed_abs, tag = 'sflag constant byte address 0x0 - dummy sync flag']
  #allocation17 [shape = 's32[]', space=sflag, size = 0x4, offset = 0, fixed_abs, tag = 'sflag constant byte address 0x0 - dummy sync flag']
  #allocation18 [shape = 's32[]', space=sflag, size = 0x4, offset = 0, fixed_abs, tag = 'sflag constant byte address 0x0 - dummy sync flag']
  #allocation19 [shape = 's32[]', space=sflag, size = 0x4, offset = 0, fixed_abs, tag = 'sflag constant byte address 0x0 - dummy sync flag']
  %s0 = inlined_call_operand.vmem [shape: f32[8,16,4], index: 0, kind: input, shape index: {}]
  %s1 = inlined_call_operand.vmem [shape: f32[4,512], index: 1, kind: input, shape index: {}]
  %s2 = inlined_call_operand.vmem [shape: f32[2,1,512], index: 2, kind: input, shape index: {}]
  %s3 = inlined_call_operand.vmem [shape: f32[1,128], index: 3, kind: input, shape index: {}]
  %s4 = inlined_call_operand.<no memory space> [shape: f32[1,1], index: 4, kind: input, shape index: {}]
  %s5 = inlined_call_operand.hbm [shape: f32[2,128,512], index: 5, kind: input, shape index: {}]
  %s6 = inlined_call_operand.hbm [shape: f32[1,128,512], index: 6, kind: input, shape index: {}]
  %s7 = inlined_call_operand.vmem [shape: f32[16,1], index: 7, kind: output, shape index: {0}]
  %s8 = inlined_call_operand.hbm [shape: f32[2,16,128], index: 8, kind: output, shape index: {1}]
  %s9 = inlined_call_operand.hbm [shape: f32[2,16,128], index: 9, kind: output, shape index: {2}]
  %10 = xla_tuple %s7, %s8, %s9
  %s11 = sld [smem:[#allocation0]]
  $region58: #{tpu_custom_call.1} parent=0
    _
  %s13 = ssub.s32 1, %s11
  %s14 = scalar_select 0, %s13, %s11
  %v15 = vstv %s4
  %16 = vst [vmem:[#allocation7] sm:$0x1] %v15
  $region1: #{tpu_custom_call.1} parent=0
    #allocation8 [shape = 'u8[16384]{0}', space=vmem, size = 0x4000, scoped, tag = 'output window, operand 1, single buffered']
    #allocation9 [shape = 's32[1]{0}', space=sflag, size = 0x4, scoped, tag = 'scoped memory for tpu_custom_call.1']
    #allocation10 [shape = 'u8[16384]{0}', space=vmem, size = 0x4000, scoped, tag = 'output window, operand 2, single buffered']
    #allocation11 [shape = 's32[1]{0}', space=sflag, size = 0x4, scoped, tag = 'scoped memory for tpu_custom_call.1']
    %17 = vsyncpa [#allocation9], 0
    %18 = vsyncpa [#allocation11], 0
    // Predicated region
    $region2: #{tpu_custom_call.1} parent=1 // pred_check
      _
    $region3: #{tpu_custom_call.1} parent=1 // pred_check_branch
      %20 = sbr.rel (0) target = $region5
    $region4: #{tpu_custom_call.1} parent=1 // pred_region
      _
    $region5: #{tpu_custom_call.1} parent=1 // pred_fallthru
      _
    // Predicated region
    $region6: #{tpu_custom_call.1} parent=1 // pred_check
      _
    $region7: #{tpu_custom_call.1} parent=1 // pred_check_branch
      %22 = sbr.rel (0) target = $region9
    $region8: #{tpu_custom_call.1} parent=1 // pred_region
      _
    $region9: #{tpu_custom_call.1} parent=1 // pred_fallthru
      _
    // Predicated region
    $region10: #{tpu_custom_call.1} parent=1 // pred_check
      _
    $region11: #{tpu_custom_call.1} parent=1 // pred_check_branch
      %24 = sbr.rel (0) target = $region13
    $region12: #{tpu_custom_call.1} parent=1 // pred_region
      _
    $region13: #{tpu_custom_call.1} parent=1 // pred_fallthru
      _
    // Predicated region
    $region14: #{tpu_custom_call.1} parent=1 // pred_check
      _
    $region15: #{tpu_custom_call.1} parent=1 // pred_check_branch
      %26 = sbr.rel (0) target = $region17
    $region16: #{tpu_custom_call.1} parent=1 // pred_region
      _
    $region17: #{tpu_custom_call.1} parent=1 // pred_fallthru
      _
    // Predicated region
    $region18: #{tpu_custom_call.1} parent=1 // pred_check
      _
    $region19: #{tpu_custom_call.1} parent=1 // pred_check_branch
      %28 = sbr.rel (0) target = $region21
    $region20: #{tpu_custom_call.1} parent=1 // pred_region
      _
    $region21: #{tpu_custom_call.1} parent=1 // pred_fallthru
      _
    // Predicated region
    $region22: #{tpu_custom_call.1} parent=1 // pred_check
      _
    $region23: #{tpu_custom_call.1} parent=1 // pred_check_branch
      %30 = sbr.rel target = $region25
    $region24: #{tpu_custom_call.1} parent=1 // pred_region
      %31 = sst [smem:[#allocation14]] [#allocation13]
      %32 = sst [smem:[#allocation15]] [#allocation12]
    $region25: #{tpu_custom_call.1} parent=1 // pred_fallthru
      _
    %34 = shalt.err (0)
    %s36 = sshll.u32 [#allocation3], 4
    %s37 = int_to_ptr.vmem [resolvable:$true] %s36
    %39 = dma.hbm_to_vmem [thread:$0]  %s5, 8192, %s37, [#allocation6]
    %s40 = scalar_lea.sflag [#allocation6], 2
    // Predicated region
    $region26: #{tpu_custom_call.1} parent=1 // pred_check
      _
    $region27: #{tpu_custom_call.1} parent=1 // pred_check_branch
      %42 = sbr.rel target = $region29
    $region28: #{tpu_custom_call.1} parent=1 // pred_region
      %43 = sst [smem:[#allocation14]] [#allocation17]
      %44 = sst [smem:[#allocation15]] [#allocation16]
    $region29: #{tpu_custom_call.1} parent=1 // pred_fallthru
      _
    %46 = shalt.err (0)
    %s48 = sshll.u32 [#allocation4], 4
    %s49 = int_to_ptr.vmem [resolvable:$true] %s48
    %51 = dma.hbm_to_vmem [thread:$0]  %s6, 8192, %s49, %s40
    %s52 = scalar_lea.hbm %s5, 8192
    %s53 = scalar_lea.vmem [#allocation3], 512
    %s54 = scalar_lea.sflag [#allocation6], 1
    // Predicated region
    $region30: #{tpu_custom_call.1} parent=1 // pred_check
      _
    $region31: #{tpu_custom_call.1} parent=1 // pred_check_branch
      %56 = sbr.rel target = $region33
    $region32: #{tpu_custom_call.1} parent=1 // pred_region
      %57 = sst [smem:[#allocation14]] [#allocation19]
      %58 = sst [smem:[#allocation15]] [#allocation18]
    $region33: #{tpu_custom_call.1} parent=1 // pred_fallthru
      _
    %60 = shalt.err (0)
    %s62 = sshll.u32 %s53, 4
    %s63 = int_to_ptr.vmem [resolvable:$true] %s62
    %65 = dma.hbm_to_vmem [thread:$0]  %s52, 8192, %s63, %s54
    %s66 = smul.u32 8, 16
    %s67 = smul.u32 %s66, 4
    %s68 = sshll.u32 %s67, 4
    %69 = dma.done [#allocation6], %s68
    %v70 = vld [vmem:[%s2] sm:$0xf]
    %v71 = vld [vmem:[%s0] sm:$0xff]
    %v72 = vld [vmem:[%s0 + $0x8] sm:$0xff]
    %v73 = vld [vmem:[%s0 + $0x10] sm:$0xff]
    %v74 = vld [vmem:[%s0 + $0x18] sm:$0xff]
    %v75 = vld [vmem:[%s0 + $0x20] sm:$0xff]
    %v76 = vld [vmem:[%s0 + $0x28] sm:$0xff]
    %v77 = vld [vmem:[%s0 + $0x30] sm:$0xff]
    %v78 = vld [vmem:[%s0 + $0x38] sm:$0xff]
    %v79 = vld [vmem:[%s0 + $0x40] sm:$0xff]
    %v80 = vld [vmem:[%s0 + $0x48] sm:$0xff]
    %v81 = vld [vmem:[%s0 + $0x50] sm:$0xff]
    %v82 = vld [vmem:[%s0 + $0x58] sm:$0xff]
    %v83 = vld [vmem:[%s0 + $0x60] sm:$0xff]
    %v84 = vld [vmem:[%s0 + $0x68] sm:$0xff]
    %v85 = vld [vmem:[%s0 + $0x70] sm:$0xff]
    %v86 = vld [vmem:[%s0 + $0x78] sm:$0xff]
    %v87 = vld [vmem:[%s1] sm:$0xff]
    %v88 = vld [vmem:[%s1 + $0x8] sm:$0xff]
    %v90 = vlaneseq
    %v91 = vshrl.u32 %v90, 7
    %v92 = vsub.s32 0, %v91
    %v93 = vrot.slane %v70, %v92
    %v94 = vlaneseq
    %v95 = vshrl.u32 %v94, 7
    %v96 = vsub.s32 1, %v95
    %v97 = vrot.slane %v70, %v96
    %v98 = vlaneseq
    %v99 = vshrl.u32 %v98, 7
    %v100 = vsub.s32 2, %v99
    %v101 = vrot.slane %v70, %v100
    %v102 = vlaneseq
    %v103 = vshrl.u32 %v102, 7
    %v104 = vsub.s32 3, %v103
    %v105 = vrot.slane %v70, %v104
    %v112 = vcombine.high %v87, %v87
    %v113 = vcombine.high %v88, %v88
    %vm114 = vcmask 31744
    %v116 = vsel %vm114, %v71, 0
    %v119 = vsel %vm114, %v72, 0
    %v122 = vsel %vm114, %v73, 0
    %v125 = vsel %vm114, %v74, 0
    %v128 = vsel %vm114, %v75, 0
    %v131 = vsel %vm114, %v76, 0
    %v134 = vsel %vm114, %v77, 0
    %v137 = vsel %vm114, %v78, 0
    %v140 = vsel %vm114, %v79, 0
    %v143 = vsel %vm114, %v80, 0
    %v146 = vsel %vm114, %v81, 0
    %v149 = vsel %vm114, %v82, 0
    %v152 = vsel %vm114, %v83, 0
    %v155 = vsel %vm114, %v84, 0
    %v158 = vsel %vm114, %v85, 0
    %v161 = vsel %vm114, %v86, 0
    %vm163 = vcmask 1043456
    %v164 = vsel %vm163, %v87, 0
    %v166 = vsel %vm163, %v112, 0
    %v168 = vsel %vm163, %v88, 0
    %v170 = vsel %vm163, %v113, 0
    %172 = vmatprep.subr.mxu0 %v166
    %173 = vmatpush1.msra.mxu0 %v164
    %174 = vmatprep.subr.mxu0 0.0
    %175 = vmatpush1.msra.mxu0 0.0
    %176 = vmatprep.subr.mxu0 0.0
    %177 = vmatpush1.msra.mxu0 0.0
    %178 = vmatprep.subr.mxu0 0.0
    %179 = vmatpush1.msra.mxu0 0.0
    %180 = vmatprep.subr.mxu0 0.0
    %181 = vmatpush1.msra.mxu0 0.0
    %182 = vmatprep.subr.mxu0 0.0
    %183 = vmatpush1.msra.mxu0 0.0
    %184 = vmatprep.subr.mxu0 0.0
    %185 = vmatpush1.msra.mxu0 0.0
    %186 = vmatprep.subr.mxu0 0.0
    %187 = vmatpush1.msra.mxu0 0.0
    %188 = vmatprep.subr.mxu0 0.0
    %189 = vmatpush1.msra.mxu0 0.0
    %190 = vmatprep.subr.mxu0 0.0
    %191 = vmatpush1.msra.mxu0 0.0
    %192 = vmatprep.subr.mxu0 0.0
    %193 = vmatpush1.msra.mxu0 0.0
    %194 = vmatprep.subr.mxu0 0.0
    %195 = vmatpush1.msra.mxu0 0.0
    %196 = vmatprep.subr.mxu0 0.0
    %197 = vmatpush1.msra.mxu0 0.0
    %198 = vmatprep.subr.mxu0 0.0
    %199 = vmatpush1.msra.mxu0 0.0
    %200 = vmatprep.subr.mxu0 0.0
    %201 = vmatpush1.msra.mxu0 0.0
    %202 = vmatprep.subr.mxu0 0.0
    %203 = vmatpush1.msra.mxu0 0.0
    %204 = vmatprep.subr.mxu0 0.0
    %205 = vmatpush1.msra.mxu0 0.0
    %206 = vmatprep.subr.mxu0 0.0
    %207 = vmatpush1.msra.mxu0 0.0
    %208 = vmatprep.subr.mxu0 0.0
    %209 = vmatpush1.msra.mxu0 0.0
    %210 = vmatprep.subr.mxu0 0.0
    %211 = vmatpush1.msra.mxu0 0.0
    %212 = vmatprep.subr.mxu0 0.0
    %213 = vmatpush1.msra.mxu0 0.0
    %214 = vmatprep.subr.mxu0 0.0
    %215 = vmatpush1.msra.mxu0 0.0
    %216 = vmatprep.subr.mxu0 0.0
    %217 = vmatpush1.msra.mxu0 0.0
    %218 = vmatprep.subr.mxu0 0.0
    %219 = vmatpush1.msra.mxu0 0.0
    %220 = vmatprep.subr.mxu0 0.0
    %221 = vmatpush1.msra.mxu0 0.0
    %222 = vmatprep.subr.mxu0 0.0
    %223 = vmatpush1.msra.mxu0 0.0
    %224 = vmatprep.subr.mxu0 0.0
    %225 = vmatpush1.msra.mxu0 0.0
    %226 = vmatprep.subr.mxu0 0.0
    %227 = vmatpush1.msra.mxu0 0.0
    %228 = vmatprep.subr.mxu0 0.0
    %229 = vmatpush1.msra.mxu0 0.0
    %230 = vmatprep.subr.mxu0 0.0
    %231 = vmatpush1.msra.mxu0 0.0
    %232 = vmatprep.subr.mxu0 0.0
    %233 = vmatpush1.msra.mxu0 0.0
    %234 = vmatprep.subr.mxu0 0.0
    %235 = vmatpush1.msra.mxu0 0.0
    %236 = vmatprep.mubr.f32.mxu0 0.0
    %237 = vmatmul.mubr.f32.gmra.mrb[0].mxu0 %v116
    %v238 = vpop.f32.mrb[0].mxu0
    %v239 = vadd.f32 %v93, %v238
    %v240 = vpop.f32.mrb[0].mxu0
    %v241 = vadd.f32 %v97, %v240
    %242 = vmatprep.mubr.f32.mxu0 0.0
    %243 = vmatmul.mubr.f32.gmra.mrb[0].mxu0 %v119
    %v244 = vpop.f32.mrb[0].mxu0
    %v245 = vadd.f32 %v93, %v244
    %v246 = vpop.f32.mrb[0].mxu0
    %v247 = vadd.f32 %v97, %v246
    %248 = vmatprep.mubr.f32.mxu0 0.0
    %249 = vmatmul.mubr.f32.gmra.mrb[0].mxu0 %v122
    %v250 = vpop.f32.mrb[0].mxu0
    %v251 = vadd.f32 %v93, %v250
    %v252 = vpop.f32.mrb[0].mxu0
    %v253 = vadd.f32 %v97, %v252
    %254 = vmatprep.mubr.f32.mxu0 0.0
    %255 = vmatmul.mubr.f32.gmra.mrb[0].mxu0 %v125
    %v256 = vpop.f32.mrb[0].mxu0
    %v257 = vadd.f32 %v93, %v256
    %v258 = vpop.f32.mrb[0].mxu0
    %v259 = vadd.f32 %v97, %v258
    %260 = vmatprep.mubr.f32.mxu0 0.0
    %261 = vmatmul.mubr.f32.gmra.mrb[0].mxu0 %v128
    %v262 = vpop.f32.mrb[0].mxu0
    %v263 = vadd.f32 %v93, %v262
    %v264 = vpop.f32.mrb[0].mxu0
    %v265 = vadd.f32 %v97, %v264
    %266 = vmatprep.mubr.f32.mxu0 0.0
    %267 = vmatmul.mubr.f32.gmra.mrb[0].mxu0 %v131
    %v268 = vpop.f32.mrb[0].mxu0
    %v269 = vadd.f32 %v93, %v268
    %v270 = vpop.f32.mrb[0].mxu0
    %v271 = vadd.f32 %v97, %v270
    %272 = vmatprep.mubr.f32.mxu0 0.0
    %273 = vmatmul.mubr.f32.gmra.mrb[0].mxu0 %v134
    %v274 = vpop.f32.mrb[0].mxu0
    %v275 = vadd.f32 %v93, %v274
    %v276 = vpop.f32.mrb[0].mxu0
    %v277 = vadd.f32 %v97, %v276
    %278 = vmatprep.mubr.f32.mxu0 0.0
    %279 = vmatmul.mubr.f32.gmra.mrb[0].mxu0 %v137
    %v280 = vpop.f32.mrb[0].mxu0
    %v281 = vadd.f32 %v93, %v280
    %v282 = vpop.f32.mrb[0].mxu0
    %v283 = vadd.f32 %v97, %v282
    %284 = vmatprep.mubr.f32.mxu0 0.0
    %285 = vmatmul.mubr.f32.gmra.mrb[0].mxu0 %v140
    %v286 = vpop.f32.mrb[0].mxu0
    %v287 = vadd.f32 %v93, %v286
    %v288 = vpop.f32.mrb[0].mxu0
    %v289 = vadd.f32 %v97, %v288
    %290 = vmatprep.mubr.f32.mxu0 0.0
    %291 = vmatmul.mubr.f32.gmra.mrb[0].mxu0 %v143
    %v292 = vpop.f32.mrb[0].mxu0
    %v293 = vadd.f32 %v93, %v292
    %v294 = vpop.f32.mrb[0].mxu0
    %v295 = vadd.f32 %v97, %v294
    %296 = vmatprep.mubr.f32.mxu0 0.0
    %297 = vmatmul.mubr.f32.gmra.mrb[0].mxu0 %v146
    %v298 = vpop.f32.mrb[0].mxu0
    %v299 = vadd.f32 %v93, %v298
    %v300 = vpop.f32.mrb[0].mxu0
    %v301 = vadd.f32 %v97, %v300
    %302 = vmatprep.mubr.f32.mxu0 0.0
    %303 = vmatmul.mubr.f32.gmra.mrb[0].mxu0 %v149
    %v304 = vpop.f32.mrb[0].mxu0
    %v305 = vadd.f32 %v93, %v304
    %v306 = vpop.f32.mrb[0].mxu0
    %v307 = vadd.f32 %v97, %v306
    %308 = vmatprep.mubr.f32.mxu0 0.0
    %309 = vmatmul.mubr.f32.gmra.mrb[0].mxu0 %v152
    %v310 = vpop.f32.mrb[0].mxu0
    %v311 = vadd.f32 %v93, %v310
    %v312 = vpop.f32.mrb[0].mxu0
    %v313 = vadd.f32 %v97, %v312
    %314 = vmatprep.mubr.f32.mxu0 0.0
    %315 = vmatmul.mubr.f32.gmra.mrb[0].mxu0 %v155
    %v316 = vpop.f32.mrb[0].mxu0
    %v317 = vadd.f32 %v93, %v316
    %v318 = vpop.f32.mrb[0].mxu0
    %v319 = vadd.f32 %v97, %v318
    %320 = vmatprep.mubr.f32.mxu0 0.0
    %321 = vmatmul.mubr.f32.gmra.mrb[0].mxu0 %v158
    %v322 = vpop.f32.mrb[0].mxu0
    %v323 = vadd.f32 %v93, %v322
    %v324 = vpop.f32.mrb[0].mxu0
    %v325 = vadd.f32 %v97, %v324
    %326 = vmatprep.mubr.f32.mxu0 0.0
    %327 = vmatmul.mubr.f32.gmra.mrb[0].mxu0 %v161
    %v328 = vpop.f32.mrb[0].mxu0
    %v329 = vadd.f32 %v93, %v328
    %v330 = vpop.f32.mrb[0].mxu0
    %v331 = vadd.f32 %v97, %v330
    %332 = vdwg.mxu0
    %333 = vmatprep.subr.mxu0 %v170
    %334 = vmatpush1.msra.mxu0 %v168
    %335 = vmatprep.subr.mxu0 0.0
    %336 = vmatpush1.msra.mxu0 0.0
    %337 = vmatprep.subr.mxu0 0.0
    %338 = vmatpush1.msra.mxu0 0.0
    %339 = vmatprep.subr.mxu0 0.0
    %340 = vmatpush1.msra.mxu0 0.0
    %341 = vmatprep.subr.mxu0 0.0
    %342 = vmatpush1.msra.mxu0 0.0
    %343 = vmatprep.subr.mxu0 0.0
    %344 = vmatpush1.msra.mxu0 0.0
    %345 = vmatprep.subr.mxu0 0.0
    %346 = vmatpush1.msra.mxu0 0.0
    %347 = vmatprep.subr.mxu0 0.0
    %348 = vmatpush1.msra.mxu0 0.0
    %349 = vmatprep.subr.mxu0 0.0
    %350 = vmatpush1.msra.mxu0 0.0
    %351 = vmatprep.subr.mxu0 0.0
    %352 = vmatpush1.msra.mxu0 0.0
    %353 = vmatprep.subr.mxu0 0.0
    %354 = vmatpush1.msra.mxu0 0.0
    %355 = vmatprep.subr.mxu0 0.0
    %356 = vmatpush1.msra.mxu0 0.0
    %357 = vmatprep.subr.mxu0 0.0
    %358 = vmatpush1.msra.mxu0 0.0
    %359 = vmatprep.subr.mxu0 0.0
    %360 = vmatpush1.msra.mxu0 0.0
    %361 = vmatprep.subr.mxu0 0.0
    %362 = vmatpush1.msra.mxu0 0.0
    %363 = vmatprep.subr.mxu0 0.0
    %364 = vmatpush1.msra.mxu0 0.0
    %365 = vmatprep.subr.mxu0 0.0
    %366 = vmatpush1.msra.mxu0 0.0
    %367 = vmatprep.subr.mxu0 0.0
    %368 = vmatpush1.msra.mxu0 0.0
    %369 = vmatprep.subr.mxu0 0.0
    %370 = vmatpush1.msra.mxu0 0.0
    %371 = vmatprep.subr.mxu0 0.0
    %372 = vmatpush1.msra.mxu0 0.0
    %373 = vmatprep.subr.mxu0 0.0
    %374 = vmatpush1.msra.mxu0 0.0
    %375 = vmatprep.subr.mxu0 0.0
    %376 = vmatpush1.msra.mxu0 0.0
    %377 = vmatprep.subr.mxu0 0.0
    %378 = vmatpush1.msra.mxu0 0.0
    %379 = vmatprep.subr.mxu0 0.0
    %380 = vmatpush1.msra.mxu0 0.0
    %381 = vmatprep.subr.mxu0 0.0
    %382 = vmatpush1.msra.mxu0 0.0
    %383 = vmatprep.subr.mxu0 0.0
    %384 = vmatpush1.msra.mxu0 0.0
    %385 = vmatprep.subr.mxu0 0.0
    %386 = vmatpush1.msra.mxu0 0.0
    %387 = vmatprep.subr.mxu0 0.0
    %388 = vmatpush1.msra.mxu0 0.0
    %389 = vmatprep.subr.mxu0 0.0
    %390 = vmatpush1.msra.mxu0 0.0
    %391 = vmatprep.subr.mxu0 0.0
    %392 = vmatpush1.msra.mxu0 0.0
    %393 = vmatprep.subr.mxu0 0.0
    %394 = vmatpush1.msra.mxu0 0.0
    %395 = vmatprep.subr.mxu0 0.0
    %396 = vmatpush1.msra.mxu0 0.0
    %397 = vmatprep.mubr.f32.mxu0 0.0
    %398 = vmatmul.mubr.f32.gmra.mrb[0].mxu0 %v116
    %v399 = vpop.f32.mrb[0].mxu0
    %v400 = vadd.f32 %v101, %v399
    %v401 = vpop.f32.mrb[0].mxu0
    %v402 = vadd.f32 %v105, %v401
    %403 = vmatprep.mubr.f32.mxu0 0.0
    %404 = vmatmul.mubr.f32.gmra.mrb[0].mxu0 %v119
    %v405 = vpop.f32.mrb[0].mxu0
    %v406 = vadd.f32 %v101, %v405
    %v407 = vpop.f32.mrb[0].mxu0
    %v408 = vadd.f32 %v105, %v407
    %409 = vmatprep.mubr.f32.mxu0 0.0
    %410 = vmatmul.mubr.f32.gmra.mrb[0].mxu0 %v122
    %v411 = vpop.f32.mrb[0].mxu0
    %v412 = vadd.f32 %v101, %v411
    %v413 = vpop.f32.mrb[0].mxu0
    %v414 = vadd.f32 %v105, %v413
    %415 = vmatprep.mubr.f32.mxu0 0.0
    %416 = vmatmul.mubr.f32.gmra.mrb[0].mxu0 %v125
    %v417 = vpop.f32.mrb[0].mxu0
    %v418 = vadd.f32 %v101, %v417
    %v419 = vpop.f32.mrb[0].mxu0
    %v420 = vadd.f32 %v105, %v419
    %421 = vmatprep.mubr.f32.mxu0 0.0
    %422 = vmatmul.mubr.f32.gmra.mrb[0].mxu0 %v128
    %v423 = vpop.f32.mrb[0].mxu0
    %v424 = vadd.f32 %v101, %v423
    %v425 = vpop.f32.mrb[0].mxu0
    %v426 = vadd.f32 %v105, %v425
    %427 = vmatprep.mubr.f32.mxu0 0.0
    %428 = vmatmul.mubr.f32.gmra.mrb[0].mxu0 %v131
    %v429 = vpop.f32.mrb[0].mxu0
    %v430 = vadd.f32 %v101, %v429
    %v431 = vpop.f32.mrb[0].mxu0
    %v432 = vadd.f32 %v105, %v431
    %433 = vmatprep.mubr.f32.mxu0 0.0
    %434 = vmatmul.mubr.f32.gmra.mrb[0].mxu0 %v134
    %v435 = vpop.f32.mrb[0].mxu0
    %v436 = vadd.f32 %v101, %v435
    %v437 = vpop.f32.mrb[0].mxu0
    %v438 = vadd.f32 %v105, %v437
    %439 = vmatprep.mubr.f32.mxu0 0.0
    %440 = vmatmul.mubr.f32.gmra.mrb[0].mxu0 %v137
    %v441 = vpop.f32.mrb[0].mxu0
    %v442 = vadd.f32 %v101, %v441
    %v443 = vpop.f32.mrb[0].mxu0
    %v444 = vadd.f32 %v105, %v443
    %445 = vmatprep.mubr.f32.mxu0 0.0
    %446 = vmatmul.mubr.f32.gmra.mrb[0].mxu0 %v140
    %v447 = vpop.f32.mrb[0].mxu0
    %v448 = vadd.f32 %v101, %v447
    %v449 = vpop.f32.mrb[0].mxu0
    %v450 = vadd.f32 %v105, %v449
    %451 = vmatprep.mubr.f32.mxu0 0.0
    %452 = vmatmul.mubr.f32.gmra.mrb[0].mxu0 %v143
    %v453 = vpop.f32.mrb[0].mxu0
    %v454 = vadd.f32 %v101, %v453
    %v455 = vpop.f32.mrb[0].mxu0
    %v456 = vadd.f32 %v105, %v455
    %457 = vmatprep.mubr.f32.mxu0 0.0
    %458 = vmatmul.mubr.f32.gmra.mrb[0].mxu0 %v146
    %v459 = vpop.f32.mrb[0].mxu0
    %v460 = vadd.f32 %v101, %v459
    %v461 = vpop.f32.mrb[0].mxu0
    %v462 = vadd.f32 %v105, %v461
    %463 = vmatprep.mubr.f32.mxu0 0.0
    %464 = vmatmul.mubr.f32.gmra.mrb[0].mxu0 %v149
    %v465 = vpop.f32.mrb[0].mxu0
    %v466 = vadd.f32 %v101, %v465
    %v467 = vpop.f32.mrb[0].mxu0
    %v468 = vadd.f32 %v105, %v467
    %469 = vmatprep.mubr.f32.mxu0 0.0
    %470 = vmatmul.mubr.f32.gmra.mrb[0].mxu0 %v152
    %v471 = vpop.f32.mrb[0].mxu0
    %v472 = vadd.f32 %v101, %v471
    %v473 = vpop.f32.mrb[0].mxu0
    %v474 = vadd.f32 %v105, %v473
    %475 = vmatprep.mubr.f32.mxu0 0.0
    %476 = vmatmul.mubr.f32.gmra.mrb[0].mxu0 %v155
    %v477 = vpop.f32.mrb[0].mxu0
    %v478 = vadd.f32 %v101, %v477
    %v479 = vpop.f32.mrb[0].mxu0
    %v480 = vadd.f32 %v105, %v479
    %481 = vmatprep.mubr.f32.mxu0 0.0
    %482 = vmatmul.mubr.f32.gmra.mrb[0].mxu0 %v158
    %v483 = vpop.f32.mrb[0].mxu0
    %v484 = vadd.f32 %v101, %v483
    %v485 = vpop.f32.mrb[0].mxu0
    %v486 = vadd.f32 %v105, %v485
    %487 = vmatprep.mubr.f32.mxu0 0.0
    %488 = vmatmul.mubr.f32.gmra.mrb[0].mxu0 %v161
    %v489 = vpop.f32.mrb[0].mxu0
    %v490 = vadd.f32 %v101, %v489
    %v491 = vpop.f32.mrb[0].mxu0
    %v492 = vadd.f32 %v105, %v491
    %493 = vdwg.mxu0
    %494 = vst [vmem:[#allocation2] sm:$0xff] %v239
    %495 = vst [vmem:[#allocation2 + $0x8] sm:$0xff] %v241
    %496 = vst [vmem:[#allocation2 + $0x10] sm:$0xff] %v400
    %497 = vst [vmem:[#allocation2 + $0x18] sm:$0xff] %v402
    %498 = vst [vmem:[#allocation2 + $0x20] sm:$0xff] %v245
    %499 = vst [vmem:[#allocation2 + $0x28] sm:$0xff] %v247
    %500 = vst [vmem:[#allocation2 + $0x30] sm:$0xff] %v406
    %501 = vst [vmem:[#allocation2 + $0x38] sm:$0xff] %v408
    %502 = vst [vmem:[#allocation2 + $0x40] sm:$0xff] %v251
    %503 = vst [vmem:[#allocation2 + $0x48] sm:$0xff] %v253
    %504 = vst [vmem:[#allocation2 + $0x50] sm:$0xff] %v412
    %505 = vst [vmem:[#allocation2 + $0x58] sm:$0xff] %v414
    %506 = vst [vmem:[#allocation2 + $0x60] sm:$0xff] %v257
    %507 = vst [vmem:[#allocation2 + $0x68] sm:$0xff] %v259
    %508 = vst [vmem:[#allocation2 + $0x70] sm:$0xff] %v418
    %509 = vst [vmem:[#allocation2 + $0x78] sm:$0xff] %v420
    %510 = vst [vmem:[#allocation2 + $0x80] sm:$0xff] %v263
    %511 = vst [vmem:[#allocation2 + $0x88] sm:$0xff] %v265
    %512 = vst [vmem:[#allocation2 + $0x90] sm:$0xff] %v424
    %513 = vst [vmem:[#allocation2 + $0x98] sm:$0xff] %v426
    %514 = vst [vmem:[#allocation2 + $0xa0] sm:$0xff] %v269
    %515 = vst [vmem:[#allocation2 + $0xa8] sm:$0xff] %v271
    %516 = vst [vmem:[#allocation2 + $0xb0] sm:$0xff] %v430
    %517 = vst [vmem:[#allocation2 + $0xb8] sm:$0xff] %v432
    %518 = vst [vmem:[#allocation2 + $0xc0] sm:$0xff] %v275
    %519 = vst [vmem:[#allocation2 + $0xc8] sm:$0xff] %v277
    %520 = vst [vmem:[#allocation2 + $0xd0] sm:$0xff] %v436
    %521 = vst [vmem:[#allocation2 + $0xd8] sm:$0xff] %v438
    %522 = vst [vmem:[#allocation2 + $0xe0] sm:$0xff] %v281
    %523 = vst [vmem:[#allocation2 + $0xe8] sm:$0xff] %v283
    %524 = vst [vmem:[#allocation2 + $0xf0] sm:$0xff] %v442
    %525 = vst [vmem:[#allocation2 + $0xf8] sm:$0xff] %v444
    %526 = vst [vmem:[#allocation2 + $0x100] sm:$0xff] %v287
    %527 = vst [vmem:[#allocation2 + $0x108] sm:$0xff] %v289
    %528 = vst [vmem:[#allocation2 + $0x110] sm:$0xff] %v448
    %529 = vst [vmem:[#allocation2 + $0x118] sm:$0xff] %v450
    %530 = vst [vmem:[#allocation2 + $0x120] sm:$0xff] %v293
    %531 = vst [vmem:[#allocation2 + $0x128] sm:$0xff] %v295
    %532 = vst [vmem:[#allocation2 + $0x130] sm:$0xff] %v454
    %533 = vst [vmem:[#allocation2 + $0x138] sm:$0xff] %v456
    %534 = vst [vmem:[#allocation2 + $0x140] sm:$0xff] %v299
    %535 = vst [vmem:[#allocation2 + $0x148] sm:$0xff] %v301
    %536 = vst [vmem:[#allocation2 + $0x150] sm:$0xff] %v460
    %537 = vst [vmem:[#allocation2 + $0x158] sm:$0xff] %v462
    %538 = vst [vmem:[#allocation2 + $0x160] sm:$0xff] %v305
    %539 = vst [vmem:[#allocation2 + $0x168] sm:$0xff] %v307
    %540 = vst [vmem:[#allocation2 + $0x170] sm:$0xff] %v466
    %541 = vst [vmem:[#allocation2 + $0x178] sm:$0xff] %v468
    %542 = vst [vmem:[#allocation2 + $0x180] sm:$0xff] %v311
    %543 = vst [vmem:[#allocation2 + $0x188] sm:$0xff] %v313
    %544 = vst [vmem:[#allocation2 + $0x190] sm:$0xff] %v472
    %545 = vst [vmem:[#allocation2 + $0x198] sm:$0xff] %v474
    %546 = vst [vmem:[#allocation2 + $0x1a0] sm:$0xff] %v317
    %547 = vst [vmem:[#allocation2 + $0x1a8] sm:$0xff] %v319
    %548 = vst [vmem:[#allocation2 + $0x1b0] sm:$0xff] %v478
    %549 = vst [vmem:[#allocation2 + $0x1b8] sm:$0xff] %v480
    %550 = vst [vmem:[#allocation2 + $0x1c0] sm:$0xff] %v323
    %551 = vst [vmem:[#allocation2 + $0x1c8] sm:$0xff] %v325
    %552 = vst [vmem:[#allocation2 + $0x1d0] sm:$0xff] %v484
    %553 = vst [vmem:[#allocation2 + $0x1d8] sm:$0xff] %v486
    %554 = vst [vmem:[#allocation2 + $0x1e0] sm:$0xff] %v329
    %555 = vst [vmem:[#allocation2 + $0x1e8] sm:$0xff] %v331
    %556 = vst [vmem:[#allocation2 + $0x1f0] sm:$0xff] %v490
    %557 = vst [vmem:[#allocation2 + $0x1f8] sm:$0xff] %v492
    %v558 = vld [vmem:[#allocation2] sm:$0xff]
    %v559 = vld [vmem:[#allocation2 + $0x8] sm:$0xff]
    %v560 = vld [vmem:[#allocation2 + $0x10] sm:$0xff]
    %v561 = vld [vmem:[#allocation2 + $0x18] sm:$0xff]
    %v562 = vld [vmem:[#allocation2 + $0x20] sm:$0xff]
    %v563 = vld [vmem:[#allocation2 + $0x28] sm:$0xff]
    %v564 = vld [vmem:[#allocation2 + $0x30] sm:$0xff]
    %v565 = vld [vmem:[#allocation2 + $0x38] sm:$0xff]
    %v566 = vld [vmem:[#allocation3] sm:$0xff]
    %v567 = vld [vmem:[#allocation3 + $0x8] sm:$0xff]
    %v568 = vld [vmem:[#allocation3 + $0x10] sm:$0xff]
    %v569 = vld [vmem:[#allocation3 + $0x18] sm:$0xff]
    %v570 = vld [vmem:[#allocation3 + $0x20] sm:$0xff]
    %v571 = vld [vmem:[#allocation3 + $0x28] sm:$0xff]
    %v572 = vld [vmem:[#allocation3 + $0x30] sm:$0xff]
    %v573 = vld [vmem:[#allocation3 + $0x38] sm:$0xff]
    %v574 = vld [vmem:[#allocation3 + $0x40] sm:$0xff]
    %v575 = vld [vmem:[#allocation3 + $0x48] sm:$0xff]
    %v576 = vld [vmem:[#allocation3 + $0x50] sm:$0xff]
    %v577 = vld [vmem:[#allocation3 + $0x58] sm:$0xff]
    %v578 = vld [vmem:[#allocation3 + $0x60] sm:$0xff]
    %v579 = vld [vmem:[#allocation3 + $0x68] sm:$0xff]
    %v580 = vld [vmem:[#allocation3 + $0x70] sm:$0xff]
    %v581 = vld [vmem:[#allocation3 + $0x78] sm:$0xff]
    %v582 = vld [vmem:[#allocation3 + $0x80] sm:$0xff]
    %v583 = vld [vmem:[#allocation3 + $0x88] sm:$0xff]
    %v584 = vld [vmem:[#allocation3 + $0x90] sm:$0xff]
    %v585 = vld [vmem:[#allocation3 + $0x98] sm:$0xff]
    %v586 = vld [vmem:[#allocation3 + $0xa0] sm:$0xff]
    %v587 = vld [vmem:[#allocation3 + $0xa8] sm:$0xff]
    %v588 = vld [vmem:[#allocation3 + $0xb0] sm:$0xff]
    %v589 = vld [vmem:[#allocation3 + $0xb8] sm:$0xff]
    %v590 = vld [vmem:[#allocation3 + $0xc0] sm:$0xff]
    %v591 = vld [vmem:[#allocation3 + $0xc8] sm:$0xff]
    %v592 = vld [vmem:[#allocation3 + $0xd0] sm:$0xff]
    %v593 = vld [vmem:[#allocation3 + $0xd8] sm:$0xff]
    %v594 = vld [vmem:[#allocation3 + $0xe0] sm:$0xff]
    %v595 = vld [vmem:[#allocation3 + $0xe8] sm:$0xff]
    %v596 = vld [vmem:[#allocation3 + $0xf0] sm:$0xff]
    %v597 = vld [vmem:[#allocation3 + $0xf8] sm:$0xff]
    %v598 = vld [vmem:[#allocation3 + $0x100] sm:$0xff]
    %v599 = vld [vmem:[#allocation3 + $0x108] sm:$0xff]
    %v600 = vld [vmem:[#allocation3 + $0x110] sm:$0xff]
    %v601 = vld [vmem:[#allocation3 + $0x118] sm:$0xff]
    %v602 = vld [vmem:[#allocation3 + $0x120] sm:$0xff]
    %v603 = vld [vmem:[#allocation3 + $0x128] sm:$0xff]
    %v604 = vld [vmem:[#allocation3 + $0x130] sm:$0xff]
    %v605 = vld [vmem:[#allocation3 + $0x138] sm:$0xff]
    %v606 = vld [vmem:[#allocation3 + $0x140] sm:$0xff]
    %v607 = vld [vmem:[#allocation3 + $0x148] sm:$0xff]
    %v608 = vld [vmem:[#allocation3 + $0x150] sm:$0xff]
    %v609 = vld [vmem:[#allocation3 + $0x158] sm:$0xff]
    %v610 = vld [vmem:[#allocation3 + $0x160] sm:$0xff]
    %v611 = vld [vmem:[#allocation3 + $0x168] sm:$0xff]
    %v612 = vld [vmem:[#allocation3 + $0x170] sm:$0xff]
    %v613 = vld [vmem:[#allocation3 + $0x178] sm:$0xff]
    %v614 = vld [vmem:[#allocation3 + $0x180] sm:$0xff]
    %v615 = vld [vmem:[#allocation3 + $0x188] sm:$0xff]
    %v616 = vld [vmem:[#allocation3 + $0x190] sm:$0xff]
    %v617 = vld [vmem:[#allocation3 + $0x198] sm:$0xff]
    %v618 = vld [vmem:[#allocation3 + $0x1a0] sm:$0xff]
    %v619 = vld [vmem:[#allocation3 + $0x1a8] sm:$0xff]
    %v620 = vld [vmem:[#allocation3 + $0x1b0] sm:$0xff]
    %v621 = vld [vmem:[#allocation3 + $0x1b8] sm:$0xff]
    %v622 = vld [vmem:[#allocation3 + $0x1c0] sm:$0xff]
    %v623 = vld [vmem:[#allocation3 + $0x1c8] sm:$0xff]
    %v624 = vld [vmem:[#allocation3 + $0x1d0] sm:$0xff]
    %v625 = vld [vmem:[#allocation3 + $0x1d8] sm:$0xff]
    %v626 = vld [vmem:[#allocation3 + $0x1e0] sm:$0xff]
    %v627 = vld [vmem:[#allocation3 + $0x1e8] sm:$0xff]
    %v628 = vld [vmem:[#allocation3 + $0x1f0] sm:$0xff]
    %v629 = vld [vmem:[#allocation3 + $0x1f8] sm:$0xff]
    %630 = vmatprep.subr.mxu0 %v567
    %631 = vmatpush1.msra.mxu0 %v566
    %632 = vmatprep.subr.mxu0 %v571
    %633 = vmatpush1.msra.mxu0 %v570
    %634 = vmatprep.subr.mxu0 %v575
    %635 = vmatpush1.msra.mxu0 %v574
    %636 = vmatprep.subr.mxu0 %v579
    %637 = vmatpush1.msra.mxu0 %v578
    %638 = vmatprep.subr.mxu0 %v583
    %639 = vmatpush1.msra.mxu0 %v582
    %640 = vmatprep.subr.mxu0 %v587
    %641 = vmatpush1.msra.mxu0 %v586
    %642 = vmatprep.subr.mxu0 %v591
    %643 = vmatpush1.msra.mxu0 %v590
    %644 = vmatprep.subr.mxu0 %v595
    %645 = vmatpush1.msra.mxu0 %v594
    %646 = vmatprep.subr.mxu0 %v599
    %647 = vmatpush1.msra.mxu0 %v598
    %648 = vmatprep.subr.mxu0 %v603
    %649 = vmatpush1.msra.mxu0 %v602
    %650 = vmatprep.subr.mxu0 %v607
    %651 = vmatpush1.msra.mxu0 %v606
    %652 = vmatprep.subr.mxu0 %v611
    %653 = vmatpush1.msra.mxu0 %v610
    %654 = vmatprep.subr.mxu0 %v615
    %655 = vmatpush1.msra.mxu0 %v614
    %656 = vmatprep.subr.mxu0 %v619
    %657 = vmatpush1.msra.mxu0 %v618
    %658 = vmatprep.subr.mxu0 %v623
    %659 = vmatpush1.msra.mxu0 %v622
    %660 = vmatprep.subr.mxu0 %v627
    %661 = vmatpush1.msra.mxu0 %v626
    %662 = vmatprep.subr.mxu0 0.0
    %663 = vmatpush1.msra.mxu0 0.0
    %664 = vmatprep.subr.mxu0 0.0
    %665 = vmatpush1.msra.mxu0 0.0
    %666 = vmatprep.subr.mxu0 0.0
    %667 = vmatpush1.msra.mxu0 0.0
    %668 = vmatprep.subr.mxu0 0.0
    %669 = vmatpush1.msra.mxu0 0.0
    %670 = vmatprep.subr.mxu0 0.0
    %671 = vmatpush1.msra.mxu0 0.0
    %672 = vmatprep.subr.mxu0 0.0
    %673 = vmatpush1.msra.mxu0 0.0
    %674 = vmatprep.subr.mxu0 0.0
    %675 = vmatpush1.msra.mxu0 0.0
    %676 = vmatprep.subr.mxu0 0.0
    %677 = vmatpush1.msra.mxu0 0.0
    %678 = vmatprep.subr.mxu0 0.0
    %679 = vmatpush1.msra.mxu0 0.0
    %680 = vmatprep.subr.mxu0 0.0
    %681 = vmatpush1.msra.mxu0 0.0
    %682 = vmatprep.subr.mxu0 0.0
    %683 = vmatpush1.msra.mxu0 0.0
    %684 = vmatprep.subr.mxu0 0.0
    %685 = vmatpush1.msra.mxu0 0.0
    %686 = vmatprep.subr.mxu0 0.0
    %687 = vmatpush1.msra.mxu0 0.0
    %688 = vmatprep.subr.mxu0 0.0
    %689 = vmatpush1.msra.mxu0 0.0
    %690 = vmatprep.subr.mxu0 0.0
    %691 = vmatpush1.msra.mxu0 0.0
    %692 = vmatprep.subr.mxu0 0.0
    %693 = vmatpush1.msra.mxu0 0.0
    %694 = vmatprep.mubr.f32.mxu0 0.0
    %695 = vmatmul.mubr.f32.gmra.mrb[0].mxu0 0.0
    %v696 = vpop.f32.mrb[0].mxu0
    %v697 = vadd.f32 0.0, %v696
    %v698 = vpop.f32.mrb[0].mxu0
    %v699 = vadd.f32 0.0, %v698
    %700 = vmatprep.mubr.f32.mxu0 0.0
    %701 = vmatmul.mubr.f32.gmra.mrb[0].mxu0 0.0
    %v702 = vpop.f32.mrb[0].mxu0
    %v703 = vadd.f32 0.0, %v702
    %v704 = vpop.f32.mrb[0].mxu0
    %v705 = vadd.f32 0.0, %v704
    %706 = vdwg.mxu0
    %707 = vmatprep.subr.mxu0 %v569
    %708 = vmatpush1.msra.mxu0 %v568
    %709 = vmatprep.subr.mxu0 %v573
    %710 = vmatpush1.msra.mxu0 %v572
    %711 = vmatprep.subr.mxu0 %v577
    %712 = vmatpush1.msra.mxu0 %v576
    %713 = vmatprep.subr.mxu0 %v581
    %714 = vmatpush1.msra.mxu0 %v580
    %715 = vmatprep.subr.mxu0 %v585
    %716 = vmatpush1.msra.mxu0 %v584
    %717 = vmatprep.subr.mxu0 %v589
    %718 = vmatpush1.msra.mxu0 %v588
    %719 = vmatprep.subr.mxu0 %v593
    %720 = vmatpush1.msra.mxu0 %v592
    %721 = vmatprep.subr.mxu0 %v597
    %722 = vmatpush1.msra.mxu0 %v596
    %723 = vmatprep.subr.mxu0 %v601
    %724 = vmatpush1.msra.mxu0 %v600
    %725 = vmatprep.subr.mxu0 %v605
    %726 = vmatpush1.msra.mxu0 %v604
    %727 = vmatprep.subr.mxu0 %v609
    %728 = vmatpush1.msra.mxu0 %v608
    %729 = vmatprep.subr.mxu0 %v613
    %730 = vmatpush1.msra.mxu0 %v612
    %731 = vmatprep.subr.mxu0 %v617
    %732 = vmatpush1.msra.mxu0 %v616
    %733 = vmatprep.subr.mxu0 %v621
    %734 = vmatpush1.msra.mxu0 %v620
    %735 = vmatprep.subr.mxu0 %v625
    %736 = vmatpush1.msra.mxu0 %v624
    %737 = vmatprep.subr.mxu0 %v629
    %738 = vmatpush1.msra.mxu0 %v628
    %739 = vmatprep.subr.mxu0 0.0
    %740 = vmatpush1.msra.mxu0 0.0
    %741 = vmatprep.subr.mxu0 0.0
    %742 = vmatpush1.msra.mxu0 0.0
    %743 = vmatprep.subr.mxu0 0.0
    %744 = vmatpush1.msra.mxu0 0.0
    %745 = vmatprep.subr.mxu0 0.0
    %746 = vmatpush1.msra.mxu0 0.0
    %747 = vmatprep.subr.mxu0 0.0
    %748 = vmatpush1.msra.mxu0 0.0
    %749 = vmatprep.subr.mxu0 0.0
    %750 = vmatpush1.msra.mxu0 0.0
    %751 = vmatprep.subr.mxu0 0.0
    %752 = vmatpush1.msra.mxu0 0.0
    %753 = vmatprep.subr.mxu0 0.0
    %754 = vmatpush1.msra.mxu0 0.0
    %755 = vmatprep.subr.mxu0 0.0
    %756 = vmatpush1.msra.mxu0 0.0
    %757 = vmatprep.subr.mxu0 0.0
    %758 = vmatpush1.msra.mxu0 0.0
    %759 = vmatprep.subr.mxu0 0.0
    %760 = vmatpush1.msra.mxu0 0.0
    %761 = vmatprep.subr.mxu0 0.0
    %762 = vmatpush1.msra.mxu0 0.0
    %763 = vmatprep.subr.mxu0 0.0
    %764 = vmatpush1.msra.mxu0 0.0
    %765 = vmatprep.subr.mxu0 0.0
    %766 = vmatpush1.msra.mxu0 0.0
    %767 = vmatprep.subr.mxu0 0.0
    %768 = vmatpush1.msra.mxu0 0.0
    %769 = vmatprep.subr.mxu0 0.0
    %770 = vmatpush1.msra.mxu0 0.0
    %771 = vmatprep.mubr.f32.mxu0 0.0
    %772 = vmatmul.mubr.f32.gmra.mrb[0].mxu0 0.0
    %v773 = vpop.f32.mrb[0].mxu0
    %v774 = vadd.f32 0.0, %v773
    %v775 = vpop.f32.mrb[0].mxu0
    %v776 = vadd.f32 0.0, %v775
    %777 = vmatprep.mubr.f32.mxu0 0.0
    %778 = vmatmul.mubr.f32.gmra.mrb[0].mxu0 0.0
    %v779 = vpop.f32.mrb[0].mxu0
    %v780 = vadd.f32 0.0, %v779
    %v781 = vpop.f32.mrb[0].mxu0
    %v782 = vadd.f32 0.0, %v781
    %783 = vdwg.mxu0
    %v784 = vadd.f32 %v558, %v697
    %v785 = vadd.f32 %v559, %v699
    %v786 = vadd.f32 %v560, %v774
    %v787 = vadd.f32 %v561, %v776
    %v788 = vadd.f32 %v562, %v703
    %v789 = vadd.f32 %v563, %v705
    %v790 = vadd.f32 %v564, %v780
    %v791 = vadd.f32 %v565, %v782
    %v792 = vxor.u32 %v784, 2147483648
    %v793 = vxor.u32 %v785, 2147483648
    %v794 = vxor.u32 %v786, 2147483648
    %v795 = vxor.u32 %v788, 2147483648
    %v796 = vxor.u32 %v789, 2147483648
    %v797 = vxor.u32 %v790, 2147483648
    %v798 = vmul.f32 %v792, 1.442695
    %v799 = vpow.pop %v798
    %v800 = vmul.f32 %v793, 1.442695
    %v801 = vpow.pop %v800
    %v802 = vmul.f32 %v794, 1.442695
    %v803 = vpow.pop %v802
    %v804 = vmul.f32 %v795, 1.442695
    %v805 = vpow.pop %v804
    %v806 = vmul.f32 %v796, 1.442695
    %v807 = vpow.pop %v806
    %v808 = vmul.f32 %v797, 1.442695
    %v809 = vpow.pop %v808
    %v810 = vadd.f32 %v799, 1.0
    %v811 = vadd.f32 %v801, 1.0
    %v812 = vadd.f32 %v803, 1.0
    %v813 = vadd.f32 %v805, 1.0
    %v814 = vadd.f32 %v807, 1.0
    %v815 = vadd.f32 %v809, 1.0
    %v816 = vrcp.pop %v810
    %v817 = vmul.f32 1.0, %v816
    %v818 = vrcp.pop %v811
    %v819 = vmul.f32 1.0, %v818
    %v820 = vrcp.pop %v812
    %v821 = vmul.f32 1.0, %v820
    %v822 = vrcp.pop %v813
    %v823 = vmul.f32 1.0, %v822
    %v824 = vrcp.pop %v814
    %v825 = vmul.f32 1.0, %v824
    %v826 = vrcp.pop %v815
    %v827 = vmul.f32 1.0, %v826
    %v828 = vtanh.pop %v787
    %v829 = vtanh.pop %v791
    %v830 = vmul.f32 %v819, 0.0
    %v831 = vmul.f32 %v825, 0.0
    %v832 = vmul.f32 %v817, %v828
    %v833 = vmul.f32 %v823, %v829
    %v834 = vadd.f32 %v830, %v832
    %v835 = vadd.f32 %v831, %v833
    %v836 = vtanh.pop %v834
    %v837 = vtanh.pop %v835
    %v838 = vmul.f32 %v821, %v836
    %v839 = vmul.f32 %v827, %v837
    %840 = vst [vmem:[#allocation5] sm:$0xff] %v838
    %841 = vst [vmem:[#allocation5 + $0x8] sm:$0xff] %v839
    %s842 = scalar_lea.vmem [#allocation2], 64
    %v843 = vld [vmem:[%s842] sm:$0xff]
    %v844 = vld [vmem:[%s842 + $0x8] sm:$0xff]
    %v845 = vld [vmem:[%s842 + $0x10] sm:$0xff]
    %v846 = vld [vmem:[%s842 + $0x18] sm:$0xff]
    %v847 = vld [vmem:[%s842 + $0x20] sm:$0xff]
    %v848 = vld [vmem:[%s842 + $0x28] sm:$0xff]
    %v849 = vld [vmem:[%s842 + $0x30] sm:$0xff]
    %v850 = vld [vmem:[%s842 + $0x38] sm:$0xff]
    %v851 = vld [vmem:[#allocation3] sm:$0xff]
    %v852 = vld [vmem:[#allocation3 + $0x8] sm:$0xff]
    %v853 = vld [vmem:[#allocation3 + $0x10] sm:$0xff]
    %v854 = vld [vmem:[#allocation3 + $0x18] sm:$0xff]
    %v855 = vld [vmem:[#allocation3 + $0x20] sm:$0xff]
    %v856 = vld [vmem:[#allocation3 + $0x28] sm:$0xff]
    %v857 = vld [vmem:[#allocation3 + $0x30] sm:$0xff]
    %v858 = vld [vmem:[#allocation3 + $0x38] sm:$0xff]
    %v859 = vld [vmem:[#allocation3 + $0x40] sm:$0xff]
    %v860 = vld [vmem:[#allocation3 + $0x48] sm:$0xff]
    %v861 = vld [vmem:[#allocation3 + $0x50] sm:$0xff]
    %v862 = vld [vmem:[#allocation3 + $0x58] sm:$0xff]
    %v863 = vld [vmem:[#allocation3 + $0x60] sm:$0xff]
    %v864 = vld [vmem:[#allocation3 + $0x68] sm:$0xff]
    %v865 = vld [vmem:[#allocation3 + $0x70] sm:$0xff]
    %v866 = vld [vmem:[#allocation3 + $0x78] sm:$0xff]
    %v867 = vld [vmem:[#allocation3 + $0x80] sm:$0xff]
    %v868 = vld [vmem:[#allocation3 + $0x88] sm:$0xff]
    %v869 = vld [vmem:[#allocation3 + $0x90] sm:$0xff]
    %v870 = vld [vmem:[#allocation3 + $0x98] sm:$0xff]
    %v871 = vld [vmem:[#allocation3 + $0xa0] sm:$0xff]
    %v872 = vld [vmem:[#allocation3 + $0xa8] sm:$0xff]
    %v873 = vld [vmem:[#allocation3 + $0xb0] sm:$0xff]
    %v874 = vld [vmem:[#allocation3 + $0xb8] sm:$0xff]
    %v875 = vld [vmem:[#allocation3 + $0xc0] sm:$0xff]
    %v876 = vld [vmem:[#allocation3 + $0xc8] sm:$0xff]
    %v877 = vld [vmem:[#allocation3 + $0xd0] sm:$0xff]
    %v878 = vld [vmem:[#allocation3 + $0xd8] sm:$0xff]
    %v879 = vld [vmem:[#allocation3 + $0xe0] sm:$0xff]
    %v880 = vld [vmem:[#allocation3 + $0xe8] sm:$0xff]
    %v881 = vld [vmem:[#allocation3 + $0xf0] sm:$0xff]
    %v882 = vld [vmem:[#allocation3 + $0xf8] sm:$0xff]
    %v883 = vld [vmem:[#allocation3 + $0x100] sm:$0xff]
    %v884 = vld [vmem:[#allocation3 + $0x108] sm:$0xff]
    %v885 = vld [vmem:[#allocation3 + $0x110] sm:$0xff]
    %v886 = vld [vmem:[#allocation3 + $0x118] sm:$0xff]
    %v887 = vld [vmem:[#allocation3 + $0x120] sm:$0xff]
    %v888 = vld [vmem:[#allocation3 + $0x128] sm:$0xff]
    %v889 = vld [vmem:[#allocation3 + $0x130] sm:$0xff]
    %v890 = vld [vmem:[#allocation3 + $0x138] sm:$0xff]
    %v891 = vld [vmem:[#allocation3 + $0x140] sm:$0xff]
    %v892 = vld [vmem:[#allocation3 + $0x148] sm:$0xff]
    %v893 = vld [vmem:[#allocation3 + $0x150] sm:$0xff]
    %v894 = vld [vmem:[#allocation3 + $0x158] sm:$0xff]
    %v895 = vld [vmem:[#allocation3 + $0x160] sm:$0xff]
    %v896 = vld [vmem:[#allocation3 + $0x168] sm:$0xff]
    %v897 = vld [vmem:[#allocation3 + $0x170] sm:$0xff]
    %v898 = vld [vmem:[#allocation3 + $0x178] sm:$0xff]
    %v899 = vld [vmem:[#allocation3 + $0x180] sm:$0xff]
    %v900 = vld [vmem:[#allocation3 + $0x188] sm:$0xff]
    %v901 = vld [vmem:[#allocation3 + $0x190] sm:$0xff]
    %v902 = vld [vmem:[#allocation3 + $0x198] sm:$0xff]
    %v903 = vld [vmem:[#allocation3 + $0x1a0] sm:$0xff]
    %v904 = vld [vmem:[#allocation3 + $0x1a8] sm:$0xff]
    %v905 = vld [vmem:[#allocation3 + $0x1b0] sm:$0xff]
    %v906 = vld [vmem:[#allocation3 + $0x1b8] sm:$0xff]
    %v907 = vld [vmem:[#allocation3 + $0x1c0] sm:$0xff]
    %v908 = vld [vmem:[#allocation3 + $0x1c8] sm:$0xff]
    %v909 = vld [vmem:[#allocation3 + $0x1d0] sm:$0xff]
    %v910 = vld [vmem:[#allocation3 + $0x1d8] sm:$0xff]
    %v911 = vld [vmem:[#allocation3 + $0x1e0] sm:$0xff]
    %v912 = vld [vmem:[#allocation3 + $0x1e8] sm:$0xff]
    %v913 = vld [vmem:[#allocation3 + $0x1f0] sm:$0xff]
    %v914 = vld [vmem:[#allocation3 + $0x1f8] sm:$0xff]
    %915 = vmatprep.subr.mxu0 %v852
    %916 = vmatpush1.msra.mxu0 %v851
    %917 = vmatprep.subr.mxu0 %v856
    %918 = vmatpush1.msra.mxu0 %v855
    %919 = vmatprep.subr.mxu0 %v860
    %920 = vmatpush1.msra.mxu0 %v859
    %921 = vmatprep.subr.mxu0 %v864
    %922 = vmatpush1.msra.mxu0 %v863
    %923 = vmatprep.subr.mxu0 %v868
    %924 = vmatpush1.msra.mxu0 %v867
    %925 = vmatprep.subr.mxu0 %v872
    %926 = vmatpush1.msra.mxu0 %v871
    %927 = vmatprep.subr.mxu0 %v876
    %928 = vmatpush1.msra.mxu0 %v875
    %929 = vmatprep.subr.mxu0 %v880
    %930 = vmatpush1.msra.mxu0 %v879
    %931 = vmatprep.subr.mxu0 %v884
    %932 = vmatpush1.msra.mxu0 %v883
    %933 = vmatprep.subr.mxu0 %v888
    %934 = vmatpush1.msra.mxu0 %v887
    %935 = vmatprep.subr.mxu0 %v892
    %936 = vmatpush1.msra.mxu0 %v891
    %937 = vmatprep.subr.mxu0 %v896
    %938 = vmatpush1.msra.mxu0 %v895
    %939 = vmatprep.subr.mxu0 %v900
    %940 = vmatpush1.msra.mxu0 %v899
    %941 = vmatprep.subr.mxu0 %v904
    %942 = vmatpush1.msra.mxu0 %v903
    %943 = vmatprep.subr.mxu0 %v908
    %944 = vmatpush1.msra.mxu0 %v907
    %945 = vmatprep.subr.mxu0 %v912
    %946 = vmatpush1.msra.mxu0 %v911
    %947 = vmatprep.subr.mxu0 0.0
    %948 = vmatpush1.msra.mxu0 0.0
    %949 = vmatprep.subr.mxu0 0.0
    %950 = vmatpush1.msra.mxu0 0.0
    %951 = vmatprep.subr.mxu0 0.0
    %952 = vmatpush1.msra.mxu0 0.0
    %953 = vmatprep.subr.mxu0 0.0
    %954 = vmatpush1.msra.mxu0 0.0
    %955 = vmatprep.subr.mxu0 0.0
    %956 = vmatpush1.msra.mxu0 0.0
    %957 = vmatprep.subr.mxu0 0.0
    %958 = vmatpush1.msra.mxu0 0.0
    %959 = vmatprep.subr.mxu0 0.0
    %960 = vmatpush1.msra.mxu0 0.0
    %961 = vmatprep.subr.mxu0 0.0
    %962 = vmatpush1.msra.mxu0 0.0
    %963 = vmatprep.subr.mxu0 0.0
    %964 = vmatpush1.msra.mxu0 0.0
    %965 = vmatprep.subr.mxu0 0.0
    %966 = vmatpush1.msra.mxu0 0.0
    %967 = vmatprep.subr.mxu0 0.0
    %968 = vmatpush1.msra.mxu0 0.0
    %969 = vmatprep.subr.mxu0 0.0
    %970 = vmatpush1.msra.mxu0 0.0
    %971 = vmatprep.subr.mxu0 0.0
    %972 = vmatpush1.msra.mxu0 0.0
    %973 = vmatprep.subr.mxu0 0.0
    %974 = vmatpush1.msra.mxu0 0.0
    %975 = vmatprep.subr.mxu0 0.0
    %976 = vmatpush1.msra.mxu0 0.0
    %977 = vmatprep.subr.mxu0 0.0
    %978 = vmatpush1.msra.mxu0 0.0
    %979 = vmatprep.mubr.f32.mxu0 0.0
    %980 = vmatmul.mubr.f32.gmra.mrb[0].mxu0 %v838
    %v981 = vpop.f32.mrb[0].mxu0
    %v982 = vadd.f32 0.0, %v981
    %v983 = vpop.f32.mrb[0].mxu0
    %v984 = vadd.f32 0.0, %v983
    %985 = vmatprep.mubr.f32.mxu0 0.0
    %986 = vmatmul.mubr.f32.gmra.mrb[0].mxu0 %v839
    %v987 = vpop.f32.mrb[0].mxu0
    %v988 = vadd.f32 0.0, %v987
    %v989 = vpop.f32.mrb[0].mxu0
    %v990 = vadd.f32 0.0, %v989
    %991 = vdwg.mxu0
    %992 = vmatprep.subr.mxu0 %v854
    %993 = vmatpush1.msra.mxu0 %v853
    %994 = vmatprep.subr.mxu0 %v858
    %995 = vmatpush1.msra.mxu0 %v857
    %996 = vmatprep.subr.mxu0 %v862
    %997 = vmatpush1.msra.mxu0 %v861
    %998 = vmatprep.subr.mxu0 %v866
    %999 = vmatpush1.msra.mxu0 %v865
    %1000 = vmatprep.subr.mxu0 %v870
    %1001 = vmatpush1.msra.mxu0 %v869
    %1002 = vmatprep.subr.mxu0 %v874
    %1003 = vmatpush1.msra.mxu0 %v873
    %1004 = vmatprep.subr.mxu0 %v878
    %1005 = vmatpush1.msra.mxu0 %v877
    %1006 = vmatprep.subr.mxu0 %v882
    %1007 = vmatpush1.msra.mxu0 %v881
    %1008 = vmatprep.subr.mxu0 %v886
    %1009 = vmatpush1.msra.mxu0 %v885
    %1010 = vmatprep.subr.mxu0 %v890
    %1011 = vmatpush1.msra.mxu0 %v889
    %1012 = vmatprep.subr.mxu0 %v894
    %1013 = vmatpush1.msra.mxu0 %v893
    %1014 = vmatprep.subr.mxu0 %v898
    %1015 = vmatpush1.msra.mxu0 %v897
    %1016 = vmatprep.subr.mxu0 %v902
    %1017 = vmatpush1.msra.mxu0 %v901
    %1018 = vmatprep.subr.mxu0 %v906
    %1019 = vmatpush1.msra.mxu0 %v905
    %1020 = vmatprep.subr.mxu0 %v910
    %1021 = vmatpush1.msra.mxu0 %v909
    %1022 = vmatprep.subr.mxu0 %v914
    %1023 = vmatpush1.msra.mxu0 %v913
    %1024 = vmatprep.subr.mxu0 0.0
    %1025 = vmatpush1.msra.mxu0 0.0
    %1026 = vmatprep.subr.mxu0 0.0
    %1027 = vmatpush1.msra.mxu0 0.0
    %1028 = vmatprep.subr.mxu0 0.0
    %1029 = vmatpush1.msra.mxu0 0.0
    %1030 = vmatprep.subr.mxu0 0.0
    %1031 = vmatpush1.msra.mxu0 0.0
    %1032 = vmatprep.subr.mxu0 0.0
    %1033 = vmatpush1.msra.mxu0 0.0
    %1034 = vmatprep.subr.mxu0 0.0
    %1035 = vmatpush1.msra.mxu0 0.0
    %1036 = vmatprep.subr.mxu0 0.0
    %1037 = vmatpush1.msra.mxu0 0.0
    %1038 = vmatprep.subr.mxu0 0.0
    %1039 = vmatpush1.msra.mxu0 0.0
    %1040 = vmatprep.subr.mxu0 0.0
    %1041 = vmatpush1.msra.mxu0 0.0
    %1042 = vmatprep.subr.mxu0 0.0
    %1043 = vmatpush1.msra.mxu0 0.0
    %1044 = vmatprep.subr.mxu0 0.0
    %1045 = vmatpush1.msra.mxu0 0.0
    %1046 = vmatprep.subr.mxu0 0.0
    %1047 = vmatpush1.msra.mxu0 0.0
    %1048 = vmatprep.subr.mxu0 0.0
    %1049 = vmatpush1.msra.mxu0 0.0
    %1050 = vmatprep.subr.mxu0 0.0
    %1051 = vmatpush1.msra.mxu0 0.0
    %1052 = vmatprep.subr.mxu0 0.0
    %1053 = vmatpush1.msra.mxu0 0.0
    %1054 = vmatprep.subr.mxu0 0.0
    %1055 = vmatpush1.msra.mxu0 0.0
    %1056 = vmatprep.mubr.f32.mxu0 0.0
    %1057 = vmatmul.mubr.f32.gmra.mrb[0].mxu0 %v838
    %v1058 = vpop.f32.mrb[0].mxu0
    %v1059 = vadd.f32 0.0, %v1058
    %v1060 = vpop.f32.mrb[0].mxu0
    %v1061 = vadd.f32 0.0, %v1060
    %1062 = vmatprep.mubr.f32.mxu0 0.0
    %1063 = vmatmul.mubr.f32.gmra.mrb[0].mxu0 %v839
    %v1064 = vpop.f32.mrb[0].mxu0
    %v1065 = vadd.f32 0.0, %v1064
    %v1066 = vpop.f32.mrb[0].mxu0
    %v1067 = vadd.f32 0.0, %v1066
    %1068 = vdwg.mxu0
    %v1069 = vadd.f32 %v843, %v982
    %v1070 = vadd.f32 %v844, %v984
    %v1071 = vadd.f32 %v845, %v1059
    %v1072 = vadd.f32 %v846, %v1061
    %v1073 = vadd.f32 %v847, %v988
    %v1074 = vadd.f32 %v848, %v990
    %v1075 = vadd.f32 %v849, %v1065
    %v1076 = vadd.f32 %v850, %v1067
    %v1077 = vxor.u32 %v1069, 2147483648
    %v1078 = vxor.u32 %v1070, 2147483648
    %v1079 = vxor.u32 %v1071, 2147483648
    %v1080 = vxor.u32 %v1073, 2147483648
    %v1081 = vxor.u32 %v1074, 2147483648
    %v1082 = vxor.u32 %v1075, 2147483648
    %v1083 = vmul.f32 %v1077, 1.442695
    %v1084 = vpow.pop %v1083
    %v1085 = vmul.f32 %v1078, 1.442695
    %v1086 = vpow.pop %v1085
    %v1087 = vmul.f32 %v1079, 1.442695
    %v1088 = vpow.pop %v1087
    %v1089 = vmul.f32 %v1080, 1.442695
    %v1090 = vpow.pop %v1089
    %v1091 = vmul.f32 %v1081, 1.442695
    %v1092 = vpow.pop %v1091
    %v1093 = vmul.f32 %v1082, 1.442695
    %v1094 = vpow.pop %v1093
    %v1095 = vadd.f32 %v1084, 1.0
    %v1096 = vadd.f32 %v1086, 1.0
    %v1097 = vadd.f32 %v1088, 1.0
    %v1098 = vadd.f32 %v1090, 1.0
    %v1099 = vadd.f32 %v1092, 1.0
    %v1100 = vadd.f32 %v1094, 1.0
    %v1101 = vrcp.pop %v1095
    %v1102 = vmul.f32 1.0, %v1101
    %v1103 = vrcp.pop %v1096
    %v1104 = vmul.f32 1.0, %v1103
    %v1105 = vrcp.pop %v1097
    %v1106 = vmul.f32 1.0, %v1105
    %v1107 = vrcp.pop %v1098
    %v1108 = vmul.f32 1.0, %v1107
    %v1109 = vrcp.pop %v1099
    %v1110 = vmul.f32 1.0, %v1109
    %v1111 = vrcp.pop %v1100
    %v1112 = vmul.f32 1.0, %v1111
    %v1113 = vtanh.pop %v1072
    %v1114 = vtanh.pop %v1076
    %v1115 = vmul.f32 %v1104, %v834
    %v1116 = vmul.f32 %v1110, %v835
    %v1117 = vmul.f32 %v1102, %v1113
    %v1118 = vmul.f32 %v1108, %v1114
    %v1119 = vadd.f32 %v1115, %v1117
    %v1120 = vadd.f32 %v1116, %v1118
    %v1121 = vtanh.pop %v1119
    %v1122 = vtanh.pop %v1120
    %v1123 = vmul.f32 %v1106, %v1121
    %v1124 = vmul.f32 %v1112, %v1122
    %s1125 = scalar_lea.vmem [#allocation5], 16
    %1126 = vst [vmem:[%s1125] sm:$0xff] %v1123
    %1127 = vst [vmem:[%s1125 + $0x8] sm:$0xff] %v1124
    %s1128 = scalar_lea.vmem [#allocation2], 128
    %v1129 = vld [vmem:[%s1128] sm:$0xff]
    %v1130 = vld [vmem:[%s1128 + $0x8] sm:$0xff]
    %v1131 = vld [vmem:[%s1128 + $0x10] sm:$0xff]
    %v1132 = vld [vmem:[%s1128 + $0x18] sm:$0xff]
    %v1133 = vld [vmem:[%s1128 + $0x20] sm:$0xff]
    %v1134 = vld [vmem:[%s1128 + $0x28] sm:$0xff]
    %v1135 = vld [vmem:[%s1128 + $0x30] sm:$0xff]
    %v1136 = vld [vmem:[%s1128 + $0x38] sm:$0xff]
    %v1137 = vld [vmem:[#allocation3] sm:$0xff]
    %v1138 = vld [vmem:[#allocation3 + $0x8] sm:$0xff]
    %v1139 = vld [vmem:[#allocation3 + $0x10] sm:$0xff]
    %v1140 = vld [vmem:[#allocation3 + $0x18] sm:$0xff]
    %v1141 = vld [vmem:[#allocation3 + $0x20] sm:$0xff]
    %v1142 = vld [vmem:[#allocation3 + $0x28] sm:$0xff]
    %v1143 = vld [vmem:[#allocation3 + $0x30] sm:$0xff]
    %v1144 = vld [vmem:[#allocation3 + $0x38] sm:$0xff]
    %v1145 = vld [vmem:[#allocation3 + $0x40] sm:$0xff]
    %v1146 = vld [vmem:[#allocation3 + $0x48] sm:$0xff]
    %v1147 = vld [vmem:[#allocation3 + $0x50] sm:$0xff]
    %v1148 = vld [vmem:[#allocation3 + $0x58] sm:$0xff]
    %v1149 = vld [vmem:[#allocation3 + $0x60] sm:$0xff]
    %v1150 = vld [vmem:[#allocation3 + $0x68] sm:$0xff]
    %v1151 = vld [vmem:[#allocation3 + $0x70] sm:$0xff]
    %v1152 = vld [vmem:[#allocation3 + $0x78] sm:$0xff]
    %v1153 = vld [vmem:[#allocation3 + $0x80] sm:$0xff]
    %v1154 = vld [vmem:[#allocation3 + $0x88] sm:$0xff]
    %v1155 = vld [vmem:[#allocation3 + $0x90] sm:$0xff]
    %v1156 = vld [vmem:[#allocation3 + $0x98] sm:$0xff]
    %v1157 = vld [vmem:[#allocation3 + $0xa0] sm:$0xff]
    %v1158 = vld [vmem:[#allocation3 + $0xa8] sm:$0xff]
    %v1159 = vld [vmem:[#allocation3 + $0xb0] sm:$0xff]
    %v1160 = vld [vmem:[#allocation3 + $0xb8] sm:$0xff]
    %v1161 = vld [vmem:[#allocation3 + $0xc0] sm:$0xff]
    %v1162 = vld [vmem:[#allocation3 + $0xc8] sm:$0xff]
    %v1163 = vld [vmem:[#allocation3 + $0xd0] sm:$0xff]
    %v1164 = vld [vmem:[#allocation3 + $0xd8] sm:$0xff]
    %v1165 = vld [vmem:[#allocation3 + $0xe0] sm:$0xff]
    %v1166 = vld [vmem:[#allocation3 + $0xe8] sm:$0xff]
    %v1167 = vld [vmem:[#allocation3 + $0xf0] sm:$0xff]
    %v1168 = vld [vmem:[#allocation3 + $0xf8] sm:$0xff]
    %v1169 = vld [vmem:[#allocation3 + $0x100] sm:$0xff]
    %v1170 = vld [vmem:[#allocation3 + $0x108] sm:$0xff]
    %v1171 = vld [vmem:[#allocation3 + $0x110] sm:$0xff]
    %v1172 = vld [vmem:[#allocation3 + $0x118] sm:$0xff]
    %v1173 = vld [vmem:[#allocation3 + $0x120] sm:$0xff]
    %v1174 = vld [vmem:[#allocation3 + $0x128] sm:$0xff]
    %v1175 = vld [vmem:[#allocation3 + $0x130] sm:$0xff]
    %v1176 = vld [vmem:[#allocation3 + $0x138] sm:$0xff]
    %v1177 = vld [vmem:[#allocation3 + $0x140] sm:$0xff]
    %v1178 = vld [vmem:[#allocation3 + $0x148] sm:$0xff]
    %v1179 = vld [vmem:[#allocation3 + $0x150] sm:$0xff]
    %v1180 = vld [vmem:[#allocation3 + $0x158] sm:$0xff]
    %v1181 = vld [vmem:[#allocation3 + $0x160] sm:$0xff]
    %v1182 = vld [vmem:[#allocation3 + $0x168] sm:$0xff]
    %v1183 = vld [vmem:[#allocation3 + $0x170] sm:$0xff]
    %v1184 = vld [vmem:[#allocation3 + $0x178] sm:$0xff]
    %v1185 = vld [vmem:[#allocation3 + $0x180] sm:$0xff]
    %v1186 = vld [vmem:[#allocation3 + $0x188] sm:$0xff]
    %v1187 = vld [vmem:[#allocation3 + $0x190] sm:$0xff]
    %v1188 = vld [vmem:[#allocation3 + $0x198] sm:$0xff]
    %v1189 = vld [vmem:[#allocation3 + $0x1a0] sm:$0xff]
    %v1190 = vld [vmem:[#allocation3 + $0x1a8] sm:$0xff]
    %v1191 = vld [vmem:[#allocation3 + $0x1b0] sm:$0xff]
    %v1192 = vld [vmem:[#allocation3 + $0x1b8] sm:$0xff]
    %v1193 = vld [vmem:[#allocation3 + $0x1c0] sm:$0xff]
    %v1194 = vld [vmem:[#allocation3 + $0x1c8] sm:$0xff]
    %v1195 = vld [vmem:[#allocation3 + $0x1d0] sm:$0xff]
    %v1196 = vld [vmem:[#allocation3 + $0x1d8] sm:$0xff]
    %v1197 = vld [vmem:[#allocation3 + $0x1e0] sm:$0xff]
    %v1198 = vld [vmem:[#allocation3 + $0x1e8] sm:$0xff]
    %v1199 = vld [vmem:[#allocation3 + $0x1f0] sm:$0xff]
    %v1200 = vld [vmem:[#allocation3 + $0x1f8] sm:$0xff]
    %1201 = vmatprep.subr.mxu0 %v1138
    %1202 = vmatpush1.msra.mxu0 %v1137
    %1203 = vmatprep.subr.mxu0 %v1142
    %1204 = vmatpush1.msra.mxu0 %v1141
    %1205 = vmatprep.subr.mxu0 %v1146
    %1206 = vmatpush1.msra.mxu0 %v1145
    %1207 = vmatprep.subr.mxu0 %v1150
    %1208 = vmatpush1.msra.mxu0 %v1149
    %1209 = vmatprep.subr.mxu0 %v1154
    %1210 = vmatpush1.msra.mxu0 %v1153
    %1211 = vmatprep.subr.mxu0 %v1158
    %1212 = vmatpush1.msra.mxu0 %v1157
    %1213 = vmatprep.subr.mxu0 %v1162
    %1214 = vmatpush1.msra.mxu0 %v1161
    %1215 = vmatprep.subr.mxu0 %v1166
    %1216 = vmatpush1.msra.mxu0 %v1165
    %1217 = vmatprep.subr.mxu0 %v1170
    %1218 = vmatpush1.msra.mxu0 %v1169
    %1219 = vmatprep.subr.mxu0 %v1174
    %1220 = vmatpush1.msra.mxu0 %v1173
    %1221 = vmatprep.subr.mxu0 %v1178
    %1222 = vmatpush1.msra.mxu0 %v1177
    %1223 = vmatprep.subr.mxu0 %v1182
    %1224 = vmatpush1.msra.mxu0 %v1181
    %1225 = vmatprep.subr.mxu0 %v1186
    %1226 = vmatpush1.msra.mxu0 %v1185
    %1227 = vmatprep.subr.mxu0 %v1190
    %1228 = vmatpush1.msra.mxu0 %v1189
    %1229 = vmatprep.subr.mxu0 %v1194
    %1230 = vmatpush1.msra.mxu0 %v1193
    %1231 = vmatprep.subr.mxu0 %v1198
    %1232 = vmatpush1.msra.mxu0 %v1197
    %1233 = vmatprep.subr.mxu0 0.0
    %1234 = vmatpush1.msra.mxu0 0.0
    %1235 = vmatprep.subr.mxu0 0.0
    %1236 = vmatpush1.msra.mxu0 0.0
    %1237 = vmatprep.subr.mxu0 0.0
    %1238 = vmatpush1.msra.mxu0 0.0
    %1239 = vmatprep.subr.mxu0 0.0
    %1240 = vmatpush1.msra.mxu0 0.0
    %1241 = vmatprep.subr.mxu0 0.0
    %1242 = vmatpush1.msra.mxu0 0.0
    %1243 = vmatprep.subr.mxu0 0.0
    %1244 = vmatpush1.msra.mxu0 0.0
    %1245 = vmatprep.subr.mxu0 0.0
    %1246 = vmatpush1.msra.mxu0 0.0
    %1247 = vmatprep.subr.mxu0 0.0
    %1248 = vmatpush1.msra.mxu0 0.0
    %1249 = vmatprep.subr.mxu0 0.0
    %1250 = vmatpush1.msra.mxu0 0.0
    %1251 = vmatprep.subr.mxu0 0.0
    %1252 = vmatpush1.msra.mxu0 0.0
    %1253 = vmatprep.subr.mxu0 0.0
    %1254 = vmatpush1.msra.mxu0 0.0
    %1255 = vmatprep.subr.mxu0 0.0
    %1256 = vmatpush1.msra.mxu0 0.0
    %1257 = vmatprep.subr.mxu0 0.0
    %1258 = vmatpush1.msra.mxu0 0.0
    %1259 = vmatprep.subr.mxu0 0.0
    %1260 = vmatpush1.msra.mxu0 0.0
    %1261 = vmatprep.subr.mxu0 0.0
    %1262 = vmatpush1.msra.mxu0 0.0
    %1263 = vmatprep.subr.mxu0 0.0
    %1264 = vmatpush1.msra.mxu0 0.0
    %1265 = vmatprep.mubr.f32.mxu0 0.0
    %1266 = vmatmul.mubr.f32.gmra.mrb[0].mxu0 %v1123
    %v1267 = vpop.f32.mrb[0].mxu0
    %v1268 = vadd.f32 0.0, %v1267
    %v1269 = vpop.f32.mrb[0].mxu0
    %v1270 = vadd.f32 0.0, %v1269
    %1271 = vmatprep.mubr.f32.mxu0 0.0
    %1272 = vmatmul.mubr.f32.gmra.mrb[0].mxu0 %v1124
    %v1273 = vpop.f32.mrb[0].mxu0
    %v1274 = vadd.f32 0.0, %v1273
    %v1275 = vpop.f32.mrb[0].mxu0
    %v1276 = vadd.f32 0.0, %v1275
    %1277 = vdwg.mxu0
    %1278 = vmatprep.subr.mxu0 %v1140
    %1279 = vmatpush1.msra.mxu0 %v1139
    %1280 = vmatprep.subr.mxu0 %v1144
    %1281 = vmatpush1.msra.mxu0 %v1143
    %1282 = vmatprep.subr.mxu0 %v1148
    %1283 = vmatpush1.msra.mxu0 %v1147
    %1284 = vmatprep.subr.mxu0 %v1152
    %1285 = vmatpush1.msra.mxu0 %v1151
    %1286 = vmatprep.subr.mxu0 %v1156
    %1287 = vmatpush1.msra.mxu0 %v1155
    %1288 = vmatprep.subr.mxu0 %v1160
    %1289 = vmatpush1.msra.mxu0 %v1159
    %1290 = vmatprep.subr.mxu0 %v1164
    %1291 = vmatpush1.msra.mxu0 %v1163
    %1292 = vmatprep.subr.mxu0 %v1168
    %1293 = vmatpush1.msra.mxu0 %v1167
    %1294 = vmatprep.subr.mxu0 %v1172
    %1295 = vmatpush1.msra.mxu0 %v1171
    %1296 = vmatprep.subr.mxu0 %v1176
    %1297 = vmatpush1.msra.mxu0 %v1175
    %1298 = vmatprep.subr.mxu0 %v1180
    %1299 = vmatpush1.msra.mxu0 %v1179
    %1300 = vmatprep.subr.mxu0 %v1184
    %1301 = vmatpush1.msra.mxu0 %v1183
    %1302 = vmatprep.subr.mxu0 %v1188
    %1303 = vmatpush1.msra.mxu0 %v1187
    %1304 = vmatprep.subr.mxu0 %v1192
    %1305 = vmatpush1.msra.mxu0 %v1191
    %1306 = vmatprep.subr.mxu0 %v1196
    %1307 = vmatpush1.msra.mxu0 %v1195
    %1308 = vmatprep.subr.mxu0 %v1200
    %1309 = vmatpush1.msra.mxu0 %v1199
    %1310 = vmatprep.subr.mxu0 0.0
    %1311 = vmatpush1.msra.mxu0 0.0
    %1312 = vmatprep.subr.mxu0 0.0
    %1313 = vmatpush1.msra.mxu0 0.0
    %1314 = vmatprep.subr.mxu0 0.0
    %1315 = vmatpush1.msra.mxu0 0.0
    %1316 = vmatprep.subr.mxu0 0.0
    %1317 = vmatpush1.msra.mxu0 0.0
    %1318 = vmatprep.subr.mxu0 0.0
    %1319 = vmatpush1.msra.mxu0 0.0
    %1320 = vmatprep.subr.mxu0 0.0
    %1321 = vmatpush1.msra.mxu0 0.0
    %1322 = vmatprep.subr.mxu0 0.0
    %1323 = vmatpush1.msra.mxu0 0.0
    %1324 = vmatprep.subr.mxu0 0.0
    %1325 = vmatpush1.msra.mxu0 0.0
    %1326 = vmatprep.subr.mxu0 0.0
    %1327 = vmatpush1.msra.mxu0 0.0
    %1328 = vmatprep.subr.mxu0 0.0
    %1329 = vmatpush1.msra.mxu0 0.0
    %1330 = vmatprep.subr.mxu0 0.0
    %1331 = vmatpush1.msra.mxu0 0.0
    %1332 = vmatprep.subr.mxu0 0.0
    %1333 = vmatpush1.msra.mxu0 0.0
    %1334 = vmatprep.subr.mxu0 0.0
    %1335 = vmatpush1.msra.mxu0 0.0
    %1336 = vmatprep.subr.mxu0 0.0
    %1337 = vmatpush1.msra.mxu0 0.0
    %1338 = vmatprep.subr.mxu0 0.0
    %1339 = vmatpush1.msra.mxu0 0.0
    %1340 = vmatprep.subr.mxu0 0.0
    %1341 = vmatpush1.msra.mxu0 0.0
    %1342 = vmatprep.mubr.f32.mxu0 0.0
    %1343 = vmatmul.mubr.f32.gmra.mrb[0].mxu0 %v1123
    %v1344 = vpop.f32.mrb[0].mxu0
    %v1345 = vadd.f32 0.0, %v1344
    %v1346 = vpop.f32.mrb[0].mxu0
    %v1347 = vadd.f32 0.0, %v1346
    %1348 = vmatprep.mubr.f32.mxu0 0.0
    %1349 = vmatmul.mubr.f32.gmra.mrb[0].mxu0 %v1124
    %v1350 = vpop.f32.mrb[0].mxu0
    %v1351 = vadd.f32 0.0, %v1350
    %v1352 = vpop.f32.mrb[0].mxu0
    %v1353 = vadd.f32 0.0, %v1352
    %1354 = vdwg.mxu0
    %v1355 = vadd.f32 %v1129, %v1268
    %v1356 = vadd.f32 %v1130, %v1270
    %v1357 = vadd.f32 %v1131, %v1345
    %v1358 = vadd.f32 %v1132, %v1347
    %v1359 = vadd.f32 %v1133, %v1274
    %v1360 = vadd.f32 %v1134, %v1276
    %v1361 = vadd.f32 %v1135, %v1351
    %v1362 = vadd.f32 %v1136, %v1353
    %v1363 = vxor.u32 %v1355, 2147483648
    %v1364 = vxor.u32 %v1356, 2147483648
    %v1365 = vxor.u32 %v1357, 2147483648
    %v1366 = vxor.u32 %v1359, 2147483648
    %v1367 = vxor.u32 %v1360, 2147483648
    %v1368 = vxor.u32 %v1361, 2147483648
    %v1369 = vmul.f32 %v1363, 1.442695
    %v1370 = vpow.pop %v1369
    %v1371 = vmul.f32 %v1364, 1.442695
    %v1372 = vpow.pop %v1371
    %v1373 = vmul.f32 %v1365, 1.442695
    %v1374 = vpow.pop %v1373
    %v1375 = vmul.f32 %v1366, 1.442695
    %v1376 = vpow.pop %v1375
    %v1377 = vmul.f32 %v1367, 1.442695
    %v1378 = vpow.pop %v1377
    %v1379 = vmul.f32 %v1368, 1.442695
    %v1380 = vpow.pop %v1379
    %v1381 = vadd.f32 %v1370, 1.0
    %v1382 = vadd.f32 %v1372, 1.0
    %v1383 = vadd.f32 %v1374, 1.0
    %v1384 = vadd.f32 %v1376, 1.0
    %v1385 = vadd.f32 %v1378, 1.0
    %v1386 = vadd.f32 %v1380, 1.0
    %v1387 = vrcp.pop %v1381
    %v1388 = vmul.f32 1.0, %v1387
    %v1389 = vrcp.pop %v1382
    %v1390 = vmul.f32 1.0, %v1389
    %v1391 = vrcp.pop %v1383
    %v1392 = vmul.f32 1.0, %v1391
    %v1393 = vrcp.pop %v1384
    %v1394 = vmul.f32 1.0, %v1393
    %v1395 = vrcp.pop %v1385
    %v1396 = vmul.f32 1.0, %v1395
    %v1397 = vrcp.pop %v1386
    %v1398 = vmul.f32 1.0, %v1397
    %v1399 = vtanh.pop %v1358
    %v1400 = vtanh.pop %v1362
    %v1401 = vmul.f32 %v1390, %v1119
    %v1402 = vmul.f32 %v1396, %v1120
    %v1403 = vmul.f32 %v1388, %v1399
    %v1404 = vmul.f32 %v1394, %v1400
    %v1405 = vadd.f32 %v1401, %v1403
    %v1406 = vadd.f32 %v1402, %v1404
    %v1407 = vtanh.pop %v1405
    %v1408 = vtanh.pop %v1406
    %v1409 = vmul.f32 %v1392, %v1407
    %v1410 = vmul.f32 %v1398, %v1408
    %s1411 = scalar_lea.vmem [#allocation5], 32
    %1412 = vst [vmem:[%s1411] sm:$0xff] %v1409
    %1413 = vst [vmem:[%s1411 + $0x8] sm:$0xff] %v1410
    %s1414 = scalar_lea.vmem [#allocation2], 192
    %v1415 = vld [vmem:[%s1414] sm:$0xff]
    %v1416 = vld [vmem:[%s1414 + $0x8] sm:$0xff]
    %v1417 = vld [vmem:[%s1414 + $0x10] sm:$0xff]
    %v1418 = vld [vmem:[%s1414 + $0x18] sm:$0xff]
    %v1419 = vld [vmem:[%s1414 + $0x20] sm:$0xff]
    %v1420 = vld [vmem:[%s1414 + $0x28] sm:$0xff]
    %v1421 = vld [vmem:[%s1414 + $0x30] sm:$0xff]
    %v1422 = vld [vmem:[%s1414 + $0x38] sm:$0xff]
    %v1423 = vld [vmem:[#allocation3] sm:$0xff]
    %v1424 = vld [vmem:[#allocation3 + $0x8] sm:$0xff]
    %v1425 = vld [vmem:[#allocation3 + $0x10] sm:$0xff]
    %v1426 = vld [vmem:[#allocation3 + $0x18] sm:$0xff]
    %v1427 = vld [vmem:[#allocation3 + $0x20] sm:$0xff]
    %v1428 = vld [vmem:[#allocation3 + $0x28] sm:$0xff]
    %v1429 = vld [vmem:[#allocation3 + $0x30] sm:$0xff]
    %v1430 = vld [vmem:[#allocation3 + $0x38] sm:$0xff]
    %v1431 = vld [vmem:[#allocation3 + $0x40] sm:$0xff]
    %v1432 = vld [vmem:[#allocation3 + $0x48] sm:$0xff]
    %v1433 = vld [vmem:[#allocation3 + $0x50] sm:$0xff]
    %v1434 = vld [vmem:[#allocation3 + $0x58] sm:$0xff]
    %v1435 = vld [vmem:[#allocation3 + $0x60] sm:$0xff]
    %v1436 = vld [vmem:[#allocation3 + $0x68] sm:$0xff]
    %v1437 = vld [vmem:[#allocation3 + $0x70] sm:$0xff]
    %v1438 = vld [vmem:[#allocation3 + $0x78] sm:$0xff]
    %v1439 = vld [vmem:[#allocation3 + $0x80] sm:$0xff]
    %v1440 = vld [vmem:[#allocation3 + $0x88] sm:$0xff]
    %v1441 = vld [vmem:[#allocation3 + $0x90] sm:$0xff]
    %v1442 = vld [vmem:[#allocation3 + $0x98] sm:$0xff]
    %v1443 = vld [vmem:[#allocation3 + $0xa0] sm:$0xff]
    %v1444 = vld [vmem:[#allocation3 + $0xa8] sm:$0xff]
    %v1445 = vld [vmem:[#allocation3 + $0xb0] sm:$0xff]
    %v1446 = vld [vmem:[#allocation3 + $0xb8] sm:$0xff]
    %v1447 = vld [vmem:[#allocation3 + $0xc0] sm:$0xff]
    %v1448 = vld [vmem:[#allocation3 + $0xc8] sm:$0xff]
    %v1449 = vld [vmem:[#allocation3 + $0xd0] sm:$0xff]
    %v1450 = vld [vmem:[#allocation3 + $0xd8] sm:$0xff]
    %v1451 = vld [vmem:[#allocation3 + $0xe0] sm:$0xff]
    %v1452 = vld [vmem:[#allocation3 + $0xe8] sm:$0xff]
    %v1453 = vld [vmem:[#allocation3 + $0xf0] sm:$0xff]
    %v1454 = vld [vmem:[#allocation3 + $0xf8] sm:$0xff]
    %v1455 = vld [vmem:[#allocation3 + $0x100] sm:$0xff]
    %v1456 = vld [vmem:[#allocation3 + $0x108] sm:$0xff]
    %v1457 = vld [vmem:[#allocation3 + $0x110] sm:$0xff]
    %v1458 = vld [vmem:[#allocation3 + $0x118] sm:$0xff]
    %v1459 = vld [vmem:[#allocation3 + $0x120] sm:$0xff]
    %v1460 = vld [vmem:[#allocation3 + $0x128] sm:$0xff]
    %v1461 = vld [vmem:[#allocation3 + $0x130] sm:$0xff]
    %v1462 = vld [vmem:[#allocation3 + $0x138] sm:$0xff]
    %v1463 = vld [vmem:[#allocation3 + $0x140] sm:$0xff]
    %v1464 = vld [vmem:[#allocation3 + $0x148] sm:$0xff]
    %v1465 = vld [vmem:[#allocation3 + $0x150] sm:$0xff]
    %v1466 = vld [vmem:[#allocation3 + $0x158] sm:$0xff]
    %v1467 = vld [vmem:[#allocation3 + $0x160] sm:$0xff]
    %v1468 = vld [vmem:[#allocation3 + $0x168] sm:$0xff]
    %v1469 = vld [vmem:[#allocation3 + $0x170] sm:$0xff]
    %v1470 = vld [vmem:[#allocation3 + $0x178] sm:$0xff]
    %v1471 = vld [vmem:[#allocation3 + $0x180] sm:$0xff]
    %v1472 = vld [vmem:[#allocation3 + $0x188] sm:$0xff]
    %v1473 = vld [vmem:[#allocation3 + $0x190] sm:$0xff]
    %v1474 = vld [vmem:[#allocation3 + $0x198] sm:$0xff]
    %v1475 = vld [vmem:[#allocation3 + $0x1a0] sm:$0xff]
    %v1476 = vld [vmem:[#allocation3 + $0x1a8] sm:$0xff]
    %v1477 = vld [vmem:[#allocation3 + $0x1b0] sm:$0xff]
    %v1478 = vld [vmem:[#allocation3 + $0x1b8] sm:$0xff]
    %v1479 = vld [vmem:[#allocation3 + $0x1c0] sm:$0xff]
    %v1480 = vld [vmem:[#allocation3 + $0x1c8] sm:$0xff]
    %v1481 = vld [vmem:[#allocation3 + $0x1d0] sm:$0xff]
    %v1482 = vld [vmem:[#allocation3 + $0x1d8] sm:$0xff]
    %v1483 = vld [vmem:[#allocation3 + $0x1e0] sm:$0xff]
    %v1484 = vld [vmem:[#allocation3 + $0x1e8] sm:$0xff]
    %v1485 = vld [vmem:[#allocation3 + $0x1f0] sm:$0xff]
    %v1486 = vld [vmem:[#allocation3 + $0x1f8] sm:$0xff]
    %1487 = vmatprep.subr.mxu0 %v1424
    %1488 = vmatpush1.msra.mxu0 %v1423
    %1489 = vmatprep.subr.mxu0 %v1428
    %1490 = vmatpush1.msra.mxu0 %v1427
    %1491 = vmatprep.subr.mxu0 %v1432
    %1492 = vmatpush1.msra.mxu0 %v1431
    %1493 = vmatprep.subr.mxu0 %v1436
    %1494 = vmatpush1.msra.mxu0 %v1435
    %1495 = vmatprep.subr.mxu0 %v1440
    %1496 = vmatpush1.msra.mxu0 %v1439
    %1497 = vmatprep.subr.mxu0 %v1444
    %1498 = vmatpush1.msra.mxu0 %v1443
    %1499 = vmatprep.subr.mxu0 %v1448
    %1500 = vmatpush1.msra.mxu0 %v1447
    %1501 = vmatprep.subr.mxu0 %v1452
    %1502 = vmatpush1.msra.mxu0 %v1451
    %1503 = vmatprep.subr.mxu0 %v1456
    %1504 = vmatpush1.msra.mxu0 %v1455
    %1505 = vmatprep.subr.mxu0 %v1460
    %1506 = vmatpush1.msra.mxu0 %v1459
    %1507 = vmatprep.subr.mxu0 %v1464
    %1508 = vmatpush1.msra.mxu0 %v1463
    %1509 = vmatprep.subr.mxu0 %v1468
    %1510 = vmatpush1.msra.mxu0 %v1467
    %1511 = vmatprep.subr.mxu0 %v1472
    %1512 = vmatpush1.msra.mxu0 %v1471
    %1513 = vmatprep.subr.mxu0 %v1476
    %1514 = vmatpush1.msra.mxu0 %v1475
    %1515 = vmatprep.subr.mxu0 %v1480
    %1516 = vmatpush1.msra.mxu0 %v1479
    %1517 = vmatprep.subr.mxu0 %v1484
    %1518 = vmatpush1.msra.mxu0 %v1483
    %1519 = vmatprep.subr.mxu0 0.0
    %1520 = vmatpush1.msra.mxu0 0.0
    %1521 = vmatprep.subr.mxu0 0.0
    %1522 = vmatpush1.msra.mxu0 0.0
    %1523 = vmatprep.subr.mxu0 0.0
    %1524 = vmatpush1.msra.mxu0 0.0
    %1525 = vmatprep.subr.mxu0 0.0
    %1526 = vmatpush1.msra.mxu0 0.0
    %1527 = vmatprep.subr.mxu0 0.0
    %1528 = vmatpush1.msra.mxu0 0.0
    %1529 = vmatprep.subr.mxu0 0.0
    %1530 = vmatpush1.msra.mxu0 0.0
    %1531 = vmatprep.subr.mxu0 0.0
    %1532 = vmatpush1.msra.mxu0 0.0
    %1533 = vmatprep.subr.mxu0 0.0
    %1534 = vmatpush1.msra.mxu0 0.0
    %1535 = vmatprep.subr.mxu0 0.0
    %1536 = vmatpush1.msra.mxu0 0.0
    %1537 = vmatprep.subr.mxu0 0.0
    %1538 = vmatpush1.msra.mxu0 0.0
    %1539 = vmatprep.subr.mxu0 0.0
    %1540 = vmatpush1.msra.mxu0 0.0
    %1541 = vmatprep.subr.mxu0 0.0
    %1542 = vmatpush1.msra.mxu0 0.0
    %1543 = vmatprep.subr.mxu0 0.0
    %1544 = vmatpush1.msra.mxu0 0.0
    %1545 = vmatprep.subr.mxu0 0.0
    %1546 = vmatpush1.msra.mxu0 0.0
    %1547 = vmatprep.subr.mxu0 0.0
    %1548 = vmatpush1.msra.mxu0 0.0
    %1549 = vmatprep.subr.mxu0 0.0
    %1550 = vmatpush1.msra.mxu0 0.0
    %1551 = vmatprep.mubr.f32.mxu0 0.0
    %1552 = vmatmul.mubr.f32.gmra.mrb[0].mxu0 %v1409
    %v1553 = vpop.f32.mrb[0].mxu0
    %v1554 = vadd.f32 0.0, %v1553
    %v1555 = vpop.f32.mrb[0].mxu0
    %v1556 = vadd.f32 0.0, %v1555
    %1557 = vmatprep.mubr.f32.mxu0 0.0
    %1558 = vmatmul.mubr.f32.gmra.mrb[0].mxu0 %v1410
    %v1559 = vpop.f32.mrb[0].mxu0
    %v1560 = vadd.f32 0.0, %v1559
    %v1561 = vpop.f32.mrb[0].mxu0
    %v1562 = vadd.f32 0.0, %v1561
    %1563 = vdwg.mxu0
    %1564 = vmatprep.subr.mxu0 %v1426
    %1565 = vmatpush1.msra.mxu0 %v1425
    %1566 = vmatprep.subr.mxu0 %v1430
    %1567 = vmatpush1.msra.mxu0 %v1429
    %1568 = vmatprep.subr.mxu0 %v1434
    %1569 = vmatpush1.msra.mxu0 %v1433
    %1570 = vmatprep.subr.mxu0 %v1438
    %1571 = vmatpush1.msra.mxu0 %v1437
    %1572 = vmatprep.subr.mxu0 %v1442
    %1573 = vmatpush1.msra.mxu0 %v1441
    %1574 = vmatprep.subr.mxu0 %v1446
    %1575 = vmatpush1.msra.mxu0 %v1445
    %1576 = vmatprep.subr.mxu0 %v1450
    %1577 = vmatpush1.msra.mxu0 %v1449
    %1578 = vmatprep.subr.mxu0 %v1454
    %1579 = vmatpush1.msra.mxu0 %v1453
    %1580 = vmatprep.subr.mxu0 %v1458
    %1581 = vmatpush1.msra.mxu0 %v1457
    %1582 = vmatprep.subr.mxu0 %v1462
    %1583 = vmatpush1.msra.mxu0 %v1461
    %1584 = vmatprep.subr.mxu0 %v1466
    %1585 = vmatpush1.msra.mxu0 %v1465
    %1586 = vmatprep.subr.mxu0 %v1470
    %1587 = vmatpush1.msra.mxu0 %v1469
    %1588 = vmatprep.subr.mxu0 %v1474
    %1589 = vmatpush1.msra.mxu0 %v1473
    %1590 = vmatprep.subr.mxu0 %v1478
    %1591 = vmatpush1.msra.mxu0 %v1477
    %1592 = vmatprep.subr.mxu0 %v1482
    %1593 = vmatpush1.msra.mxu0 %v1481
    %1594 = vmatprep.subr.mxu0 %v1486
    %1595 = vmatpush1.msra.mxu0 %v1485
    %1596 = vmatprep.subr.mxu0 0.0
    %1597 = vmatpush1.msra.mxu0 0.0
    %1598 = vmatprep.subr.mxu0 0.0
    %1599 = vmatpush1.msra.mxu0 0.0
    %1600 = vmatprep.subr.mxu0 0.0
    %1601 = vmatpush1.msra.mxu0 0.0
    %1602 = vmatprep.subr.mxu0 0.0
    %1603 = vmatpush1.msra.mxu0 0.0
    %1604 = vmatprep.subr.mxu0 0.0
    %1605 = vmatpush1.msra.mxu0 0.0
    %1606 = vmatprep.subr.mxu0 0.0
    %1607 = vmatpush1.msra.mxu0 0.0
    %1608 = vmatprep.subr.mxu0 0.0
    %1609 = vmatpush1.msra.mxu0 0.0
    %1610 = vmatprep.subr.mxu0 0.0
    %1611 = vmatpush1.msra.mxu0 0.0
    %1612 = vmatprep.subr.mxu0 0.0
    %1613 = vmatpush1.msra.mxu0 0.0
    %1614 = vmatprep.subr.mxu0 0.0
    %1615 = vmatpush1.msra.mxu0 0.0
    %1616 = vmatprep.subr.mxu0 0.0
    %1617 = vmatpush1.msra.mxu0 0.0
    %1618 = vmatprep.subr.mxu0 0.0
    %1619 = vmatpush1.msra.mxu0 0.0
    %1620 = vmatprep.subr.mxu0 0.0
    %1621 = vmatpush1.msra.mxu0 0.0
    %1622 = vmatprep.subr.mxu0 0.0
    %1623 = vmatpush1.msra.mxu0 0.0
    %1624 = vmatprep.subr.mxu0 0.0
    %1625 = vmatpush1.msra.mxu0 0.0
    %1626 = vmatprep.subr.mxu0 0.0
    %1627 = vmatpush1.msra.mxu0 0.0
    %1628 = vmatprep.mubr.f32.mxu0 0.0
    %1629 = vmatmul.mubr.f32.gmra.mrb[0].mxu0 %v1409
    %v1630 = vpop.f32.mrb[0].mxu0
    %v1631 = vadd.f32 0.0, %v1630
    %v1632 = vpop.f32.mrb[0].mxu0
    %v1633 = vadd.f32 0.0, %v1632
    %1634 = vmatprep.mubr.f32.mxu0 0.0
    %1635 = vmatmul.mubr.f32.gmra.mrb[0].mxu0 %v1410
    %v1636 = vpop.f32.mrb[0].mxu0
    %v1637 = vadd.f32 0.0, %v1636
    %v1638 = vpop.f32.mrb[0].mxu0
    %v1639 = vadd.f32 0.0, %v1638
    %1640 = vdwg.mxu0
    %v1641 = vadd.f32 %v1415, %v1554
    %v1642 = vadd.f32 %v1416, %v1556
    %v1643 = vadd.f32 %v1417, %v1631
    %v1644 = vadd.f32 %v1418, %v1633
    %v1645 = vadd.f32 %v1419, %v1560
    %v1646 = vadd.f32 %v1420, %v1562
    %v1647 = vadd.f32 %v1421, %v1637
    %v1648 = vadd.f32 %v1422, %v1639
    %v1649 = vxor.u32 %v1641, 2147483648
    %v1650 = vxor.u32 %v1642, 2147483648
    %v1651 = vxor.u32 %v1643, 2147483648
    %v1652 = vxor.u32 %v1645, 2147483648
    %v1653 = vxor.u32 %v1646, 2147483648
    %v1654 = vxor.u32 %v1647, 2147483648
    %v1655 = vmul.f32 %v1649, 1.442695
    %v1656 = vpow.pop %v1655
    %v1657 = vmul.f32 %v1650, 1.442695
    %v1658 = vpow.pop %v1657
    %v1659 = vmul.f32 %v1651, 1.442695
    %v1660 = vpow.pop %v1659
    %v1661 = vmul.f32 %v1652, 1.442695
    %v1662 = vpow.pop %v1661
    %v1663 = vmul.f32 %v1653, 1.442695
    %v1664 = vpow.pop %v1663
    %v1665 = vmul.f32 %v1654, 1.442695
    %v1666 = vpow.pop %v1665
    %v1667 = vadd.f32 %v1656, 1.0
    %v1668 = vadd.f32 %v1658, 1.0
    %v1669 = vadd.f32 %v1660, 1.0
    %v1670 = vadd.f32 %v1662, 1.0
    %v1671 = vadd.f32 %v1664, 1.0
    %v1672 = vadd.f32 %v1666, 1.0
    %v1673 = vrcp.pop %v1667
    %v1674 = vmul.f32 1.0, %v1673
    %v1675 = vrcp.pop %v1668
    %v1676 = vmul.f32 1.0, %v1675
    %v1677 = vrcp.pop %v1669
    %v1678 = vmul.f32 1.0, %v1677
    %v1679 = vrcp.pop %v1670
    %v1680 = vmul.f32 1.0, %v1679
    %v1681 = vrcp.pop %v1671
    %v1682 = vmul.f32 1.0, %v1681
    %v1683 = vrcp.pop %v1672
    %v1684 = vmul.f32 1.0, %v1683
    %v1685 = vtanh.pop %v1644
    %v1686 = vtanh.pop %v1648
    %v1687 = vmul.f32 %v1676, %v1405
    %v1688 = vmul.f32 %v1682, %v1406
    %v1689 = vmul.f32 %v1674, %v1685
    %v1690 = vmul.f32 %v1680, %v1686
    %v1691 = vadd.f32 %v1687, %v1689
    %v1692 = vadd.f32 %v1688, %v1690
    %v1693 = vtanh.pop %v1691
    %v1694 = vtanh.pop %v1692
    %v1695 = vmul.f32 %v1678, %v1693
    %v1696 = vmul.f32 %v1684, %v1694
    %s1697 = scalar_lea.vmem [#allocation5], 48
    %1698 = vst [vmem:[%s1697] sm:$0xff] %v1695
    %1699 = vst [vmem:[%s1697 + $0x8] sm:$0xff] %v1696
    %s1700 = scalar_lea.vmem [#allocation2], 256
    %v1701 = vld [vmem:[%s1700] sm:$0xff]
    %v1702 = vld [vmem:[%s1700 + $0x8] sm:$0xff]
    %v1703 = vld [vmem:[%s1700 + $0x10] sm:$0xff]
    %v1704 = vld [vmem:[%s1700 + $0x18] sm:$0xff]
    %v1705 = vld [vmem:[%s1700 + $0x20] sm:$0xff]
    %v1706 = vld [vmem:[%s1700 + $0x28] sm:$0xff]
    %v1707 = vld [vmem:[%s1700 + $0x30] sm:$0xff]
    %v1708 = vld [vmem:[%s1700 + $0x38] sm:$0xff]
    %v1709 = vld [vmem:[#allocation3] sm:$0xff]
    %v1710 = vld [vmem:[#allocation3 + $0x8] sm:$0xff]
    %v1711 = vld [vmem:[#allocation3 + $0x10] sm:$0xff]
    %v1712 = vld [vmem:[#allocation3 + $0x18] sm:$0xff]
    %v1713 = vld [vmem:[#allocation3 + $0x20] sm:$0xff]
    %v1714 = vld [vmem:[#allocation3 + $0x28] sm:$0xff]
    %v1715 = vld [vmem:[#allocation3 + $0x30] sm:$0xff]
    %v1716 = vld [vmem:[#allocation3 + $0x38] sm:$0xff]
    %v1717 = vld [vmem:[#allocation3 + $0x40] sm:$0xff]
    %v1718 = vld [vmem:[#allocation3 + $0x48] sm:$0xff]
    %v1719 = vld [vmem:[#allocation3 + $0x50] sm:$0xff]
    %v1720 = vld [vmem:[#allocation3 + $0x58] sm:$0xff]
    %v1721 = vld [vmem:[#allocation3 + $0x60] sm:$0xff]
    %v1722 = vld [vmem:[#allocation3 + $0x68] sm:$0xff]
    %v1723 = vld [vmem:[#allocation3 + $0x70] sm:$0xff]
    %v1724 = vld [vmem:[#allocation3 + $0x78] sm:$0xff]
    %v1725 = vld [vmem:[#allocation3 + $0x80] sm:$0xff]
    %v1726 = vld [vmem:[#allocation3 + $0x88] sm:$0xff]
    %v1727 = vld [vmem:[#allocation3 + $0x90] sm:$0xff]
    %v1728 = vld [vmem:[#allocation3 + $0x98] sm:$0xff]
    %v1729 = vld [vmem:[#allocation3 + $0xa0] sm:$0xff]
    %v1730 = vld [vmem:[#allocation3 + $0xa8] sm:$0xff]
    %v1731 = vld [vmem:[#allocation3 + $0xb0] sm:$0xff]
    %v1732 = vld [vmem:[#allocation3 + $0xb8] sm:$0xff]
    %v1733 = vld [vmem:[#allocation3 + $0xc0] sm:$0xff]
    %v1734 = vld [vmem:[#allocation3 + $0xc8] sm:$0xff]
    %v1735 = vld [vmem:[#allocation3 + $0xd0] sm:$0xff]
    %v1736 = vld [vmem:[#allocation3 + $0xd8] sm:$0xff]
    %v1737 = vld [vmem:[#allocation3 + $0xe0] sm:$0xff]
    %v1738 = vld [vmem:[#allocation3 + $0xe8] sm:$0xff]
    %v1739 = vld [vmem:[#allocation3 + $0xf0] sm:$0xff]
    %v1740 = vld [vmem:[#allocation3 + $0xf8] sm:$0xff]
    %v1741 = vld [vmem:[#allocation3 + $0x100] sm:$0xff]
    %v1742 = vld [vmem:[#allocation3 + $0x108] sm:$0xff]
    %v1743 = vld [vmem:[#allocation3 + $0x110] sm:$0xff]
    %v1744 = vld [vmem:[#allocation3 + $0x118] sm:$0xff]
    %v1745 = vld [vmem:[#allocation3 + $0x120] sm:$0xff]
    %v1746 = vld [vmem:[#allocation3 + $0x128] sm:$0xff]
    %v1747 = vld [vmem:[#allocation3 + $0x130] sm:$0xff]
    %v1748 = vld [vmem:[#allocation3 + $0x138] sm:$0xff]
    %v1749 = vld [vmem:[#allocation3 + $0x140] sm:$0xff]
    %v1750 = vld [vmem:[#allocation3 + $0x148] sm:$0xff]
    %v1751 = vld [vmem:[#allocation3 + $0x150] sm:$0xff]
    %v1752 = vld [vmem:[#allocation3 + $0x158] sm:$0xff]
    %v1753 = vld [vmem:[#allocation3 + $0x160] sm:$0xff]
    %v1754 = vld [vmem:[#allocation3 + $0x168] sm:$0xff]
    %v1755 = vld [vmem:[#allocation3 + $0x170] sm:$0xff]
    %v1756 = vld [vmem:[#allocation3 + $0x178] sm:$0xff]
    %v1757 = vld [vmem:[#allocation3 + $0x180] sm:$0xff]
    %v1758 = vld [vmem:[#allocation3 + $0x188] sm:$0xff]
    %v1759 = vld [vmem:[#allocation3 + $0x190] sm:$0xff]
    %v1760 = vld [vmem:[#allocation3 + $0x198] sm:$0xff]
    %v1761 = vld [vmem:[#allocation3 + $0x1a0] sm:$0xff]
    %v1762 = vld [vmem:[#allocation3 + $0x1a8] sm:$0xff]
    %v1763 = vld [vmem:[#allocation3 + $0x1b0] sm:$0xff]
    %v1764 = vld [vmem:[#allocation3 + $0x1b8] sm:$0xff]
    %v1765 = vld [vmem:[#allocation3 + $0x1c0] sm:$0xff]
    %v1766 = vld [vmem:[#allocation3 + $0x1c8] sm:$0xff]
    %v1767 = vld [vmem:[#allocation3 + $0x1d0] sm:$0xff]
    %v1768 = vld [vmem:[#allocation3 + $0x1d8] sm:$0xff]
    %v1769 = vld [vmem:[#allocation3 + $0x1e0] sm:$0xff]
    %v1770 = vld [vmem:[#allocation3 + $0x1e8] sm:$0xff]
    %v1771 = vld [vmem:[#allocation3 + $0x1f0] sm:$0xff]
    %v1772 = vld [vmem:[#allocation3 + $0x1f8] sm:$0xff]
    %1773 = vmatprep.subr.mxu0 %v1710
    %1774 = vmatpush1.msra.mxu0 %v1709
    %1775 = vmatprep.subr.mxu0 %v1714
    %1776 = vmatpush1.msra.mxu0 %v1713
    %1777 = vmatprep.subr.mxu0 %v1718
    %1778 = vmatpush1.msra.mxu0 %v1717
    %1779 = vmatprep.subr.mxu0 %v1722
    %1780 = vmatpush1.msra.mxu0 %v1721
    %1781 = vmatprep.subr.mxu0 %v1726
    %1782 = vmatpush1.msra.mxu0 %v1725
    %1783 = vmatprep.subr.mxu0 %v1730
    %1784 = vmatpush1.msra.mxu0 %v1729
    %1785 = vmatprep.subr.mxu0 %v1734
    %1786 = vmatpush1.msra.mxu0 %v1733
    %1787 = vmatprep.subr.mxu0 %v1738
    %1788 = vmatpush1.msra.mxu0 %v1737
    %1789 = vmatprep.subr.mxu0 %v1742
    %1790 = vmatpush1.msra.mxu0 %v1741
    %1791 = vmatprep.subr.mxu0 %v1746
    %1792 = vmatpush1.msra.mxu0 %v1745
    %1793 = vmatprep.subr.mxu0 %v1750
    %1794 = vmatpush1.msra.mxu0 %v1749
    %1795 = vmatprep.subr.mxu0 %v1754
    %1796 = vmatpush1.msra.mxu0 %v1753
    %1797 = vmatprep.subr.mxu0 %v1758
    %1798 = vmatpush1.msra.mxu0 %v1757
    %1799 = vmatprep.subr.mxu0 %v1762
    %1800 = vmatpush1.msra.mxu0 %v1761
    %1801 = vmatprep.subr.mxu0 %v1766
    %1802 = vmatpush1.msra.mxu0 %v1765
    %1803 = vmatprep.subr.mxu0 %v1770
    %1804 = vmatpush1.msra.mxu0 %v1769
    %1805 = vmatprep.subr.mxu0 0.0
    %1806 = vmatpush1.msra.mxu0 0.0
    %1807 = vmatprep.subr.mxu0 0.0
    %1808 = vmatpush1.msra.mxu0 0.0
    %1809 = vmatprep.subr.mxu0 0.0
    %1810 = vmatpush1.msra.mxu0 0.0
    %1811 = vmatprep.subr.mxu0 0.0
    %1812 = vmatpush1.msra.mxu0 0.0
    %1813 = vmatprep.subr.mxu0 0.0
    %1814 = vmatpush1.msra.mxu0 0.0
    %1815 = vmatprep.subr.mxu0 0.0
    %1816 = vmatpush1.msra.mxu0 0.0
    %1817 = vmatprep.subr.mxu0 0.0
    %1818 = vmatpush1.msra.mxu0 0.0
    %1819 = vmatprep.subr.mxu0 0.0
    %1820 = vmatpush1.msra.mxu0 0.0
    %1821 = vmatprep.subr.mxu0 0.0
    %1822 = vmatpush1.msra.mxu0 0.0
    %1823 = vmatprep.subr.mxu0 0.0
    %1824 = vmatpush1.msra.mxu0 0.0
    %1825 = vmatprep.subr.mxu0 0.0
    %1826 = vmatpush1.msra.mxu0 0.0
    %1827 = vmatprep.subr.mxu0 0.0
    %1828 = vmatpush1.msra.mxu0 0.0
    %1829 = vmatprep.subr.mxu0 0.0
    %1830 = vmatpush1.msra.mxu0 0.0
    %1831 = vmatprep.subr.mxu0 0.0
    %1832 = vmatpush1.msra.mxu0 0.0
    %1833 = vmatprep.subr.mxu0 0.0
    %1834 = vmatpush1.msra.mxu0 0.0
    %1835 = vmatprep.subr.mxu0 0.0
    %1836 = vmatpush1.msra.mxu0 0.0
    %1837 = vmatprep.mubr.f32.mxu0 0.0
    %1838 = vmatmul.mubr.f32.gmra.mrb[0].mxu0 %v1695
    %v1839 = vpop.f32.mrb[0].mxu0
    %v1840 = vadd.f32 0.0, %v1839
    %v1841 = vpop.f32.mrb[0].mxu0
    %v1842 = vadd.f32 0.0, %v1841
    %1843 = vmatprep.mubr.f32.mxu0 0.0
    %1844 = vmatmul.mubr.f32.gmra.mrb[0].mxu0 %v1696
    %v1845 = vpop.f32.mrb[0].mxu0
    %v1846 = vadd.f32 0.0, %v1845
    %v1847 = vpop.f32.mrb[0].mxu0
    %v1848 = vadd.f32 0.0, %v1847
    %1849 = vdwg.mxu0
    %1850 = vmatprep.subr.mxu0 %v1712
    %1851 = vmatpush1.msra.mxu0 %v1711
    %1852 = vmatprep.subr.mxu0 %v1716
    %1853 = vmatpush1.msra.mxu0 %v1715
    %1854 = vmatprep.subr.mxu0 %v1720
    %1855 = vmatpush1.msra.mxu0 %v1719
    %1856 = vmatprep.subr.mxu0 %v1724
    %1857 = vmatpush1.msra.mxu0 %v1723
    %1858 = vmatprep.subr.mxu0 %v1728
    %1859 = vmatpush1.msra.mxu0 %v1727
    %1860 = vmatprep.subr.mxu0 %v1732
    %1861 = vmatpush1.msra.mxu0 %v1731
    %1862 = vmatprep.subr.mxu0 %v1736
    %1863 = vmatpush1.msra.mxu0 %v1735
    %1864 = vmatprep.subr.mxu0 %v1740
    %1865 = vmatpush1.msra.mxu0 %v1739
    %1866 = vmatprep.subr.mxu0 %v1744
    %1867 = vmatpush1.msra.mxu0 %v1743
    %1868 = vmatprep.subr.mxu0 %v1748
    %1869 = vmatpush1.msra.mxu0 %v1747
    %1870 = vmatprep.subr.mxu0 %v1752
    %1871 = vmatpush1.msra.mxu0 %v1751
    %1872 = vmatprep.subr.mxu0 %v1756
    %1873 = vmatpush1.msra.mxu0 %v1755
    %1874 = vmatprep.subr.mxu0 %v1760
    %1875 = vmatpush1.msra.mxu0 %v1759
    %1876 = vmatprep.subr.mxu0 %v1764
    %1877 = vmatpush1.msra.mxu0 %v1763
    %1878 = vmatprep.subr.mxu0 %v1768
    %1879 = vmatpush1.msra.mxu0 %v1767
    %1880 = vmatprep.subr.mxu0 %v1772
    %1881 = vmatpush1.msra.mxu0 %v1771
    %1882 = vmatprep.subr.mxu0 0.0
    %1883 = vmatpush1.msra.mxu0 0.0
    %1884 = vmatprep.subr.mxu0 0.0
    %1885 = vmatpush1.msra.mxu0 0.0
    %1886 = vmatprep.subr.mxu0 0.0
    %1887 = vmatpush1.msra.mxu0 0.0
    %1888 = vmatprep.subr.mxu0 0.0
    %1889 = vmatpush1.msra.mxu0 0.0
    %1890 = vmatprep.subr.mxu0 0.0
    %1891 = vmatpush1.msra.mxu0 0.0
    %1892 = vmatprep.subr.mxu0 0.0
    %1893 = vmatpush1.msra.mxu0 0.0
    %1894 = vmatprep.subr.mxu0 0.0
    %1895 = vmatpush1.msra.mxu0 0.0
    %1896 = vmatprep.subr.mxu0 0.0
    %1897 = vmatpush1.msra.mxu0 0.0
    %1898 = vmatprep.subr.mxu0 0.0
    %1899 = vmatpush1.msra.mxu0 0.0
    %1900 = vmatprep.subr.mxu0 0.0
    %1901 = vmatpush1.msra.mxu0 0.0
    %1902 = vmatprep.subr.mxu0 0.0
    %1903 = vmatpush1.msra.mxu0 0.0
    %1904 = vmatprep.subr.mxu0 0.0
    %1905 = vmatpush1.msra.mxu0 0.0
    %1906 = vmatprep.subr.mxu0 0.0
    %1907 = vmatpush1.msra.mxu0 0.0
    %1908 = vmatprep.subr.mxu0 0.0
    %1909 = vmatpush1.msra.mxu0 0.0
    %1910 = vmatprep.subr.mxu0 0.0
    %1911 = vmatpush1.msra.mxu0 0.0
    %1912 = vmatprep.subr.mxu0 0.0
    %1913 = vmatpush1.msra.mxu0 0.0
    %1914 = vmatprep.mubr.f32.mxu0 0.0
    %1915 = vmatmul.mubr.f32.gmra.mrb[0].mxu0 %v1695
    %v1916 = vpop.f32.mrb[0].mxu0
    %v1917 = vadd.f32 0.0, %v1916
    %v1918 = vpop.f32.mrb[0].mxu0
    %v1919 = vadd.f32 0.0, %v1918
    %1920 = vmatprep.mubr.f32.mxu0 0.0
    %1921 = vmatmul.mubr.f32.gmra.mrb[0].mxu0 %v1696
    %v1922 = vpop.f32.mrb[0].mxu0
    %v1923 = vadd.f32 0.0, %v1922
    %v1924 = vpop.f32.mrb[0].mxu0
    %v1925 = vadd.f32 0.0, %v1924
    %1926 = vdwg.mxu0
    %v1927 = vadd.f32 %v1701, %v1840
    %v1928 = vadd.f32 %v1702, %v1842
    %v1929 = vadd.f32 %v1703, %v1917
    %v1930 = vadd.f32 %v1704, %v1919
    %v1931 = vadd.f32 %v1705, %v1846
    %v1932 = vadd.f32 %v1706, %v1848
    %v1933 = vadd.f32 %v1707, %v1923
    %v1934 = vadd.f32 %v1708, %v1925
    %v1935 = vxor.u32 %v1927, 2147483648
    %v1936 = vxor.u32 %v1928, 2147483648
    %v1937 = vxor.u32 %v1929, 2147483648
    %v1938 = vxor.u32 %v1931, 2147483648
    %v1939 = vxor.u32 %v1932, 2147483648
    %v1940 = vxor.u32 %v1933, 2147483648
    %v1941 = vmul.f32 %v1935, 1.442695
    %v1942 = vpow.pop %v1941
    %v1943 = vmul.f32 %v1936, 1.442695
    %v1944 = vpow.pop %v1943
    %v1945 = vmul.f32 %v1937, 1.442695
    %v1946 = vpow.pop %v1945
    %v1947 = vmul.f32 %v1938, 1.442695
    %v1948 = vpow.pop %v1947
    %v1949 = vmul.f32 %v1939, 1.442695
    %v1950 = vpow.pop %v1949
    %v1951 = vmul.f32 %v1940, 1.442695
    %v1952 = vpow.pop %v1951
    %v1953 = vadd.f32 %v1942, 1.0
    %v1954 = vadd.f32 %v1944, 1.0
    %v1955 = vadd.f32 %v1946, 1.0
    %v1956 = vadd.f32 %v1948, 1.0
    %v1957 = vadd.f32 %v1950, 1.0
    %v1958 = vadd.f32 %v1952, 1.0
    %v1959 = vrcp.pop %v1953
    %v1960 = vmul.f32 1.0, %v1959
    %v1961 = vrcp.pop %v1954
    %v1962 = vmul.f32 1.0, %v1961
    %v1963 = vrcp.pop %v1955
    %v1964 = vmul.f32 1.0, %v1963
    %v1965 = vrcp.pop %v1956
    %v1966 = vmul.f32 1.0, %v1965
    %v1967 = vrcp.pop %v1957
    %v1968 = vmul.f32 1.0, %v1967
    %v1969 = vrcp.pop %v1958
    %v1970 = vmul.f32 1.0, %v1969
    %v1971 = vtanh.pop %v1930
    %v1972 = vtanh.pop %v1934
    %v1973 = vmul.f32 %v1962, %v1691
    %v1974 = vmul.f32 %v1968, %v1692
    %v1975 = vmul.f32 %v1960, %v1971
    %v1976 = vmul.f32 %v1966, %v1972
    %v1977 = vadd.f32 %v1973, %v1975
    %v1978 = vadd.f32 %v1974, %v1976
    %v1979 = vtanh.pop %v1977
    %v1980 = vtanh.pop %v1978
    %v1981 = vmul.f32 %v1964, %v1979
    %v1982 = vmul.f32 %v1970, %v1980
    %s1983 = scalar_lea.vmem [#allocation5], 64
    %1984 = vst [vmem:[%s1983] sm:$0xff] %v1981
    %1985 = vst [vmem:[%s1983 + $0x8] sm:$0xff] %v1982
    %s1986 = scalar_lea.vmem [#allocation2], 320
    %v1987 = vld [vmem:[%s1986] sm:$0xff]
    %v1988 = vld [vmem:[%s1986 + $0x8] sm:$0xff]
    %v1989 = vld [vmem:[%s1986 + $0x10] sm:$0xff]
    %v1990 = vld [vmem:[%s1986 + $0x18] sm:$0xff]
    %v1991 = vld [vmem:[%s1986 + $0x20] sm:$0xff]
    %v1992 = vld [vmem:[%s1986 + $0x28] sm:$0xff]
    %v1993 = vld [vmem:[%s1986 + $0x30] sm:$0xff]
    %v1994 = vld [vmem:[%s1986 + $0x38] sm:$0xff]
    %v1995 = vld [vmem:[#allocation3] sm:$0xff]
    %v1996 = vld [vmem:[#allocation3 + $0x8] sm:$0xff]
    %v1997 = vld [vmem:[#allocation3 + $0x10] sm:$0xff]
    %v1998 = vld [vmem:[#allocation3 + $0x18] sm:$0xff]
    %v1999 = vld [vmem:[#allocation3 + $0x20] sm:$0xff]
    %v2000 = vld [vmem:[#allocation3 + $0x28] sm:$0xff]
    %v2001 = vld [vmem:[#allocation3 + $0x30] sm:$0xff]
    %v2002 = vld [vmem:[#allocation3 + $0x38] sm:$0xff]
    %v2003 = vld [vmem:[#allocation3 + $0x40] sm:$0xff]
    %v2004 = vld [vmem:[#allocation3 + $0x48] sm:$0xff]
    %v2005 = vld [vmem:[#allocation3 + $0x50] sm:$0xff]
    %v2006 = vld [vmem:[#allocation3 + $0x58] sm:$0xff]
    %v2007 = vld [vmem:[#allocation3 + $0x60] sm:$0xff]
    %v2008 = vld [vmem:[#allocation3 + $0x68] sm:$0xff]
    %v2009 = vld [vmem:[#allocation3 + $0x70] sm:$0xff]
    %v2010 = vld [vmem:[#allocation3 + $0x78] sm:$0xff]
    %v2011 = vld [vmem:[#allocation3 + $0x80] sm:$0xff]
    %v2012 = vld [vmem:[#allocation3 + $0x88] sm:$0xff]
    %v2013 = vld [vmem:[#allocation3 + $0x90] sm:$0xff]
    %v2014 = vld [vmem:[#allocation3 + $0x98] sm:$0xff]
    %v2015 = vld [vmem:[#allocation3 + $0xa0] sm:$0xff]
    %v2016 = vld [vmem:[#allocation3 + $0xa8] sm:$0xff]
    %v2017 = vld [vmem:[#allocation3 + $0xb0] sm:$0xff]
    %v2018 = vld [vmem:[#allocation3 + $0xb8] sm:$0xff]
    %v2019 = vld [vmem:[#allocation3 + $0xc0] sm:$0xff]
    %v2020 = vld [vmem:[#allocation3 + $0xc8] sm:$0xff]
    %v2021 = vld [vmem:[#allocation3 + $0xd0] sm:$0xff]
    %v2022 = vld [vmem:[#allocation3 + $0xd8] sm:$0xff]
    %v2023 = vld [vmem:[#allocation3 + $0xe0] sm:$0xff]
    %v2024 = vld [vmem:[#allocation3 + $0xe8] sm:$0xff]
    %v2025 = vld [vmem:[#allocation3 + $0xf0] sm:$0xff]
    %v2026 = vld [vmem:[#allocation3 + $0xf8] sm:$0xff]
    %v2027 = vld [vmem:[#allocation3 + $0x100] sm:$0xff]
    %v2028 = vld [vmem:[#allocation3 + $0x108] sm:$0xff]
    %v2029 = vld [vmem:[#allocation3 + $0x110] sm:$0xff]
    %v2030 = vld [vmem:[#allocation3 + $0x118] sm:$0xff]
    %v2031 = vld [vmem:[#allocation3 + $0x120] sm:$0xff]
    %v2032 = vld [vmem:[#allocation3 + $0x128] sm:$0xff]
    %v2033 = vld [vmem:[#allocation3 + $0x130] sm:$0xff]
    %v2034 = vld [vmem:[#allocation3 + $0x138] sm:$0xff]
    %v2035 = vld [vmem:[#allocation3 + $0x140] sm:$0xff]
    %v2036 = vld [vmem:[#allocation3 + $0x148] sm:$0xff]
    %v2037 = vld [vmem:[#allocation3 + $0x150] sm:$0xff]
    %v2038 = vld [vmem:[#allocation3 + $0x158] sm:$0xff]
    %v2039 = vld [vmem:[#allocation3 + $0x160] sm:$0xff]
    %v2040 = vld [vmem:[#allocation3 + $0x168] sm:$0xff]
    %v2041 = vld [vmem:[#allocation3 + $0x170] sm:$0xff]
    %v2042 = vld [vmem:[#allocation3 + $0x178] sm:$0xff]
    %v2043 = vld [vmem:[#allocation3 + $0x180] sm:$0xff]
    %v2044 = vld [vmem:[#allocation3 + $0x188] sm:$0xff]
    %v2045 = vld [vmem:[#allocation3 + $0x190] sm:$0xff]
    %v2046 = vld [vmem:[#allocation3 + $0x198] sm:$0xff]
    %v2047 = vld [vmem:[#allocation3 + $0x1a0] sm:$0xff]
    %v2048 = vld [vmem:[#allocation3 + $0x1a8] sm:$0xff]
    %v2049 = vld [vmem:[#allocation3 + $0x1b0] sm:$0xff]
    %v2050 = vld [vmem:[#allocation3 + $0x1b8] sm:$0xff]
    %v2051 = vld [vmem:[#allocation3 + $0x1c0] sm:$0xff]
    %v2052 = vld [vmem:[#allocation3 + $0x1c8] sm:$0xff]
    %v2053 = vld [vmem:[#allocation3 + $0x1d0] sm:$0xff]
    %v2054 = vld [vmem:[#allocation3 + $0x1d8] sm:$0xff]
    %v2055 = vld [vmem:[#allocation3 + $0x1e0] sm:$0xff]
    %v2056 = vld [vmem:[#allocation3 + $0x1e8] sm:$0xff]
    %v2057 = vld [vmem:[#allocation3 + $0x1f0] sm:$0xff]
    %v2058 = vld [vmem:[#allocation3 + $0x1f8] sm:$0xff]
    %2059 = vmatprep.subr.mxu0 %v1996
    %2060 = vmatpush1.msra.mxu0 %v1995
    %2061 = vmatprep.subr.mxu0 %v2000
    %2062 = vmatpush1.msra.mxu0 %v1999
    %2063 = vmatprep.subr.mxu0 %v2004
    %2064 = vmatpush1.msra.mxu0 %v2003
    %2065 = vmatprep.subr.mxu0 %v2008
    %2066 = vmatpush1.msra.mxu0 %v2007
    %2067 = vmatprep.subr.mxu0 %v2012
    %2068 = vmatpush1.msra.mxu0 %v2011
    %2069 = vmatprep.subr.mxu0 %v2016
    %2070 = vmatpush1.msra.mxu0 %v2015
    %2071 = vmatprep.subr.mxu0 %v2020
    %2072 = vmatpush1.msra.mxu0 %v2019
    %2073 = vmatprep.subr.mxu0 %v2024
    %2074 = vmatpush1.msra.mxu0 %v2023
    %2075 = vmatprep.subr.mxu0 %v2028
    %2076 = vmatpush1.msra.mxu0 %v2027
    %2077 = vmatprep.subr.mxu0 %v2032
    %2078 = vmatpush1.msra.mxu0 %v2031
    %2079 = vmatprep.subr.mxu0 %v2036
    %2080 = vmatpush1.msra.mxu0 %v2035
    %2081 = vmatprep.subr.mxu0 %v2040
    %2082 = vmatpush1.msra.mxu0 %v2039
    %2083 = vmatprep.subr.mxu0 %v2044
    %2084 = vmatpush1.msra.mxu0 %v2043
    %2085 = vmatprep.subr.mxu0 %v2048
    %2086 = vmatpush1.msra.mxu0 %v2047
    %2087 = vmatprep.subr.mxu0 %v2052
    %2088 = vmatpush1.msra.mxu0 %v2051
    %2089 = vmatprep.subr.mxu0 %v2056
    %2090 = vmatpush1.msra.mxu0 %v2055
    %2091 = vmatprep.subr.mxu0 0.0
    %2092 = vmatpush1.msra.mxu0 0.0
    %2093 = vmatprep.subr.mxu0 0.0
    %2094 = vmatpush1.msra.mxu0 0.0
    %2095 = vmatprep.subr.mxu0 0.0
    %2096 = vmatpush1.msra.mxu0 0.0
    %2097 = vmatprep.subr.mxu0 0.0
    %2098 = vmatpush1.msra.mxu0 0.0
    %2099 = vmatprep.subr.mxu0 0.0
    %2100 = vmatpush1.msra.mxu0 0.0
    %2101 = vmatprep.subr.mxu0 0.0
    %2102 = vmatpush1.msra.mxu0 0.0
    %2103 = vmatprep.subr.mxu0 0.0
    %2104 = vmatpush1.msra.mxu0 0.0
    %2105 = vmatprep.subr.mxu0 0.0
    %2106 = vmatpush1.msra.mxu0 0.0
    %2107 = vmatprep.subr.mxu0 0.0
    %2108 = vmatpush1.msra.mxu0 0.0
    %2109 = vmatprep.subr.mxu0 0.0
    %2110 = vmatpush1.msra.mxu0 0.0
    %2111 = vmatprep.subr.mxu0 0.0
    %2112 = vmatpush1.msra.mxu0 0.0
    %2113 = vmatprep.subr.mxu0 0.0
    %2114 = vmatpush1.msra.mxu0 0.0
    %2115 = vmatprep.subr.mxu0 0.0
    %2116 = vmatpush1.msra.mxu0 0.0
    %2117 = vmatprep.subr.mxu0 0.0
    %2118 = vmatpush1.msra.mxu0 0.0
    %2119 = vmatprep.subr.mxu0 0.0
    %2120 = vmatpush1.msra.mxu0 0.0
    %2121 = vmatprep.subr.mxu0 0.0
    %2122 = vmatpush1.msra.mxu0 0.0
    %2123 = vmatprep.mubr.f32.mxu0 0.0
    %2124 = vmatmul.mubr.f32.gmra.mrb[0].mxu0 %v1981
    %v2125 = vpop.f32.mrb[0].mxu0
    %v2126 = vadd.f32 0.0, %v2125
    %v2127 = vpop.f32.mrb[0].mxu0
    %v2128 = vadd.f32 0.0, %v2127
    %2129 = vmatprep.mubr.f32.mxu0 0.0
    %2130 = vmatmul.mubr.f32.gmra.mrb[0].mxu0 %v1982
    %v2131 = vpop.f32.mrb[0].mxu0
    %v2132 = vadd.f32 0.0, %v2131
    %v2133 = vpop.f32.mrb[0].mxu0
    %v2134 = vadd.f32 0.0, %v2133
    %2135 = vdwg.mxu0
    %2136 = vmatprep.subr.mxu0 %v1998
    %2137 = vmatpush1.msra.mxu0 %v1997
    %2138 = vmatprep.subr.mxu0 %v2002
    %2139 = vmatpush1.msra.mxu0 %v2001
    %2140 = vmatprep.subr.mxu0 %v2006
    %2141 = vmatpush1.msra.mxu0 %v2005
    %2142 = vmatprep.subr.mxu0 %v2010
    %2143 = vmatpush1.msra.mxu0 %v2009
    %2144 = vmatprep.subr.mxu0 %v2014
    %2145 = vmatpush1.msra.mxu0 %v2013
    %2146 = vmatprep.subr.mxu0 %v2018
    %2147 = vmatpush1.msra.mxu0 %v2017
    %2148 = vmatprep.subr.mxu0 %v2022
    %2149 = vmatpush1.msra.mxu0 %v2021
    %2150 = vmatprep.subr.mxu0 %v2026
    %2151 = vmatpush1.msra.mxu0 %v2025
    %2152 = vmatprep.subr.mxu0 %v2030
    %2153 = vmatpush1.msra.mxu0 %v2029
    %2154 = vmatprep.subr.mxu0 %v2034
    %2155 = vmatpush1.msra.mxu0 %v2033
    %2156 = vmatprep.subr.mxu0 %v2038
    %2157 = vmatpush1.msra.mxu0 %v2037
    %2158 = vmatprep.subr.mxu0 %v2042
    %2159 = vmatpush1.msra.mxu0 %v2041
    %2160 = vmatprep.subr.mxu0 %v2046
    %2161 = vmatpush1.msra.mxu0 %v2045
    %2162 = vmatprep.subr.mxu0 %v2050
    %2163 = vmatpush1.msra.mxu0 %v2049
    %2164 = vmatprep.subr.mxu0 %v2054
    %2165 = vmatpush1.msra.mxu0 %v2053
    %2166 = vmatprep.subr.mxu0 %v2058
    %2167 = vmatpush1.msra.mxu0 %v2057
    %2168 = vmatprep.subr.mxu0 0.0
    %2169 = vmatpush1.msra.mxu0 0.0
    %2170 = vmatprep.subr.mxu0 0.0
    %2171 = vmatpush1.msra.mxu0 0.0
    %2172 = vmatprep.subr.mxu0 0.0
    %2173 = vmatpush1.msra.mxu0 0.0
    %2174 = vmatprep.subr.mxu0 0.0
    %2175 = vmatpush1.msra.mxu0 0.0
    %2176 = vmatprep.subr.mxu0 0.0
    %2177 = vmatpush1.msra.mxu0 0.0
    %2178 = vmatprep.subr.mxu0 0.0
    %2179 = vmatpush1.msra.mxu0 0.0
    %2180 = vmatprep.subr.mxu0 0.0
    %2181 = vmatpush1.msra.mxu0 0.0
    %2182 = vmatprep.subr.mxu0 0.0
    %2183 = vmatpush1.msra.mxu0 0.0
    %2184 = vmatprep.subr.mxu0 0.0
    %2185 = vmatpush1.msra.mxu0 0.0
    %2186 = vmatprep.subr.mxu0 0.0
    %2187 = vmatpush1.msra.mxu0 0.0
    %2188 = vmatprep.subr.mxu0 0.0
    %2189 = vmatpush1.msra.mxu0 0.0
    %2190 = vmatprep.subr.mxu0 0.0
    %2191 = vmatpush1.msra.mxu0 0.0
    %2192 = vmatprep.subr.mxu0 0.0
    %2193 = vmatpush1.msra.mxu0 0.0
    %2194 = vmatprep.subr.mxu0 0.0
    %2195 = vmatpush1.msra.mxu0 0.0
    %2196 = vmatprep.subr.mxu0 0.0
    %2197 = vmatpush1.msra.mxu0 0.0
    %2198 = vmatprep.subr.mxu0 0.0
    %2199 = vmatpush1.msra.mxu0 0.0
    %2200 = vmatprep.mubr.f32.mxu0 0.0
    %2201 = vmatmul.mubr.f32.gmra.mrb[0].mxu0 %v1981
    %v2202 = vpop.f32.mrb[0].mxu0
    %v2203 = vadd.f32 0.0, %v2202
    %v2204 = vpop.f32.mrb[0].mxu0
    %v2205 = vadd.f32 0.0, %v2204
    %2206 = vmatprep.mubr.f32.mxu0 0.0
    %2207 = vmatmul.mubr.f32.gmra.mrb[0].mxu0 %v1982
    %v2208 = vpop.f32.mrb[0].mxu0
    %v2209 = vadd.f32 0.0, %v2208
    %v2210 = vpop.f32.mrb[0].mxu0
    %v2211 = vadd.f32 0.0, %v2210
    %2212 = vdwg.mxu0
    %v2213 = vadd.f32 %v1987, %v2126
    %v2214 = vadd.f32 %v1988, %v2128
    %v2215 = vadd.f32 %v1989, %v2203
    %v2216 = vadd.f32 %v1990, %v2205
    %v2217 = vadd.f32 %v1991, %v2132
    %v2218 = vadd.f32 %v1992, %v2134
    %v2219 = vadd.f32 %v1993, %v2209
    %v2220 = vadd.f32 %v1994, %v2211
    %v2221 = vxor.u32 %v2213, 2147483648
    %v2222 = vxor.u32 %v2214, 2147483648
    %v2223 = vxor.u32 %v2215, 2147483648
    %v2224 = vxor.u32 %v2217, 2147483648
    %v2225 = vxor.u32 %v2218, 2147483648
    %v2226 = vxor.u32 %v2219, 2147483648
    %v2227 = vmul.f32 %v2221, 1.442695
    %v2228 = vpow.pop %v2227
    %v2229 = vmul.f32 %v2222, 1.442695
    %v2230 = vpow.pop %v2229
    %v2231 = vmul.f32 %v2223, 1.442695
    %v2232 = vpow.pop %v2231
    %v2233 = vmul.f32 %v2224, 1.442695
    %v2234 = vpow.pop %v2233
    %v2235 = vmul.f32 %v2225, 1.442695
    %v2236 = vpow.pop %v2235
    %v2237 = vmul.f32 %v2226, 1.442695
    %v2238 = vpow.pop %v2237
    %v2239 = vadd.f32 %v2228, 1.0
    %v2240 = vadd.f32 %v2230, 1.0
    %v2241 = vadd.f32 %v2232, 1.0
    %v2242 = vadd.f32 %v2234, 1.0
    %v2243 = vadd.f32 %v2236, 1.0
    %v2244 = vadd.f32 %v2238, 1.0
    %v2245 = vrcp.pop %v2239
    %v2246 = vmul.f32 1.0, %v2245
    %v2247 = vrcp.pop %v2240
    %v2248 = vmul.f32 1.0, %v2247
    %v2249 = vrcp.pop %v2241
    %v2250 = vmul.f32 1.0, %v2249
    %v2251 = vrcp.pop %v2242
    %v2252 = vmul.f32 1.0, %v2251
    %v2253 = vrcp.pop %v2243
    %v2254 = vmul.f32 1.0, %v2253
    %v2255 = vrcp.pop %v2244
    %v2256 = vmul.f32 1.0, %v2255
    %v2257 = vtanh.pop %v2216
    %v2258 = vtanh.pop %v2220
    %v2259 = vmul.f32 %v2248, %v1977
    %v2260 = vmul.f32 %v2254, %v1978
    %v2261 = vmul.f32 %v2246, %v2257
    %v2262 = vmul.f32 %v2252, %v2258
    %v2263 = vadd.f32 %v2259, %v2261
    %v2264 = vadd.f32 %v2260, %v2262
    %v2265 = vtanh.pop %v2263
    %v2266 = vtanh.pop %v2264
    %v2267 = vmul.f32 %v2250, %v2265
    %v2268 = vmul.f32 %v2256, %v2266
    %s2269 = scalar_lea.vmem [#allocation5], 80
    %2270 = vst [vmem:[%s2269] sm:$0xff] %v2267
    %2271 = vst [vmem:[%s2269 + $0x8] sm:$0xff] %v2268
    %s2272 = scalar_lea.vmem [#allocation2], 384
    %v2273 = vld [vmem:[%s2272] sm:$0xff]
    %v2274 = vld [vmem:[%s2272 + $0x8] sm:$0xff]
    %v2275 = vld [vmem:[%s2272 + $0x10] sm:$0xff]
    %v2276 = vld [vmem:[%s2272 + $0x18] sm:$0xff]
    %v2277 = vld [vmem:[%s2272 + $0x20] sm:$0xff]
    %v2278 = vld [vmem:[%s2272 + $0x28] sm:$0xff]
    %v2279 = vld [vmem:[%s2272 + $0x30] sm:$0xff]
    %v2280 = vld [vmem:[%s2272 + $0x38] sm:$0xff]
    %v2281 = vld [vmem:[#allocation3] sm:$0xff]
    %v2282 = vld [vmem:[#allocation3 + $0x8] sm:$0xff]
    %v2283 = vld [vmem:[#allocation3 + $0x10] sm:$0xff]
    %v2284 = vld [vmem:[#allocation3 + $0x18] sm:$0xff]
    %v2285 = vld [vmem:[#allocation3 + $0x20] sm:$0xff]
    %v2286 = vld [vmem:[#allocation3 + $0x28] sm:$0xff]
    %v2287 = vld [vmem:[#allocation3 + $0x30] sm:$0xff]
    %v2288 = vld [vmem:[#allocation3 + $0x38] sm:$0xff]
    %v2289 = vld [vmem:[#allocation3 + $0x40] sm:$0xff]
    %v2290 = vld [vmem:[#allocation3 + $0x48] sm:$0xff]
    %v2291 = vld [vmem:[#allocation3 + $0x50] sm:$0xff]
    %v2292 = vld [vmem:[#allocation3 + $0x58] sm:$0xff]
    %v2293 = vld [vmem:[#allocation3 + $0x60] sm:$0xff]
    %v2294 = vld [vmem:[#allocation3 + $0x68] sm:$0xff]
    %v2295 = vld [vmem:[#allocation3 + $0x70] sm:$0xff]
    %v2296 = vld [vmem:[#allocation3 + $0x78] sm:$0xff]
    %v2297 = vld [vmem:[#allocation3 + $0x80] sm:$0xff]
    %v2298 = vld [vmem:[#allocation3 + $0x88] sm:$0xff]
    %v2299 = vld [vmem:[#allocation3 + $0x90] sm:$0xff]
    %v2300 = vld [vmem:[#allocation3 + $0x98] sm:$0xff]
    %v2301 = vld [vmem:[#allocation3 + $0xa0] sm:$0xff]
    %v2302 = vld [vmem:[#allocation3 + $0xa8] sm:$0xff]
    %v2303 = vld [vmem:[#allocation3 + $0xb0] sm:$0xff]
    %v2304 = vld [vmem:[#allocation3 + $0xb8] sm:$0xff]
    %v2305 = vld [vmem:[#allocation3 + $0xc0] sm:$0xff]
    %v2306 = vld [vmem:[#allocation3 + $0xc8] sm:$0xff]
    %v2307 = vld [vmem:[#allocation3 + $0xd0] sm:$0xff]
    %v2308 = vld [vmem:[#allocation3 + $0xd8] sm:$0xff]
    %v2309 = vld [vmem:[#allocation3 + $0xe0] sm:$0xff]
    %v2310 = vld [vmem:[#allocation3 + $0xe8] sm:$0xff]
    %v2311 = vld [vmem:[#allocation3 + $0xf0] sm:$0xff]
    %v2312 = vld [vmem:[#allocation3 + $0xf8] sm:$0xff]
    %v2313 = vld [vmem:[#allocation3 + $0x100] sm:$0xff]
    %v2314 = vld [vmem:[#allocation3 + $0x108] sm:$0xff]
    %v2315 = vld [vmem:[#allocation3 + $0x110] sm:$0xff]
    %v2316 = vld [vmem:[#allocation3 + $0x118] sm:$0xff]
    %v2317 = vld [vmem:[#allocation3 + $0x120] sm:$0xff]
    %v2318 = vld [vmem:[#allocation3 + $0x128] sm:$0xff]
    %v2319 = vld [vmem:[#allocation3 + $0x130] sm:$0xff]
    %v2320 = vld [vmem:[#allocation3 + $0x138] sm:$0xff]
    %v2321 = vld [vmem:[#allocation3 + $0x140] sm:$0xff]
    %v2322 = vld [vmem:[#allocation3 + $0x148] sm:$0xff]
    %v2323 = vld [vmem:[#allocation3 + $0x150] sm:$0xff]
    %v2324 = vld [vmem:[#allocation3 + $0x158] sm:$0xff]
    %v2325 = vld [vmem:[#allocation3 + $0x160] sm:$0xff]
    %v2326 = vld [vmem:[#allocation3 + $0x168] sm:$0xff]
    %v2327 = vld [vmem:[#allocation3 + $0x170] sm:$0xff]
    %v2328 = vld [vmem:[#allocation3 + $0x178] sm:$0xff]
    %v2329 = vld [vmem:[#allocation3 + $0x180] sm:$0xff]
    %v2330 = vld [vmem:[#allocation3 + $0x188] sm:$0xff]
    %v2331 = vld [vmem:[#allocation3 + $0x190] sm:$0xff]
    %v2332 = vld [vmem:[#allocation3 + $0x198] sm:$0xff]
    %v2333 = vld [vmem:[#allocation3 + $0x1a0] sm:$0xff]
    %v2334 = vld [vmem:[#allocation3 + $0x1a8] sm:$0xff]
    %v2335 = vld [vmem:[#allocation3 + $0x1b0] sm:$0xff]
    %v2336 = vld [vmem:[#allocation3 + $0x1b8] sm:$0xff]
    %v2337 = vld [vmem:[#allocation3 + $0x1c0] sm:$0xff]
    %v2338 = vld [vmem:[#allocation3 + $0x1c8] sm:$0xff]
    %v2339 = vld [vmem:[#allocation3 + $0x1d0] sm:$0xff]
    %v2340 = vld [vmem:[#allocation3 + $0x1d8] sm:$0xff]
    %v2341 = vld [vmem:[#allocation3 + $0x1e0] sm:$0xff]
    %v2342 = vld [vmem:[#allocation3 + $0x1e8] sm:$0xff]
    %v2343 = vld [vmem:[#allocation3 + $0x1f0] sm:$0xff]
    %v2344 = vld [vmem:[#allocation3 + $0x1f8] sm:$0xff]
    %2345 = vmatprep.subr.mxu0 %v2282
    %2346 = vmatpush1.msra.mxu0 %v2281
    %2347 = vmatprep.subr.mxu0 %v2286
    %2348 = vmatpush1.msra.mxu0 %v2285
    %2349 = vmatprep.subr.mxu0 %v2290
    %2350 = vmatpush1.msra.mxu0 %v2289
    %2351 = vmatprep.subr.mxu0 %v2294
    %2352 = vmatpush1.msra.mxu0 %v2293
    %2353 = vmatprep.subr.mxu0 %v2298
    %2354 = vmatpush1.msra.mxu0 %v2297
    %2355 = vmatprep.subr.mxu0 %v2302
    %2356 = vmatpush1.msra.mxu0 %v2301
    %2357 = vmatprep.subr.mxu0 %v2306
    %2358 = vmatpush1.msra.mxu0 %v2305
    %2359 = vmatprep.subr.mxu0 %v2310
    %2360 = vmatpush1.msra.mxu0 %v2309
    %2361 = vmatprep.subr.mxu0 %v2314
    %2362 = vmatpush1.msra.mxu0 %v2313
    %2363 = vmatprep.subr.mxu0 %v2318
    %2364 = vmatpush1.msra.mxu0 %v2317
    %2365 = vmatprep.subr.mxu0 %v2322
    %2366 = vmatpush1.msra.mxu0 %v2321
    %2367 = vmatprep.subr.mxu0 %v2326
    %2368 = vmatpush1.msra.mxu0 %v2325
    %2369 = vmatprep.subr.mxu0 %v2330
    %2370 = vmatpush1.msra.mxu0 %v2329
    %2371 = vmatprep.subr.mxu0 %v2334
    %2372 = vmatpush1.msra.mxu0 %v2333
    %2373 = vmatprep.subr.mxu0 %v2338
    %2374 = vmatpush1.msra.mxu0 %v2337
    %2375 = vmatprep.subr.mxu0 %v2342
    %2376 = vmatpush1.msra.mxu0 %v2341
    %2377 = vmatprep.subr.mxu0 0.0
    %2378 = vmatpush1.msra.mxu0 0.0
    %2379 = vmatprep.subr.mxu0 0.0
    %2380 = vmatpush1.msra.mxu0 0.0
    %2381 = vmatprep.subr.mxu0 0.0
    %2382 = vmatpush1.msra.mxu0 0.0
    %2383 = vmatprep.subr.mxu0 0.0
    %2384 = vmatpush1.msra.mxu0 0.0
    %2385 = vmatprep.subr.mxu0 0.0
    %2386 = vmatpush1.msra.mxu0 0.0
    %2387 = vmatprep.subr.mxu0 0.0
    %2388 = vmatpush1.msra.mxu0 0.0
    %2389 = vmatprep.subr.mxu0 0.0
    %2390 = vmatpush1.msra.mxu0 0.0
    %2391 = vmatprep.subr.mxu0 0.0
    %2392 = vmatpush1.msra.mxu0 0.0
    %2393 = vmatprep.subr.mxu0 0.0
    %2394 = vmatpush1.msra.mxu0 0.0
    %2395 = vmatprep.subr.mxu0 0.0
    %2396 = vmatpush1.msra.mxu0 0.0
    %2397 = vmatprep.subr.mxu0 0.0
    %2398 = vmatpush1.msra.mxu0 0.0
    %2399 = vmatprep.subr.mxu0 0.0
    %2400 = vmatpush1.msra.mxu0 0.0
    %2401 = vmatprep.subr.mxu0 0.0
    %2402 = vmatpush1.msra.mxu0 0.0
    %2403 = vmatprep.subr.mxu0 0.0
    %2404 = vmatpush1.msra.mxu0 0.0
    %2405 = vmatprep.subr.mxu0 0.0
    %2406 = vmatpush1.msra.mxu0 0.0
    %2407 = vmatprep.subr.mxu0 0.0
    %2408 = vmatpush1.msra.mxu0 0.0
    %2409 = vmatprep.mubr.f32.mxu0 0.0
    %2410 = vmatmul.mubr.f32.gmra.mrb[0].mxu0 %v2267
    %v2411 = vpop.f32.mrb[0].mxu0
    %v2412 = vadd.f32 0.0, %v2411
    %v2413 = vpop.f32.mrb[0].mxu0
    %v2414 = vadd.f32 0.0, %v2413
    %2415 = vmatprep.mubr.f32.mxu0 0.0
    %2416 = vmatmul.mubr.f32.gmra.mrb[0].mxu0 %v2268
    %v2417 = vpop.f32.mrb[0].mxu0
    %v2418 = vadd.f32 0.0, %v2417
    %v2419 = vpop.f32.mrb[0].mxu0
    %v2420 = vadd.f32 0.0, %v2419
    %2421 = vdwg.mxu0
    %2422 = vmatprep.subr.mxu0 %v2284
    %2423 = vmatpush1.msra.mxu0 %v2283
    %2424 = vmatprep.subr.mxu0 %v2288
    %2425 = vmatpush1.msra.mxu0 %v2287
    %2426 = vmatprep.subr.mxu0 %v2292
    %2427 = vmatpush1.msra.mxu0 %v2291
    %2428 = vmatprep.subr.mxu0 %v2296
    %2429 = vmatpush1.msra.mxu0 %v2295
    %2430 = vmatprep.subr.mxu0 %v2300
    %2431 = vmatpush1.msra.mxu0 %v2299
    %2432 = vmatprep.subr.mxu0 %v2304
    %2433 = vmatpush1.msra.mxu0 %v2303
    %2434 = vmatprep.subr.mxu0 %v2308
    %2435 = vmatpush1.msra.mxu0 %v2307
    %2436 = vmatprep.subr.mxu0 %v2312
    %2437 = vmatpush1.msra.mxu0 %v2311
    %2438 = vmatprep.subr.mxu0 %v2316
    %2439 = vmatpush1.msra.mxu0 %v2315
    %2440 = vmatprep.subr.mxu0 %v2320
    %2441 = vmatpush1.msra.mxu0 %v2319
    %2442 = vmatprep.subr.mxu0 %v2324
    %2443 = vmatpush1.msra.mxu0 %v2323
    %2444 = vmatprep.subr.mxu0 %v2328
    %2445 = vmatpush1.msra.mxu0 %v2327
    %2446 = vmatprep.subr.mxu0 %v2332
    %2447 = vmatpush1.msra.mxu0 %v2331
    %2448 = vmatprep.subr.mxu0 %v2336
    %2449 = vmatpush1.msra.mxu0 %v2335
    %2450 = vmatprep.subr.mxu0 %v2340
    %2451 = vmatpush1.msra.mxu0 %v2339
    %2452 = vmatprep.subr.mxu0 %v2344
    %2453 = vmatpush1.msra.mxu0 %v2343
    %2454 = vmatprep.subr.mxu0 0.0
    %2455 = vmatpush1.msra.mxu0 0.0
    %2456 = vmatprep.subr.mxu0 0.0
    %2457 = vmatpush1.msra.mxu0 0.0
    %2458 = vmatprep.subr.mxu0 0.0
    %2459 = vmatpush1.msra.mxu0 0.0
    %2460 = vmatprep.subr.mxu0 0.0
    %2461 = vmatpush1.msra.mxu0 0.0
    %2462 = vmatprep.subr.mxu0 0.0
    %2463 = vmatpush1.msra.mxu0 0.0
    %2464 = vmatprep.subr.mxu0 0.0
    %2465 = vmatpush1.msra.mxu0 0.0
    %2466 = vmatprep.subr.mxu0 0.0
    %2467 = vmatpush1.msra.mxu0 0.0
    %2468 = vmatprep.subr.mxu0 0.0
    %2469 = vmatpush1.msra.mxu0 0.0
    %2470 = vmatprep.subr.mxu0 0.0
    %2471 = vmatpush1.msra.mxu0 0.0
    %2472 = vmatprep.subr.mxu0 0.0
    %2473 = vmatpush1.msra.mxu0 0.0
    %2474 = vmatprep.subr.mxu0 0.0
    %2475 = vmatpush1.msra.mxu0 0.0
    %2476 = vmatprep.subr.mxu0 0.0
    %2477 = vmatpush1.msra.mxu0 0.0
    %2478 = vmatprep.subr.mxu0 0.0
    %2479 = vmatpush1.msra.mxu0 0.0
    %2480 = vmatprep.subr.mxu0 0.0
    %2481 = vmatpush1.msra.mxu0 0.0
    %2482 = vmatprep.subr.mxu0 0.0
    %2483 = vmatpush1.msra.mxu0 0.0
    %2484 = vmatprep.subr.mxu0 0.0
    %2485 = vmatpush1.msra.mxu0 0.0
    %2486 = vmatprep.mubr.f32.mxu0 0.0
    %2487 = vmatmul.mubr.f32.gmra.mrb[0].mxu0 %v2267
    %v2488 = vpop.f32.mrb[0].mxu0
    %v2489 = vadd.f32 0.0, %v2488
    %v2490 = vpop.f32.mrb[0].mxu0
    %v2491 = vadd.f32 0.0, %v2490
    %2492 = vmatprep.mubr.f32.mxu0 0.0
    %2493 = vmatmul.mubr.f32.gmra.mrb[0].mxu0 %v2268
    %v2494 = vpop.f32.mrb[0].mxu0
    %v2495 = vadd.f32 0.0, %v2494
    %v2496 = vpop.f32.mrb[0].mxu0
    %v2497 = vadd.f32 0.0, %v2496
    %2498 = vdwg.mxu0
    %v2499 = vadd.f32 %v2273, %v2412
    %v2500 = vadd.f32 %v2274, %v2414
    %v2501 = vadd.f32 %v2275, %v2489
    %v2502 = vadd.f32 %v2276, %v2491
    %v2503 = vadd.f32 %v2277, %v2418
    %v2504 = vadd.f32 %v2278, %v2420
    %v2505 = vadd.f32 %v2279, %v2495
    %v2506 = vadd.f32 %v2280, %v2497
    %v2507 = vxor.u32 %v2499, 2147483648
    %v2508 = vxor.u32 %v2500, 2147483648
    %v2509 = vxor.u32 %v2501, 2147483648
    %v2510 = vxor.u32 %v2503, 2147483648
    %v2511 = vxor.u32 %v2504, 2147483648
    %v2512 = vxor.u32 %v2505, 2147483648
    %v2513 = vmul.f32 %v2507, 1.442695
    %v2514 = vpow.pop %v2513
    %v2515 = vmul.f32 %v2508, 1.442695
    %v2516 = vpow.pop %v2515
    %v2517 = vmul.f32 %v2509, 1.442695
    %v2518 = vpow.pop %v2517
    %v2519 = vmul.f32 %v2510, 1.442695
    %v2520 = vpow.pop %v2519
    %v2521 = vmul.f32 %v2511, 1.442695
    %v2522 = vpow.pop %v2521
    %v2523 = vmul.f32 %v2512, 1.442695
    %v2524 = vpow.pop %v2523
    %v2525 = vadd.f32 %v2514, 1.0
    %v2526 = vadd.f32 %v2516, 1.0
    %v2527 = vadd.f32 %v2518, 1.0
    %v2528 = vadd.f32 %v2520, 1.0
    %v2529 = vadd.f32 %v2522, 1.0
    %v2530 = vadd.f32 %v2524, 1.0
    %v2531 = vrcp.pop %v2525
    %v2532 = vmul.f32 1.0, %v2531
    %v2533 = vrcp.pop %v2526
    %v2534 = vmul.f32 1.0, %v2533
    %v2535 = vrcp.pop %v2527
    %v2536 = vmul.f32 1.0, %v2535
    %v2537 = vrcp.pop %v2528
    %v2538 = vmul.f32 1.0, %v2537
    %v2539 = vrcp.pop %v2529
    %v2540 = vmul.f32 1.0, %v2539
    %v2541 = vrcp.pop %v2530
    %v2542 = vmul.f32 1.0, %v2541
    %v2543 = vtanh.pop %v2502
    %v2544 = vtanh.pop %v2506
    %v2545 = vmul.f32 %v2534, %v2263
    %v2546 = vmul.f32 %v2540, %v2264
    %v2547 = vmul.f32 %v2532, %v2543
    %v2548 = vmul.f32 %v2538, %v2544
    %v2549 = vadd.f32 %v2545, %v2547
    %v2550 = vadd.f32 %v2546, %v2548
    %v2551 = vtanh.pop %v2549
    %v2552 = vtanh.pop %v2550
    %v2553 = vmul.f32 %v2536, %v2551
    %v2554 = vmul.f32 %v2542, %v2552
    %s2555 = scalar_lea.vmem [#allocation5], 96
    %2556 = vst [vmem:[%s2555] sm:$0xff] %v2553
    %2557 = vst [vmem:[%s2555 + $0x8] sm:$0xff] %v2554
    %s2558 = scalar_lea.vmem [#allocation2], 448
    %v2559 = vld [vmem:[%s2558] sm:$0xff]
    %v2560 = vld [vmem:[%s2558 + $0x8] sm:$0xff]
    %v2561 = vld [vmem:[%s2558 + $0x10] sm:$0xff]
    %v2562 = vld [vmem:[%s2558 + $0x18] sm:$0xff]
    %v2563 = vld [vmem:[%s2558 + $0x20] sm:$0xff]
    %v2564 = vld [vmem:[%s2558 + $0x28] sm:$0xff]
    %v2565 = vld [vmem:[%s2558 + $0x30] sm:$0xff]
    %v2566 = vld [vmem:[%s2558 + $0x38] sm:$0xff]
    %v2567 = vld [vmem:[#allocation3] sm:$0xff]
    %v2568 = vld [vmem:[#allocation3 + $0x8] sm:$0xff]
    %v2569 = vld [vmem:[#allocation3 + $0x10] sm:$0xff]
    %v2570 = vld [vmem:[#allocation3 + $0x18] sm:$0xff]
    %v2571 = vld [vmem:[#allocation3 + $0x20] sm:$0xff]
    %v2572 = vld [vmem:[#allocation3 + $0x28] sm:$0xff]
    %v2573 = vld [vmem:[#allocation3 + $0x30] sm:$0xff]
    %v2574 = vld [vmem:[#allocation3 + $0x38] sm:$0xff]
    %v2575 = vld [vmem:[#allocation3 + $0x40] sm:$0xff]
    %v2576 = vld [vmem:[#allocation3 + $0x48] sm:$0xff]
    %v2577 = vld [vmem:[#allocation3 + $0x50] sm:$0xff]
    %v2578 = vld [vmem:[#allocation3 + $0x58] sm:$0xff]
    %v2579 = vld [vmem:[#allocation3 + $0x60] sm:$0xff]
    %v2580 = vld [vmem:[#allocation3 + $0x68] sm:$0xff]
    %v2581 = vld [vmem:[#allocation3 + $0x70] sm:$0xff]
    %v2582 = vld [vmem:[#allocation3 + $0x78] sm:$0xff]
    %v2583 = vld [vmem:[#allocation3 + $0x80] sm:$0xff]
    %v2584 = vld [vmem:[#allocation3 + $0x88] sm:$0xff]
    %v2585 = vld [vmem:[#allocation3 + $0x90] sm:$0xff]
    %v2586 = vld [vmem:[#allocation3 + $0x98] sm:$0xff]
    %v2587 = vld [vmem:[#allocation3 + $0xa0] sm:$0xff]
    %v2588 = vld [vmem:[#allocation3 + $0xa8] sm:$0xff]
    %v2589 = vld [vmem:[#allocation3 + $0xb0] sm:$0xff]
    %v2590 = vld [vmem:[#allocation3 + $0xb8] sm:$0xff]
    %v2591 = vld [vmem:[#allocation3 + $0xc0] sm:$0xff]
    %v2592 = vld [vmem:[#allocation3 + $0xc8] sm:$0xff]
    %v2593 = vld [vmem:[#allocation3 + $0xd0] sm:$0xff]
    %v2594 = vld [vmem:[#allocation3 + $0xd8] sm:$0xff]
    %v2595 = vld [vmem:[#allocation3 + $0xe0] sm:$0xff]
    %v2596 = vld [vmem:[#allocation3 + $0xe8] sm:$0xff]
    %v2597 = vld [vmem:[#allocation3 + $0xf0] sm:$0xff]
    %v2598 = vld [vmem:[#allocation3 + $0xf8] sm:$0xff]
    %v2599 = vld [vmem:[#allocation3 + $0x100] sm:$0xff]
    %v2600 = vld [vmem:[#allocation3 + $0x108] sm:$0xff]
    %v2601 = vld [vmem:[#allocation3 + $0x110] sm:$0xff]
    %v2602 = vld [vmem:[#allocation3 + $0x118] sm:$0xff]
    %v2603 = vld [vmem:[#allocation3 + $0x120] sm:$0xff]
    %v2604 = vld [vmem:[#allocation3 + $0x128] sm:$0xff]
    %v2605 = vld [vmem:[#allocation3 + $0x130] sm:$0xff]
    %v2606 = vld [vmem:[#allocation3 + $0x138] sm:$0xff]
    %v2607 = vld [vmem:[#allocation3 + $0x140] sm:$0xff]
    %v2608 = vld [vmem:[#allocation3 + $0x148] sm:$0xff]
    %v2609 = vld [vmem:[#allocation3 + $0x150] sm:$0xff]
    %v2610 = vld [vmem:[#allocation3 + $0x158] sm:$0xff]
    %v2611 = vld [vmem:[#allocation3 + $0x160] sm:$0xff]
    %v2612 = vld [vmem:[#allocation3 + $0x168] sm:$0xff]
    %v2613 = vld [vmem:[#allocation3 + $0x170] sm:$0xff]
    %v2614 = vld [vmem:[#allocation3 + $0x178] sm:$0xff]
    %v2615 = vld [vmem:[#allocation3 + $0x180] sm:$0xff]
    %v2616 = vld [vmem:[#allocation3 + $0x188] sm:$0xff]
    %v2617 = vld [vmem:[#allocation3 + $0x190] sm:$0xff]
    %v2618 = vld [vmem:[#allocation3 + $0x198] sm:$0xff]
    %v2619 = vld [vmem:[#allocation3 + $0x1a0] sm:$0xff]
    %v2620 = vld [vmem:[#allocation3 + $0x1a8] sm:$0xff]
    %v2621 = vld [vmem:[#allocation3 + $0x1b0] sm:$0xff]
    %v2622 = vld [vmem:[#allocation3 + $0x1b8] sm:$0xff]
    %v2623 = vld [vmem:[#allocation3 + $0x1c0] sm:$0xff]
    %v2624 = vld [vmem:[#allocation3 + $0x1c8] sm:$0xff]
    %v2625 = vld [vmem:[#allocation3 + $0x1d0] sm:$0xff]
    %v2626 = vld [vmem:[#allocation3 + $0x1d8] sm:$0xff]
    %v2627 = vld [vmem:[#allocation3 + $0x1e0] sm:$0xff]
    %v2628 = vld [vmem:[#allocation3 + $0x1e8] sm:$0xff]
    %v2629 = vld [vmem:[#allocation3 + $0x1f0] sm:$0xff]
    %v2630 = vld [vmem:[#allocation3 + $0x1f8] sm:$0xff]
    %2631 = vmatprep.subr.mxu0 %v2568
    %2632 = vmatpush1.msra.mxu0 %v2567
    %2633 = vmatprep.subr.mxu0 %v2572
    %2634 = vmatpush1.msra.mxu0 %v2571
    %2635 = vmatprep.subr.mxu0 %v2576
    %2636 = vmatpush1.msra.mxu0 %v2575
    %2637 = vmatprep.subr.mxu0 %v2580
    %2638 = vmatpush1.msra.mxu0 %v2579
    %2639 = vmatprep.subr.mxu0 %v2584
    %2640 = vmatpush1.msra.mxu0 %v2583
    %2641 = vmatprep.subr.mxu0 %v2588
    %2642 = vmatpush1.msra.mxu0 %v2587
    %2643 = vmatprep.subr.mxu0 %v2592
    %2644 = vmatpush1.msra.mxu0 %v2591
    %2645 = vmatprep.subr.mxu0 %v2596
    %2646 = vmatpush1.msra.mxu0 %v2595
    %2647 = vmatprep.subr.mxu0 %v2600
    %2648 = vmatpush1.msra.mxu0 %v2599
    %2649 = vmatprep.subr.mxu0 %v2604
    %2650 = vmatpush1.msra.mxu0 %v2603
    %2651 = vmatprep.subr.mxu0 %v2608
    %2652 = vmatpush1.msra.mxu0 %v2607
    %2653 = vmatprep.subr.mxu0 %v2612
    %2654 = vmatpush1.msra.mxu0 %v2611
    %2655 = vmatprep.subr.mxu0 %v2616
    %2656 = vmatpush1.msra.mxu0 %v2615
    %2657 = vmatprep.subr.mxu0 %v2620
    %2658 = vmatpush1.msra.mxu0 %v2619
    %2659 = vmatprep.subr.mxu0 %v2624
    %2660 = vmatpush1.msra.mxu0 %v2623
    %2661 = vmatprep.subr.mxu0 %v2628
    %2662 = vmatpush1.msra.mxu0 %v2627
    %2663 = vmatprep.subr.mxu0 0.0
    %2664 = vmatpush1.msra.mxu0 0.0
    %2665 = vmatprep.subr.mxu0 0.0
    %2666 = vmatpush1.msra.mxu0 0.0
    %2667 = vmatprep.subr.mxu0 0.0
    %2668 = vmatpush1.msra.mxu0 0.0
    %2669 = vmatprep.subr.mxu0 0.0
    %2670 = vmatpush1.msra.mxu0 0.0
    %2671 = vmatprep.subr.mxu0 0.0
    %2672 = vmatpush1.msra.mxu0 0.0
    %2673 = vmatprep.subr.mxu0 0.0
    %2674 = vmatpush1.msra.mxu0 0.0
    %2675 = vmatprep.subr.mxu0 0.0
    %2676 = vmatpush1.msra.mxu0 0.0
    %2677 = vmatprep.subr.mxu0 0.0
    %2678 = vmatpush1.msra.mxu0 0.0
    %2679 = vmatprep.subr.mxu0 0.0
    %2680 = vmatpush1.msra.mxu0 0.0
    %2681 = vmatprep.subr.mxu0 0.0
    %2682 = vmatpush1.msra.mxu0 0.0
    %2683 = vmatprep.subr.mxu0 0.0
    %2684 = vmatpush1.msra.mxu0 0.0
    %2685 = vmatprep.subr.mxu0 0.0
    %2686 = vmatpush1.msra.mxu0 0.0
    %2687 = vmatprep.subr.mxu0 0.0
    %2688 = vmatpush1.msra.mxu0 0.0
    %2689 = vmatprep.subr.mxu0 0.0
    %2690 = vmatpush1.msra.mxu0 0.0
    %2691 = vmatprep.subr.mxu0 0.0
    %2692 = vmatpush1.msra.mxu0 0.0
    %2693 = vmatprep.subr.mxu0 0.0
    %2694 = vmatpush1.msra.mxu0 0.0
    %2695 = vmatprep.mubr.f32.mxu0 0.0
    %2696 = vmatmul.mubr.f32.gmra.mrb[0].mxu0 %v2553
    %v2697 = vpop.f32.mrb[0].mxu0
    %v2698 = vadd.f32 0.0, %v2697
    %v2699 = vpop.f32.mrb[0].mxu0
    %v2700 = vadd.f32 0.0, %v2699
    %2701 = vmatprep.mubr.f32.mxu0 0.0
    %2702 = vmatmul.mubr.f32.gmra.mrb[0].mxu0 %v2554
    %v2703 = vpop.f32.mrb[0].mxu0
    %v2704 = vadd.f32 0.0, %v2703
    %v2705 = vpop.f32.mrb[0].mxu0
    %v2706 = vadd.f32 0.0, %v2705
    %2707 = vdwg.mxu0
    %2708 = vmatprep.subr.mxu0 %v2570
    %2709 = vmatpush1.msra.mxu0 %v2569
    %2710 = vmatprep.subr.mxu0 %v2574
    %2711 = vmatpush1.msra.mxu0 %v2573
    %2712 = vmatprep.subr.mxu0 %v2578
    %2713 = vmatpush1.msra.mxu0 %v2577
    %2714 = vmatprep.subr.mxu0 %v2582
    %2715 = vmatpush1.msra.mxu0 %v2581
    %2716 = vmatprep.subr.mxu0 %v2586
    %2717 = vmatpush1.msra.mxu0 %v2585
    %2718 = vmatprep.subr.mxu0 %v2590
    %2719 = vmatpush1.msra.mxu0 %v2589
    %2720 = vmatprep.subr.mxu0 %v2594
    %2721 = vmatpush1.msra.mxu0 %v2593
    %2722 = vmatprep.subr.mxu0 %v2598
    %2723 = vmatpush1.msra.mxu0 %v2597
    %2724 = vmatprep.subr.mxu0 %v2602
    %2725 = vmatpush1.msra.mxu0 %v2601
    %2726 = vmatprep.subr.mxu0 %v2606
    %2727 = vmatpush1.msra.mxu0 %v2605
    %2728 = vmatprep.subr.mxu0 %v2610
    %2729 = vmatpush1.msra.mxu0 %v2609
    %2730 = vmatprep.subr.mxu0 %v2614
    %2731 = vmatpush1.msra.mxu0 %v2613
    %2732 = vmatprep.subr.mxu0 %v2618
    %2733 = vmatpush1.msra.mxu0 %v2617
    %2734 = vmatprep.subr.mxu0 %v2622
    %2735 = vmatpush1.msra.mxu0 %v2621
    %2736 = vmatprep.subr.mxu0 %v2626
    %2737 = vmatpush1.msra.mxu0 %v2625
    %2738 = vmatprep.subr.mxu0 %v2630
    %2739 = vmatpush1.msra.mxu0 %v2629
    %2740 = vmatprep.subr.mxu0 0.0
    %2741 = vmatpush1.msra.mxu0 0.0
    %2742 = vmatprep.subr.mxu0 0.0
    %2743 = vmatpush1.msra.mxu0 0.0
    %2744 = vmatprep.subr.mxu0 0.0
    %2745 = vmatpush1.msra.mxu0 0.0
    %2746 = vmatprep.subr.mxu0 0.0
    %2747 = vmatpush1.msra.mxu0 0.0
    %2748 = vmatprep.subr.mxu0 0.0
    %2749 = vmatpush1.msra.mxu0 0.0
    %2750 = vmatprep.subr.mxu0 0.0
    %2751 = vmatpush1.msra.mxu0 0.0
    %2752 = vmatprep.subr.mxu0 0.0
    %2753 = vmatpush1.msra.mxu0 0.0
    %2754 = vmatprep.subr.mxu0 0.0
    %2755 = vmatpush1.msra.mxu0 0.0
    %2756 = vmatprep.subr.mxu0 0.0
    %2757 = vmatpush1.msra.mxu0 0.0
    %2758 = vmatprep.subr.mxu0 0.0
    %2759 = vmatpush1.msra.mxu0 0.0
    %2760 = vmatprep.subr.mxu0 0.0
    %2761 = vmatpush1.msra.mxu0 0.0
    %2762 = vmatprep.subr.mxu0 0.0
    %2763 = vmatpush1.msra.mxu0 0.0
    %2764 = vmatprep.subr.mxu0 0.0
    %2765 = vmatpush1.msra.mxu0 0.0
    %2766 = vmatprep.subr.mxu0 0.0
    %2767 = vmatpush1.msra.mxu0 0.0
    %2768 = vmatprep.subr.mxu0 0.0
    %2769 = vmatpush1.msra.mxu0 0.0
    %2770 = vmatprep.subr.mxu0 0.0
    %2771 = vmatpush1.msra.mxu0 0.0
    %2772 = vmatprep.mubr.f32.mxu0 0.0
    %2773 = vmatmul.mubr.f32.gmra.mrb[0].mxu0 %v2553
    %v2774 = vpop.f32.mrb[0].mxu0
    %v2775 = vadd.f32 0.0, %v2774
    %v2776 = vpop.f32.mrb[0].mxu0
    %v2777 = vadd.f32 0.0, %v2776
    %2778 = vmatprep.mubr.f32.mxu0 0.0
    %2779 = vmatmul.mubr.f32.gmra.mrb[0].mxu0 %v2554
    %v2780 = vpop.f32.mrb[0].mxu0
    %v2781 = vadd.f32 0.0, %v2780
    %v2782 = vpop.f32.mrb[0].mxu0
    %v2783 = vadd.f32 0.0, %v2782
    %2784 = vdwg.mxu0
    %v2785 = vadd.f32 %v2559, %v2698
    %v2786 = vadd.f32 %v2560, %v2700
    %v2787 = vadd.f32 %v2561, %v2775
    %v2788 = vadd.f32 %v2562, %v2777
    %v2789 = vadd.f32 %v2563, %v2704
    %v2790 = vadd.f32 %v2564, %v2706
    %v2791 = vadd.f32 %v2565, %v2781
    %v2792 = vadd.f32 %v2566, %v2783
    %v2793 = vxor.u32 %v2785, 2147483648
    %v2794 = vxor.u32 %v2786, 2147483648
    %v2795 = vxor.u32 %v2787, 2147483648
    %v2796 = vxor.u32 %v2789, 2147483648
    %v2797 = vxor.u32 %v2790, 2147483648
    %v2798 = vxor.u32 %v2791, 2147483648
    %v2799 = vmul.f32 %v2793, 1.442695
    %v2800 = vpow.pop %v2799
    %v2801 = vmul.f32 %v2794, 1.442695
    %v2802 = vpow.pop %v2801
    %v2803 = vmul.f32 %v2795, 1.442695
    %v2804 = vpow.pop %v2803
    %v2805 = vmul.f32 %v2796, 1.442695
    %v2806 = vpow.pop %v2805
    %v2807 = vmul.f32 %v2797, 1.442695
    %v2808 = vpow.pop %v2807
    %v2809 = vmul.f32 %v2798, 1.442695
    %v2810 = vpow.pop %v2809
    %v2811 = vadd.f32 %v2800, 1.0
    %v2812 = vadd.f32 %v2802, 1.0
    %v2813 = vadd.f32 %v2804, 1.0
    %v2814 = vadd.f32 %v2806, 1.0
    %v2815 = vadd.f32 %v2808, 1.0
    %v2816 = vadd.f32 %v2810, 1.0
    %v2817 = vrcp.pop %v2811
    %v2818 = vmul.f32 1.0, %v2817
    %v2819 = vrcp.pop %v2812
    %v2820 = vmul.f32 1.0, %v2819
    %v2821 = vrcp.pop %v2813
    %v2822 = vmul.f32 1.0, %v2821
    %v2823 = vrcp.pop %v2814
    %v2824 = vmul.f32 1.0, %v2823
    %v2825 = vrcp.pop %v2815
    %v2826 = vmul.f32 1.0, %v2825
    %v2827 = vrcp.pop %v2816
    %v2828 = vmul.f32 1.0, %v2827
    %v2829 = vtanh.pop %v2788
    %v2830 = vtanh.pop %v2792
    %v2831 = vmul.f32 %v2820, %v2549
    %v2832 = vmul.f32 %v2826, %v2550
    %v2833 = vmul.f32 %v2818, %v2829
    %v2834 = vmul.f32 %v2824, %v2830
    %v2835 = vadd.f32 %v2831, %v2833
    %v2836 = vadd.f32 %v2832, %v2834
    %v2837 = vtanh.pop %v2835
    %v2838 = vtanh.pop %v2836
    %v2839 = vmul.f32 %v2822, %v2837
    %v2840 = vmul.f32 %v2828, %v2838
    %s2841 = scalar_lea.vmem [#allocation5], 112
    %2842 = vst [vmem:[%s2841] sm:$0xff] %v2839
    %2843 = vst [vmem:[%s2841 + $0x8] sm:$0xff] %v2840
    %2844 = vst [vmem:[#allocation8] sm:$0xff] %v2839
    %2845 = vst [vmem:[#allocation8 + $0x8] sm:$0xff] %v2840
    %2846 = vst [vmem:[#allocation10] sm:$0xff] %v2835
    %2847 = vst [vmem:[#allocation10 + $0x8] sm:$0xff] %v2836
    %s2848 = sshll.u32 %s67, 4
    %2849 = dma.done %s40, %s2848
    %s2850 = sshll.u32 %s67, 4
    %2851 = dma.done %s54, %s2850
    %s2852 = scalar_lea.vmem %s2, 4
    %v2853 = vld [vmem:[%s2852] sm:$0xf]
    %v2854 = vld [vmem:[#allocation5] sm:$0xff]
    %v2855 = vld [vmem:[#allocation5 + $0x8] sm:$0xff]
    %v2856 = vld [vmem:[#allocation5 + $0x10] sm:$0xff]
    %v2857 = vld [vmem:[#allocation5 + $0x18] sm:$0xff]
    %v2858 = vld [vmem:[#allocation5 + $0x20] sm:$0xff]
    %v2859 = vld [vmem:[#allocation5 + $0x28] sm:$0xff]
    %v2860 = vld [vmem:[#allocation5 + $0x30] sm:$0xff]
    %v2861 = vld [vmem:[#allocation5 + $0x38] sm:$0xff]
    %v2862 = vld [vmem:[#allocation5 + $0x40] sm:$0xff]
    %v2863 = vld [vmem:[#allocation5 + $0x48] sm:$0xff]
    %v2864 = vld [vmem:[#allocation5 + $0x50] sm:$0xff]
    %v2865 = vld [vmem:[#allocation5 + $0x58] sm:$0xff]
    %v2866 = vld [vmem:[#allocation5 + $0x60] sm:$0xff]
    %v2867 = vld [vmem:[#allocation5 + $0x68] sm:$0xff]
    %v2868 = vld [vmem:[#allocation5 + $0x70] sm:$0xff]
    %v2869 = vld [vmem:[#allocation5 + $0x78] sm:$0xff]
    %v2870 = vld [vmem:[#allocation4] sm:$0xff]
    %v2871 = vld [vmem:[#allocation4 + $0x8] sm:$0xff]
    %v2872 = vld [vmem:[#allocation4 + $0x10] sm:$0xff]
    %v2873 = vld [vmem:[#allocation4 + $0x18] sm:$0xff]
    %v2874 = vld [vmem:[#allocation4 + $0x20] sm:$0xff]
    %v2875 = vld [vmem:[#allocation4 + $0x28] sm:$0xff]
    %v2876 = vld [vmem:[#allocation4 + $0x30] sm:$0xff]
    %v2877 = vld [vmem:[#allocation4 + $0x38] sm:$0xff]
    %v2878 = vld [vmem:[#allocation4 + $0x40] sm:$0xff]
    %v2879 = vld [vmem:[#allocation4 + $0x48] sm:$0xff]
    %v2880 = vld [vmem:[#allocation4 + $0x50] sm:$0xff]
    %v2881 = vld [vmem:[#allocation4 + $0x58] sm:$0xff]
    %v2882 = vld [vmem:[#allocation4 + $0x60] sm:$0xff]
    %v2883 = vld [vmem:[#allocation4 + $0x68] sm:$0xff]
    %v2884 = vld [vmem:[#allocation4 + $0x70] sm:$0xff]
    %v2885 = vld [vmem:[#allocation4 + $0x78] sm:$0xff]
    %v2886 = vld [vmem:[#allocation4 + $0x80] sm:$0xff]
    %v2887 = vld [vmem:[#allocation4 + $0x88] sm:$0xff]
    %v2888 = vld [vmem:[#allocation4 + $0x90] sm:$0xff]
    %v2889 = vld [vmem:[#allocation4 + $0x98] sm:$0xff]
    %v2890 = vld [vmem:[#allocation4 + $0xa0] sm:$0xff]
    %v2891 = vld [vmem:[#allocation4 + $0xa8] sm:$0xff]
    %v2892 = vld [vmem:[#allocation4 + $0xb0] sm:$0xff]
    %v2893 = vld [vmem:[#allocation4 + $0xb8] sm:$0xff]
    %v2894 = vld [vmem:[#allocation4 + $0xc0] sm:$0xff]
    %v2895 = vld [vmem:[#allocation4 + $0xc8] sm:$0xff]
    %v2896 = vld [vmem:[#allocation4 + $0xd0] sm:$0xff]
    %v2897 = vld [vmem:[#allocation4 + $0xd8] sm:$0xff]
    %v2898 = vld [vmem:[#allocation4 + $0xe0] sm:$0xff]
    %v2899 = vld [vmem:[#allocation4 + $0xe8] sm:$0xff]
    %v2900 = vld [vmem:[#allocation4 + $0xf0] sm:$0xff]
    %v2901 = vld [vmem:[#allocation4 + $0xf8] sm:$0xff]
    %v2902 = vld [vmem:[#allocation4 + $0x100] sm:$0xff]
    %v2903 = vld [vmem:[#allocation4 + $0x108] sm:$0xff]
    %v2904 = vld [vmem:[#allocation4 + $0x110] sm:$0xff]
    %v2905 = vld [vmem:[#allocation4 + $0x118] sm:$0xff]
    %v2906 = vld [vmem:[#allocation4 + $0x120] sm:$0xff]
    %v2907 = vld [vmem:[#allocation4 + $0x128] sm:$0xff]
    %v2908 = vld [vmem:[#allocation4 + $0x130] sm:$0xff]
    %v2909 = vld [vmem:[#allocation4 + $0x138] sm:$0xff]
    %v2910 = vld [vmem:[#allocation4 + $0x140] sm:$0xff]
    %v2911 = vld [vmem:[#allocation4 + $0x148] sm:$0xff]
    %v2912 = vld [vmem:[#allocation4 + $0x150] sm:$0xff]
    %v2913 = vld [vmem:[#allocation4 + $0x158] sm:$0xff]
    %v2914 = vld [vmem:[#allocation4 + $0x160] sm:$0xff]
    %v2915 = vld [vmem:[#allocation4 + $0x168] sm:$0xff]
    %v2916 = vld [vmem:[#allocation4 + $0x170] sm:$0xff]
    %v2917 = vld [vmem:[#allocation4 + $0x178] sm:$0xff]
    %v2918 = vld [vmem:[#allocation4 + $0x180] sm:$0xff]
    %v2919 = vld [vmem:[#allocation4 + $0x188] sm:$0xff]
    %v2920 = vld [vmem:[#allocation4 + $0x190] sm:$0xff]
    %v2921 = vld [vmem:[#allocation4 + $0x198] sm:$0xff]
    %v2922 = vld [vmem:[#allocation4 + $0x1a0] sm:$0xff]
    %v2923 = vld [vmem:[#allocation4 + $0x1a8] sm:$0xff]
    %v2924 = vld [vmem:[#allocation4 + $0x1b0] sm:$0xff]
    %v2925 = vld [vmem:[#allocation4 + $0x1b8] sm:$0xff]
    %v2926 = vld [vmem:[#allocation4 + $0x1c0] sm:$0xff]
    %v2927 = vld [vmem:[#allocation4 + $0x1c8] sm:$0xff]
    %v2928 = vld [vmem:[#allocation4 + $0x1d0] sm:$0xff]
    %v2929 = vld [vmem:[#allocation4 + $0x1d8] sm:$0xff]
    %v2930 = vld [vmem:[#allocation4 + $0x1e0] sm:$0xff]
    %v2931 = vld [vmem:[#allocation4 + $0x1e8] sm:$0xff]
    %v2932 = vld [vmem:[#allocation4 + $0x1f0] sm:$0xff]
    %v2933 = vld [vmem:[#allocation4 + $0x1f8] sm:$0xff]
    %v2935 = vlaneseq
    %v2936 = vshrl.u32 %v2935, 7
    %v2937 = vsub.s32 0, %v2936
    %v2938 = vrot.slane %v2853, %v2937
    %v2939 = vlaneseq
    %v2940 = vshrl.u32 %v2939, 7
    %v2941 = vsub.s32 1, %v2940
    %v2942 = vrot.slane %v2853, %v2941
    %v2943 = vlaneseq
    %v2944 = vshrl.u32 %v2943, 7
    %v2945 = vsub.s32 2, %v2944
    %v2946 = vrot.slane %v2853, %v2945
    %v2947 = vlaneseq
    %v2948 = vshrl.u32 %v2947, 7
    %v2949 = vsub.s32 3, %v2948
    %v2950 = vrot.slane %v2853, %v2949
    %2955 = vmatprep.subr.mxu0 %v2871
    %2956 = vmatpush1.msra.mxu0 %v2870
    %2957 = vmatprep.subr.mxu0 %v2875
    %2958 = vmatpush1.msra.mxu0 %v2874
    %2959 = vmatprep.subr.mxu0 %v2879
    %2960 = vmatpush1.msra.mxu0 %v2878
    %2961 = vmatprep.subr.mxu0 %v2883
    %2962 = vmatpush1.msra.mxu0 %v2882
    %2963 = vmatprep.subr.mxu0 %v2887
    %2964 = vmatpush1.msra.mxu0 %v2886
    %2965 = vmatprep.subr.mxu0 %v2891
    %2966 = vmatpush1.msra.mxu0 %v2890
    %2967 = vmatprep.subr.mxu0 %v2895
    %2968 = vmatpush1.msra.mxu0 %v2894
    %2969 = vmatprep.subr.mxu0 %v2899
    %2970 = vmatpush1.msra.mxu0 %v2898
    %2971 = vmatprep.subr.mxu0 %v2903
    %2972 = vmatpush1.msra.mxu0 %v2902
    %2973 = vmatprep.subr.mxu0 %v2907
    %2974 = vmatpush1.msra.mxu0 %v2906
    %2975 = vmatprep.subr.mxu0 %v2911
    %2976 = vmatpush1.msra.mxu0 %v2910
    %2977 = vmatprep.subr.mxu0 %v2915
    %2978 = vmatpush1.msra.mxu0 %v2914
    %2979 = vmatprep.subr.mxu0 %v2919
    %2980 = vmatpush1.msra.mxu0 %v2918
    %2981 = vmatprep.subr.mxu0 %v2923
    %2982 = vmatpush1.msra.mxu0 %v2922
    %2983 = vmatprep.subr.mxu0 %v2927
    %2984 = vmatpush1.msra.mxu0 %v2926
    %2985 = vmatprep.subr.mxu0 %v2931
    %2986 = vmatpush1.msra.mxu0 %v2930
    %2987 = vmatprep.subr.mxu0 0.0
    %2988 = vmatpush1.msra.mxu0 0.0
    %2989 = vmatprep.subr.mxu0 0.0
    %2990 = vmatpush1.msra.mxu0 0.0
    %2991 = vmatprep.subr.mxu0 0.0
    %2992 = vmatpush1.msra.mxu0 0.0
    %2993 = vmatprep.subr.mxu0 0.0
    %2994 = vmatpush1.msra.mxu0 0.0
    %2995 = vmatprep.subr.mxu0 0.0
    %2996 = vmatpush1.msra.mxu0 0.0
    %2997 = vmatprep.subr.mxu0 0.0
    %2998 = vmatpush1.msra.mxu0 0.0
    %2999 = vmatprep.subr.mxu0 0.0
    %3000 = vmatpush1.msra.mxu0 0.0
    %3001 = vmatprep.subr.mxu0 0.0
    %3002 = vmatpush1.msra.mxu0 0.0
    %3003 = vmatprep.subr.mxu0 0.0
    %3004 = vmatpush1.msra.mxu0 0.0
    %3005 = vmatprep.subr.mxu0 0.0
    %3006 = vmatpush1.msra.mxu0 0.0
    %3007 = vmatprep.subr.mxu0 0.0
    %3008 = vmatpush1.msra.mxu0 0.0
    %3009 = vmatprep.subr.mxu0 0.0
    %3010 = vmatpush1.msra.mxu0 0.0
    %3011 = vmatprep.subr.mxu0 0.0
    %3012 = vmatpush1.msra.mxu0 0.0
    %3013 = vmatprep.subr.mxu0 0.0
    %3014 = vmatpush1.msra.mxu0 0.0
    %3015 = vmatprep.subr.mxu0 0.0
    %3016 = vmatpush1.msra.mxu0 0.0
    %3017 = vmatprep.subr.mxu0 0.0
    %3018 = vmatpush1.msra.mxu0 0.0
    %3019 = vmatprep.mubr.f32.mxu0 0.0
    %3020 = vmatmul.mubr.f32.gmra.mrb[0].mxu0 %v2854
    %v3021 = vpop.f32.mrb[0].mxu0
    %v3022 = vadd.f32 %v2938, %v3021
    %v3023 = vpop.f32.mrb[0].mxu0
    %v3024 = vadd.f32 %v2942, %v3023
    %3025 = vmatprep.mubr.f32.mxu0 0.0
    %3026 = vmatmul.mubr.f32.gmra.mrb[0].mxu0 %v2855
    %v3027 = vpop.f32.mrb[0].mxu0
    %v3028 = vadd.f32 %v2938, %v3027
    %v3029 = vpop.f32.mrb[0].mxu0
    %v3030 = vadd.f32 %v2942, %v3029
    %3031 = vmatprep.mubr.f32.mxu0 0.0
    %3032 = vmatmul.mubr.f32.gmra.mrb[0].mxu0 %v2856
    %v3033 = vpop.f32.mrb[0].mxu0
    %v3034 = vadd.f32 %v2938, %v3033
    %v3035 = vpop.f32.mrb[0].mxu0
    %v3036 = vadd.f32 %v2942, %v3035
    %3037 = vmatprep.mubr.f32.mxu0 0.0
    %3038 = vmatmul.mubr.f32.gmra.mrb[0].mxu0 %v2857
    %v3039 = vpop.f32.mrb[0].mxu0
    %v3040 = vadd.f32 %v2938, %v3039
    %v3041 = vpop.f32.mrb[0].mxu0
    %v3042 = vadd.f32 %v2942, %v3041
    %3043 = vmatprep.mubr.f32.mxu0 0.0
    %3044 = vmatmul.mubr.f32.gmra.mrb[0].mxu0 %v2858
    %v3045 = vpop.f32.mrb[0].mxu0
    %v3046 = vadd.f32 %v2938, %v3045
    %v3047 = vpop.f32.mrb[0].mxu0
    %v3048 = vadd.f32 %v2942, %v3047
    %3049 = vmatprep.mubr.f32.mxu0 0.0
    %3050 = vmatmul.mubr.f32.gmra.mrb[0].mxu0 %v2859
    %v3051 = vpop.f32.mrb[0].mxu0
    %v3052 = vadd.f32 %v2938, %v3051
    %v3053 = vpop.f32.mrb[0].mxu0
    %v3054 = vadd.f32 %v2942, %v3053
    %3055 = vmatprep.mubr.f32.mxu0 0.0
    %3056 = vmatmul.mubr.f32.gmra.mrb[0].mxu0 %v2860
    %v3057 = vpop.f32.mrb[0].mxu0
    %v3058 = vadd.f32 %v2938, %v3057
    %v3059 = vpop.f32.mrb[0].mxu0
    %v3060 = vadd.f32 %v2942, %v3059
    %3061 = vmatprep.mubr.f32.mxu0 0.0
    %3062 = vmatmul.mubr.f32.gmra.mrb[0].mxu0 %v2861
    %v3063 = vpop.f32.mrb[0].mxu0
    %v3064 = vadd.f32 %v2938, %v3063
    %v3065 = vpop.f32.mrb[0].mxu0
    %v3066 = vadd.f32 %v2942, %v3065
    %3067 = vmatprep.mubr.f32.mxu0 0.0
    %3068 = vmatmul.mubr.f32.gmra.mrb[0].mxu0 %v2862
    %v3069 = vpop.f32.mrb[0].mxu0
    %v3070 = vadd.f32 %v2938, %v3069
    %v3071 = vpop.f32.mrb[0].mxu0
    %v3072 = vadd.f32 %v2942, %v3071
    %3073 = vmatprep.mubr.f32.mxu0 0.0
    %3074 = vmatmul.mubr.f32.gmra.mrb[0].mxu0 %v2863
    %v3075 = vpop.f32.mrb[0].mxu0
    %v3076 = vadd.f32 %v2938, %v3075
    %v3077 = vpop.f32.mrb[0].mxu0
    %v3078 = vadd.f32 %v2942, %v3077
    %3079 = vmatprep.mubr.f32.mxu0 0.0
    %3080 = vmatmul.mubr.f32.gmra.mrb[0].mxu0 %v2864
    %v3081 = vpop.f32.mrb[0].mxu0
    %v3082 = vadd.f32 %v2938, %v3081
    %v3083 = vpop.f32.mrb[0].mxu0
    %v3084 = vadd.f32 %v2942, %v3083
    %3085 = vmatprep.mubr.f32.mxu0 0.0
    %3086 = vmatmul.mubr.f32.gmra.mrb[0].mxu0 %v2865
    %v3087 = vpop.f32.mrb[0].mxu0
    %v3088 = vadd.f32 %v2938, %v3087
    %v3089 = vpop.f32.mrb[0].mxu0
    %v3090 = vadd.f32 %v2942, %v3089
    %3091 = vmatprep.mubr.f32.mxu0 0.0
    %3092 = vmatmul.mubr.f32.gmra.mrb[0].mxu0 %v2866
    %v3093 = vpop.f32.mrb[0].mxu0
    %v3094 = vadd.f32 %v2938, %v3093
    %v3095 = vpop.f32.mrb[0].mxu0
    %v3096 = vadd.f32 %v2942, %v3095
    %3097 = vmatprep.mubr.f32.mxu0 0.0
    %3098 = vmatmul.mubr.f32.gmra.mrb[0].mxu0 %v2867
    %v3099 = vpop.f32.mrb[0].mxu0
    %v3100 = vadd.f32 %v2938, %v3099
    %v3101 = vpop.f32.mrb[0].mxu0
    %v3102 = vadd.f32 %v2942, %v3101
    %3103 = vmatprep.mubr.f32.mxu0 0.0
    %3104 = vmatmul.mubr.f32.gmra.mrb[0].mxu0 %v2868
    %v3105 = vpop.f32.mrb[0].mxu0
    %v3106 = vadd.f32 %v2938, %v3105
    %v3107 = vpop.f32.mrb[0].mxu0
    %v3108 = vadd.f32 %v2942, %v3107
    %3109 = vmatprep.mubr.f32.mxu0 0.0
    %3110 = vmatmul.mubr.f32.gmra.mrb[0].mxu0 %v2869
    %v3111 = vpop.f32.mrb[0].mxu0
    %v3112 = vadd.f32 %v2938, %v3111
    %v3113 = vpop.f32.mrb[0].mxu0
    %v3114 = vadd.f32 %v2942, %v3113
    %3115 = vdwg.mxu0
    %3116 = vmatprep.subr.mxu0 %v2873
    %3117 = vmatpush1.msra.mxu0 %v2872
    %3118 = vmatprep.subr.mxu0 %v2877
    %3119 = vmatpush1.msra.mxu0 %v2876
    %3120 = vmatprep.subr.mxu0 %v2881
    %3121 = vmatpush1.msra.mxu0 %v2880
    %3122 = vmatprep.subr.mxu0 %v2885
    %3123 = vmatpush1.msra.mxu0 %v2884
    %3124 = vmatprep.subr.mxu0 %v2889
    %3125 = vmatpush1.msra.mxu0 %v2888
    %3126 = vmatprep.subr.mxu0 %v2893
    %3127 = vmatpush1.msra.mxu0 %v2892
    %3128 = vmatprep.subr.mxu0 %v2897
    %3129 = vmatpush1.msra.mxu0 %v2896
    %3130 = vmatprep.subr.mxu0 %v2901
    %3131 = vmatpush1.msra.mxu0 %v2900
    %3132 = vmatprep.subr.mxu0 %v2905
    %3133 = vmatpush1.msra.mxu0 %v2904
    %3134 = vmatprep.subr.mxu0 %v2909
    %3135 = vmatpush1.msra.mxu0 %v2908
    %3136 = vmatprep.subr.mxu0 %v2913
    %3137 = vmatpush1.msra.mxu0 %v2912
    %3138 = vmatprep.subr.mxu0 %v2917
    %3139 = vmatpush1.msra.mxu0 %v2916
    %3140 = vmatprep.subr.mxu0 %v2921
    %3141 = vmatpush1.msra.mxu0 %v2920
    %3142 = vmatprep.subr.mxu0 %v2925
    %3143 = vmatpush1.msra.mxu0 %v2924
    %3144 = vmatprep.subr.mxu0 %v2929
    %3145 = vmatpush1.msra.mxu0 %v2928
    %3146 = vmatprep.subr.mxu0 %v2933
    %3147 = vmatpush1.msra.mxu0 %v2932
    %3148 = vmatprep.subr.mxu0 0.0
    %3149 = vmatpush1.msra.mxu0 0.0
    %3150 = vmatprep.subr.mxu0 0.0
    %3151 = vmatpush1.msra.mxu0 0.0
    %3152 = vmatprep.subr.mxu0 0.0
    %3153 = vmatpush1.msra.mxu0 0.0
    %3154 = vmatprep.subr.mxu0 0.0
    %3155 = vmatpush1.msra.mxu0 0.0
    %3156 = vmatprep.subr.mxu0 0.0
    %3157 = vmatpush1.msra.mxu0 0.0
    %3158 = vmatprep.subr.mxu0 0.0
    %3159 = vmatpush1.msra.mxu0 0.0
    %3160 = vmatprep.subr.mxu0 0.0
    %3161 = vmatpush1.msra.mxu0 0.0
    %3162 = vmatprep.subr.mxu0 0.0
    %3163 = vmatpush1.msra.mxu0 0.0
    %3164 = vmatprep.subr.mxu0 0.0
    %3165 = vmatpush1.msra.mxu0 0.0
    %3166 = vmatprep.subr.mxu0 0.0
    %3167 = vmatpush1.msra.mxu0 0.0
    %3168 = vmatprep.subr.mxu0 0.0
    %3169 = vmatpush1.msra.mxu0 0.0
    %3170 = vmatprep.subr.mxu0 0.0
    %3171 = vmatpush1.msra.mxu0 0.0
    %3172 = vmatprep.subr.mxu0 0.0
    %3173 = vmatpush1.msra.mxu0 0.0
    %3174 = vmatprep.subr.mxu0 0.0
    %3175 = vmatpush1.msra.mxu0 0.0
    %3176 = vmatprep.subr.mxu0 0.0
    %3177 = vmatpush1.msra.mxu0 0.0
    %3178 = vmatprep.subr.mxu0 0.0
    %3179 = vmatpush1.msra.mxu0 0.0
    %3180 = vmatprep.mubr.f32.mxu0 0.0
    %3181 = vmatmul.mubr.f32.gmra.mrb[0].mxu0 %v2854
    %v3182 = vpop.f32.mrb[0].mxu0
    %v3183 = vadd.f32 %v2946, %v3182
    %v3184 = vpop.f32.mrb[0].mxu0
    %v3185 = vadd.f32 %v2950, %v3184
    %3186 = vmatprep.mubr.f32.mxu0 0.0
    %3187 = vmatmul.mubr.f32.gmra.mrb[0].mxu0 %v2855
    %v3188 = vpop.f32.mrb[0].mxu0
    %v3189 = vadd.f32 %v2946, %v3188
    %v3190 = vpop.f32.mrb[0].mxu0
    %v3191 = vadd.f32 %v2950, %v3190
    %3192 = vmatprep.mubr.f32.mxu0 0.0
    %3193 = vmatmul.mubr.f32.gmra.mrb[0].mxu0 %v2856
    %v3194 = vpop.f32.mrb[0].mxu0
    %v3195 = vadd.f32 %v2946, %v3194
    %v3196 = vpop.f32.mrb[0].mxu0
    %v3197 = vadd.f32 %v2950, %v3196
    %3198 = vmatprep.mubr.f32.mxu0 0.0
    %3199 = vmatmul.mubr.f32.gmra.mrb[0].mxu0 %v2857
    %v3200 = vpop.f32.mrb[0].mxu0
    %v3201 = vadd.f32 %v2946, %v3200
    %v3202 = vpop.f32.mrb[0].mxu0
    %v3203 = vadd.f32 %v2950, %v3202
    %3204 = vmatprep.mubr.f32.mxu0 0.0
    %3205 = vmatmul.mubr.f32.gmra.mrb[0].mxu0 %v2858
    %v3206 = vpop.f32.mrb[0].mxu0
    %v3207 = vadd.f32 %v2946, %v3206
    %v3208 = vpop.f32.mrb[0].mxu0
    %v3209 = vadd.f32 %v2950, %v3208
    %3210 = vmatprep.mubr.f32.mxu0 0.0
    %3211 = vmatmul.mubr.f32.gmra.mrb[0].mxu0 %v2859
    %v3212 = vpop.f32.mrb[0].mxu0
    %v3213 = vadd.f32 %v2946, %v3212
    %v3214 = vpop.f32.mrb[0].mxu0
    %v3215 = vadd.f32 %v2950, %v3214
    %3216 = vmatprep.mubr.f32.mxu0 0.0
    %3217 = vmatmul.mubr.f32.gmra.mrb[0].mxu0 %v2860
    %v3218 = vpop.f32.mrb[0].mxu0
    %v3219 = vadd.f32 %v2946, %v3218
    %v3220 = vpop.f32.mrb[0].mxu0
    %v3221 = vadd.f32 %v2950, %v3220
    %3222 = vmatprep.mubr.f32.mxu0 0.0
    %3223 = vmatmul.mubr.f32.gmra.mrb[0].mxu0 %v2861
    %v3224 = vpop.f32.mrb[0].mxu0
    %v3225 = vadd.f32 %v2946, %v3224
    %v3226 = vpop.f32.mrb[0].mxu0
    %v3227 = vadd.f32 %v2950, %v3226
    %3228 = vmatprep.mubr.f32.mxu0 0.0
    %3229 = vmatmul.mubr.f32.gmra.mrb[0].mxu0 %v2862
    %v3230 = vpop.f32.mrb[0].mxu0
    %v3231 = vadd.f32 %v2946, %v3230
    %v3232 = vpop.f32.mrb[0].mxu0
    %v3233 = vadd.f32 %v2950, %v3232
    %3234 = vmatprep.mubr.f32.mxu0 0.0
    %3235 = vmatmul.mubr.f32.gmra.mrb[0].mxu0 %v2863
    %v3236 = vpop.f32.mrb[0].mxu0
    %v3237 = vadd.f32 %v2946, %v3236
    %v3238 = vpop.f32.mrb[0].mxu0
    %v3239 = vadd.f32 %v2950, %v3238
    %3240 = vmatprep.mubr.f32.mxu0 0.0
    %3241 = vmatmul.mubr.f32.gmra.mrb[0].mxu0 %v2864
    %v3242 = vpop.f32.mrb[0].mxu0
    %v3243 = vadd.f32 %v2946, %v3242
    %v3244 = vpop.f32.mrb[0].mxu0
    %v3245 = vadd.f32 %v2950, %v3244
    %3246 = vmatprep.mubr.f32.mxu0 0.0
    %3247 = vmatmul.mubr.f32.gmra.mrb[0].mxu0 %v2865
    %v3248 = vpop.f32.mrb[0].mxu0
    %v3249 = vadd.f32 %v2946, %v3248
    %v3250 = vpop.f32.mrb[0].mxu0
    %v3251 = vadd.f32 %v2950, %v3250
    %3252 = vmatprep.mubr.f32.mxu0 0.0
    %3253 = vmatmul.mubr.f32.gmra.mrb[0].mxu0 %v2866
    %v3254 = vpop.f32.mrb[0].mxu0
    %v3255 = vadd.f32 %v2946, %v3254
    %v3256 = vpop.f32.mrb[0].mxu0
    %v3257 = vadd.f32 %v2950, %v3256
    %3258 = vmatprep.mubr.f32.mxu0 0.0
    %3259 = vmatmul.mubr.f32.gmra.mrb[0].mxu0 %v2867
    %v3260 = vpop.f32.mrb[0].mxu0
    %v3261 = vadd.f32 %v2946, %v3260
    %v3262 = vpop.f32.mrb[0].mxu0
    %v3263 = vadd.f32 %v2950, %v3262
    %3264 = vmatprep.mubr.f32.mxu0 0.0
    %3265 = vmatmul.mubr.f32.gmra.mrb[0].mxu0 %v2868
    %v3266 = vpop.f32.mrb[0].mxu0
    %v3267 = vadd.f32 %v2946, %v3266
    %v3268 = vpop.f32.mrb[0].mxu0
    %v3269 = vadd.f32 %v2950, %v3268
    %3270 = vmatprep.mubr.f32.mxu0 0.0
    %3271 = vmatmul.mubr.f32.gmra.mrb[0].mxu0 %v2869
    %v3272 = vpop.f32.mrb[0].mxu0
    %v3273 = vadd.f32 %v2946, %v3272
    %v3274 = vpop.f32.mrb[0].mxu0
    %v3275 = vadd.f32 %v2950, %v3274
    %3276 = vdwg.mxu0
    %3277 = vst [vmem:[#allocation2] sm:$0xff] %v3022
    %3278 = vst [vmem:[#allocation2 + $0x8] sm:$0xff] %v3024
    %3279 = vst [vmem:[#allocation2 + $0x10] sm:$0xff] %v3183
    %3280 = vst [vmem:[#allocation2 + $0x18] sm:$0xff] %v3185
    %3281 = vst [vmem:[#allocation2 + $0x20] sm:$0xff] %v3028
    %3282 = vst [vmem:[#allocation2 + $0x28] sm:$0xff] %v3030
    %3283 = vst [vmem:[#allocation2 + $0x30] sm:$0xff] %v3189
    %3284 = vst [vmem:[#allocation2 + $0x38] sm:$0xff] %v3191
    %3285 = vst [vmem:[#allocation2 + $0x40] sm:$0xff] %v3034
    %3286 = vst [vmem:[#allocation2 + $0x48] sm:$0xff] %v3036
    %3287 = vst [vmem:[#allocation2 + $0x50] sm:$0xff] %v3195
    %3288 = vst [vmem:[#allocation2 + $0x58] sm:$0xff] %v3197
    %3289 = vst [vmem:[#allocation2 + $0x60] sm:$0xff] %v3040
    %3290 = vst [vmem:[#allocation2 + $0x68] sm:$0xff] %v3042
    %3291 = vst [vmem:[#allocation2 + $0x70] sm:$0xff] %v3201
    %3292 = vst [vmem:[#allocation2 + $0x78] sm:$0xff] %v3203
    %3293 = vst [vmem:[#allocation2 + $0x80] sm:$0xff] %v3046
    %3294 = vst [vmem:[#allocation2 + $0x88] sm:$0xff] %v3048
    %3295 = vst [vmem:[#allocation2 + $0x90] sm:$0xff] %v3207
    %3296 = vst [vmem:[#allocation2 + $0x98] sm:$0xff] %v3209
    %3297 = vst [vmem:[#allocation2 + $0xa0] sm:$0xff] %v3052
    %3298 = vst [vmem:[#allocation2 + $0xa8] sm:$0xff] %v3054
    %3299 = vst [vmem:[#allocation2 + $0xb0] sm:$0xff] %v3213
    %3300 = vst [vmem:[#allocation2 + $0xb8] sm:$0xff] %v3215
    %3301 = vst [vmem:[#allocation2 + $0xc0] sm:$0xff] %v3058
    %3302 = vst [vmem:[#allocation2 + $0xc8] sm:$0xff] %v3060
    %3303 = vst [vmem:[#allocation2 + $0xd0] sm:$0xff] %v3219
    %3304 = vst [vmem:[#allocation2 + $0xd8] sm:$0xff] %v3221
    %3305 = vst [vmem:[#allocation2 + $0xe0] sm:$0xff] %v3064
    %3306 = vst [vmem:[#allocation2 + $0xe8] sm:$0xff] %v3066
    %3307 = vst [vmem:[#allocation2 + $0xf0] sm:$0xff] %v3225
    %3308 = vst [vmem:[#allocation2 + $0xf8] sm:$0xff] %v3227
    %3309 = vst [vmem:[#allocation2 + $0x100] sm:$0xff] %v3070
    %3310 = vst [vmem:[#allocation2 + $0x108] sm:$0xff] %v3072
    %3311 = vst [vmem:[#allocation2 + $0x110] sm:$0xff] %v3231
    %3312 = vst [vmem:[#allocation2 + $0x118] sm:$0xff] %v3233
    %3313 = vst [vmem:[#allocation2 + $0x120] sm:$0xff] %v3076
    %3314 = vst [vmem:[#allocation2 + $0x128] sm:$0xff] %v3078
    %3315 = vst [vmem:[#allocation2 + $0x130] sm:$0xff] %v3237
    %3316 = vst [vmem:[#allocation2 + $0x138] sm:$0xff] %v3239
    %3317 = vst [vmem:[#allocation2 + $0x140] sm:$0xff] %v3082
    %3318 = vst [vmem:[#allocation2 + $0x148] sm:$0xff] %v3084
    %3319 = vst [vmem:[#allocation2 + $0x150] sm:$0xff] %v3243
    %3320 = vst [vmem:[#allocation2 + $0x158] sm:$0xff] %v3245
    %3321 = vst [vmem:[#allocation2 + $0x160] sm:$0xff] %v3088
    %3322 = vst [vmem:[#allocation2 + $0x168] sm:$0xff] %v3090
    %3323 = vst [vmem:[#allocation2 + $0x170] sm:$0xff] %v3249
    %3324 = vst [vmem:[#allocation2 + $0x178] sm:$0xff] %v3251
    %3325 = vst [vmem:[#allocation2 + $0x180] sm:$0xff] %v3094
    %3326 = vst [vmem:[#allocation2 + $0x188] sm:$0xff] %v3096
    %3327 = vst [vmem:[#allocation2 + $0x190] sm:$0xff] %v3255
    %3328 = vst [vmem:[#allocation2 + $0x198] sm:$0xff] %v3257
    %3329 = vst [vmem:[#allocation2 + $0x1a0] sm:$0xff] %v3100
    %3330 = vst [vmem:[#allocation2 + $0x1a8] sm:$0xff] %v3102
    %3331 = vst [vmem:[#allocation2 + $0x1b0] sm:$0xff] %v3261
    %3332 = vst [vmem:[#allocation2 + $0x1b8] sm:$0xff] %v3263
    %3333 = vst [vmem:[#allocation2 + $0x1c0] sm:$0xff] %v3106
    %3334 = vst [vmem:[#allocation2 + $0x1c8] sm:$0xff] %v3108
    %3335 = vst [vmem:[#allocation2 + $0x1d0] sm:$0xff] %v3267
    %3336 = vst [vmem:[#allocation2 + $0x1d8] sm:$0xff] %v3269
    %3337 = vst [vmem:[#allocation2 + $0x1e0] sm:$0xff] %v3112
    %3338 = vst [vmem:[#allocation2 + $0x1e8] sm:$0xff] %v3114
    %3339 = vst [vmem:[#allocation2 + $0x1f0] sm:$0xff] %v3273
    %3340 = vst [vmem:[#allocation2 + $0x1f8] sm:$0xff] %v3275
    %v3341 = vld [vmem:[#allocation2] sm:$0xff]
    %v3342 = vld [vmem:[#allocation2 + $0x8] sm:$0xff]
    %v3343 = vld [vmem:[#allocation2 + $0x10] sm:$0xff]
    %v3344 = vld [vmem:[#allocation2 + $0x18] sm:$0xff]
    %v3345 = vld [vmem:[#allocation2 + $0x20] sm:$0xff]
    %v3346 = vld [vmem:[#allocation2 + $0x28] sm:$0xff]
    %v3347 = vld [vmem:[#allocation2 + $0x30] sm:$0xff]
    %v3348 = vld [vmem:[#allocation2 + $0x38] sm:$0xff]
    %v3349 = vld [vmem:[%s53] sm:$0xff]
    %v3350 = vld [vmem:[%s53 + $0x8] sm:$0xff]
    %v3351 = vld [vmem:[%s53 + $0x10] sm:$0xff]
    %v3352 = vld [vmem:[%s53 + $0x18] sm:$0xff]
    %v3353 = vld [vmem:[%s53 + $0x20] sm:$0xff]
    %v3354 = vld [vmem:[%s53 + $0x28] sm:$0xff]
    %v3355 = vld [vmem:[%s53 + $0x30] sm:$0xff]
    %v3356 = vld [vmem:[%s53 + $0x38] sm:$0xff]
    %v3357 = vld [vmem:[%s53 + $0x40] sm:$0xff]
    %v3358 = vld [vmem:[%s53 + $0x48] sm:$0xff]
    %v3359 = vld [vmem:[%s53 + $0x50] sm:$0xff]
    %v3360 = vld [vmem:[%s53 + $0x58] sm:$0xff]
    %v3361 = vld [vmem:[%s53 + $0x60] sm:$0xff]
    %v3362 = vld [vmem:[%s53 + $0x68] sm:$0xff]
    %v3363 = vld [vmem:[%s53 + $0x70] sm:$0xff]
    %v3364 = vld [vmem:[%s53 + $0x78] sm:$0xff]
    %v3365 = vld [vmem:[%s53 + $0x80] sm:$0xff]
    %v3366 = vld [vmem:[%s53 + $0x88] sm:$0xff]
    %v3367 = vld [vmem:[%s53 + $0x90] sm:$0xff]
    %v3368 = vld [vmem:[%s53 + $0x98] sm:$0xff]
    %v3369 = vld [vmem:[%s53 + $0xa0] sm:$0xff]
    %v3370 = vld [vmem:[%s53 + $0xa8] sm:$0xff]
    %v3371 = vld [vmem:[%s53 + $0xb0] sm:$0xff]
    %v3372 = vld [vmem:[%s53 + $0xb8] sm:$0xff]
    %v3373 = vld [vmem:[%s53 + $0xc0] sm:$0xff]
    %v3374 = vld [vmem:[%s53 + $0xc8] sm:$0xff]
    %v3375 = vld [vmem:[%s53 + $0xd0] sm:$0xff]
    %v3376 = vld [vmem:[%s53 + $0xd8] sm:$0xff]
    %v3377 = vld [vmem:[%s53 + $0xe0] sm:$0xff]
    %v3378 = vld [vmem:[%s53 + $0xe8] sm:$0xff]
    %v3379 = vld [vmem:[%s53 + $0xf0] sm:$0xff]
    %v3380 = vld [vmem:[%s53 + $0xf8] sm:$0xff]
    %v3381 = vld [vmem:[%s53 + $0x100] sm:$0xff]
    %v3382 = vld [vmem:[%s53 + $0x108] sm:$0xff]
    %v3383 = vld [vmem:[%s53 + $0x110] sm:$0xff]
    %v3384 = vld [vmem:[%s53 + $0x118] sm:$0xff]
    %v3385 = vld [vmem:[%s53 + $0x120] sm:$0xff]
    %v3386 = vld [vmem:[%s53 + $0x128] sm:$0xff]
    %v3387 = vld [vmem:[%s53 + $0x130] sm:$0xff]
    %v3388 = vld [vmem:[%s53 + $0x138] sm:$0xff]
    %v3389 = vld [vmem:[%s53 + $0x140] sm:$0xff]
    %v3390 = vld [vmem:[%s53 + $0x148] sm:$0xff]
    %v3391 = vld [vmem:[%s53 + $0x150] sm:$0xff]
    %v3392 = vld [vmem:[%s53 + $0x158] sm:$0xff]
    %v3393 = vld [vmem:[%s53 + $0x160] sm:$0xff]
    %v3394 = vld [vmem:[%s53 + $0x168] sm:$0xff]
    %v3395 = vld [vmem:[%s53 + $0x170] sm:$0xff]
    %v3396 = vld [vmem:[%s53 + $0x178] sm:$0xff]
    %v3397 = vld [vmem:[%s53 + $0x180] sm:$0xff]
    %v3398 = vld [vmem:[%s53 + $0x188] sm:$0xff]
    %v3399 = vld [vmem:[%s53 + $0x190] sm:$0xff]
    %v3400 = vld [vmem:[%s53 + $0x198] sm:$0xff]
    %v3401 = vld [vmem:[%s53 + $0x1a0] sm:$0xff]
    %v3402 = vld [vmem:[%s53 + $0x1a8] sm:$0xff]
    %v3403 = vld [vmem:[%s53 + $0x1b0] sm:$0xff]
    %v3404 = vld [vmem:[%s53 + $0x1b8] sm:$0xff]
    %v3405 = vld [vmem:[%s53 + $0x1c0] sm:$0xff]
    %v3406 = vld [vmem:[%s53 + $0x1c8] sm:$0xff]
    %v3407 = vld [vmem:[%s53 + $0x1d0] sm:$0xff]
    %v3408 = vld [vmem:[%s53 + $0x1d8] sm:$0xff]
    %v3409 = vld [vmem:[%s53 + $0x1e0] sm:$0xff]
    %v3410 = vld [vmem:[%s53 + $0x1e8] sm:$0xff]
    %v3411 = vld [vmem:[%s53 + $0x1f0] sm:$0xff]
    %v3412 = vld [vmem:[%s53 + $0x1f8] sm:$0xff]
    %3413 = vmatprep.subr.mxu0 %v3350
    %3414 = vmatpush1.msra.mxu0 %v3349
    %3415 = vmatprep.subr.mxu0 %v3354
    %3416 = vmatpush1.msra.mxu0 %v3353
    %3417 = vmatprep.subr.mxu0 %v3358
    %3418 = vmatpush1.msra.mxu0 %v3357
    %3419 = vmatprep.subr.mxu0 %v3362
    %3420 = vmatpush1.msra.mxu0 %v3361
    %3421 = vmatprep.subr.mxu0 %v3366
    %3422 = vmatpush1.msra.mxu0 %v3365
    %3423 = vmatprep.subr.mxu0 %v3370
    %3424 = vmatpush1.msra.mxu0 %v3369
    %3425 = vmatprep.subr.mxu0 %v3374
    %3426 = vmatpush1.msra.mxu0 %v3373
    %3427 = vmatprep.subr.mxu0 %v3378
    %3428 = vmatpush1.msra.mxu0 %v3377
    %3429 = vmatprep.subr.mxu0 %v3382
    %3430 = vmatpush1.msra.mxu0 %v3381
    %3431 = vmatprep.subr.mxu0 %v3386
    %3432 = vmatpush1.msra.mxu0 %v3385
    %3433 = vmatprep.subr.mxu0 %v3390
    %3434 = vmatpush1.msra.mxu0 %v3389
    %3435 = vmatprep.subr.mxu0 %v3394
    %3436 = vmatpush1.msra.mxu0 %v3393
    %3437 = vmatprep.subr.mxu0 %v3398
    %3438 = vmatpush1.msra.mxu0 %v3397
    %3439 = vmatprep.subr.mxu0 %v3402
    %3440 = vmatpush1.msra.mxu0 %v3401
    %3441 = vmatprep.subr.mxu0 %v3406
    %3442 = vmatpush1.msra.mxu0 %v3405
    %3443 = vmatprep.subr.mxu0 %v3410
    %3444 = vmatpush1.msra.mxu0 %v3409
    %3445 = vmatprep.subr.mxu0 0.0
    %3446 = vmatpush1.msra.mxu0 0.0
    %3447 = vmatprep.subr.mxu0 0.0
    %3448 = vmatpush1.msra.mxu0 0.0
    %3449 = vmatprep.subr.mxu0 0.0
    %3450 = vmatpush1.msra.mxu0 0.0
    %3451 = vmatprep.subr.mxu0 0.0
    %3452 = vmatpush1.msra.mxu0 0.0
    %3453 = vmatprep.subr.mxu0 0.0
    %3454 = vmatpush1.msra.mxu0 0.0
    %3455 = vmatprep.subr.mxu0 0.0
    %3456 = vmatpush1.msra.mxu0 0.0
    %3457 = vmatprep.subr.mxu0 0.0
    %3458 = vmatpush1.msra.mxu0 0.0
    %3459 = vmatprep.subr.mxu0 0.0
    %3460 = vmatpush1.msra.mxu0 0.0
    %3461 = vmatprep.subr.mxu0 0.0
    %3462 = vmatpush1.msra.mxu0 0.0
    %3463 = vmatprep.subr.mxu0 0.0
    %3464 = vmatpush1.msra.mxu0 0.0
    %3465 = vmatprep.subr.mxu0 0.0
    %3466 = vmatpush1.msra.mxu0 0.0
    %3467 = vmatprep.subr.mxu0 0.0
    %3468 = vmatpush1.msra.mxu0 0.0
    %3469 = vmatprep.subr.mxu0 0.0
    %3470 = vmatpush1.msra.mxu0 0.0
    %3471 = vmatprep.subr.mxu0 0.0
    %3472 = vmatpush1.msra.mxu0 0.0
    %3473 = vmatprep.subr.mxu0 0.0
    %3474 = vmatpush1.msra.mxu0 0.0
    %3475 = vmatprep.subr.mxu0 0.0
    %3476 = vmatpush1.msra.mxu0 0.0
    %3477 = vmatprep.mubr.f32.mxu0 0.0
    %3478 = vmatmul.mubr.f32.gmra.mrb[0].mxu0 0.0
    %v3479 = vpop.f32.mrb[0].mxu0
    %v3480 = vadd.f32 0.0, %v3479
    %v3481 = vpop.f32.mrb[0].mxu0
    %v3482 = vadd.f32 0.0, %v3481
    %3483 = vmatprep.mubr.f32.mxu0 0.0
    %3484 = vmatmul.mubr.f32.gmra.mrb[0].mxu0 0.0
    %v3485 = vpop.f32.mrb[0].mxu0
    %v3486 = vadd.f32 0.0, %v3485
    %v3487 = vpop.f32.mrb[0].mxu0
    %v3488 = vadd.f32 0.0, %v3487
    %3489 = vdwg.mxu0
    %3490 = vmatprep.subr.mxu0 %v3352
    %3491 = vmatpush1.msra.mxu0 %v3351
    %3492 = vmatprep.subr.mxu0 %v3356
    %3493 = vmatpush1.msra.mxu0 %v3355
    %3494 = vmatprep.subr.mxu0 %v3360
    %3495 = vmatpush1.msra.mxu0 %v3359
    %3496 = vmatprep.subr.mxu0 %v3364
    %3497 = vmatpush1.msra.mxu0 %v3363
    %3498 = vmatprep.subr.mxu0 %v3368
    %3499 = vmatpush1.msra.mxu0 %v3367
    %3500 = vmatprep.subr.mxu0 %v3372
    %3501 = vmatpush1.msra.mxu0 %v3371
    %3502 = vmatprep.subr.mxu0 %v3376
    %3503 = vmatpush1.msra.mxu0 %v3375
    %3504 = vmatprep.subr.mxu0 %v3380
    %3505 = vmatpush1.msra.mxu0 %v3379
    %3506 = vmatprep.subr.mxu0 %v3384
    %3507 = vmatpush1.msra.mxu0 %v3383
    %3508 = vmatprep.subr.mxu0 %v3388
    %3509 = vmatpush1.msra.mxu0 %v3387
    %3510 = vmatprep.subr.mxu0 %v3392
    %3511 = vmatpush1.msra.mxu0 %v3391
    %3512 = vmatprep.subr.mxu0 %v3396
    %3513 = vmatpush1.msra.mxu0 %v3395
    %3514 = vmatprep.subr.mxu0 %v3400
    %3515 = vmatpush1.msra.mxu0 %v3399
    %3516 = vmatprep.subr.mxu0 %v3404
    %3517 = vmatpush1.msra.mxu0 %v3403
    %3518 = vmatprep.subr.mxu0 %v3408
    %3519 = vmatpush1.msra.mxu0 %v3407
    %3520 = vmatprep.subr.mxu0 %v3412
    %3521 = vmatpush1.msra.mxu0 %v3411
    %3522 = vmatprep.subr.mxu0 0.0
    %3523 = vmatpush1.msra.mxu0 0.0
    %3524 = vmatprep.subr.mxu0 0.0
    %3525 = vmatpush1.msra.mxu0 0.0
    %3526 = vmatprep.subr.mxu0 0.0
    %3527 = vmatpush1.msra.mxu0 0.0
    %3528 = vmatprep.subr.mxu0 0.0
    %3529 = vmatpush1.msra.mxu0 0.0
    %3530 = vmatprep.subr.mxu0 0.0
    %3531 = vmatpush1.msra.mxu0 0.0
    %3532 = vmatprep.subr.mxu0 0.0
    %3533 = vmatpush1.msra.mxu0 0.0
    %3534 = vmatprep.subr.mxu0 0.0
    %3535 = vmatpush1.msra.mxu0 0.0
    %3536 = vmatprep.subr.mxu0 0.0
    %3537 = vmatpush1.msra.mxu0 0.0
    %3538 = vmatprep.subr.mxu0 0.0
    %3539 = vmatpush1.msra.mxu0 0.0
    %3540 = vmatprep.subr.mxu0 0.0
    %3541 = vmatpush1.msra.mxu0 0.0
    %3542 = vmatprep.subr.mxu0 0.0
    %3543 = vmatpush1.msra.mxu0 0.0
    %3544 = vmatprep.subr.mxu0 0.0
    %3545 = vmatpush1.msra.mxu0 0.0
    %3546 = vmatprep.subr.mxu0 0.0
    %3547 = vmatpush1.msra.mxu0 0.0
    %3548 = vmatprep.subr.mxu0 0.0
    %3549 = vmatpush1.msra.mxu0 0.0
    %3550 = vmatprep.subr.mxu0 0.0
    %3551 = vmatpush1.msra.mxu0 0.0
    %3552 = vmatprep.subr.mxu0 0.0
    %3553 = vmatpush1.msra.mxu0 0.0
    %3554 = vmatprep.mubr.f32.mxu0 0.0
    %3555 = vmatmul.mubr.f32.gmra.mrb[0].mxu0 0.0
    %v3556 = vpop.f32.mrb[0].mxu0
    %v3557 = vadd.f32 0.0, %v3556
    %v3558 = vpop.f32.mrb[0].mxu0
    %v3559 = vadd.f32 0.0, %v3558
    %3560 = vmatprep.mubr.f32.mxu0 0.0
    %3561 = vmatmul.mubr.f32.gmra.mrb[0].mxu0 0.0
    %v3562 = vpop.f32.mrb[0].mxu0
    %v3563 = vadd.f32 0.0, %v3562
    %v3564 = vpop.f32.mrb[0].mxu0
    %v3565 = vadd.f32 0.0, %v3564
    %3566 = vdwg.mxu0
    %v3567 = vadd.f32 %v3341, %v3480
    %v3568 = vadd.f32 %v3342, %v3482
    %v3569 = vadd.f32 %v3343, %v3557
    %v3570 = vadd.f32 %v3344, %v3559
    %v3571 = vadd.f32 %v3345, %v3486
    %v3572 = vadd.f32 %v3346, %v3488
    %v3573 = vadd.f32 %v3347, %v3563
    %v3574 = vadd.f32 %v3348, %v3565
    %v3575 = vxor.u32 %v3567, 2147483648
    %v3576 = vxor.u32 %v3568, 2147483648
    %v3577 = vxor.u32 %v3569, 2147483648
    %v3578 = vxor.u32 %v3571, 2147483648
    %v3579 = vxor.u32 %v3572, 2147483648
    %v3580 = vxor.u32 %v3573, 2147483648
    %v3581 = vmul.f32 %v3575, 1.442695
    %v3582 = vpow.pop %v3581
    %v3583 = vmul.f32 %v3576, 1.442695
    %v3584 = vpow.pop %v3583
    %v3585 = vmul.f32 %v3577, 1.442695
    %v3586 = vpow.pop %v3585
    %v3587 = vmul.f32 %v3578, 1.442695
    %v3588 = vpow.pop %v3587
    %v3589 = vmul.f32 %v3579, 1.442695
    %v3590 = vpow.pop %v3589
    %v3591 = vmul.f32 %v3580, 1.442695
    %v3592 = vpow.pop %v3591
    %v3593 = vadd.f32 %v3582, 1.0
    %v3594 = vadd.f32 %v3584, 1.0
    %v3595 = vadd.f32 %v3586, 1.0
    %v3596 = vadd.f32 %v3588, 1.0
    %v3597 = vadd.f32 %v3590, 1.0
    %v3598 = vadd.f32 %v3592, 1.0
    %v3599 = vrcp.pop %v3593
    %v3600 = vmul.f32 1.0, %v3599
    %v3601 = vrcp.pop %v3594
    %v3602 = vmul.f32 1.0, %v3601
    %v3603 = vrcp.pop %v3595
    %v3604 = vmul.f32 1.0, %v3603
    %v3605 = vrcp.pop %v3596
    %v3606 = vmul.f32 1.0, %v3605
    %v3607 = vrcp.pop %v3597
    %v3608 = vmul.f32 1.0, %v3607
    %v3609 = vrcp.pop %v3598
    %v3610 = vmul.f32 1.0, %v3609
    %v3611 = vtanh.pop %v3570
    %v3612 = vtanh.pop %v3574
    %v3613 = vmul.f32 %v3602, 0.0
    %v3614 = vmul.f32 %v3608, 0.0
    %v3615 = vmul.f32 %v3600, %v3611
    %v3616 = vmul.f32 %v3606, %v3612
    %v3617 = vadd.f32 %v3613, %v3615
    %v3618 = vadd.f32 %v3614, %v3616
    %v3619 = vtanh.pop %v3617
    %v3620 = vtanh.pop %v3618
    %v3621 = vmul.f32 %v3604, %v3619
    %v3622 = vmul.f32 %v3610, %v3620
    %v3623 = vld [vmem:[%s842] sm:$0xff]
    %v3624 = vld [vmem:[%s842 + $0x8] sm:$0xff]
    %v3625 = vld [vmem:[%s842 + $0x10] sm:$0xff]
    %v3626 = vld [vmem:[%s842 + $0x18] sm:$0xff]
    %v3627 = vld [vmem:[%s842 + $0x20] sm:$0xff]
    %v3628 = vld [vmem:[%s842 + $0x28] sm:$0xff]
    %v3629 = vld [vmem:[%s842 + $0x30] sm:$0xff]
    %v3630 = vld [vmem:[%s842 + $0x38] sm:$0xff]
    %3631 = vmatprep.subr.mxu0 %v3350
    %3632 = vmatpush1.msra.mxu0 %v3349
    %3633 = vmatprep.subr.mxu0 %v3354
    %3634 = vmatpush1.msra.mxu0 %v3353
    %3635 = vmatprep.subr.mxu0 %v3358
    %3636 = vmatpush1.msra.mxu0 %v3357
    %3637 = vmatprep.subr.mxu0 %v3362
    %3638 = vmatpush1.msra.mxu0 %v3361
    %3639 = vmatprep.subr.mxu0 %v3366
    %3640 = vmatpush1.msra.mxu0 %v3365
    %3641 = vmatprep.subr.mxu0 %v3370
    %3642 = vmatpush1.msra.mxu0 %v3369
    %3643 = vmatprep.subr.mxu0 %v3374
    %3644 = vmatpush1.msra.mxu0 %v3373
    %3645 = vmatprep.subr.mxu0 %v3378
    %3646 = vmatpush1.msra.mxu0 %v3377
    %3647 = vmatprep.subr.mxu0 %v3382
    %3648 = vmatpush1.msra.mxu0 %v3381
    %3649 = vmatprep.subr.mxu0 %v3386
    %3650 = vmatpush1.msra.mxu0 %v3385
    %3651 = vmatprep.subr.mxu0 %v3390
    %3652 = vmatpush1.msra.mxu0 %v3389
    %3653 = vmatprep.subr.mxu0 %v3394
    %3654 = vmatpush1.msra.mxu0 %v3393
    %3655 = vmatprep.subr.mxu0 %v3398
    %3656 = vmatpush1.msra.mxu0 %v3397
    %3657 = vmatprep.subr.mxu0 %v3402
    %3658 = vmatpush1.msra.mxu0 %v3401
    %3659 = vmatprep.subr.mxu0 %v3406
    %3660 = vmatpush1.msra.mxu0 %v3405
    %3661 = vmatprep.subr.mxu0 %v3410
    %3662 = vmatpush1.msra.mxu0 %v3409
    %3663 = vmatprep.subr.mxu0 0.0
    %3664 = vmatpush1.msra.mxu0 0.0
    %3665 = vmatprep.subr.mxu0 0.0
    %3666 = vmatpush1.msra.mxu0 0.0
    %3667 = vmatprep.subr.mxu0 0.0
    %3668 = vmatpush1.msra.mxu0 0.0
    %3669 = vmatprep.subr.mxu0 0.0
    %3670 = vmatpush1.msra.mxu0 0.0
    %3671 = vmatprep.subr.mxu0 0.0
    %3672 = vmatpush1.msra.mxu0 0.0
    %3673 = vmatprep.subr.mxu0 0.0
    %3674 = vmatpush1.msra.mxu0 0.0
    %3675 = vmatprep.subr.mxu0 0.0
    %3676 = vmatpush1.msra.mxu0 0.0
    %3677 = vmatprep.subr.mxu0 0.0
    %3678 = vmatpush1.msra.mxu0 0.0
    %3679 = vmatprep.subr.mxu0 0.0
    %3680 = vmatpush1.msra.mxu0 0.0
    %3681 = vmatprep.subr.mxu0 0.0
    %3682 = vmatpush1.msra.mxu0 0.0
    %3683 = vmatprep.subr.mxu0 0.0
    %3684 = vmatpush1.msra.mxu0 0.0
    %3685 = vmatprep.subr.mxu0 0.0
    %3686 = vmatpush1.msra.mxu0 0.0
    %3687 = vmatprep.subr.mxu0 0.0
    %3688 = vmatpush1.msra.mxu0 0.0
    %3689 = vmatprep.subr.mxu0 0.0
    %3690 = vmatpush1.msra.mxu0 0.0
    %3691 = vmatprep.subr.mxu0 0.0
    %3692 = vmatpush1.msra.mxu0 0.0
    %3693 = vmatprep.subr.mxu0 0.0
    %3694 = vmatpush1.msra.mxu0 0.0
    %3695 = vmatprep.mubr.f32.mxu0 0.0
    %3696 = vmatmul.mubr.f32.gmra.mrb[0].mxu0 %v3621
    %v3697 = vpop.f32.mrb[0].mxu0
    %v3698 = vadd.f32 0.0, %v3697
    %v3699 = vpop.f32.mrb[0].mxu0
    %v3700 = vadd.f32 0.0, %v3699
    %3701 = vmatprep.mubr.f32.mxu0 0.0
    %3702 = vmatmul.mubr.f32.gmra.mrb[0].mxu0 %v3622
    %v3703 = vpop.f32.mrb[0].mxu0
    %v3704 = vadd.f32 0.0, %v3703
    %v3705 = vpop.f32.mrb[0].mxu0
    %v3706 = vadd.f32 0.0, %v3705
    %3707 = vdwg.mxu0
    %3708 = vmatprep.subr.mxu0 %v3352
    %3709 = vmatpush1.msra.mxu0 %v3351
    %3710 = vmatprep.subr.mxu0 %v3356
    %3711 = vmatpush1.msra.mxu0 %v3355
    %3712 = vmatprep.subr.mxu0 %v3360
    %3713 = vmatpush1.msra.mxu0 %v3359
    %3714 = vmatprep.subr.mxu0 %v3364
    %3715 = vmatpush1.msra.mxu0 %v3363
    %3716 = vmatprep.subr.mxu0 %v3368
    %3717 = vmatpush1.msra.mxu0 %v3367
    %3718 = vmatprep.subr.mxu0 %v3372
    %3719 = vmatpush1.msra.mxu0 %v3371
    %3720 = vmatprep.subr.mxu0 %v3376
    %3721 = vmatpush1.msra.mxu0 %v3375
    %3722 = vmatprep.subr.mxu0 %v3380
    %3723 = vmatpush1.msra.mxu0 %v3379
    %3724 = vmatprep.subr.mxu0 %v3384
    %3725 = vmatpush1.msra.mxu0 %v3383
    %3726 = vmatprep.subr.mxu0 %v3388
    %3727 = vmatpush1.msra.mxu0 %v3387
    %3728 = vmatprep.subr.mxu0 %v3392
    %3729 = vmatpush1.msra.mxu0 %v3391
    %3730 = vmatprep.subr.mxu0 %v3396
    %3731 = vmatpush1.msra.mxu0 %v3395
    %3732 = vmatprep.subr.mxu0 %v3400
    %3733 = vmatpush1.msra.mxu0 %v3399
    %3734 = vmatprep.subr.mxu0 %v3404
    %3735 = vmatpush1.msra.mxu0 %v3403
    %3736 = vmatprep.subr.mxu0 %v3408
    %3737 = vmatpush1.msra.mxu0 %v3407
    %3738 = vmatprep.subr.mxu0 %v3412
    %3739 = vmatpush1.msra.mxu0 %v3411
    %3740 = vmatprep.subr.mxu0 0.0
    %3741 = vmatpush1.msra.mxu0 0.0
    %3742 = vmatprep.subr.mxu0 0.0
    %3743 = vmatpush1.msra.mxu0 0.0
    %3744 = vmatprep.subr.mxu0 0.0
    %3745 = vmatpush1.msra.mxu0 0.0
    %3746 = vmatprep.subr.mxu0 0.0
    %3747 = vmatpush1.msra.mxu0 0.0
    %3748 = vmatprep.subr.mxu0 0.0
    %3749 = vmatpush1.msra.mxu0 0.0
    %3750 = vmatprep.subr.mxu0 0.0
    %3751 = vmatpush1.msra.mxu0 0.0
    %3752 = vmatprep.subr.mxu0 0.0
    %3753 = vmatpush1.msra.mxu0 0.0
    %3754 = vmatprep.subr.mxu0 0.0
    %3755 = vmatpush1.msra.mxu0 0.0
    %3756 = vmatprep.subr.mxu0 0.0
    %3757 = vmatpush1.msra.mxu0 0.0
    %3758 = vmatprep.subr.mxu0 0.0
    %3759 = vmatpush1.msra.mxu0 0.0
    %3760 = vmatprep.subr.mxu0 0.0
    %3761 = vmatpush1.msra.mxu0 0.0
    %3762 = vmatprep.subr.mxu0 0.0
    %3763 = vmatpush1.msra.mxu0 0.0
    %3764 = vmatprep.subr.mxu0 0.0
    %3765 = vmatpush1.msra.mxu0 0.0
    %3766 = vmatprep.subr.mxu0 0.0
    %3767 = vmatpush1.msra.mxu0 0.0
    %3768 = vmatprep.subr.mxu0 0.0
    %3769 = vmatpush1.msra.mxu0 0.0
    %3770 = vmatprep.subr.mxu0 0.0
    %3771 = vmatpush1.msra.mxu0 0.0
    %3772 = vmatprep.mubr.f32.mxu0 0.0
    %3773 = vmatmul.mubr.f32.gmra.mrb[0].mxu0 %v3621
    %v3774 = vpop.f32.mrb[0].mxu0
    %v3775 = vadd.f32 0.0, %v3774
    %v3776 = vpop.f32.mrb[0].mxu0
    %v3777 = vadd.f32 0.0, %v3776
    %3778 = vmatprep.mubr.f32.mxu0 0.0
    %3779 = vmatmul.mubr.f32.gmra.mrb[0].mxu0 %v3622
    %v3780 = vpop.f32.mrb[0].mxu0
    %v3781 = vadd.f32 0.0, %v3780
    %v3782 = vpop.f32.mrb[0].mxu0
    %v3783 = vadd.f32 0.0, %v3782
    %3784 = vdwg.mxu0
    %v3785 = vadd.f32 %v3623, %v3698
    %v3786 = vadd.f32 %v3624, %v3700
    %v3787 = vadd.f32 %v3625, %v3775
    %v3788 = vadd.f32 %v3626, %v3777
    %v3789 = vadd.f32 %v3627, %v3704
    %v3790 = vadd.f32 %v3628, %v3706
    %v3791 = vadd.f32 %v3629, %v3781
    %v3792 = vadd.f32 %v3630, %v3783
    %v3793 = vxor.u32 %v3785, 2147483648
    %v3794 = vxor.u32 %v3786, 2147483648
    %v3795 = vxor.u32 %v3787, 2147483648
    %v3796 = vxor.u32 %v3789, 2147483648
    %v3797 = vxor.u32 %v3790, 2147483648
    %v3798 = vxor.u32 %v3791, 2147483648
    %v3799 = vmul.f32 %v3793, 1.442695
    %v3800 = vpow.pop %v3799
    %v3801 = vmul.f32 %v3794, 1.442695
    %v3802 = vpow.pop %v3801
    %v3803 = vmul.f32 %v3795, 1.442695
    %v3804 = vpow.pop %v3803
    %v3805 = vmul.f32 %v3796, 1.442695
    %v3806 = vpow.pop %v3805
    %v3807 = vmul.f32 %v3797, 1.442695
    %v3808 = vpow.pop %v3807
    %v3809 = vmul.f32 %v3798, 1.442695
    %v3810 = vpow.pop %v3809
    %v3811 = vadd.f32 %v3800, 1.0
    %v3812 = vadd.f32 %v3802, 1.0
    %v3813 = vadd.f32 %v3804, 1.0
    %v3814 = vadd.f32 %v3806, 1.0
    %v3815 = vadd.f32 %v3808, 1.0
    %v3816 = vadd.f32 %v3810, 1.0
    %v3817 = vrcp.pop %v3811
    %v3818 = vmul.f32 1.0, %v3817
    %v3819 = vrcp.pop %v3812
    %v3820 = vmul.f32 1.0, %v3819
    %v3821 = vrcp.pop %v3813
    %v3822 = vmul.f32 1.0, %v3821
    %v3823 = vrcp.pop %v3814
    %v3824 = vmul.f32 1.0, %v3823
    %v3825 = vrcp.pop %v3815
    %v3826 = vmul.f32 1.0, %v3825
    %v3827 = vrcp.pop %v3816
    %v3828 = vmul.f32 1.0, %v3827
    %v3829 = vtanh.pop %v3788
    %v3830 = vtanh.pop %v3792
    %v3831 = vmul.f32 %v3820, %v3617
    %v3832 = vmul.f32 %v3826, %v3618
    %v3833 = vmul.f32 %v3818, %v3829
    %v3834 = vmul.f32 %v3824, %v3830
    %v3835 = vadd.f32 %v3831, %v3833
    %v3836 = vadd.f32 %v3832, %v3834
    %v3837 = vtanh.pop %v3835
    %v3838 = vtanh.pop %v3836
    %v3839 = vmul.f32 %v3822, %v3837
    %v3840 = vmul.f32 %v3828, %v3838
    %v3841 = vld [vmem:[%s1128] sm:$0xff]
    %v3842 = vld [vmem:[%s1128 + $0x8] sm:$0xff]
    %v3843 = vld [vmem:[%s1128 + $0x10] sm:$0xff]
    %v3844 = vld [vmem:[%s1128 + $0x18] sm:$0xff]
    %v3845 = vld [vmem:[%s1128 + $0x20] sm:$0xff]
    %v3846 = vld [vmem:[%s1128 + $0x28] sm:$0xff]
    %v3847 = vld [vmem:[%s1128 + $0x30] sm:$0xff]
    %v3848 = vld [vmem:[%s1128 + $0x38] sm:$0xff]
    %3849 = vmatprep.subr.mxu0 %v3350
    %3850 = vmatpush1.msra.mxu0 %v3349
    %3851 = vmatprep.subr.mxu0 %v3354
    %3852 = vmatpush1.msra.mxu0 %v3353
    %3853 = vmatprep.subr.mxu0 %v3358
    %3854 = vmatpush1.msra.mxu0 %v3357
    %3855 = vmatprep.subr.mxu0 %v3362
    %3856 = vmatpush1.msra.mxu0 %v3361
    %3857 = vmatprep.subr.mxu0 %v3366
    %3858 = vmatpush1.msra.mxu0 %v3365
    %3859 = vmatprep.subr.mxu0 %v3370
    %3860 = vmatpush1.msra.mxu0 %v3369
    %3861 = vmatprep.subr.mxu0 %v3374
    %3862 = vmatpush1.msra.mxu0 %v3373
    %3863 = vmatprep.subr.mxu0 %v3378
    %3864 = vmatpush1.msra.mxu0 %v3377
    %3865 = vmatprep.subr.mxu0 %v3382
    %3866 = vmatpush1.msra.mxu0 %v3381
    %3867 = vmatprep.subr.mxu0 %v3386
    %3868 = vmatpush1.msra.mxu0 %v3385
    %3869 = vmatprep.subr.mxu0 %v3390
    %3870 = vmatpush1.msra.mxu0 %v3389
    %3871 = vmatprep.subr.mxu0 %v3394
    %3872 = vmatpush1.msra.mxu0 %v3393
    %3873 = vmatprep.subr.mxu0 %v3398
    %3874 = vmatpush1.msra.mxu0 %v3397
    %3875 = vmatprep.subr.mxu0 %v3402
    %3876 = vmatpush1.msra.mxu0 %v3401
    %3877 = vmatprep.subr.mxu0 %v3406
    %3878 = vmatpush1.msra.mxu0 %v3405
    %3879 = vmatprep.subr.mxu0 %v3410
    %3880 = vmatpush1.msra.mxu0 %v3409
    %3881 = vmatprep.subr.mxu0 0.0
    %3882 = vmatpush1.msra.mxu0 0.0
    %3883 = vmatprep.subr.mxu0 0.0
    %3884 = vmatpush1.msra.mxu0 0.0
    %3885 = vmatprep.subr.mxu0 0.0
    %3886 = vmatpush1.msra.mxu0 0.0
    %3887 = vmatprep.subr.mxu0 0.0
    %3888 = vmatpush1.msra.mxu0 0.0
    %3889 = vmatprep.subr.mxu0 0.0
    %3890 = vmatpush1.msra.mxu0 0.0
    %3891 = vmatprep.subr.mxu0 0.0
    %3892 = vmatpush1.msra.mxu0 0.0
    %3893 = vmatprep.subr.mxu0 0.0
    %3894 = vmatpush1.msra.mxu0 0.0
    %3895 = vmatprep.subr.mxu0 0.0
    %3896 = vmatpush1.msra.mxu0 0.0
    %3897 = vmatprep.subr.mxu0 0.0
    %3898 = vmatpush1.msra.mxu0 0.0
    %3899 = vmatprep.subr.mxu0 0.0
    %3900 = vmatpush1.msra.mxu0 0.0
    %3901 = vmatprep.subr.mxu0 0.0
    %3902 = vmatpush1.msra.mxu0 0.0
    %3903 = vmatprep.subr.mxu0 0.0
    %3904 = vmatpush1.msra.mxu0 0.0
    %3905 = vmatprep.subr.mxu0 0.0
    %3906 = vmatpush1.msra.mxu0 0.0
    %3907 = vmatprep.subr.mxu0 0.0
    %3908 = vmatpush1.msra.mxu0 0.0
    %3909 = vmatprep.subr.mxu0 0.0
    %3910 = vmatpush1.msra.mxu0 0.0
    %3911 = vmatprep.subr.mxu0 0.0
    %3912 = vmatpush1.msra.mxu0 0.0
    %3913 = vmatprep.mubr.f32.mxu0 0.0
    %3914 = vmatmul.mubr.f32.gmra.mrb[0].mxu0 %v3839
    %v3915 = vpop.f32.mrb[0].mxu0
    %v3916 = vadd.f32 0.0, %v3915
    %v3917 = vpop.f32.mrb[0].mxu0
    %v3918 = vadd.f32 0.0, %v3917
    %3919 = vmatprep.mubr.f32.mxu0 0.0
    %3920 = vmatmul.mubr.f32.gmra.mrb[0].mxu0 %v3840
    %v3921 = vpop.f32.mrb[0].mxu0
    %v3922 = vadd.f32 0.0, %v3921
    %v3923 = vpop.f32.mrb[0].mxu0
    %v3924 = vadd.f32 0.0, %v3923
    %3925 = vdwg.mxu0
    %3926 = vmatprep.subr.mxu0 %v3352
    %3927 = vmatpush1.msra.mxu0 %v3351
    %3928 = vmatprep.subr.mxu0 %v3356
    %3929 = vmatpush1.msra.mxu0 %v3355
    %3930 = vmatprep.subr.mxu0 %v3360
    %3931 = vmatpush1.msra.mxu0 %v3359
    %3932 = vmatprep.subr.mxu0 %v3364
    %3933 = vmatpush1.msra.mxu0 %v3363
    %3934 = vmatprep.subr.mxu0 %v3368
    %3935 = vmatpush1.msra.mxu0 %v3367
    %3936 = vmatprep.subr.mxu0 %v3372
    %3937 = vmatpush1.msra.mxu0 %v3371
    %3938 = vmatprep.subr.mxu0 %v3376
    %3939 = vmatpush1.msra.mxu0 %v3375
    %3940 = vmatprep.subr.mxu0 %v3380
    %3941 = vmatpush1.msra.mxu0 %v3379
    %3942 = vmatprep.subr.mxu0 %v3384
    %3943 = vmatpush1.msra.mxu0 %v3383
    %3944 = vmatprep.subr.mxu0 %v3388
    %3945 = vmatpush1.msra.mxu0 %v3387
    %3946 = vmatprep.subr.mxu0 %v3392
    %3947 = vmatpush1.msra.mxu0 %v3391
    %3948 = vmatprep.subr.mxu0 %v3396
    %3949 = vmatpush1.msra.mxu0 %v3395
    %3950 = vmatprep.subr.mxu0 %v3400
    %3951 = vmatpush1.msra.mxu0 %v3399
    %3952 = vmatprep.subr.mxu0 %v3404
    %3953 = vmatpush1.msra.mxu0 %v3403
    %3954 = vmatprep.subr.mxu0 %v3408
    %3955 = vmatpush1.msra.mxu0 %v3407
    %3956 = vmatprep.subr.mxu0 %v3412
    %3957 = vmatpush1.msra.mxu0 %v3411
    %3958 = vmatprep.subr.mxu0 0.0
    %3959 = vmatpush1.msra.mxu0 0.0
    %3960 = vmatprep.subr.mxu0 0.0
    %3961 = vmatpush1.msra.mxu0 0.0
    %3962 = vmatprep.subr.mxu0 0.0
    %3963 = vmatpush1.msra.mxu0 0.0
    %3964 = vmatprep.subr.mxu0 0.0
    %3965 = vmatpush1.msra.mxu0 0.0
    %3966 = vmatprep.subr.mxu0 0.0
    %3967 = vmatpush1.msra.mxu0 0.0
    %3968 = vmatprep.subr.mxu0 0.0
    %3969 = vmatpush1.msra.mxu0 0.0
    %3970 = vmatprep.subr.mxu0 0.0
    %3971 = vmatpush1.msra.mxu0 0.0
    %3972 = vmatprep.subr.mxu0 0.0
    %3973 = vmatpush1.msra.mxu0 0.0
    %3974 = vmatprep.subr.mxu0 0.0
    %3975 = vmatpush1.msra.mxu0 0.0
    %3976 = vmatprep.subr.mxu0 0.0
    %3977 = vmatpush1.msra.mxu0 0.0
    %3978 = vmatprep.subr.mxu0 0.0
    %3979 = vmatpush1.msra.mxu0 0.0
    %3980 = vmatprep.subr.mxu0 0.0
    %3981 = vmatpush1.msra.mxu0 0.0
    %3982 = vmatprep.subr.mxu0 0.0
    %3983 = vmatpush1.msra.mxu0 0.0
    %3984 = vmatprep.subr.mxu0 0.0
    %3985 = vmatpush1.msra.mxu0 0.0
    %3986 = vmatprep.subr.mxu0 0.0
    %3987 = vmatpush1.msra.mxu0 0.0
    %3988 = vmatprep.subr.mxu0 0.0
    %3989 = vmatpush1.msra.mxu0 0.0
    %3990 = vmatprep.mubr.f32.mxu0 0.0
    %3991 = vmatmul.mubr.f32.gmra.mrb[0].mxu0 %v3839
    %v3992 = vpop.f32.mrb[0].mxu0
    %v3993 = vadd.f32 0.0, %v3992
    %v3994 = vpop.f32.mrb[0].mxu0
    %v3995 = vadd.f32 0.0, %v3994
    %3996 = vmatprep.mubr.f32.mxu0 0.0
    %3997 = vmatmul.mubr.f32.gmra.mrb[0].mxu0 %v3840
    %v3998 = vpop.f32.mrb[0].mxu0
    %v3999 = vadd.f32 0.0, %v3998
    %v4000 = vpop.f32.mrb[0].mxu0
    %v4001 = vadd.f32 0.0, %v4000
    %4002 = vdwg.mxu0
    %v4003 = vadd.f32 %v3841, %v3916
    %v4004 = vadd.f32 %v3842, %v3918
    %v4005 = vadd.f32 %v3843, %v3993
    %v4006 = vadd.f32 %v3844, %v3995
    %v4007 = vadd.f32 %v3845, %v3922
    %v4008 = vadd.f32 %v3846, %v3924
    %v4009 = vadd.f32 %v3847, %v3999
    %v4010 = vadd.f32 %v3848, %v4001
    %v4011 = vxor.u32 %v4003, 2147483648
    %v4012 = vxor.u32 %v4004, 2147483648
    %v4013 = vxor.u32 %v4005, 2147483648
    %v4014 = vxor.u32 %v4007, 2147483648
    %v4015 = vxor.u32 %v4008, 2147483648
    %v4016 = vxor.u32 %v4009, 2147483648
    %v4017 = vmul.f32 %v4011, 1.442695
    %v4018 = vpow.pop %v4017
    %v4019 = vmul.f32 %v4012, 1.442695
    %v4020 = vpow.pop %v4019
    %v4021 = vmul.f32 %v4013, 1.442695
    %v4022 = vpow.pop %v4021
    %v4023 = vmul.f32 %v4014, 1.442695
    %v4024 = vpow.pop %v4023
    %v4025 = vmul.f32 %v4015, 1.442695
    %v4026 = vpow.pop %v4025
    %v4027 = vmul.f32 %v4016, 1.442695
    %v4028 = vpow.pop %v4027
    %v4029 = vadd.f32 %v4018, 1.0
    %v4030 = vadd.f32 %v4020, 1.0
    %v4031 = vadd.f32 %v4022, 1.0
    %v4032 = vadd.f32 %v4024, 1.0
    %v4033 = vadd.f32 %v4026, 1.0
    %v4034 = vadd.f32 %v4028, 1.0
    %v4035 = vrcp.pop %v4029
    %v4036 = vmul.f32 1.0, %v4035
    %v4037 = vrcp.pop %v4030
    %v4038 = vmul.f32 1.0, %v4037
    %v4039 = vrcp.pop %v4031
    %v4040 = vmul.f32 1.0, %v4039
    %v4041 = vrcp.pop %v4032
    %v4042 = vmul.f32 1.0, %v4041
    %v4043 = vrcp.pop %v4033
    %v4044 = vmul.f32 1.0, %v4043
    %v4045 = vrcp.pop %v4034
    %v4046 = vmul.f32 1.0, %v4045
    %v4047 = vtanh.pop %v4006
    %v4048 = vtanh.pop %v4010
    %v4049 = vmul.f32 %v4038, %v3835
    %v4050 = vmul.f32 %v4044, %v3836
    %v4051 = vmul.f32 %v4036, %v4047
    %v4052 = vmul.f32 %v4042, %v4048
    %v4053 = vadd.f32 %v4049, %v4051
    %v4054 = vadd.f32 %v4050, %v4052
    %v4055 = vtanh.pop %v4053
    %v4056 = vtanh.pop %v4054
    %v4057 = vmul.f32 %v4040, %v4055
    %v4058 = vmul.f32 %v4046, %v4056
    %v4059 = vld [vmem:[%s1414] sm:$0xff]
    %v4060 = vld [vmem:[%s1414 + $0x8] sm:$0xff]
    %v4061 = vld [vmem:[%s1414 + $0x10] sm:$0xff]
    %v4062 = vld [vmem:[%s1414 + $0x18] sm:$0xff]
    %v4063 = vld [vmem:[%s1414 + $0x20] sm:$0xff]
    %v4064 = vld [vmem:[%s1414 + $0x28] sm:$0xff]
    %v4065 = vld [vmem:[%s1414 + $0x30] sm:$0xff]
    %v4066 = vld [vmem:[%s1414 + $0x38] sm:$0xff]
    %4067 = vmatprep.subr.mxu0 %v3350
    %4068 = vmatpush1.msra.mxu0 %v3349
    %4069 = vmatprep.subr.mxu0 %v3354
    %4070 = vmatpush1.msra.mxu0 %v3353
    %4071 = vmatprep.subr.mxu0 %v3358
    %4072 = vmatpush1.msra.mxu0 %v3357
    %4073 = vmatprep.subr.mxu0 %v3362
    %4074 = vmatpush1.msra.mxu0 %v3361
    %4075 = vmatprep.subr.mxu0 %v3366
    %4076 = vmatpush1.msra.mxu0 %v3365
    %4077 = vmatprep.subr.mxu0 %v3370
    %4078 = vmatpush1.msra.mxu0 %v3369
    %4079 = vmatprep.subr.mxu0 %v3374
    %4080 = vmatpush1.msra.mxu0 %v3373
    %4081 = vmatprep.subr.mxu0 %v3378
    %4082 = vmatpush1.msra.mxu0 %v3377
    %4083 = vmatprep.subr.mxu0 %v3382
    %4084 = vmatpush1.msra.mxu0 %v3381
    %4085 = vmatprep.subr.mxu0 %v3386
    %4086 = vmatpush1.msra.mxu0 %v3385
    %4087 = vmatprep.subr.mxu0 %v3390
    %4088 = vmatpush1.msra.mxu0 %v3389
    %4089 = vmatprep.subr.mxu0 %v3394
    %4090 = vmatpush1.msra.mxu0 %v3393
    %4091 = vmatprep.subr.mxu0 %v3398
    %4092 = vmatpush1.msra.mxu0 %v3397
    %4093 = vmatprep.subr.mxu0 %v3402
    %4094 = vmatpush1.msra.mxu0 %v3401
    %4095 = vmatprep.subr.mxu0 %v3406
    %4096 = vmatpush1.msra.mxu0 %v3405
    %4097 = vmatprep.subr.mxu0 %v3410
    %4098 = vmatpush1.msra.mxu0 %v3409
    %4099 = vmatprep.subr.mxu0 0.0
    %4100 = vmatpush1.msra.mxu0 0.0
    %4101 = vmatprep.subr.mxu0 0.0
    %4102 = vmatpush1.msra.mxu0 0.0
    %4103 = vmatprep.subr.mxu0 0.0
    %4104 = vmatpush1.msra.mxu0 0.0
    %4105 = vmatprep.subr.mxu0 0.0
    %4106 = vmatpush1.msra.mxu0 0.0
    %4107 = vmatprep.subr.mxu0 0.0
    %4108 = vmatpush1.msra.mxu0 0.0
    %4109 = vmatprep.subr.mxu0 0.0
    %4110 = vmatpush1.msra.mxu0 0.0
    %4111 = vmatprep.subr.mxu0 0.0
    %4112 = vmatpush1.msra.mxu0 0.0
    %4113 = vmatprep.subr.mxu0 0.0
    %4114 = vmatpush1.msra.mxu0 0.0
    %4115 = vmatprep.subr.mxu0 0.0
    %4116 = vmatpush1.msra.mxu0 0.0
    %4117 = vmatprep.subr.mxu0 0.0
    %4118 = vmatpush1.msra.mxu0 0.0
    %4119 = vmatprep.subr.mxu0 0.0
    %4120 = vmatpush1.msra.mxu0 0.0
    %4121 = vmatprep.subr.mxu0 0.0
    %4122 = vmatpush1.msra.mxu0 0.0
    %4123 = vmatprep.subr.mxu0 0.0
    %4124 = vmatpush1.msra.mxu0 0.0
    %4125 = vmatprep.subr.mxu0 0.0
    %4126 = vmatpush1.msra.mxu0 0.0
    %4127 = vmatprep.subr.mxu0 0.0
    %4128 = vmatpush1.msra.mxu0 0.0
    %4129 = vmatprep.subr.mxu0 0.0
    %4130 = vmatpush1.msra.mxu0 0.0
    %4131 = vmatprep.mubr.f32.mxu0 0.0
    %4132 = vmatmul.mubr.f32.gmra.mrb[0].mxu0 %v4057
    %v4133 = vpop.f32.mrb[0].mxu0
    %v4134 = vadd.f32 0.0, %v4133
    %v4135 = vpop.f32.mrb[0].mxu0
    %v4136 = vadd.f32 0.0, %v4135
    %4137 = vmatprep.mubr.f32.mxu0 0.0
    %4138 = vmatmul.mubr.f32.gmra.mrb[0].mxu0 %v4058
    %v4139 = vpop.f32.mrb[0].mxu0
    %v4140 = vadd.f32 0.0, %v4139
    %v4141 = vpop.f32.mrb[0].mxu0
    %v4142 = vadd.f32 0.0, %v4141
    %4143 = vdwg.mxu0
    %4144 = vmatprep.subr.mxu0 %v3352
    %4145 = vmatpush1.msra.mxu0 %v3351
    %4146 = vmatprep.subr.mxu0 %v3356
    %4147 = vmatpush1.msra.mxu0 %v3355
    %4148 = vmatprep.subr.mxu0 %v3360
    %4149 = vmatpush1.msra.mxu0 %v3359
    %4150 = vmatprep.subr.mxu0 %v3364
    %4151 = vmatpush1.msra.mxu0 %v3363
    %4152 = vmatprep.subr.mxu0 %v3368
    %4153 = vmatpush1.msra.mxu0 %v3367
    %4154 = vmatprep.subr.mxu0 %v3372
    %4155 = vmatpush1.msra.mxu0 %v3371
    %4156 = vmatprep.subr.mxu0 %v3376
    %4157 = vmatpush1.msra.mxu0 %v3375
    %4158 = vmatprep.subr.mxu0 %v3380
    %4159 = vmatpush1.msra.mxu0 %v3379
    %4160 = vmatprep.subr.mxu0 %v3384
    %4161 = vmatpush1.msra.mxu0 %v3383
    %4162 = vmatprep.subr.mxu0 %v3388
    %4163 = vmatpush1.msra.mxu0 %v3387
    %4164 = vmatprep.subr.mxu0 %v3392
    %4165 = vmatpush1.msra.mxu0 %v3391
    %4166 = vmatprep.subr.mxu0 %v3396
    %4167 = vmatpush1.msra.mxu0 %v3395
    %4168 = vmatprep.subr.mxu0 %v3400
    %4169 = vmatpush1.msra.mxu0 %v3399
    %4170 = vmatprep.subr.mxu0 %v3404
    %4171 = vmatpush1.msra.mxu0 %v3403
    %4172 = vmatprep.subr.mxu0 %v3408
    %4173 = vmatpush1.msra.mxu0 %v3407
    %4174 = vmatprep.subr.mxu0 %v3412
    %4175 = vmatpush1.msra.mxu0 %v3411
    %4176 = vmatprep.subr.mxu0 0.0
    %4177 = vmatpush1.msra.mxu0 0.0
    %4178 = vmatprep.subr.mxu0 0.0
    %4179 = vmatpush1.msra.mxu0 0.0
    %4180 = vmatprep.subr.mxu0 0.0
    %4181 = vmatpush1.msra.mxu0 0.0
    %4182 = vmatprep.subr.mxu0 0.0
    %4183 = vmatpush1.msra.mxu0 0.0
    %4184 = vmatprep.subr.mxu0 0.0
    %4185 = vmatpush1.msra.mxu0 0.0
    %4186 = vmatprep.subr.mxu0 0.0
    %4187 = vmatpush1.msra.mxu0 0.0
    %4188 = vmatprep.subr.mxu0 0.0
    %4189 = vmatpush1.msra.mxu0 0.0
    %4190 = vmatprep.subr.mxu0 0.0
    %4191 = vmatpush1.msra.mxu0 0.0
    %4192 = vmatprep.subr.mxu0 0.0
    %4193 = vmatpush1.msra.mxu0 0.0
    %4194 = vmatprep.subr.mxu0 0.0
    %4195 = vmatpush1.msra.mxu0 0.0
    %4196 = vmatprep.subr.mxu0 0.0
    %4197 = vmatpush1.msra.mxu0 0.0
    %4198 = vmatprep.subr.mxu0 0.0
    %4199 = vmatpush1.msra.mxu0 0.0
    %4200 = vmatprep.subr.mxu0 0.0
    %4201 = vmatpush1.msra.mxu0 0.0
    %4202 = vmatprep.subr.mxu0 0.0
    %4203 = vmatpush1.msra.mxu0 0.0
    %4204 = vmatprep.subr.mxu0 0.0
    %4205 = vmatpush1.msra.mxu0 0.0
    %4206 = vmatprep.subr.mxu0 0.0
    %4207 = vmatpush1.msra.mxu0 0.0
    %4208 = vmatprep.mubr.f32.mxu0 0.0
    %4209 = vmatmul.mubr.f32.gmra.mrb[0].mxu0 %v4057
    %v4210 = vpop.f32.mrb[0].mxu0
    %v4211 = vadd.f32 0.0, %v4210
    %v4212 = vpop.f32.mrb[0].mxu0
    %v4213 = vadd.f32 0.0, %v4212
    %4214 = vmatprep.mubr.f32.mxu0 0.0
    %4215 = vmatmul.mubr.f32.gmra.mrb[0].mxu0 %v4058
    %v4216 = vpop.f32.mrb[0].mxu0
    %v4217 = vadd.f32 0.0, %v4216
    %v4218 = vpop.f32.mrb[0].mxu0
    %v4219 = vadd.f32 0.0, %v4218
    %4220 = vdwg.mxu0
    %v4221 = vadd.f32 %v4059, %v4134
    %v4222 = vadd.f32 %v4060, %v4136
    %v4223 = vadd.f32 %v4061, %v4211
    %v4224 = vadd.f32 %v4062, %v4213
    %v4225 = vadd.f32 %v4063, %v4140
    %v4226 = vadd.f32 %v4064, %v4142
    %v4227 = vadd.f32 %v4065, %v4217
    %v4228 = vadd.f32 %v4066, %v4219
    %v4229 = vxor.u32 %v4221, 2147483648
    %v4230 = vxor.u32 %v4222, 2147483648
    %v4231 = vxor.u32 %v4223, 2147483648
    %v4232 = vxor.u32 %v4225, 2147483648
    %v4233 = vxor.u32 %v4226, 2147483648
    %v4234 = vxor.u32 %v4227, 2147483648
    %v4235 = vmul.f32 %v4229, 1.442695
    %v4236 = vpow.pop %v4235
    %v4237 = vmul.f32 %v4230, 1.442695
    %v4238 = vpow.pop %v4237
    %v4239 = vmul.f32 %v4231, 1.442695
    %v4240 = vpow.pop %v4239
    %v4241 = vmul.f32 %v4232, 1.442695
    %v4242 = vpow.pop %v4241
    %v4243 = vmul.f32 %v4233, 1.442695
    %v4244 = vpow.pop %v4243
    %v4245 = vmul.f32 %v4234, 1.442695
    %v4246 = vpow.pop %v4245
    %v4247 = vadd.f32 %v4236, 1.0
    %v4248 = vadd.f32 %v4238, 1.0
    %v4249 = vadd.f32 %v4240, 1.0
    %v4250 = vadd.f32 %v4242, 1.0
    %v4251 = vadd.f32 %v4244, 1.0
    %v4252 = vadd.f32 %v4246, 1.0
    %v4253 = vrcp.pop %v4247
    %v4254 = vmul.f32 1.0, %v4253
    %v4255 = vrcp.pop %v4248
    %v4256 = vmul.f32 1.0, %v4255
    %v4257 = vrcp.pop %v4249
    %v4258 = vmul.f32 1.0, %v4257
    %v4259 = vrcp.pop %v4250
    %v4260 = vmul.f32 1.0, %v4259
    %v4261 = vrcp.pop %v4251
    %v4262 = vmul.f32 1.0, %v4261
    %v4263 = vrcp.pop %v4252
    %v4264 = vmul.f32 1.0, %v4263
    %v4265 = vtanh.pop %v4224
    %v4266 = vtanh.pop %v4228
    %v4267 = vmul.f32 %v4256, %v4053
    %v4268 = vmul.f32 %v4262, %v4054
    %v4269 = vmul.f32 %v4254, %v4265
    %v4270 = vmul.f32 %v4260, %v4266
    %v4271 = vadd.f32 %v4267, %v4269
    %v4272 = vadd.f32 %v4268, %v4270
    %v4273 = vtanh.pop %v4271
    %v4274 = vtanh.pop %v4272
    %v4275 = vmul.f32 %v4258, %v4273
    %v4276 = vmul.f32 %v4264, %v4274
    %v4277 = vld [vmem:[%s1700] sm:$0xff]
    %v4278 = vld [vmem:[%s1700 + $0x8] sm:$0xff]
    %v4279 = vld [vmem:[%s1700 + $0x10] sm:$0xff]
    %v4280 = vld [vmem:[%s1700 + $0x18] sm:$0xff]
    %v4281 = vld [vmem:[%s1700 + $0x20] sm:$0xff]
    %v4282 = vld [vmem:[%s1700 + $0x28] sm:$0xff]
    %v4283 = vld [vmem:[%s1700 + $0x30] sm:$0xff]
    %v4284 = vld [vmem:[%s1700 + $0x38] sm:$0xff]
    %4285 = vmatprep.subr.mxu0 %v3350
    %4286 = vmatpush1.msra.mxu0 %v3349
    %4287 = vmatprep.subr.mxu0 %v3354
    %4288 = vmatpush1.msra.mxu0 %v3353
    %4289 = vmatprep.subr.mxu0 %v3358
    %4290 = vmatpush1.msra.mxu0 %v3357
    %4291 = vmatprep.subr.mxu0 %v3362
    %4292 = vmatpush1.msra.mxu0 %v3361
    %4293 = vmatprep.subr.mxu0 %v3366
    %4294 = vmatpush1.msra.mxu0 %v3365
    %4295 = vmatprep.subr.mxu0 %v3370
    %4296 = vmatpush1.msra.mxu0 %v3369
    %4297 = vmatprep.subr.mxu0 %v3374
    %4298 = vmatpush1.msra.mxu0 %v3373
    %4299 = vmatprep.subr.mxu0 %v3378
    %4300 = vmatpush1.msra.mxu0 %v3377
    %4301 = vmatprep.subr.mxu0 %v3382
    %4302 = vmatpush1.msra.mxu0 %v3381
    %4303 = vmatprep.subr.mxu0 %v3386
    %4304 = vmatpush1.msra.mxu0 %v3385
    %4305 = vmatprep.subr.mxu0 %v3390
    %4306 = vmatpush1.msra.mxu0 %v3389
    %4307 = vmatprep.subr.mxu0 %v3394
    %4308 = vmatpush1.msra.mxu0 %v3393
    %4309 = vmatprep.subr.mxu0 %v3398
    %4310 = vmatpush1.msra.mxu0 %v3397
    %4311 = vmatprep.subr.mxu0 %v3402
    %4312 = vmatpush1.msra.mxu0 %v3401
    %4313 = vmatprep.subr.mxu0 %v3406
    %4314 = vmatpush1.msra.mxu0 %v3405
    %4315 = vmatprep.subr.mxu0 %v3410
    %4316 = vmatpush1.msra.mxu0 %v3409
    %4317 = vmatprep.subr.mxu0 0.0
    %4318 = vmatpush1.msra.mxu0 0.0
    %4319 = vmatprep.subr.mxu0 0.0
    %4320 = vmatpush1.msra.mxu0 0.0
    %4321 = vmatprep.subr.mxu0 0.0
    %4322 = vmatpush1.msra.mxu0 0.0
    %4323 = vmatprep.subr.mxu0 0.0
    %4324 = vmatpush1.msra.mxu0 0.0
    %4325 = vmatprep.subr.mxu0 0.0
    %4326 = vmatpush1.msra.mxu0 0.0
    %4327 = vmatprep.subr.mxu0 0.0
    %4328 = vmatpush1.msra.mxu0 0.0
    %4329 = vmatprep.subr.mxu0 0.0
    %4330 = vmatpush1.msra.mxu0 0.0
    %4331 = vmatprep.subr.mxu0 0.0
    %4332 = vmatpush1.msra.mxu0 0.0
    %4333 = vmatprep.subr.mxu0 0.0
    %4334 = vmatpush1.msra.mxu0 0.0
    %4335 = vmatprep.subr.mxu0 0.0
    %4336 = vmatpush1.msra.mxu0 0.0
    %4337 = vmatprep.subr.mxu0 0.0
    %4338 = vmatpush1.msra.mxu0 0.0
    %4339 = vmatprep.subr.mxu0 0.0
    %4340 = vmatpush1.msra.mxu0 0.0
    %4341 = vmatprep.subr.mxu0 0.0
    %4342 = vmatpush1.msra.mxu0 0.0
    %4343 = vmatprep.subr.mxu0 0.0
    %4344 = vmatpush1.msra.mxu0 0.0
    %4345 = vmatprep.subr.mxu0 0.0
    %4346 = vmatpush1.msra.mxu0 0.0
    %4347 = vmatprep.subr.mxu0 0.0
    %4348 = vmatpush1.msra.mxu0 0.0
    %4349 = vmatprep.mubr.f32.mxu0 0.0
    %4350 = vmatmul.mubr.f32.gmra.mrb[0].mxu0 %v4275
    %v4351 = vpop.f32.mrb[0].mxu0
    %v4352 = vadd.f32 0.0, %v4351
    %v4353 = vpop.f32.mrb[0].mxu0
    %v4354 = vadd.f32 0.0, %v4353
    %4355 = vmatprep.mubr.f32.mxu0 0.0
    %4356 = vmatmul.mubr.f32.gmra.mrb[0].mxu0 %v4276
    %v4357 = vpop.f32.mrb[0].mxu0
    %v4358 = vadd.f32 0.0, %v4357
    %v4359 = vpop.f32.mrb[0].mxu0
    %v4360 = vadd.f32 0.0, %v4359
    %4361 = vdwg.mxu0
    %4362 = vmatprep.subr.mxu0 %v3352
    %4363 = vmatpush1.msra.mxu0 %v3351
    %4364 = vmatprep.subr.mxu0 %v3356
    %4365 = vmatpush1.msra.mxu0 %v3355
    %4366 = vmatprep.subr.mxu0 %v3360
    %4367 = vmatpush1.msra.mxu0 %v3359
    %4368 = vmatprep.subr.mxu0 %v3364
    %4369 = vmatpush1.msra.mxu0 %v3363
    %4370 = vmatprep.subr.mxu0 %v3368
    %4371 = vmatpush1.msra.mxu0 %v3367
    %4372 = vmatprep.subr.mxu0 %v3372
    %4373 = vmatpush1.msra.mxu0 %v3371
    %4374 = vmatprep.subr.mxu0 %v3376
    %4375 = vmatpush1.msra.mxu0 %v3375
    %4376 = vmatprep.subr.mxu0 %v3380
    %4377 = vmatpush1.msra.mxu0 %v3379
    %4378 = vmatprep.subr.mxu0 %v3384
    %4379 = vmatpush1.msra.mxu0 %v3383
    %4380 = vmatprep.subr.mxu0 %v3388
    %4381 = vmatpush1.msra.mxu0 %v3387
    %4382 = vmatprep.subr.mxu0 %v3392
    %4383 = vmatpush1.msra.mxu0 %v3391
    %4384 = vmatprep.subr.mxu0 %v3396
    %4385 = vmatpush1.msra.mxu0 %v3395
    %4386 = vmatprep.subr.mxu0 %v3400
    %4387 = vmatpush1.msra.mxu0 %v3399
    %4388 = vmatprep.subr.mxu0 %v3404
    %4389 = vmatpush1.msra.mxu0 %v3403
    %4390 = vmatprep.subr.mxu0 %v3408
    %4391 = vmatpush1.msra.mxu0 %v3407
    %4392 = vmatprep.subr.mxu0 %v3412
    %4393 = vmatpush1.msra.mxu0 %v3411
    %4394 = vmatprep.subr.mxu0 0.0
    %4395 = vmatpush1.msra.mxu0 0.0
    %4396 = vmatprep.subr.mxu0 0.0
    %4397 = vmatpush1.msra.mxu0 0.0
    %4398 = vmatprep.subr.mxu0 0.0
    %4399 = vmatpush1.msra.mxu0 0.0
    %4400 = vmatprep.subr.mxu0 0.0
    %4401 = vmatpush1.msra.mxu0 0.0
    %4402 = vmatprep.subr.mxu0 0.0
    %4403 = vmatpush1.msra.mxu0 0.0
    %4404 = vmatprep.subr.mxu0 0.0
    %4405 = vmatpush1.msra.mxu0 0.0
    %4406 = vmatprep.subr.mxu0 0.0
    %4407 = vmatpush1.msra.mxu0 0.0
    %4408 = vmatprep.subr.mxu0 0.0
    %4409 = vmatpush1.msra.mxu0 0.0
    %4410 = vmatprep.subr.mxu0 0.0
    %4411 = vmatpush1.msra.mxu0 0.0
    %4412 = vmatprep.subr.mxu0 0.0
    %4413 = vmatpush1.msra.mxu0 0.0
    %4414 = vmatprep.subr.mxu0 0.0
    %4415 = vmatpush1.msra.mxu0 0.0
    %4416 = vmatprep.subr.mxu0 0.0
    %4417 = vmatpush1.msra.mxu0 0.0
    %4418 = vmatprep.subr.mxu0 0.0
    %4419 = vmatpush1.msra.mxu0 0.0
    %4420 = vmatprep.subr.mxu0 0.0
    %4421 = vmatpush1.msra.mxu0 0.0
    %4422 = vmatprep.subr.mxu0 0.0
    %4423 = vmatpush1.msra.mxu0 0.0
    %4424 = vmatprep.subr.mxu0 0.0
    %4425 = vmatpush1.msra.mxu0 0.0
    %4426 = vmatprep.mubr.f32.mxu0 0.0
    %4427 = vmatmul.mubr.f32.gmra.mrb[0].mxu0 %v4275
    %v4428 = vpop.f32.mrb[0].mxu0
    %v4429 = vadd.f32 0.0, %v4428
    %v4430 = vpop.f32.mrb[0].mxu0
    %v4431 = vadd.f32 0.0, %v4430
    %4432 = vmatprep.mubr.f32.mxu0 0.0
    %4433 = vmatmul.mubr.f32.gmra.mrb[0].mxu0 %v4276
    %v4434 = vpop.f32.mrb[0].mxu0
    %v4435 = vadd.f32 0.0, %v4434
    %v4436 = vpop.f32.mrb[0].mxu0
    %v4437 = vadd.f32 0.0, %v4436
    %4438 = vdwg.mxu0
    %v4439 = vadd.f32 %v4277, %v4352
    %v4440 = vadd.f32 %v4278, %v4354
    %v4441 = vadd.f32 %v4279, %v4429
    %v4442 = vadd.f32 %v4280, %v4431
    %v4443 = vadd.f32 %v4281, %v4358
    %v4444 = vadd.f32 %v4282, %v4360
    %v4445 = vadd.f32 %v4283, %v4435
    %v4446 = vadd.f32 %v4284, %v4437
    %v4447 = vxor.u32 %v4439, 2147483648
    %v4448 = vxor.u32 %v4440, 2147483648
    %v4449 = vxor.u32 %v4441, 2147483648
    %v4450 = vxor.u32 %v4443, 2147483648
    %v4451 = vxor.u32 %v4444, 2147483648
    %v4452 = vxor.u32 %v4445, 2147483648
    %v4453 = vmul.f32 %v4447, 1.442695
    %v4454 = vpow.pop %v4453
    %v4455 = vmul.f32 %v4448, 1.442695
    %v4456 = vpow.pop %v4455
    %v4457 = vmul.f32 %v4449, 1.442695
    %v4458 = vpow.pop %v4457
    %v4459 = vmul.f32 %v4450, 1.442695
    %v4460 = vpow.pop %v4459
    %v4461 = vmul.f32 %v4451, 1.442695
    %v4462 = vpow.pop %v4461
    %v4463 = vmul.f32 %v4452, 1.442695
    %v4464 = vpow.pop %v4463
    %v4465 = vadd.f32 %v4454, 1.0
    %v4466 = vadd.f32 %v4456, 1.0
    %v4467 = vadd.f32 %v4458, 1.0
    %v4468 = vadd.f32 %v4460, 1.0
    %v4469 = vadd.f32 %v4462, 1.0
    %v4470 = vadd.f32 %v4464, 1.0
    %v4471 = vrcp.pop %v4465
    %v4472 = vmul.f32 1.0, %v4471
    %v4473 = vrcp.pop %v4466
    %v4474 = vmul.f32 1.0, %v4473
    %v4475 = vrcp.pop %v4467
    %v4476 = vmul.f32 1.0, %v4475
    %v4477 = vrcp.pop %v4468
    %v4478 = vmul.f32 1.0, %v4477
    %v4479 = vrcp.pop %v4469
    %v4480 = vmul.f32 1.0, %v4479
    %v4481 = vrcp.pop %v4470
    %v4482 = vmul.f32 1.0, %v4481
    %v4483 = vtanh.pop %v4442
    %v4484 = vtanh.pop %v4446
    %v4485 = vmul.f32 %v4474, %v4271
    %v4486 = vmul.f32 %v4480, %v4272
    %v4487 = vmul.f32 %v4472, %v4483
    %v4488 = vmul.f32 %v4478, %v4484
    %v4489 = vadd.f32 %v4485, %v4487
    %v4490 = vadd.f32 %v4486, %v4488
    %v4491 = vtanh.pop %v4489
    %v4492 = vtanh.pop %v4490
    %v4493 = vmul.f32 %v4476, %v4491
    %v4494 = vmul.f32 %v4482, %v4492
    %v4495 = vld [vmem:[%s1986] sm:$0xff]
    %v4496 = vld [vmem:[%s1986 + $0x8] sm:$0xff]
    %v4497 = vld [vmem:[%s1986 + $0x10] sm:$0xff]
    %v4498 = vld [vmem:[%s1986 + $0x18] sm:$0xff]
    %v4499 = vld [vmem:[%s1986 + $0x20] sm:$0xff]
    %v4500 = vld [vmem:[%s1986 + $0x28] sm:$0xff]
    %v4501 = vld [vmem:[%s1986 + $0x30] sm:$0xff]
    %v4502 = vld [vmem:[%s1986 + $0x38] sm:$0xff]
    %4503 = vmatprep.subr.mxu0 %v3350
    %4504 = vmatpush1.msra.mxu0 %v3349
    %4505 = vmatprep.subr.mxu0 %v3354
    %4506 = vmatpush1.msra.mxu0 %v3353
    %4507 = vmatprep.subr.mxu0 %v3358
    %4508 = vmatpush1.msra.mxu0 %v3357
    %4509 = vmatprep.subr.mxu0 %v3362
    %4510 = vmatpush1.msra.mxu0 %v3361
    %4511 = vmatprep.subr.mxu0 %v3366
    %4512 = vmatpush1.msra.mxu0 %v3365
    %4513 = vmatprep.subr.mxu0 %v3370
    %4514 = vmatpush1.msra.mxu0 %v3369
    %4515 = vmatprep.subr.mxu0 %v3374
    %4516 = vmatpush1.msra.mxu0 %v3373
    %4517 = vmatprep.subr.mxu0 %v3378
    %4518 = vmatpush1.msra.mxu0 %v3377
    %4519 = vmatprep.subr.mxu0 %v3382
    %4520 = vmatpush1.msra.mxu0 %v3381
    %4521 = vmatprep.subr.mxu0 %v3386
    %4522 = vmatpush1.msra.mxu0 %v3385
    %4523 = vmatprep.subr.mxu0 %v3390
    %4524 = vmatpush1.msra.mxu0 %v3389
    %4525 = vmatprep.subr.mxu0 %v3394
    %4526 = vmatpush1.msra.mxu0 %v3393
    %4527 = vmatprep.subr.mxu0 %v3398
    %4528 = vmatpush1.msra.mxu0 %v3397
    %4529 = vmatprep.subr.mxu0 %v3402
    %4530 = vmatpush1.msra.mxu0 %v3401
    %4531 = vmatprep.subr.mxu0 %v3406
    %4532 = vmatpush1.msra.mxu0 %v3405
    %4533 = vmatprep.subr.mxu0 %v3410
    %4534 = vmatpush1.msra.mxu0 %v3409
    %4535 = vmatprep.subr.mxu0 0.0
    %4536 = vmatpush1.msra.mxu0 0.0
    %4537 = vmatprep.subr.mxu0 0.0
    %4538 = vmatpush1.msra.mxu0 0.0
    %4539 = vmatprep.subr.mxu0 0.0
    %4540 = vmatpush1.msra.mxu0 0.0
    %4541 = vmatprep.subr.mxu0 0.0
    %4542 = vmatpush1.msra.mxu0 0.0
    %4543 = vmatprep.subr.mxu0 0.0
    %4544 = vmatpush1.msra.mxu0 0.0
    %4545 = vmatprep.subr.mxu0 0.0
    %4546 = vmatpush1.msra.mxu0 0.0
    %4547 = vmatprep.subr.mxu0 0.0
    %4548 = vmatpush1.msra.mxu0 0.0
    %4549 = vmatprep.subr.mxu0 0.0
    %4550 = vmatpush1.msra.mxu0 0.0
    %4551 = vmatprep.subr.mxu0 0.0
    %4552 = vmatpush1.msra.mxu0 0.0
    %4553 = vmatprep.subr.mxu0 0.0
    %4554 = vmatpush1.msra.mxu0 0.0
    %4555 = vmatprep.subr.mxu0 0.0
    %4556 = vmatpush1.msra.mxu0 0.0
    %4557 = vmatprep.subr.mxu0 0.0
    %4558 = vmatpush1.msra.mxu0 0.0
    %4559 = vmatprep.subr.mxu0 0.0
    %4560 = vmatpush1.msra.mxu0 0.0
    %4561 = vmatprep.subr.mxu0 0.0
    %4562 = vmatpush1.msra.mxu0 0.0
    %4563 = vmatprep.subr.mxu0 0.0
    %4564 = vmatpush1.msra.mxu0 0.0
    %4565 = vmatprep.subr.mxu0 0.0
    %4566 = vmatpush1.msra.mxu0 0.0
    %4567 = vmatprep.mubr.f32.mxu0 0.0
    %4568 = vmatmul.mubr.f32.gmra.mrb[0].mxu0 %v4493
    %v4569 = vpop.f32.mrb[0].mxu0
    %v4570 = vadd.f32 0.0, %v4569
    %v4571 = vpop.f32.mrb[0].mxu0
    %v4572 = vadd.f32 0.0, %v4571
    %4573 = vmatprep.mubr.f32.mxu0 0.0
    %4574 = vmatmul.mubr.f32.gmra.mrb[0].mxu0 %v4494
    %v4575 = vpop.f32.mrb[0].mxu0
    %v4576 = vadd.f32 0.0, %v4575
    %v4577 = vpop.f32.mrb[0].mxu0
    %v4578 = vadd.f32 0.0, %v4577
    %4579 = vdwg.mxu0
    %4580 = vmatprep.subr.mxu0 %v3352
    %4581 = vmatpush1.msra.mxu0 %v3351
    %4582 = vmatprep.subr.mxu0 %v3356
    %4583 = vmatpush1.msra.mxu0 %v3355
    %4584 = vmatprep.subr.mxu0 %v3360
    %4585 = vmatpush1.msra.mxu0 %v3359
    %4586 = vmatprep.subr.mxu0 %v3364
    %4587 = vmatpush1.msra.mxu0 %v3363
    %4588 = vmatprep.subr.mxu0 %v3368
    %4589 = vmatpush1.msra.mxu0 %v3367
    %4590 = vmatprep.subr.mxu0 %v3372
    %4591 = vmatpush1.msra.mxu0 %v3371
    %4592 = vmatprep.subr.mxu0 %v3376
    %4593 = vmatpush1.msra.mxu0 %v3375
    %4594 = vmatprep.subr.mxu0 %v3380
    %4595 = vmatpush1.msra.mxu0 %v3379
    %4596 = vmatprep.subr.mxu0 %v3384
    %4597 = vmatpush1.msra.mxu0 %v3383
    %4598 = vmatprep.subr.mxu0 %v3388
    %4599 = vmatpush1.msra.mxu0 %v3387
    %4600 = vmatprep.subr.mxu0 %v3392
    %4601 = vmatpush1.msra.mxu0 %v3391
    %4602 = vmatprep.subr.mxu0 %v3396
    %4603 = vmatpush1.msra.mxu0 %v3395
    %4604 = vmatprep.subr.mxu0 %v3400
    %4605 = vmatpush1.msra.mxu0 %v3399
    %4606 = vmatprep.subr.mxu0 %v3404
    %4607 = vmatpush1.msra.mxu0 %v3403
    %4608 = vmatprep.subr.mxu0 %v3408
    %4609 = vmatpush1.msra.mxu0 %v3407
    %4610 = vmatprep.subr.mxu0 %v3412
    %4611 = vmatpush1.msra.mxu0 %v3411
    %4612 = vmatprep.subr.mxu0 0.0
    %4613 = vmatpush1.msra.mxu0 0.0
    %4614 = vmatprep.subr.mxu0 0.0
    %4615 = vmatpush1.msra.mxu0 0.0
    %4616 = vmatprep.subr.mxu0 0.0
    %4617 = vmatpush1.msra.mxu0 0.0
    %4618 = vmatprep.subr.mxu0 0.0
    %4619 = vmatpush1.msra.mxu0 0.0
    %4620 = vmatprep.subr.mxu0 0.0
    %4621 = vmatpush1.msra.mxu0 0.0
    %4622 = vmatprep.subr.mxu0 0.0
    %4623 = vmatpush1.msra.mxu0 0.0
    %4624 = vmatprep.subr.mxu0 0.0
    %4625 = vmatpush1.msra.mxu0 0.0
    %4626 = vmatprep.subr.mxu0 0.0
    %4627 = vmatpush1.msra.mxu0 0.0
    %4628 = vmatprep.subr.mxu0 0.0
    %4629 = vmatpush1.msra.mxu0 0.0
    %4630 = vmatprep.subr.mxu0 0.0
    %4631 = vmatpush1.msra.mxu0 0.0
    %4632 = vmatprep.subr.mxu0 0.0
    %4633 = vmatpush1.msra.mxu0 0.0
    %4634 = vmatprep.subr.mxu0 0.0
    %4635 = vmatpush1.msra.mxu0 0.0
    %4636 = vmatprep.subr.mxu0 0.0
    %4637 = vmatpush1.msra.mxu0 0.0
    %4638 = vmatprep.subr.mxu0 0.0
    %4639 = vmatpush1.msra.mxu0 0.0
    %4640 = vmatprep.subr.mxu0 0.0
    %4641 = vmatpush1.msra.mxu0 0.0
    %4642 = vmatprep.subr.mxu0 0.0
    %4643 = vmatpush1.msra.mxu0 0.0
    %4644 = vmatprep.mubr.f32.mxu0 0.0
    %4645 = vmatmul.mubr.f32.gmra.mrb[0].mxu0 %v4493
    %v4646 = vpop.f32.mrb[0].mxu0
    %v4647 = vadd.f32 0.0, %v4646
    %v4648 = vpop.f32.mrb[0].mxu0
    %v4649 = vadd.f32 0.0, %v4648
    %4650 = vmatprep.mubr.f32.mxu0 0.0
    %4651 = vmatmul.mubr.f32.gmra.mrb[0].mxu0 %v4494
    %v4652 = vpop.f32.mrb[0].mxu0
    %v4653 = vadd.f32 0.0, %v4652
    %v4654 = vpop.f32.mrb[0].mxu0
    %v4655 = vadd.f32 0.0, %v4654
    %4656 = vdwg.mxu0
    %v4657 = vadd.f32 %v4495, %v4570
    %v4658 = vadd.f32 %v4496, %v4572
    %v4659 = vadd.f32 %v4497, %v4647
    %v4660 = vadd.f32 %v4498, %v4649
    %v4661 = vadd.f32 %v4499, %v4576
    %v4662 = vadd.f32 %v4500, %v4578
    %v4663 = vadd.f32 %v4501, %v4653
    %v4664 = vadd.f32 %v4502, %v4655
    %v4665 = vxor.u32 %v4657, 2147483648
    %v4666 = vxor.u32 %v4658, 2147483648
    %v4667 = vxor.u32 %v4659, 2147483648
    %v4668 = vxor.u32 %v4661, 2147483648
    %v4669 = vxor.u32 %v4662, 2147483648
    %v4670 = vxor.u32 %v4663, 2147483648
    %v4671 = vmul.f32 %v4665, 1.442695
    %v4672 = vpow.pop %v4671
    %v4673 = vmul.f32 %v4666, 1.442695
    %v4674 = vpow.pop %v4673
    %v4675 = vmul.f32 %v4667, 1.442695
    %v4676 = vpow.pop %v4675
    %v4677 = vmul.f32 %v4668, 1.442695
    %v4678 = vpow.pop %v4677
    %v4679 = vmul.f32 %v4669, 1.442695
    %v4680 = vpow.pop %v4679
    %v4681 = vmul.f32 %v4670, 1.442695
    %v4682 = vpow.pop %v4681
    %v4683 = vadd.f32 %v4672, 1.0
    %v4684 = vadd.f32 %v4674, 1.0
    %v4685 = vadd.f32 %v4676, 1.0
    %v4686 = vadd.f32 %v4678, 1.0
    %v4687 = vadd.f32 %v4680, 1.0
    %v4688 = vadd.f32 %v4682, 1.0
    %v4689 = vrcp.pop %v4683
    %v4690 = vmul.f32 1.0, %v4689
    %v4691 = vrcp.pop %v4684
    %v4692 = vmul.f32 1.0, %v4691
    %v4693 = vrcp.pop %v4685
    %v4694 = vmul.f32 1.0, %v4693
    %v4695 = vrcp.pop %v4686
    %v4696 = vmul.f32 1.0, %v4695
    %v4697 = vrcp.pop %v4687
    %v4698 = vmul.f32 1.0, %v4697
    %v4699 = vrcp.pop %v4688
    %v4700 = vmul.f32 1.0, %v4699
    %v4701 = vtanh.pop %v4660
    %v4702 = vtanh.pop %v4664
    %v4703 = vmul.f32 %v4692, %v4489
    %v4704 = vmul.f32 %v4698, %v4490
    %v4705 = vmul.f32 %v4690, %v4701
    %v4706 = vmul.f32 %v4696, %v4702
    %v4707 = vadd.f32 %v4703, %v4705
    %v4708 = vadd.f32 %v4704, %v4706
    %v4709 = vtanh.pop %v4707
    %v4710 = vtanh.pop %v4708
    %v4711 = vmul.f32 %v4694, %v4709
    %v4712 = vmul.f32 %v4700, %v4710
    %v4713 = vld [vmem:[%s2272] sm:$0xff]
    %v4714 = vld [vmem:[%s2272 + $0x8] sm:$0xff]
    %v4715 = vld [vmem:[%s2272 + $0x10] sm:$0xff]
    %v4716 = vld [vmem:[%s2272 + $0x18] sm:$0xff]
    %v4717 = vld [vmem:[%s2272 + $0x20] sm:$0xff]
    %v4718 = vld [vmem:[%s2272 + $0x28] sm:$0xff]
    %v4719 = vld [vmem:[%s2272 + $0x30] sm:$0xff]
    %v4720 = vld [vmem:[%s2272 + $0x38] sm:$0xff]
    %4721 = vmatprep.subr.mxu0 %v3350
    %4722 = vmatpush1.msra.mxu0 %v3349
    %4723 = vmatprep.subr.mxu0 %v3354
    %4724 = vmatpush1.msra.mxu0 %v3353
    %4725 = vmatprep.subr.mxu0 %v3358
    %4726 = vmatpush1.msra.mxu0 %v3357
    %4727 = vmatprep.subr.mxu0 %v3362
    %4728 = vmatpush1.msra.mxu0 %v3361
    %4729 = vmatprep.subr.mxu0 %v3366
    %4730 = vmatpush1.msra.mxu0 %v3365
    %4731 = vmatprep.subr.mxu0 %v3370
    %4732 = vmatpush1.msra.mxu0 %v3369
    %4733 = vmatprep.subr.mxu0 %v3374
    %4734 = vmatpush1.msra.mxu0 %v3373
    %4735 = vmatprep.subr.mxu0 %v3378
    %4736 = vmatpush1.msra.mxu0 %v3377
    %4737 = vmatprep.subr.mxu0 %v3382
    %4738 = vmatpush1.msra.mxu0 %v3381
    %4739 = vmatprep.subr.mxu0 %v3386
    %4740 = vmatpush1.msra.mxu0 %v3385
    %4741 = vmatprep.subr.mxu0 %v3390
    %4742 = vmatpush1.msra.mxu0 %v3389
    %4743 = vmatprep.subr.mxu0 %v3394
    %4744 = vmatpush1.msra.mxu0 %v3393
    %4745 = vmatprep.subr.mxu0 %v3398
    %4746 = vmatpush1.msra.mxu0 %v3397
    %4747 = vmatprep.subr.mxu0 %v3402
    %4748 = vmatpush1.msra.mxu0 %v3401
    %4749 = vmatprep.subr.mxu0 %v3406
    %4750 = vmatpush1.msra.mxu0 %v3405
    %4751 = vmatprep.subr.mxu0 %v3410
    %4752 = vmatpush1.msra.mxu0 %v3409
    %4753 = vmatprep.subr.mxu0 0.0
    %4754 = vmatpush1.msra.mxu0 0.0
    %4755 = vmatprep.subr.mxu0 0.0
    %4756 = vmatpush1.msra.mxu0 0.0
    %4757 = vmatprep.subr.mxu0 0.0
    %4758 = vmatpush1.msra.mxu0 0.0
    %4759 = vmatprep.subr.mxu0 0.0
    %4760 = vmatpush1.msra.mxu0 0.0
    %4761 = vmatprep.subr.mxu0 0.0
    %4762 = vmatpush1.msra.mxu0 0.0
    %4763 = vmatprep.subr.mxu0 0.0
    %4764 = vmatpush1.msra.mxu0 0.0
    %4765 = vmatprep.subr.mxu0 0.0
    %4766 = vmatpush1.msra.mxu0 0.0
    %4767 = vmatprep.subr.mxu0 0.0
    %4768 = vmatpush1.msra.mxu0 0.0
    %4769 = vmatprep.subr.mxu0 0.0
    %4770 = vmatpush1.msra.mxu0 0.0
    %4771 = vmatprep.subr.mxu0 0.0
    %4772 = vmatpush1.msra.mxu0 0.0
    %4773 = vmatprep.subr.mxu0 0.0
    %4774 = vmatpush1.msra.mxu0 0.0
    %4775 = vmatprep.subr.mxu0 0.0
    %4776 = vmatpush1.msra.mxu0 0.0
    %4777 = vmatprep.subr.mxu0 0.0
    %4778 = vmatpush1.msra.mxu0 0.0
    %4779 = vmatprep.subr.mxu0 0.0
    %4780 = vmatpush1.msra.mxu0 0.0
    %4781 = vmatprep.subr.mxu0 0.0
    %4782 = vmatpush1.msra.mxu0 0.0
    %4783 = vmatprep.subr.mxu0 0.0
    %4784 = vmatpush1.msra.mxu0 0.0
    %4785 = vmatprep.mubr.f32.mxu0 0.0
    %4786 = vmatmul.mubr.f32.gmra.mrb[0].mxu0 %v4711
    %v4787 = vpop.f32.mrb[0].mxu0
    %v4788 = vadd.f32 0.0, %v4787
    %v4789 = vpop.f32.mrb[0].mxu0
    %v4790 = vadd.f32 0.0, %v4789
    %4791 = vmatprep.mubr.f32.mxu0 0.0
    %4792 = vmatmul.mubr.f32.gmra.mrb[0].mxu0 %v4712
    %v4793 = vpop.f32.mrb[0].mxu0
    %v4794 = vadd.f32 0.0, %v4793
    %v4795 = vpop.f32.mrb[0].mxu0
    %v4796 = vadd.f32 0.0, %v4795
    %4797 = vdwg.mxu0
    %4798 = vmatprep.subr.mxu0 %v3352
    %4799 = vmatpush1.msra.mxu0 %v3351
    %4800 = vmatprep.subr.mxu0 %v3356
    %4801 = vmatpush1.msra.mxu0 %v3355
    %4802 = vmatprep.subr.mxu0 %v3360
    %4803 = vmatpush1.msra.mxu0 %v3359
    %4804 = vmatprep.subr.mxu0 %v3364
    %4805 = vmatpush1.msra.mxu0 %v3363
    %4806 = vmatprep.subr.mxu0 %v3368
    %4807 = vmatpush1.msra.mxu0 %v3367
    %4808 = vmatprep.subr.mxu0 %v3372
    %4809 = vmatpush1.msra.mxu0 %v3371
    %4810 = vmatprep.subr.mxu0 %v3376
    %4811 = vmatpush1.msra.mxu0 %v3375
    %4812 = vmatprep.subr.mxu0 %v3380
    %4813 = vmatpush1.msra.mxu0 %v3379
    %4814 = vmatprep.subr.mxu0 %v3384
    %4815 = vmatpush1.msra.mxu0 %v3383
    %4816 = vmatprep.subr.mxu0 %v3388
    %4817 = vmatpush1.msra.mxu0 %v3387
    %4818 = vmatprep.subr.mxu0 %v3392
    %4819 = vmatpush1.msra.mxu0 %v3391
    %4820 = vmatprep.subr.mxu0 %v3396
    %4821 = vmatpush1.msra.mxu0 %v3395
    %4822 = vmatprep.subr.mxu0 %v3400
    %4823 = vmatpush1.msra.mxu0 %v3399
    %4824 = vmatprep.subr.mxu0 %v3404
    %4825 = vmatpush1.msra.mxu0 %v3403
    %4826 = vmatprep.subr.mxu0 %v3408
    %4827 = vmatpush1.msra.mxu0 %v3407
    %4828 = vmatprep.subr.mxu0 %v3412
    %4829 = vmatpush1.msra.mxu0 %v3411
    %4830 = vmatprep.subr.mxu0 0.0
    %4831 = vmatpush1.msra.mxu0 0.0
    %4832 = vmatprep.subr.mxu0 0.0
    %4833 = vmatpush1.msra.mxu0 0.0
    %4834 = vmatprep.subr.mxu0 0.0
    %4835 = vmatpush1.msra.mxu0 0.0
    %4836 = vmatprep.subr.mxu0 0.0
    %4837 = vmatpush1.msra.mxu0 0.0
    %4838 = vmatprep.subr.mxu0 0.0
    %4839 = vmatpush1.msra.mxu0 0.0
    %4840 = vmatprep.subr.mxu0 0.0
    %4841 = vmatpush1.msra.mxu0 0.0
    %4842 = vmatprep.subr.mxu0 0.0
    %4843 = vmatpush1.msra.mxu0 0.0
    %4844 = vmatprep.subr.mxu0 0.0
    %4845 = vmatpush1.msra.mxu0 0.0
    %4846 = vmatprep.subr.mxu0 0.0
    %4847 = vmatpush1.msra.mxu0 0.0
    %4848 = vmatprep.subr.mxu0 0.0
    %4849 = vmatpush1.msra.mxu0 0.0
    %4850 = vmatprep.subr.mxu0 0.0
    %4851 = vmatpush1.msra.mxu0 0.0
    %4852 = vmatprep.subr.mxu0 0.0
    %4853 = vmatpush1.msra.mxu0 0.0
    %4854 = vmatprep.subr.mxu0 0.0
    %4855 = vmatpush1.msra.mxu0 0.0
    %4856 = vmatprep.subr.mxu0 0.0
    %4857 = vmatpush1.msra.mxu0 0.0
    %4858 = vmatprep.subr.mxu0 0.0
    %4859 = vmatpush1.msra.mxu0 0.0
    %4860 = vmatprep.subr.mxu0 0.0
    %4861 = vmatpush1.msra.mxu0 0.0
    %4862 = vmatprep.mubr.f32.mxu0 0.0
    %4863 = vmatmul.mubr.f32.gmra.mrb[0].mxu0 %v4711
    %v4864 = vpop.f32.mrb[0].mxu0
    %v4865 = vadd.f32 0.0, %v4864
    %v4866 = vpop.f32.mrb[0].mxu0
    %v4867 = vadd.f32 0.0, %v4866
    %4868 = vmatprep.mubr.f32.mxu0 0.0
    %4869 = vmatmul.mubr.f32.gmra.mrb[0].mxu0 %v4712
    %v4870 = vpop.f32.mrb[0].mxu0
    %v4871 = vadd.f32 0.0, %v4870
    %v4872 = vpop.f32.mrb[0].mxu0
    %v4873 = vadd.f32 0.0, %v4872
    %4874 = vdwg.mxu0
    %v4875 = vadd.f32 %v4713, %v4788
    %v4876 = vadd.f32 %v4714, %v4790
    %v4877 = vadd.f32 %v4715, %v4865
    %v4878 = vadd.f32 %v4716, %v4867
    %v4879 = vadd.f32 %v4717, %v4794
    %v4880 = vadd.f32 %v4718, %v4796
    %v4881 = vadd.f32 %v4719, %v4871
    %v4882 = vadd.f32 %v4720, %v4873
    %v4883 = vxor.u32 %v4875, 2147483648
    %v4884 = vxor.u32 %v4876, 2147483648
    %v4885 = vxor.u32 %v4877, 2147483648
    %v4886 = vxor.u32 %v4879, 2147483648
    %v4887 = vxor.u32 %v4880, 2147483648
    %v4888 = vxor.u32 %v4881, 2147483648
    %v4889 = vmul.f32 %v4883, 1.442695
    %v4890 = vpow.pop %v4889
    %v4891 = vmul.f32 %v4884, 1.442695
    %v4892 = vpow.pop %v4891
    %v4893 = vmul.f32 %v4885, 1.442695
    %v4894 = vpow.pop %v4893
    %v4895 = vmul.f32 %v4886, 1.442695
    %v4896 = vpow.pop %v4895
    %v4897 = vmul.f32 %v4887, 1.442695
    %v4898 = vpow.pop %v4897
    %v4899 = vmul.f32 %v4888, 1.442695
    %v4900 = vpow.pop %v4899
    %v4901 = vadd.f32 %v4890, 1.0
    %v4902 = vadd.f32 %v4892, 1.0
    %v4903 = vadd.f32 %v4894, 1.0
    %v4904 = vadd.f32 %v4896, 1.0
    %v4905 = vadd.f32 %v4898, 1.0
    %v4906 = vadd.f32 %v4900, 1.0
    %v4907 = vrcp.pop %v4901
    %v4908 = vmul.f32 1.0, %v4907
    %v4909 = vrcp.pop %v4902
    %v4910 = vmul.f32 1.0, %v4909
    %v4911 = vrcp.pop %v4903
    %v4912 = vmul.f32 1.0, %v4911
    %v4913 = vrcp.pop %v4904
    %v4914 = vmul.f32 1.0, %v4913
    %v4915 = vrcp.pop %v4905
    %v4916 = vmul.f32 1.0, %v4915
    %v4917 = vrcp.pop %v4906
    %v4918 = vmul.f32 1.0, %v4917
    %v4919 = vtanh.pop %v4878
    %v4920 = vtanh.pop %v4882
    %v4921 = vmul.f32 %v4910, %v4707
    %v4922 = vmul.f32 %v4916, %v4708
    %v4923 = vmul.f32 %v4908, %v4919
    %v4924 = vmul.f32 %v4914, %v4920
    %v4925 = vadd.f32 %v4921, %v4923
    %v4926 = vadd.f32 %v4922, %v4924
    %v4927 = vtanh.pop %v4925
    %v4928 = vtanh.pop %v4926
    %v4929 = vmul.f32 %v4912, %v4927
    %v4930 = vmul.f32 %v4918, %v4928
    %v4931 = vld [vmem:[%s2558] sm:$0xff]
    %v4932 = vld [vmem:[%s2558 + $0x8] sm:$0xff]
    %v4933 = vld [vmem:[%s2558 + $0x10] sm:$0xff]
    %v4934 = vld [vmem:[%s2558 + $0x18] sm:$0xff]
    %v4935 = vld [vmem:[%s2558 + $0x20] sm:$0xff]
    %v4936 = vld [vmem:[%s2558 + $0x28] sm:$0xff]
    %v4937 = vld [vmem:[%s2558 + $0x30] sm:$0xff]
    %v4938 = vld [vmem:[%s2558 + $0x38] sm:$0xff]
    %4939 = vmatprep.subr.mxu0 %v3350
    %4940 = vmatpush1.msra.mxu0 %v3349
    %4941 = vmatprep.subr.mxu0 %v3354
    %4942 = vmatpush1.msra.mxu0 %v3353
    %4943 = vmatprep.subr.mxu0 %v3358
    %4944 = vmatpush1.msra.mxu0 %v3357
    %4945 = vmatprep.subr.mxu0 %v3362
    %4946 = vmatpush1.msra.mxu0 %v3361
    %4947 = vmatprep.subr.mxu0 %v3366
    %4948 = vmatpush1.msra.mxu0 %v3365
    %4949 = vmatprep.subr.mxu0 %v3370
    %4950 = vmatpush1.msra.mxu0 %v3369
    %4951 = vmatprep.subr.mxu0 %v3374
    %4952 = vmatpush1.msra.mxu0 %v3373
    %4953 = vmatprep.subr.mxu0 %v3378
    %4954 = vmatpush1.msra.mxu0 %v3377
    %4955 = vmatprep.subr.mxu0 %v3382
    %4956 = vmatpush1.msra.mxu0 %v3381
    %4957 = vmatprep.subr.mxu0 %v3386
    %4958 = vmatpush1.msra.mxu0 %v3385
    %4959 = vmatprep.subr.mxu0 %v3390
    %4960 = vmatpush1.msra.mxu0 %v3389
    %4961 = vmatprep.subr.mxu0 %v3394
    %4962 = vmatpush1.msra.mxu0 %v3393
    %4963 = vmatprep.subr.mxu0 %v3398
    %4964 = vmatpush1.msra.mxu0 %v3397
    %4965 = vmatprep.subr.mxu0 %v3402
    %4966 = vmatpush1.msra.mxu0 %v3401
    %4967 = vmatprep.subr.mxu0 %v3406
    %4968 = vmatpush1.msra.mxu0 %v3405
    %4969 = vmatprep.subr.mxu0 %v3410
    %4970 = vmatpush1.msra.mxu0 %v3409
    %4971 = vmatprep.subr.mxu0 0.0
    %4972 = vmatpush1.msra.mxu0 0.0
    %4973 = vmatprep.subr.mxu0 0.0
    %4974 = vmatpush1.msra.mxu0 0.0
    %4975 = vmatprep.subr.mxu0 0.0
    %4976 = vmatpush1.msra.mxu0 0.0
    %4977 = vmatprep.subr.mxu0 0.0
    %4978 = vmatpush1.msra.mxu0 0.0
    %4979 = vmatprep.subr.mxu0 0.0
    %4980 = vmatpush1.msra.mxu0 0.0
    %4981 = vmatprep.subr.mxu0 0.0
    %4982 = vmatpush1.msra.mxu0 0.0
    %4983 = vmatprep.subr.mxu0 0.0
    %4984 = vmatpush1.msra.mxu0 0.0
    %4985 = vmatprep.subr.mxu0 0.0
    %4986 = vmatpush1.msra.mxu0 0.0
    %4987 = vmatprep.subr.mxu0 0.0
    %4988 = vmatpush1.msra.mxu0 0.0
    %4989 = vmatprep.subr.mxu0 0.0
    %4990 = vmatpush1.msra.mxu0 0.0
    %4991 = vmatprep.subr.mxu0 0.0
    %4992 = vmatpush1.msra.mxu0 0.0
    %4993 = vmatprep.subr.mxu0 0.0
    %4994 = vmatpush1.msra.mxu0 0.0
    %4995 = vmatprep.subr.mxu0 0.0
    %4996 = vmatpush1.msra.mxu0 0.0
    %4997 = vmatprep.subr.mxu0 0.0
    %4998 = vmatpush1.msra.mxu0 0.0
    %4999 = vmatprep.subr.mxu0 0.0
    %5000 = vmatpush1.msra.mxu0 0.0
    %5001 = vmatprep.subr.mxu0 0.0
    %5002 = vmatpush1.msra.mxu0 0.0
    %5003 = vmatprep.mubr.f32.mxu0 0.0
    %5004 = vmatmul.mubr.f32.gmra.mrb[0].mxu0 %v4929
    %v5005 = vpop.f32.mrb[0].mxu0
    %v5006 = vadd.f32 0.0, %v5005
    %v5007 = vpop.f32.mrb[0].mxu0
    %v5008 = vadd.f32 0.0, %v5007
    %5009 = vmatprep.mubr.f32.mxu0 0.0
    %5010 = vmatmul.mubr.f32.gmra.mrb[0].mxu0 %v4930
    %v5011 = vpop.f32.mrb[0].mxu0
    %v5012 = vadd.f32 0.0, %v5011
    %v5013 = vpop.f32.mrb[0].mxu0
    %v5014 = vadd.f32 0.0, %v5013
    %5015 = vdwg.mxu0
    %5016 = vmatprep.subr.mxu0 %v3352
    %5017 = vmatpush1.msra.mxu0 %v3351
    %5018 = vmatprep.subr.mxu0 %v3356
    %5019 = vmatpush1.msra.mxu0 %v3355
    %5020 = vmatprep.subr.mxu0 %v3360
    %5021 = vmatpush1.msra.mxu0 %v3359
    %5022 = vmatprep.subr.mxu0 %v3364
    %5023 = vmatpush1.msra.mxu0 %v3363
    %5024 = vmatprep.subr.mxu0 %v3368
    %5025 = vmatpush1.msra.mxu0 %v3367
    %5026 = vmatprep.subr.mxu0 %v3372
    %5027 = vmatpush1.msra.mxu0 %v3371
    %5028 = vmatprep.subr.mxu0 %v3376
    %5029 = vmatpush1.msra.mxu0 %v3375
    %5030 = vmatprep.subr.mxu0 %v3380
    %5031 = vmatpush1.msra.mxu0 %v3379
    %5032 = vmatprep.subr.mxu0 %v3384
    %5033 = vmatpush1.msra.mxu0 %v3383
    %5034 = vmatprep.subr.mxu0 %v3388
    %5035 = vmatpush1.msra.mxu0 %v3387
    %5036 = vmatprep.subr.mxu0 %v3392
    %5037 = vmatpush1.msra.mxu0 %v3391
    %5038 = vmatprep.subr.mxu0 %v3396
    %5039 = vmatpush1.msra.mxu0 %v3395
    %5040 = vmatprep.subr.mxu0 %v3400
    %5041 = vmatpush1.msra.mxu0 %v3399
    %5042 = vmatprep.subr.mxu0 %v3404
    %5043 = vmatpush1.msra.mxu0 %v3403
    %5044 = vmatprep.subr.mxu0 %v3408
    %5045 = vmatpush1.msra.mxu0 %v3407
    %5046 = vmatprep.subr.mxu0 %v3412
    %5047 = vmatpush1.msra.mxu0 %v3411
    %5048 = vmatprep.subr.mxu0 0.0
    %5049 = vmatpush1.msra.mxu0 0.0
    %5050 = vmatprep.subr.mxu0 0.0
    %5051 = vmatpush1.msra.mxu0 0.0
    %5052 = vmatprep.subr.mxu0 0.0
    %5053 = vmatpush1.msra.mxu0 0.0
    %5054 = vmatprep.subr.mxu0 0.0
    %5055 = vmatpush1.msra.mxu0 0.0
    %5056 = vmatprep.subr.mxu0 0.0
    %5057 = vmatpush1.msra.mxu0 0.0
    %5058 = vmatprep.subr.mxu0 0.0
    %5059 = vmatpush1.msra.mxu0 0.0
    %5060 = vmatprep.subr.mxu0 0.0
    %5061 = vmatpush1.msra.mxu0 0.0
    %5062 = vmatprep.subr.mxu0 0.0
    %5063 = vmatpush1.msra.mxu0 0.0
    %5064 = vmatprep.subr.mxu0 0.0
    %5065 = vmatpush1.msra.mxu0 0.0
    %5066 = vmatprep.subr.mxu0 0.0
    %5067 = vmatpush1.msra.mxu0 0.0
    %5068 = vmatprep.subr.mxu0 0.0
    %5069 = vmatpush1.msra.mxu0 0.0
    %5070 = vmatprep.subr.mxu0 0.0
    %5071 = vmatpush1.msra.mxu0 0.0
    %5072 = vmatprep.subr.mxu0 0.0
    %5073 = vmatpush1.msra.mxu0 0.0
    %5074 = vmatprep.subr.mxu0 0.0
    %5075 = vmatpush1.msra.mxu0 0.0
    %5076 = vmatprep.subr.mxu0 0.0
    %5077 = vmatpush1.msra.mxu0 0.0
    %5078 = vmatprep.subr.mxu0 0.0
    %5079 = vmatpush1.msra.mxu0 0.0
    %5080 = vmatprep.mubr.f32.mxu0 0.0
    %5081 = vmatmul.mubr.f32.gmra.mrb[0].mxu0 %v4929
    %v5082 = vpop.f32.mrb[0].mxu0
    %v5083 = vadd.f32 0.0, %v5082
    %v5084 = vpop.f32.mrb[0].mxu0
    %v5085 = vadd.f32 0.0, %v5084
    %5086 = vmatprep.mubr.f32.mxu0 0.0
    %5087 = vmatmul.mubr.f32.gmra.mrb[0].mxu0 %v4930
    %v5088 = vpop.f32.mrb[0].mxu0
    %v5089 = vadd.f32 0.0, %v5088
    %v5090 = vpop.f32.mrb[0].mxu0
    %v5091 = vadd.f32 0.0, %v5090
    %5092 = vdwg.mxu0
    %v5093 = vadd.f32 %v4931, %v5006
    %v5094 = vadd.f32 %v4932, %v5008
    %v5095 = vadd.f32 %v4933, %v5083
    %v5096 = vadd.f32 %v4934, %v5085
    %v5097 = vadd.f32 %v4935, %v5012
    %v5098 = vadd.f32 %v4936, %v5014
    %v5099 = vadd.f32 %v4937, %v5089
    %v5100 = vadd.f32 %v4938, %v5091
    %v5101 = vxor.u32 %v5093, 2147483648
    %v5102 = vxor.u32 %v5094, 2147483648
    %v5103 = vxor.u32 %v5095, 2147483648
    %v5104 = vxor.u32 %v5097, 2147483648
    %v5105 = vxor.u32 %v5098, 2147483648
    %v5106 = vxor.u32 %v5099, 2147483648
    %v5107 = vmul.f32 %v5101, 1.442695
    %v5108 = vpow.pop %v5107
    %v5109 = vmul.f32 %v5102, 1.442695
    %v5110 = vpow.pop %v5109
    %v5111 = vmul.f32 %v5103, 1.442695
    %v5112 = vpow.pop %v5111
    %v5113 = vmul.f32 %v5104, 1.442695
    %v5114 = vpow.pop %v5113
    %v5115 = vmul.f32 %v5105, 1.442695
    %v5116 = vpow.pop %v5115
    %v5117 = vmul.f32 %v5106, 1.442695
    %v5118 = vpow.pop %v5117
    %v5119 = vadd.f32 %v5108, 1.0
    %v5120 = vadd.f32 %v5110, 1.0
    %v5121 = vadd.f32 %v5112, 1.0
    %v5122 = vadd.f32 %v5114, 1.0
    %v5123 = vadd.f32 %v5116, 1.0
    %v5124 = vadd.f32 %v5118, 1.0
    %v5125 = vrcp.pop %v5119
    %v5126 = vmul.f32 1.0, %v5125
    %v5127 = vrcp.pop %v5120
    %v5128 = vmul.f32 1.0, %v5127
    %v5129 = vrcp.pop %v5121
    %v5130 = vmul.f32 1.0, %v5129
    %v5131 = vrcp.pop %v5122
    %v5132 = vmul.f32 1.0, %v5131
    %v5133 = vrcp.pop %v5123
    %v5134 = vmul.f32 1.0, %v5133
    %v5135 = vrcp.pop %v5124
    %v5136 = vmul.f32 1.0, %v5135
    %v5137 = vtanh.pop %v5096
    %v5138 = vtanh.pop %v5100
    %v5139 = vmul.f32 %v5128, %v4925
    %v5140 = vmul.f32 %v5134, %v4926
    %v5141 = vmul.f32 %v5126, %v5137
    %v5142 = vmul.f32 %v5132, %v5138
    %v5143 = vadd.f32 %v5139, %v5141
    %v5144 = vadd.f32 %v5140, %v5142
    %v5145 = vtanh.pop %v5143
    %v5146 = vtanh.pop %v5144
    %v5147 = vmul.f32 %v5130, %v5145
    %v5148 = vmul.f32 %v5136, %v5146
    %s5149 = scalar_lea.vmem [#allocation8], 16
    %5150 = vst [vmem:[%s5149] sm:$0xff] %v5147
    %5151 = vst [vmem:[%s5149 + $0x8] sm:$0xff] %v5148
    %s5152 = scalar_lea.vmem [#allocation10], 16
    %5153 = vst [vmem:[%s5152] sm:$0xff] %v5143
    %5154 = vst [vmem:[%s5152 + $0x8] sm:$0xff] %v5144
    %v5155 = vld [vmem:[%s3] sm:$0x1]
    %v5157 = vlaneseq
    %v5158 = vshrl.u32 %v5157, 7
    %v5159 = vsub.s32 0, %v5158
    %v5160 = vrot.slane %v5155, %v5159
    %v5162 = vmul.f32 %v5147, %v5160
    %v5163 = vmul.f32 %v5148, %v5160
    %5164 = vadd.xlane.f32.xlu0 %v5162
    %v5165 = vpop.xlane.xlu0 %5164
    %5166 = vadd.xlane.f32.xlu0 %v5163
    %v5167 = vpop.xlane.xlu0 %5166
    %v5168 = vld [vmem:[#allocation7] sm:$0x1]
    %v5170 = vlaneseq
    %v5171 = vshrl.u32 %v5170, 7
    %v5172 = vsub.s32 0, %v5171
    %v5173 = vrot.slane %v5168, %v5172
    %v5175 = vadd.f32 %v5165, %v5173
    %v5176 = vadd.f32 %v5167, %v5173
    %vm5177 = vcmask 7168
    %5178 = vst.msk [vmem:[%s7] sm:$0xff] %vm5177, %v5175
    %5179 = vst.msk [vmem:[%s7 + $0x8] sm:$0xff] %vm5177, %v5176
    // Predicated region
    $region34: #{tpu_custom_call.1} parent=1 // pred_check
      _
    $region35: #{tpu_custom_call.1} parent=1 // pred_check_branch
      %5181 = sbr.rel (0) target = $region37
    $region36: #{tpu_custom_call.1} parent=1 // pred_region
      _
    $region37: #{tpu_custom_call.1} parent=1 // pred_fallthru
      _
    // Predicated region
    $region38: #{tpu_custom_call.1} parent=1 // pred_check
      _
    $region39: #{tpu_custom_call.1} parent=1 // pred_check_branch
      %5183 = sbr.rel (0) target = $region41
    $region40: #{tpu_custom_call.1} parent=1 // pred_region
      %s5185 = ssub.s32 512, 512
      %5186 = vsyncadd [#allocation9], %s5185
      %s5187 = sshll.u32 [#allocation8], 4
      %s5188 = int_to_ptr.vmem [resolvable:$true] %s5187
      %5193 = dma.vmem_to_hbm [thread:$0]  %s5188, 512, %s8, [#allocation9], 128, 128, 8
    $region41: #{tpu_custom_call.1} parent=1 // pred_fallthru
      _
    // Predicated region
    $region42: #{tpu_custom_call.1} parent=1 // pred_check
      _
    $region43: #{tpu_custom_call.1} parent=1 // pred_check_branch
      %5195 = sbr.rel (0) target = $region45
    $region44: #{tpu_custom_call.1} parent=1 // pred_region
      %s5197 = ssub.s32 512, 512
      %5198 = vsyncadd [#allocation11], %s5197
      %s5199 = sshll.u32 [#allocation10], 4
      %s5200 = int_to_ptr.vmem [resolvable:$true] %s5199
      %5205 = dma.vmem_to_hbm [thread:$0]  %s5200, 512, %s9, [#allocation11], 128, 128, 8
    $region45: #{tpu_custom_call.1} parent=1 // pred_fallthru
      _
    // Predicated region
    $region46: #{tpu_custom_call.1} parent=1 // pred_check
      _
    $region47: #{tpu_custom_call.1} parent=1 // pred_check_branch
      %5207 = sbr.rel (0) target = $region49
    $region48: #{tpu_custom_call.1} parent=1 // pred_region
      _
    $region49: #{tpu_custom_call.1} parent=1 // pred_fallthru
      _
    // Predicated region
    $region50: #{tpu_custom_call.1} parent=1 // pred_check
      _
    $region51: #{tpu_custom_call.1} parent=1 // pred_check_branch
      %5209 = sbr.rel (0) target = $region53
    $region52: #{tpu_custom_call.1} parent=1 // pred_region
      %5210 = dma.done [#allocation9], 512
    $region53: #{tpu_custom_call.1} parent=1 // pred_fallthru
      _
    // Predicated region
    $region54: #{tpu_custom_call.1} parent=1 // pred_check
      _
    $region55: #{tpu_custom_call.1} parent=1 // pred_check_branch
      %5212 = sbr.rel (0) target = $region57
    $region56: #{tpu_custom_call.1} parent=1 // pred_region
      %5213 = dma.done [#allocation11], 512
    $region57: #{tpu_custom_call.1} parent=1 // pred_fallthru
      _
    %5214 = vsyncpa [#allocation9], 1
    %5215 = vsyncpa [#allocation11], 1
  %5216 = vsyncmov [#allocation6]
  %s5217 = vpop.sfrf %5216
  %p5218 = scmp.eq.s32.totalorder %s5217, 0
  %p5219 = pneg %p5218
  %5221 = shalt.err (%p5219)
  %s5222 = scalar_lea.sflag [#allocation6], 1
  %5223 = vsyncmov %s5222
  %s5224 = vpop.sfrf %5223
  %p5225 = scmp.eq.s32.totalorder %s5224, 0
  %p5226 = pneg %p5225
  %5228 = shalt.err (%p5226)
  %s5229 = scalar_lea.sflag [#allocation6], 2
  %5230 = vsyncmov %s5229
  %s5231 = vpop.sfrf %5230
  %p5232 = scmp.eq.s32.totalorder %s5231, 0
  %p5233 = pneg %p5232
  %5235 = shalt.err (%p5233)
  %s5236 = scalar_lea.sflag [#allocation6], 3
  %5237 = vsyncmov %s5236
  %s5238 = vpop.sfrf %5237
  %p5239 = scmp.eq.s32.totalorder %s5238, 0
  %p5240 = pneg %p5239
  %5242 = shalt.err (%p5240)

</llo_original>
